<compile_context>
chip_gen: v5e
topology: v5e:2x2
jax: 0.10.0
libtpu: 0.0.40
codegen_flags: <defaults>
</compile_context>

<pallas_src>
import functools

import jax
import jax.numpy as jnp
from jax.experimental import pallas as pl
from jax.experimental.pallas import tpu as pltpu


def _round_up(x, m):
    return (x + m - 1) // m * m


# ---------------------------------------------------------------------------
# Pallas kernel 1: X @ W + b (+ optional ReLU).  bf16 operands, f32 accumulate.
# Used (batched over B*HW rows) for both 3x3 convs (via im2col) and both 1x1s.
# ---------------------------------------------------------------------------
def _mm_bias_kernel(apply_relu, x_ref, w_ref, b_ref, o_ref):
    acc = jnp.dot(x_ref[...], w_ref[...], preferred_element_type=jnp.float32)
    acc = acc + b_ref[...]                       # (1, N) bias broadcasts over rows
    if apply_relu:
        acc = jnp.maximum(acc, 0.0)
    o_ref[...] = acc.astype(o_ref.dtype)


def matmul_bias(x, w, b, relu=False, tm=256):
    """x: [M, K], w: [K, N], b: [N] -> [M, N] f32.  M is padded to tm internally."""
    M, K = x.shape
    Kw, N = w.shape
    assert K == Kw
    Mp = _round_up(M, tm)
    if Mp != M:
        x = jnp.pad(x, ((0, Mp - M), (0, 0)))
    out = pl.pallas_call(
        functools.partial(_mm_bias_kernel, relu),
        out_shape=jax.ShapeDtypeStruct((Mp, N), jnp.float32),
        grid_spec=pltpu.PrefetchScalarGridSpec(
            num_scalar_prefetch=0,
            grid=(Mp // tm,),
            in_specs=[
                pl.BlockSpec((tm, K), lambda i: (i, 0)),
                pl.BlockSpec((K, N), lambda i: (0, 0)),   # block index never changes
                pl.BlockSpec((1, N), lambda i: (0, 0)),
            ],
            out_specs=pl.BlockSpec((tm, N), lambda i: (i, 0)),
        ),
        compiler_params=pltpu.CompilerParams(dimension_semantics=("parallel",)),
    )(x.astype(jnp.bfloat16), w.astype(jnp.bfloat16),
      b.reshape(1, N).astype(jnp.float32))
    return out[:M]


# ---------------------------------------------------------------------------
# Pallas kernel 2: row-wise L2 normalization (F.normalize, eps=1e-12), done ONCE
# for the shared q/k patch matrix; emits bf16 so the similarity kernel streams
# half the bytes and hits full MXU rate on v6e/v7x.
# ---------------------------------------------------------------------------
def _l2norm_kernel(x_ref, o_ref):
    x = x_ref[...]
    norm = jnp.sqrt(jnp.sum(x * x, axis=-1, keepdims=True))
    inv = pl.reciprocal(jnp.maximum(norm, jnp.float32(1e-12)), approx=True)
    o_ref[...] = (x * inv).astype(o_ref.dtype)


def l2_normalize_rows(x, tm=256, out_dtype=jnp.bfloat16):
    M, D = x.shape
    Mp = _round_up(M, tm)
    if Mp != M:
        x = jnp.pad(x, ((0, Mp - M), (0, 0)))
    out = pl.pallas_call(
        _l2norm_kernel,
        out_shape=jax.ShapeDtypeStruct((Mp, D), out_dtype),
        grid_spec=pltpu.PrefetchScalarGridSpec(
            num_scalar_prefetch=0,
            grid=(Mp // tm,),
            in_specs=[pl.BlockSpec((tm, D), lambda i: (i, 0))],
            out_specs=pl.BlockSpec((tm, D), lambda i: (i, 0)),
        ),
        compiler_params=pltpu.CompilerParams(dimension_semantics=("parallel",)),
    )(x.astype(jnp.float32))
    return out[:M]


# ---------------------------------------------------------------------------
# Pallas kernel 3: patch similarity + streaming top-k over the key axis.
#   S[q, key] = <pn[q], pn[key]>   (pn = pre-normalized patches, q == k)
#   grid = (batch, query tiles [parallel], key tiles [arbitrary, innermost]).
#   A running top-k (values + global key indices) lives in VMEM scratch and is
#   merged with each key block, so the resident key set / score matrix stay
#   bounded for large H*W.  Output is one lane-dense (tq, 128) int32 slab per
#   query tile: lanes [0, topk) hold the f32 values bitcast to int32, lanes
#   [topk, 2*topk) hold the int32 key indices.
# ---------------------------------------------------------------------------
def _sim_topk_kernel(topk, tk, hw_real, q_ref, k_ref, out_ref, cand_v, cand_i):
    ki = pl.program_id(2)

    @pl.when(ki == 0)
    def _init():
        cand_v[...] = jnp.full(cand_v.shape, -jnp.inf, jnp.float32)
        cand_i[...] = jnp.full(cand_i.shape, 2 ** 30, jnp.int32)

    q = q_ref[...]                                   # (tq, D) bf16, normalized
    k = k_ref[...]                                   # (tk, D) bf16, normalized
    s = jax.lax.dot_general(q, k, (((1,), (1,)), ((), ())),
                            preferred_element_type=jnp.float32)        # (tq, tk)
    col = jax.lax.broadcasted_iota(jnp.int32, s.shape, 1) + ki * tk    # global key id
    if hw_real is not None:                          # mask zero-padded keys
        s = jnp.where(col < hw_real, s, -jnp.inf)

    # merge current key block with the running candidates
    s_all = jnp.concatenate([cand_v[...], s], axis=-1)      # (tq, topk + tk)
    i_all = jnp.concatenate([cand_i[...], col], axis=-1)

    # Iterative top-k with lowest-index tie-break (torch.topk leaves tie order
    # unspecified).  Kept as max + masked-min (2 exact XLU reductions per pick);
    # a packed value/index single-reduction variant would truncate the returned
    # similarity values.
    big = jnp.int32(2 ** 30)
    vlist, ilist = [], []
    for _ in range(topk):
        m = jnp.max(s_all, axis=-1, keepdims=True)                       # (tq, 1)
        sel = jnp.min(jnp.where(s_all >= m, i_all, big),
                      axis=-1, keepdims=True)                            # (tq, 1)
        vlist.append(m)
        ilist.append(sel)
        s_all = jnp.where(i_all == sel, -jnp.inf, s_all)  # knock out the selection
    cand_v[...] = jnp.concatenate(vlist, axis=-1)
    cand_i[...] = jnp.concatenate(ilist, axis=-1)

    @pl.when(ki == pl.num_programs(2) - 1)
    def _emit():
        out_ref[...] = jnp.zeros(out_ref.shape, jnp.int32)
        out_ref[:, 0:topk] = pltpu.bitcast(cand_v[...], jnp.int32)
        out_ref[:, topk:2 * topk] = cand_i[...]


def sim_topk(pn, topk, tile=128):
    """pn: [B, HW, D] pre-normalized patches -> (vals [B,HW,topk] f32 descending,
    idx [B,HW,topk] int32)."""
    B, HW, D = pn.shape
    assert topk <= HW and topk <= tile and 2 * topk <= 128
    HWp = _round_up(HW, tile)
    if HWp != HW:
        pn = jnp.pad(pn, ((0, 0), (0, HWp - HW), (0, 0)))
    nq = nk = HWp // tile
    out = pl.pallas_call(
        functools.partial(_sim_topk_kernel, topk, tile,
                          HW if HWp != HW else None),
        out_shape=jax.ShapeDtypeStruct((B, HWp, 128), jnp.int32),
        grid_spec=pltpu.PrefetchScalarGridSpec(
            num_scalar_prefetch=0,
            grid=(B, nq, nk),
            in_specs=[
                pl.BlockSpec((None, tile, D), lambda b, qi, ki: (b, qi, 0)),  # queries
                pl.BlockSpec((None, tile, D), lambda b, qi, ki: (b, ki, 0)),  # keys
            ],
            out_specs=pl.BlockSpec((None, tile, 128), lambda b, qi, ki: (b, qi, 0)),
            scratch_shapes=[pltpu.VMEM((tile, topk), jnp.float32),
                            pltpu.VMEM((tile, topk), jnp.int32)],
        ),
        compiler_params=pltpu.CompilerParams(
            dimension_semantics=("parallel", "parallel", "arbitrary")),
    )(pn, pn)
    raw = out[:, :HW, :]
    vals = jax.lax.bitcast_convert_type(raw[..., 0:topk], jnp.float32)
    idx = raw[..., topk:2 * topk]
    return vals, idx


# ---------------------------------------------------------------------------
# Glue (plain JAX, channels-last): padding, 3x3 im2col, fold scatter-add.
# The unfolded feature index is (ky*3+kx)*C + c; conv weights are stored
# pre-reshaped to match (a fixed permutation of the torch [out,in,kh,kw] layout),
# which leaves the module's math unchanged.
# ---------------------------------------------------------------------------
def _pad_zero(x):
    return jnp.pad(x, ((0, 0), (1, 1), (1, 1), (0, 0)))


def _pad_reflect(x):
    return jnp.pad(x, ((0, 0), (1, 1), (1, 1), (0, 0)), mode="reflect")


def unfold3(xp):
    """xp: [B, H+2, W+2, C] (already padded) -> [B*H*W, 9*C]."""
    B, Hp, Wp, C = xp.shape
    H, W = Hp - 2, Wp - 2
    cols = [xp[:, ky:ky + H, kx:kx + W, :] for ky in range(3) for kx in range(3)]
    return jnp.concatenate(cols, axis=-1).reshape(B * H * W, 9 * C)


def fold3(t, H, W):
    """Adjoint of unfold3 with padding=1. t: [B, H, W, 9, C] -> [B, H, W, C]."""
    B = t.shape[0]
    C = t.shape[-1]
    acc = jnp.zeros((B, H + 2, W + 2, C), t.dtype)
    for k in range(9):
        ky, kx = divmod(k, 3)
        acc = acc.at[:, ky:ky + H, kx:kx + W, :].add(t[:, :, :, k, :])
    return acc[:, 1:1 + H, 1:1 + W, :]


# ---------------------------------------------------------------------------
# TransformerV5 forward (locate=None path), batched.
# ---------------------------------------------------------------------------
def transformer_v5_forward(x, params, topk=5):
    """x: [B, C, H, W] float32 (NCHW, matching the torch module)."""
    B, C, H, W = x.shape
    HW = H * W
    xl = jnp.transpose(x, (0, 2, 3, 1))                        # [B, H, W, C]

    # self.feature: conv3x3(pad=1) -> ReLU -> conv3x3(pad=1), im2col + Pallas matmul
    p1 = unfold3(_pad_zero(xl))                                # [B*HW, 9C]
    f1 = matmul_bias(p1, params["w_f1"], params["b_f1"], relu=True)
    p2 = unfold3(_pad_zero(f1.reshape(B, H, W, C)))
    feature = matmul_bias(p2, params["w_f2"], params["b_f2"])  # [B*HW, C]

    # shared reflection-padded patches (q == k == x_unfold)
    patches = unfold3(_pad_reflect(xl))                        # [B*HW, 9C] f32
    pn = l2_normalize_rows(patches).reshape(B, HW, 9 * C)      # normalized once, bf16
    patches = patches.reshape(B, HW, 9 * C)

    # R_qk = bmm(k_n, q_n) ; topk over the key axis (Pallas streaming merge)
    vals, inds = sim_topk(pn, topk)                            # [B, HW, topk] each

    # texture branch: gather selected patches, fold(scatter-add)/9, scale by score.
    # TODO(synk): fuse this gather + fold + scale (+ the 1x1 texture_conv1) into a
    #             Pallas kernel with scalar-prefetched indices to remove the
    #             remaining HBM round trips (biggest win on v5e).
    Ts = []
    for i in range(1, topk):
        gi = jnp.broadcast_to(inds[:, :, i][:, :, None], patches.shape)
        g = jnp.take_along_axis(patches, gi, axis=1)           # [B, HW, 9C]
        T = fold3(g.reshape(B, H, W, 9, C), H, W) * (1.0 / 9.0)
        S = vals[:, :, i].reshape(B, H, W, 1)
        Ts.append(T * S)
    tex_in = jnp.concatenate(Ts, axis=-1).reshape(B * HW, (topk - 1) * C)

    texture = matmul_bias(tex_in, params["w_t1"], params["b_t1"])          # [B*HW, C]
    cat = jnp.concatenate([feature, xl.reshape(B * HW, C), texture], axis=-1)
    y = matmul_bias(cat, params["w_t2"], params["b_t2"])                   # [B*HW, C]
    return jnp.transpose(y.reshape(B, H, W, C), (0, 3, 1, 2))


# ---------------------------------------------------------------------------
# Deterministic parameter init (shapes follow TransformerV5.__init__).
# Conv weights are stored pre-reshaped into matmul form [K, out] with the K axis
# ordered (ky*3+kx)*C + c for the 3x3 convs.
# ---------------------------------------------------------------------------
def init_params(key, in_c, topk):
    ks = jax.random.split(key, 8)

    def w(k, shape, scale=0.1):
        return scale * jax.random.normal(k, shape, jnp.float32)

    return {
        "w_f1": w(ks[0], (in_c * 9, in_c)),
        "b_f1": w(ks[1], (in_c,), 0.01),
        "w_f2": w(ks[2], (in_c * 9, in_c)),
        "b_f2": w(ks[3], (in_c,), 0.01),
        "w_t1": w(ks[4], (in_c * (topk - 1), in_c)),
        "b_t1": w(ks[5], (in_c,), 0.01),
        "w_t2": w(ks[6], (in_c * 3, in_c)),
        "b_t2": w(ks[7], (in_c,), 0.01),
    }


if __name__ == "__main__":
    key = jax.random.PRNGKey(0)
    kx, kp = jax.random.split(key)

    B, C, H, W = 2, 4, 16, 16          # HW = 256 -> 2 query tiles x 2 key tiles
    topk = 5

    x = jax.random.normal(kx, (B, C, H, W), jnp.float32)
    params = init_params(kp, C, topk)

    fwd = jax.jit(functools.partial(transformer_v5_forward, topk=topk))
    y = fwd(x, params)
    jax.block_until_ready(y)

    assert y.shape == (B, C, H, W), y.shape
    assert y.dtype == jnp.float32
    print("KERNEL_OK")
</pallas_src>

<mosaic_0001>
module attributes {stable_mosaic.version = 11 : i64} {
  func.func @_l2norm_kernel(%arg0: i32, %arg1: memref<256x36xf32, #tpu.memory_space<vmem>>, %arg2: memref<256x36xbf16, #tpu.memory_space<vmem>>) attributes {dimension_semantics = [#tpu.dimension_semantics<parallel>], iteration_bounds = array<i64: 2>, scalar_prefetch = 0 : i64, scratch_operands = 0 : i64, tpu.core_type = #tpu.core_type<tc>, window_params = [{transform_indices = @transform_0, window_bounds = array<i64: 256, 36>}, {transform_indices = @transform_1, window_bounds = array<i64: 256, 36>}]} {
    %c0 = arith.constant 0 : index
    %c0_0 = arith.constant 0 : index
    %0 = vector.load %arg1[%c0, %c0_0] : memref<256x36xf32, #tpu.memory_space<vmem>>, vector<256x36xf32>
    %1 = arith.mulf %0, %0 : vector<256x36xf32>
    %cst = arith.constant dense<0.000000e+00> : vector<256xf32>
    %2 = vector.multi_reduction <add>, %1, %cst [1] : vector<256x36xf32> to vector<256xf32>
    %3 = vector.shape_cast %2 : vector<256xf32> to vector<256x1xf32>
    %4 = math.sqrt %3 : vector<256x1xf32>
    %cst_1 = arith.constant 9.99999996E-13 : f32
    %5 = vector.broadcast %cst_1 : f32 to vector<256x1xf32>
    %6 = arith.maximumf %4, %5 : vector<256x1xf32>
    %7 = tpu.reciprocal %6 {approx = true} : vector<256x1xf32> -> vector<256x1xf32>
    %8 = vector.broadcast %7 : vector<256x1xf32> to vector<256x36xf32>
    %9 = arith.mulf %0, %8 : vector<256x36xf32>
    %10 = arith.truncf %9 : vector<256x36xf32> to vector<256x36xbf16>
    %c0_2 = arith.constant 0 : index
    %c0_3 = arith.constant 0 : index
    %11 = vector.load %arg2[%c0_2, %c0_3] : memref<256x36xbf16, #tpu.memory_space<vmem>>, vector<256x36xbf16>
    tpu.vector_store %arg2[%c0_2, %c0_3], %10 {strides = array<i32>} : memref<256x36xbf16, #tpu.memory_space<vmem>>, vector<256x36xbf16>,
    return
  }
  func.func @transform_0(%arg0: i32) -> (i32, i32) {
    %c0_i32 = arith.constant 0 : i32
    %c0_i32_0 = arith.constant 0 : i32
    return %arg0, %c0_i32 : i32, i32
  }
  func.func @transform_1(%arg0: i32) -> (i32, i32) {
    %c0_i32 = arith.constant 0 : i32
    %c0_i32_0 = arith.constant 0 : i32
    return %arg0, %c0_i32 : i32, i32
  }
}

module attributes {stable_mosaic.version = 11 : i64} {
  func.func @_sim_topk_kernel(%arg0: i32, %arg1: i32, %arg2: i32, %arg3: memref<1x128x36xbf16, #tpu.memory_space<vmem>>, %arg4: memref<1x128x36xbf16, #tpu.memory_space<vmem>>, %arg5: memref<1x128x128xi32, #tpu.memory_space<vmem>>, %arg6: memref<128x5xf32, #tpu.memory_space<vmem>>, %arg7: memref<128x5xi32, #tpu.memory_space<vmem>>) attributes {dimension_semantics = [#tpu.dimension_semantics<parallel>, #tpu.dimension_semantics<parallel>, #tpu.dimension_semantics<arbitrary>], iteration_bounds = array<i64: 2, 2, 2>, scalar_prefetch = 0 : i64, scratch_operands = 2 : i64, tpu.core_type = #tpu.core_type<tc>, window_params = [{transform_indices = @transform_0, window_bounds = array<i64: 1, 128, 36>}, {transform_indices = @transform_1, window_bounds = array<i64: 1, 128, 36>}, {transform_indices = @transform_2, window_bounds = array<i64: 1, 128, 128>}]} {
    %c0_i32 = arith.constant 0 : i32
    %0 = arith.cmpi eq, %arg2, %c0_i32 : i32
    %1 = arith.extui %0 : i1 to i32
    %c0_i32_0 = arith.constant 0 : i32
    %2 = arith.cmpi ne, %1, %c0_i32_0 : i32
    scf.if %2 {
      %cst_33 = arith.constant 0xFF800000 : f32
      %79 = vector.broadcast %cst_33 : f32 to vector<128x5xf32>
      %c0_34 = arith.constant 0 : index
      %c0_35 = arith.constant 0 : index
      %80 = vector.load %arg6[%c0_34, %c0_35] : memref<128x5xf32, #tpu.memory_space<vmem>>, vector<128x5xf32>
      tpu.vector_store %arg6[%c0_34, %c0_35], %79 {strides = array<i32>} : memref<128x5xf32, #tpu.memory_space<vmem>>, vector<128x5xf32>,
      %c1073741824_i32_36 = arith.constant 1073741824 : i32
      %81 = vector.broadcast %c1073741824_i32_36 : i32 to vector<128x5xi32>
      %c0_37 = arith.constant 0 : index
      %c0_38 = arith.constant 0 : index
      %82 = vector.load %arg7[%c0_37, %c0_38] : memref<128x5xi32, #tpu.memory_space<vmem>>, vector<128x5xi32>
      tpu.vector_store %arg7[%c0_37, %c0_38], %81 {strides = array<i32>} : memref<128x5xi32, #tpu.memory_space<vmem>>, vector<128x5xi32>,
    } else {
    }
    %c0 = arith.constant 0 : index
    %c0_1 = arith.constant 0 : index
    %c0_2 = arith.constant 0 : index
    %3 = vector.load %arg3[%c0, %c0_1, %c0_2] : memref<1x128x36xbf16, #tpu.memory_space<vmem>>, vector<1x128x36xbf16>
    %4 = vector.shape_cast %3 : vector<1x128x36xbf16> to vector<128x36xbf16>
    %c0_3 = arith.constant 0 : index
    %c0_4 = arith.constant 0 : index
    %c0_5 = arith.constant 0 : index
    %5 = vector.load %arg4[%c0_3, %c0_4, %c0_5] : memref<1x128x36xbf16, #tpu.memory_space<vmem>>, vector<1x128x36xbf16>
    %6 = vector.shape_cast %5 : vector<1x128x36xbf16> to vector<128x36xbf16>
    %cst = arith.constant dense<0.000000e+00> : vector<128x128xf32>
    %7 = tpu.matmul %4, %6, %cst {dimension_numbers = #tpu.dot_dimension_numbers<[1], [1], [0], [0], [0, 0, 1, 0], [], []>} : vector<128x36xbf16>, vector<128x36xbf16>, vector<128x128xf32> -> vector<128x128xf32>
    %8 = tpu.iota {dimensions = array<i32: 1>} : vector<128x128xi32>
    %c128_i32 = arith.constant 128 : i32
    %9 = arith.muli %arg2, %c128_i32 : i32
    %10 = vector.broadcast %9 : i32 to vector<128x128xi32>
    %11 = arith.addi %8, %10 : vector<128x128xi32>
    %c0_6 = arith.constant 0 : index
    %c0_7 = arith.constant 0 : index
    %12 = vector.load %arg6[%c0_6, %c0_7] : memref<128x5xf32, #tpu.memory_space<vmem>>, vector<128x5xf32>
    %13 = tpu.concatenate %12, %7 in 1 : vector<128x5xf32>, vector<128x128xf32> -> vector<128x133xf32>
    %c0_8 = arith.constant 0 : index
    %c0_9 = arith.constant 0 : index
    %14 = vector.load %arg7[%c0_8, %c0_9] : memref<128x5xi32, #tpu.memory_space<vmem>>, vector<128x5xi32>
    %15 = tpu.concatenate %14, %11 in 1 : vector<128x5xi32>, vector<128x128xi32> -> vector<128x133xi32>
    %cst_10 = arith.constant dense<0xFF800000> : vector<128xf32>
    %16 = vector.multi_reduction <maximumf>, %13, %cst_10 [1] : vector<128x133xf32> to vector<128xf32>
    %17 = vector.shape_cast %16 : vector<128xf32> to vector<128x1xf32>
    %18 = vector.broadcast %17 : vector<128x1xf32> to vector<128x133xf32>
    %19 = arith.cmpf oge, %13, %18 : vector<128x133xf32>
    %c1073741824_i32 = arith.constant 1073741824 : i32
    %20 = vector.broadcast %c1073741824_i32 : i32 to vector<128x133xi32>
    %21 = arith.select %19, %15, %20 : vector<128x133xi1>, vector<128x133xi32>
    %cst_11 = arith.constant dense<2147483647> : vector<128xi32>
    %22 = vector.multi_reduction <minsi>, %21, %cst_11 [1] : vector<128x133xi32> to vector<128xi32>
    %23 = vector.shape_cast %22 : vector<128xi32> to vector<128x1xi32>
    %24 = vector.broadcast %23 : vector<128x1xi32> to vector<128x133xi32>
    %25 = arith.cmpi eq, %15, %24 : vector<128x133xi32>
    %cst_12 = arith.constant 0xFF800000 : f32
    %26 = vector.broadcast %cst_12 : f32 to vector<128x133xf32>
    %27 = arith.select %25, %26, %13 : vector<128x133xi1>, vector<128x133xf32>
    %cst_13 = arith.constant dense<0xFF800000> : vector<128xf32>
    %28 = vector.multi_reduction <maximumf>, %27, %cst_13 [1] : vector<128x133xf32> to vector<128xf32>
    %29 = vector.shape_cast %28 : vector<128xf32> to vector<128x1xf32>
    %30 = vector.broadcast %29 : vector<128x1xf32> to vector<128x133xf32>
    %31 = arith.cmpf oge, %27, %30 : vector<128x133xf32>
    %c1073741824_i32_14 = arith.constant 1073741824 : i32
    %32 = vector.broadcast %c1073741824_i32_14 : i32 to vector<128x133xi32>
    %33 = arith.select %31, %15, %32 : vector<128x133xi1>, vector<128x133xi32>
    %cst_15 = arith.constant dense<2147483647> : vector<128xi32>
    %34 = vector.multi_reduction <minsi>, %33, %cst_15 [1] : vector<128x133xi32> to vector<128xi32>
    %35 = vector.shape_cast %34 : vector<128xi32> to vector<128x1xi32>
    %36 = vector.broadcast %35 : vector<128x1xi32> to vector<128x133xi32>
    %37 = arith.cmpi eq, %15, %36 : vector<128x133xi32>
    %cst_16 = arith.constant 0xFF800000 : f32
    %38 = vector.broadcast %cst_16 : f32 to vector<128x133xf32>
    %39 = arith.select %37, %38, %27 : vector<128x133xi1>, vector<128x133xf32>
    %cst_17 = arith.constant dense<0xFF800000> : vector<128xf32>
    %40 = vector.multi_reduction <maximumf>, %39, %cst_17 [1] : vector<128x133xf32> to vector<128xf32>
    %41 = vector.shape_cast %40 : vector<128xf32> to vector<128x1xf32>
    %42 = vector.broadcast %41 : vector<128x1xf32> to vector<128x133xf32>
    %43 = arith.cmpf oge, %39, %42 : vector<128x133xf32>
    %c1073741824_i32_18 = arith.constant 1073741824 : i32
    %44 = vector.broadcast %c1073741824_i32_18 : i32 to vector<128x133xi32>
    %45 = arith.select %43, %15, %44 : vector<128x133xi1>, vector<128x133xi32>
    %cst_19 = arith.constant dense<2147483647> : vector<128xi32>
    %46 = vector.multi_reduction <minsi>, %45, %cst_19 [1] : vector<128x133xi32> to vector<128xi32>
    %47 = vector.shape_cast %46 : vector<128xi32> to vector<128x1xi32>
    %48 = vector.broadcast %47 : vector<128x1xi32> to vector<128x133xi32>
    %49 = arith.cmpi eq, %15, %48 : vector<128x133xi32>
    %cst_20 = arith.constant 0xFF800000 : f32
    %50 = vector.broadcast %cst_20 : f32 to vector<128x133xf32>
    %51 = arith.select %49, %50, %39 : vector<128x133xi1>, vector<128x133xf32>
    %cst_21 = arith.constant dense<0xFF800000> : vector<128xf32>
    %52 = vector.multi_reduction <maximumf>, %51, %cst_21 [1] : vector<128x133xf32> to vector<128xf32>
    %53 = vector.shape_cast %52 : vector<128xf32> to vector<128x1xf32>
    %54 = vector.broadcast %53 : vector<128x1xf32> to vector<128x133xf32>
    %55 = arith.cmpf oge, %51, %54 : vector<128x133xf32>
    %c1073741824_i32_22 = arith.constant 1073741824 : i32
    %56 = vector.broadcast %c1073741824_i32_22 : i32 to vector<128x133xi32>
    %57 = arith.select %55, %15, %56 : vector<128x133xi1>, vector<128x133xi32>
    %cst_23 = arith.constant dense<2147483647> : vector<128xi32>
    %58 = vector.multi_reduction <minsi>, %57, %cst_23 [1] : vector<128x133xi32> to vector<128xi32>
    %59 = vector.shape_cast %58 : vector<128xi32> to vector<128x1xi32>
    %60 = vector.broadcast %59 : vector<128x1xi32> to vector<128x133xi32>
    %61 = arith.cmpi eq, %15, %60 : vector<128x133xi32>
    %cst_24 = arith.constant 0xFF800000 : f32
    %62 = vector.broadcast %cst_24 : f32 to vector<128x133xf32>
    %63 = arith.select %61, %62, %51 : vector<128x133xi1>, vector<128x133xf32>
    %cst_25 = arith.constant dense<0xFF800000> : vector<128xf32>
    %64 = vector.multi_reduction <maximumf>, %63, %cst_25 [1] : vector<128x133xf32> to vector<128xf32>
    %65 = vector.shape_cast %64 : vector<128xf32> to vector<128x1xf32>
    %66 = vector.broadcast %65 : vector<128x1xf32> to vector<128x133xf32>
    %67 = arith.cmpf oge, %63, %66 : vector<128x133xf32>
    %c1073741824_i32_26 = arith.constant 1073741824 : i32
    %68 = vector.broadcast %c1073741824_i32_26 : i32 to vector<128x133xi32>
    %69 = arith.select %67, %15, %68 : vector<128x133xi1>, vector<128x133xi32>
    %cst_27 = arith.constant dense<2147483647> : vector<128xi32>
    %70 = vector.multi_reduction <minsi>, %69, %cst_27 [1] : vector<128x133xi32> to vector<128xi32>
    %71 = vector.shape_cast %70 : vector<128xi32> to vector<128x1xi32>
    %72 = tpu.concatenate %17, %29, %41, %53, %65 in 1 : vector<128x1xf32>, vector<128x1xf32>, vector<128x1xf32>, vector<128x1xf32>, vector<128x1xf32> -> vector<128x5xf32>
    %c0_28 = arith.constant 0 : index
    %c0_29 = arith.constant 0 : index
    %73 = vector.load %arg6[%c0_28, %c0_29] : memref<128x5xf32, #tpu.memory_space<vmem>>, vector<128x5xf32>
    tpu.vector_store %arg6[%c0_28, %c0_29], %72 {strides = array<i32>} : memref<128x5xf32, #tpu.memory_space<vmem>>, vector<128x5xf32>,
    %74 = tpu.concatenate %23, %35, %47, %59, %71 in 1 : vector<128x1xi32>, vector<128x1xi32>, vector<128x1xi32>, vector<128x1xi32>, vector<128x1xi32> -> vector<128x5xi32>
    %c0_30 = arith.constant 0 : index
    %c0_31 = arith.constant 0 : index
    %75 = vector.load %arg7[%c0_30, %c0_31] : memref<128x5xi32, #tpu.memory_space<vmem>>, vector<128x5xi32>
    tpu.vector_store %arg7[%c0_30, %c0_31], %74 {strides = array<i32>} : memref<128x5xi32, #tpu.memory_space<vmem>>, vector<128x5xi32>,
    %c1_i32 = arith.constant 1 : i32
    %76 = arith.cmpi eq, %arg2, %c1_i32 : i32
    %77 = arith.extui %76 : i1 to i32
    %c0_i32_32 = arith.constant 0 : i32
    %78 = arith.cmpi ne, %77, %c0_i32_32 : i32
    scf.if %78 {
      %c0_i32_33 = arith.constant 0 : i32
      %79 = vector.broadcast %c0_i32_33 : i32 to vector<128x128xi32>
      %c0_34 = arith.constant 0 : index
      %c0_35 = arith.constant 0 : index
      %c0_36 = arith.constant 0 : index
      %80 = vector.load %arg5[%c0_34, %c0_35, %c0_36] : memref<1x128x128xi32, #tpu.memory_space<vmem>>, vector<1x128x128xi32>
      %81 = vector.shape_cast %80 : vector<1x128x128xi32> to vector<128x128xi32>
      %82 = vector.shape_cast %79 : vector<128x128xi32> to vector<1x128x128xi32>
      tpu.vector_store %arg5[%c0_34, %c0_35, %c0_36], %82 {strides = array<i32>} : memref<1x128x128xi32, #tpu.memory_space<vmem>>, vector<1x128x128xi32>,
      %c0_37 = arith.constant 0 : index
      %c0_38 = arith.constant 0 : index
      %83 = vector.load %arg6[%c0_37, %c0_38] : memref<128x5xf32, #tpu.memory_space<vmem>>, vector<128x5xf32>
      %84 = tpu.bitcast %83 : vector<128x5xf32> -> vector<128x5xi32>
      %c0_39 = arith.constant 0 : index
      %c0_40 = arith.constant 0 : index
      %c0_41 = arith.constant 0 : index
      %85 = vector.load %arg5[%c0_39, %c0_40, %c0_41] : memref<1x128x128xi32, #tpu.memory_space<vmem>>, vector<1x128x5xi32>
      %86 = vector.shape_cast %85 : vector<1x128x5xi32> to vector<128x5xi32>
      %87 = vector.shape_cast %84 : vector<128x5xi32> to vector<1x128x5xi32>
      tpu.vector_store %arg5[%c0_39, %c0_40, %c0_41], %87 {strides = array<i32>} : memref<1x128x128xi32, #tpu.memory_space<vmem>>, vector<1x128x5xi32>,
      %c0_42 = arith.constant 0 : index
      %c0_43 = arith.constant 0 : index
      %88 = vector.load %arg7[%c0_42, %c0_43] : memref<128x5xi32, #tpu.memory_space<vmem>>, vector<128x5xi32>
      %c0_44 = arith.constant 0 : index
      %c0_45 = arith.constant 0 : index
      %c5 = arith.constant 5 : index
      %89 = vector.load %arg5[%c0_44, %c0_45, %c5] : memref<1x128x128xi32, #tpu.memory_space<vmem>>, vector<1x128x5xi32>
      %90 = vector.shape_cast %89 : vector<1x128x5xi32> to vector<128x5xi32>
      %91 = vector.shape_cast %88 : vector<128x5xi32> to vector<1x128x5xi32>
      tpu.vector_store %arg5[%c0_44, %c0_45, %c5], %91 {strides = array<i32>} : memref<1x128x128xi32, #tpu.memory_space<vmem>>, vector<1x128x5xi32>,
    } else {
    }
    return
  }
  func.func @transform_0(%arg0: i32, %arg1: i32, %arg2: i32) -> (i32, i32, i32) {
    %c0_i32 = arith.constant 0 : i32
    %c0_i32_0 = arith.constant 0 : i32
    return %arg0, %arg1, %c0_i32 : i32, i32, i32
  }
  func.func @transform_1(%arg0: i32, %arg1: i32, %arg2: i32) -> (i32, i32, i32) {
    %c0_i32 = arith.constant 0 : i32
    %c0_i32_0 = arith.constant 0 : i32
    return %arg0, %arg2, %c0_i32 : i32, i32, i32
  }
  func.func @transform_2(%arg0: i32, %arg1: i32, %arg2: i32) -> (i32, i32, i32) {
    %c0_i32 = arith.constant 0 : i32
    %c0_i32_0 = arith.constant 0 : i32
    return %arg0, %arg1, %c0_i32 : i32, i32, i32
  }
}

module attributes {stable_mosaic.version = 11 : i64} {
  func.func @_mm_bias_kernel(%arg0: i32, %arg1: memref<256x16xbf16, #tpu.memory_space<vmem>>, %arg2: memref<16x4xbf16, #tpu.memory_space<vmem>>, %arg3: memref<1x4xf32, #tpu.memory_space<vmem>>, %arg4: memref<256x4xf32, #tpu.memory_space<vmem>>) attributes {dimension_semantics = [#tpu.dimension_semantics<parallel>], iteration_bounds = array<i64: 2>, scalar_prefetch = 0 : i64, scratch_operands = 0 : i64, tpu.core_type = #tpu.core_type<tc>, window_params = [{transform_indices = @transform_0, window_bounds = array<i64: 256, 16>}, {pipeline_mode = #tpu.pipeline_mode<synchronous>, transform_indices = @transform_1, window_bounds = array<i64: 16, 4>}, {pipeline_mode = #tpu.pipeline_mode<synchronous>, transform_indices = @transform_2, window_bounds = array<i64: 1, 4>}, {transform_indices = @transform_3, window_bounds = array<i64: 256, 4>}]} {
    %c0 = arith.constant 0 : index
    %c0_0 = arith.constant 0 : index
    %0 = vector.load %arg1[%c0, %c0_0] : memref<256x16xbf16, #tpu.memory_space<vmem>>, vector<256x16xbf16>
    %c0_1 = arith.constant 0 : index
    %c0_2 = arith.constant 0 : index
    %1 = vector.load %arg2[%c0_1, %c0_2] : memref<16x4xbf16, #tpu.memory_space<vmem>>, vector<16x4xbf16>
    %cst = arith.constant dense<0.000000e+00> : vector<256x4xf32>
    %2 = tpu.matmul %0, %1, %cst {dimension_numbers = #tpu.dot_dimension_numbers<[1], [0], [0], [1], [0, 0, 1, 1], [], []>} : vector<256x16xbf16>, vector<16x4xbf16>, vector<256x4xf32> -> vector<256x4xf32>
    %c0_3 = arith.constant 0 : index
    %c0_4 = arith.constant 0 : index
    %3 = vector.load %arg3[%c0_3, %c0_4] : memref<1x4xf32, #tpu.memory_space<vmem>>, vector<1x4xf32>
    %4 = vector.broadcast %3 : vector<1x4xf32> to vector<256x4xf32>
    %5 = arith.addf %2, %4 : vector<256x4xf32>
    %c0_5 = arith.constant 0 : index
    %c0_6 = arith.constant 0 : index
    %6 = vector.load %arg4[%c0_5, %c0_6] : memref<256x4xf32, #tpu.memory_space<vmem>>, vector<256x4xf32>
    tpu.vector_store %arg4[%c0_5, %c0_6], %5 {strides = array<i32>} : memref<256x4xf32, #tpu.memory_space<vmem>>, vector<256x4xf32>,
    return
  }
  func.func @transform_0(%arg0: i32) -> (i32, i32) {
    %c0_i32 = arith.constant 0 : i32
    %c0_i32_0 = arith.constant 0 : i32
    return %arg0, %c0_i32 : i32, i32
  }
  func.func @transform_1(%arg0: i32) -> (i32, i32) {
    %c0_i32 = arith.constant 0 : i32
    %c0_i32_0 = arith.constant 0 : i32
    %c0_i32_1 = arith.constant 0 : i32
    return %c0_i32, %c0_i32_0 : i32, i32
  }
  func.func @transform_2(%arg0: i32) -> (i32, i32) {
    %c0_i32 = arith.constant 0 : i32
    %c0_i32_0 = arith.constant 0 : i32
    %c0_i32_1 = arith.constant 0 : i32
    return %c0_i32, %c0_i32_0 : i32, i32
  }
  func.func @transform_3(%arg0: i32) -> (i32, i32) {
    %c0_i32 = arith.constant 0 : i32
    %c0_i32_0 = arith.constant 0 : i32
    return %arg0, %c0_i32 : i32, i32
  }
}

module attributes {stable_mosaic.version = 11 : i64} {
  func.func @_mm_bias_kernel(%arg0: i32, %arg1: memref<256x36xbf16, #tpu.memory_space<vmem>>, %arg2: memref<36x4xbf16, #tpu.memory_space<vmem>>, %arg3: memref<1x4xf32, #tpu.memory_space<vmem>>, %arg4: memref<256x4xf32, #tpu.memory_space<vmem>>) attributes {dimension_semantics = [#tpu.dimension_semantics<parallel>], iteration_bounds = array<i64: 2>, scalar_prefetch = 0 : i64, scratch_operands = 0 : i64, tpu.core_type = #tpu.core_type<tc>, window_params = [{transform_indices = @transform_0, window_bounds = array<i64: 256, 36>}, {pipeline_mode = #tpu.pipeline_mode<synchronous>, transform_indices = @transform_1, window_bounds = array<i64: 36, 4>}, {pipeline_mode = #tpu.pipeline_mode<synchronous>, transform_indices = @transform_2, window_bounds = array<i64: 1, 4>}, {transform_indices = @transform_3, window_bounds = array<i64: 256, 4>}]} {
    %c0 = arith.constant 0 : index
    %c0_0 = arith.constant 0 : index
    %0 = vector.load %arg1[%c0, %c0_0] : memref<256x36xbf16, #tpu.memory_space<vmem>>, vector<256x36xbf16>
    %c0_1 = arith.constant 0 : index
    %c0_2 = arith.constant 0 : index
    %1 = vector.load %arg2[%c0_1, %c0_2] : memref<36x4xbf16, #tpu.memory_space<vmem>>, vector<36x4xbf16>
    %cst = arith.constant dense<0.000000e+00> : vector<256x4xf32>
    %2 = tpu.matmul %0, %1, %cst {dimension_numbers = #tpu.dot_dimension_numbers<[1], [0], [0], [1], [0, 0, 1, 1], [], []>} : vector<256x36xbf16>, vector<36x4xbf16>, vector<256x4xf32> -> vector<256x4xf32>
    %c0_3 = arith.constant 0 : index
    %c0_4 = arith.constant 0 : index
    %3 = vector.load %arg3[%c0_3, %c0_4] : memref<1x4xf32, #tpu.memory_space<vmem>>, vector<1x4xf32>
    %4 = vector.broadcast %3 : vector<1x4xf32> to vector<256x4xf32>
    %5 = arith.addf %2, %4 : vector<256x4xf32>
    %cst_5 = arith.constant 0.000000e+00 : f32
    %6 = vector.broadcast %cst_5 : f32 to vector<256x4xf32>
    %7 = arith.maximumf %5, %6 : vector<256x4xf32>
    %c0_6 = arith.constant 0 : index
    %c0_7 = arith.constant 0 : index
    %8 = vector.load %arg4[%c0_6, %c0_7] : memref<256x4xf32, #tpu.memory_space<vmem>>, vector<256x4xf32>
    tpu.vector_store %arg4[%c0_6, %c0_7], %7 {strides = array<i32>} : memref<256x4xf32, #tpu.memory_space<vmem>>, vector<256x4xf32>,
    return
  }
  func.func @transform_0(%arg0: i32) -> (i32, i32) {
    %c0_i32 = arith.constant 0 : i32
    %c0_i32_0 = arith.constant 0 : i32
    return %arg0, %c0_i32 : i32, i32
  }
  func.func @transform_1(%arg0: i32) -> (i32, i32) {
    %c0_i32 = arith.constant 0 : i32
    %c0_i32_0 = arith.constant 0 : i32
    %c0_i32_1 = arith.constant 0 : i32
    return %c0_i32, %c0_i32_0 : i32, i32
  }
  func.func @transform_2(%arg0: i32) -> (i32, i32) {
    %c0_i32 = arith.constant 0 : i32
    %c0_i32_0 = arith.constant 0 : i32
    %c0_i32_1 = arith.constant 0 : i32
    return %c0_i32, %c0_i32_0 : i32, i32
  }
  func.func @transform_3(%arg0: i32) -> (i32, i32) {
    %c0_i32 = arith.constant 0 : i32
    %c0_i32_0 = arith.constant 0 : i32
    return %arg0, %c0_i32 : i32, i32
  }
}

module attributes {stable_mosaic.version = 11 : i64} {
  func.func @_mm_bias_kernel(%arg0: i32, %arg1: memref<256x36xbf16, #tpu.memory_space<vmem>>, %arg2: memref<36x4xbf16, #tpu.memory_space<vmem>>, %arg3: memref<1x4xf32, #tpu.memory_space<vmem>>, %arg4: memref<256x4xf32, #tpu.memory_space<vmem>>) attributes {dimension_semantics = [#tpu.dimension_semantics<parallel>], iteration_bounds = array<i64: 2>, scalar_prefetch = 0 : i64, scratch_operands = 0 : i64, tpu.core_type = #tpu.core_type<tc>, window_params = [{transform_indices = @transform_0, window_bounds = array<i64: 256, 36>}, {pipeline_mode = #tpu.pipeline_mode<synchronous>, transform_indices = @transform_1, window_bounds = array<i64: 36, 4>}, {pipeline_mode = #tpu.pipeline_mode<synchronous>, transform_indices = @transform_2, window_bounds = array<i64: 1, 4>}, {transform_indices = @transform_3, window_bounds = array<i64: 256, 4>}]} {
    %c0 = arith.constant 0 : index
    %c0_0 = arith.constant 0 : index
    %0 = vector.load %arg1[%c0, %c0_0] : memref<256x36xbf16, #tpu.memory_space<vmem>>, vector<256x36xbf16>
    %c0_1 = arith.constant 0 : index
    %c0_2 = arith.constant 0 : index
    %1 = vector.load %arg2[%c0_1, %c0_2] : memref<36x4xbf16, #tpu.memory_space<vmem>>, vector<36x4xbf16>
    %cst = arith.constant dense<0.000000e+00> : vector<256x4xf32>
    %2 = tpu.matmul %0, %1, %cst {dimension_numbers = #tpu.dot_dimension_numbers<[1], [0], [0], [1], [0, 0, 1, 1], [], []>} : vector<256x36xbf16>, vector<36x4xbf16>, vector<256x4xf32> -> vector<256x4xf32>
    %c0_3 = arith.constant 0 : index
    %c0_4 = arith.constant 0 : index
    %3 = vector.load %arg3[%c0_3, %c0_4] : memref<1x4xf32, #tpu.memory_space<vmem>>, vector<1x4xf32>
    %4 = vector.broadcast %3 : vector<1x4xf32> to vector<256x4xf32>
    %5 = arith.addf %2, %4 : vector<256x4xf32>
    %c0_5 = arith.constant 0 : index
    %c0_6 = arith.constant 0 : index
    %6 = vector.load %arg4[%c0_5, %c0_6] : memref<256x4xf32, #tpu.memory_space<vmem>>, vector<256x4xf32>
    tpu.vector_store %arg4[%c0_5, %c0_6], %5 {strides = array<i32>} : memref<256x4xf32, #tpu.memory_space<vmem>>, vector<256x4xf32>,
    return
  }
  func.func @transform_0(%arg0: i32) -> (i32, i32) {
    %c0_i32 = arith.constant 0 : i32
    %c0_i32_0 = arith.constant 0 : i32
    return %arg0, %c0_i32 : i32, i32
  }
  func.func @transform_1(%arg0: i32) -> (i32, i32) {
    %c0_i32 = arith.constant 0 : i32
    %c0_i32_0 = arith.constant 0 : i32
    %c0_i32_1 = arith.constant 0 : i32
    return %c0_i32, %c0_i32_0 : i32, i32
  }
  func.func @transform_2(%arg0: i32) -> (i32, i32) {
    %c0_i32 = arith.constant 0 : i32
    %c0_i32_0 = arith.constant 0 : i32
    %c0_i32_1 = arith.constant 0 : i32
    return %c0_i32, %c0_i32_0 : i32, i32
  }
  func.func @transform_3(%arg0: i32) -> (i32, i32) {
    %c0_i32 = arith.constant 0 : i32
    %c0_i32_0 = arith.constant 0 : i32
    return %arg0, %c0_i32 : i32, i32
  }
}

module attributes {stable_mosaic.version = 11 : i64} {
  func.func @_mm_bias_kernel(%arg0: i32, %arg1: memref<256x12xbf16, #tpu.memory_space<vmem>>, %arg2: memref<12x4xbf16, #tpu.memory_space<vmem>>, %arg3: memref<1x4xf32, #tpu.memory_space<vmem>>, %arg4: memref<256x4xf32, #tpu.memory_space<vmem>>) attributes {dimension_semantics = [#tpu.dimension_semantics<parallel>], iteration_bounds = array<i64: 2>, scalar_prefetch = 0 : i64, scratch_operands = 0 : i64, tpu.core_type = #tpu.core_type<tc>, window_params = [{transform_indices = @transform_0, window_bounds = array<i64: 256, 12>}, {pipeline_mode = #tpu.pipeline_mode<synchronous>, transform_indices = @transform_1, window_bounds = array<i64: 12, 4>}, {pipeline_mode = #tpu.pipeline_mode<synchronous>, transform_indices = @transform_2, window_bounds = array<i64: 1, 4>}, {transform_indices = @transform_3, window_bounds = array<i64: 256, 4>}]} {
    %c0 = arith.constant 0 : index
    %c0_0 = arith.constant 0 : index
    %0 = vector.load %arg1[%c0, %c0_0] : memref<256x12xbf16, #tpu.memory_space<vmem>>, vector<256x12xbf16>
    %c0_1 = arith.constant 0 : index
    %c0_2 = arith.constant 0 : index
    %1 = vector.load %arg2[%c0_1, %c0_2] : memref<12x4xbf16, #tpu.memory_space<vmem>>, vector<12x4xbf16>
    %cst = arith.constant dense<0.000000e+00> : vector<256x4xf32>
    %2 = tpu.matmul %0, %1, %cst {dimension_numbers = #tpu.dot_dimension_numbers<[1], [0], [0], [1], [0, 0, 1, 1], [], []>} : vector<256x12xbf16>, vector<12x4xbf16>, vector<256x4xf32> -> vector<256x4xf32>
    %c0_3 = arith.constant 0 : index
    %c0_4 = arith.constant 0 : index
    %3 = vector.load %arg3[%c0_3, %c0_4] : memref<1x4xf32, #tpu.memory_space<vmem>>, vector<1x4xf32>
    %4 = vector.broadcast %3 : vector<1x4xf32> to vector<256x4xf32>
    %5 = arith.addf %2, %4 : vector<256x4xf32>
    %c0_5 = arith.constant 0 : index
    %c0_6 = arith.constant 0 : index
    %6 = vector.load %arg4[%c0_5, %c0_6] : memref<256x4xf32, #tpu.memory_space<vmem>>, vector<256x4xf32>
    tpu.vector_store %arg4[%c0_5, %c0_6], %5 {strides = array<i32>} : memref<256x4xf32, #tpu.memory_space<vmem>>, vector<256x4xf32>,
    return
  }
  func.func @transform_0(%arg0: i32) -> (i32, i32) {
    %c0_i32 = arith.constant 0 : i32
    %c0_i32_0 = arith.constant 0 : i32
    return %arg0, %c0_i32 : i32, i32
  }
  func.func @transform_1(%arg0: i32) -> (i32, i32) {
    %c0_i32 = arith.constant 0 : i32
    %c0_i32_0 = arith.constant 0 : i32
    %c0_i32_1 = arith.constant 0 : i32
    return %c0_i32, %c0_i32_0 : i32, i32
  }
  func.func @transform_2(%arg0: i32) -> (i32, i32) {
    %c0_i32 = arith.constant 0 : i32
    %c0_i32_0 = arith.constant 0 : i32
    %c0_i32_1 = arith.constant 0 : i32
    return %c0_i32, %c0_i32_0 : i32, i32
  }
  func.func @transform_3(%arg0: i32) -> (i32, i32) {
    %c0_i32 = arith.constant 0 : i32
    %c0_i32_0 = arith.constant 0 : i32
    return %arg0, %c0_i32 : i32, i32
  }
}

</mosaic_0001>

<llo_original>
// kernel: transformer_v5_forward.8
$region0: #{transformer_v5_forward.8}
  #allocation0 [shape = 'u32[]', space=smem, size = 0x4, offset = 0x4, fixed_abs, tag = 'smem constant byte address 0x4 - core index']
  #allocation1 [shape = 'u32[72,128]{1,0:T(1,128)}', space=vmem, size = 0x9000, scoped, tag = 'internal scratch']
  %s0 = inlined_call_operand.vmem [shape: f32[512,36], index: 0, kind: input, shape index: {}]
  %s1 = inlined_call_operand.vmem [shape: bf16[512,36], index: 1, kind: output, shape index: {}]
  %s2 = sld [smem:[#allocation0]]
  $region37: #{transformer_v5_forward.8} parent=0
    _
  %s4 = ssub.s32 1, %s2
  %s5 = scalar_select 0, %s4, %s2
  loop: start=0, step=1, limit=4
  $region2: #{transformer_v5_forward.8} parent=0 // loop_pre_header
    _
  $region3: #{transformer_v5_forward.8} parent=0 // loop_header
    %s7 = sphi 0, %s11
    %p8 = scmp.ge.s32.totalorder %s7, 4
    %s17 = sphi 0, %s19
    %s20 = sphi 0, %s17
    %s21 = sphi 0, %s20
    %s37 = sphi 0, %s21
    %s43 = sphi 0, %s45
    %s46 = sphi 0, %s43
    %s47 = sphi 0, %s46
    %s63 = sphi 0, %s47
  $region4: #{transformer_v5_forward.8} parent=0 // loop_header_branch
    %10 = sbr.rel (%p8) target = $region8
  $region5: #{transformer_v5_forward.8} parent=0 // loop_body
    %s12 = ssub.s32 %s7, 1
    %s13 = ssub.s32 %s7, 2
    %s14 = sadd.s32 %s7, 1
    %s15 = ssub.s32 %s7, %s14
    %p16 = scmp.eq.s32.totalorder %s15, 0
    %s18 = sadd.s32 %s17, 1
    %s19 = scalar_select %p16, %s17, %s18
    %p22 = pneg %p16
    %p23 = scmp.eq.s32.totalorder %s7, 1
    %p24 = por %p22, %p23
    %p25 = scmp.ne.s32.totalorder %s17, %s20
    %p26 = scmp.eq.s32.totalorder %s7, 0
    %p27 = por %p25, %p26
    %p28 = scmp.ne.s32.totalorder %s17, %s20
    %p29 = scmp.eq.s32.totalorder %s12, 1
    %p30 = por %p28, %p29
    %p31 = scmp.ne.s32.totalorder %s20, %s21
    %p32 = scmp.eq.s32.totalorder %s12, 0
    %p33 = por %p31, %p32
    %p34 = scmp.ne.s32.totalorder %s20, %s21
    %p35 = scmp.eq.s32.totalorder %s13, 1
    %p36 = por %p34, %p35
    %p38 = scmp.ne.s32.totalorder %s21, %s37
    %p39 = scmp.eq.s32.totalorder %s13, 0
    %p40 = por %p38, %p39
    %s41 = ssub.s32 %s7, %s14
    %p42 = scmp.eq.s32.totalorder %s41, 0
    %s44 = sadd.s32 %s43, 1
    %s45 = scalar_select %p42, %s43, %s44
    %p48 = pneg %p42
    %p49 = scmp.eq.s32.totalorder %s7, 1
    %p50 = por %p48, %p49
    %p51 = scmp.ne.s32.totalorder %s43, %s46
    %p52 = scmp.eq.s32.totalorder %s7, 0
    %p53 = por %p51, %p52
    %p54 = scmp.ne.s32.totalorder %s43, %s46
    %p55 = scmp.eq.s32.totalorder %s12, 1
    %p56 = por %p54, %p55
    %p57 = scmp.ne.s32.totalorder %s46, %s47
    %p58 = scmp.eq.s32.totalorder %s12, 0
    %p59 = por %p57, %p58
    %p60 = scmp.ne.s32.totalorder %s46, %s47
    %p61 = scmp.eq.s32.totalorder %s13, 1
    %p62 = por %p60, %p61
    %p64 = scmp.ne.s32.totalorder %s47, %s63
    %p65 = scmp.eq.s32.totalorder %s13, 0
    %p66 = por %p64, %p65
    %p67 = scmp.le.s32.totalorder 1, %s7
    %p68 = scmp.lt.s32.totalorder %s7, 3
    %p69 = pnand %p67, %p68
    %p70 = pneg %p69
    // Predicated region
    $region9: #{transformer_v5_forward.8} parent=5 // pred_check
      _
    $region10: #{transformer_v5_forward.8} parent=5 // pred_check_branch
      %72 = sbr.rel (%p69) target = $region12
    $region11: #{transformer_v5_forward.8} parent=5 // pred_region
      %s73 = ssub.s32 %s7, 1
    $region12: #{transformer_v5_forward.8} parent=5 // pred_fallthru
      _
    %p74 = scmp.lt.s32.totalorder %s7, 2
    // Predicated region
    $region13: #{transformer_v5_forward.8} parent=5 // pred_check
      %p75 = pneg %p74
    $region14: #{transformer_v5_forward.8} parent=5 // pred_check_branch
      %77 = sbr.rel (%p75) target = $region16
    $region15: #{transformer_v5_forward.8} parent=5 // pred_region
      // Predicated region
      $region17: #{transformer_v5_forward.8} parent=15 // pred_check
        %p78 = pneg %p27
      $region18: #{transformer_v5_forward.8} parent=15 // pred_check_branch
        %80 = sbr.rel (%p78) target = $region20
      $region19: #{transformer_v5_forward.8} parent=15 // pred_region
        %s81 = smul.u32 32, %s7
        %p82 = scmp.lt.s32.totalorder %s81, 63
        %s83 = scalar_select %p82, %s81, 63
        %s84 = smul.addr %s83, 8
        %s85 = scalar_lea.vmem %s0, %s84
        %s86 = smul.u32 32, %s7
      $region20: #{transformer_v5_forward.8} parent=15 // pred_fallthru
        _
    $region16: #{transformer_v5_forward.8} parent=5 // pred_fallthru
      _
    %p87 = scmp.le.s32.totalorder 1, %s7
    %p88 = scmp.lt.s32.totalorder %s7, 3
    %p89 = pnand %p87, %p88
    %p90 = pneg %p89
    // Predicated region
    $region21: #{transformer_v5_forward.8} parent=5 // pred_check
      _
    $region22: #{transformer_v5_forward.8} parent=5 // pred_check_branch
      %92 = sbr.rel (%p89) target = $region24
    $region23: #{transformer_v5_forward.8} parent=5 // pred_region
      %s93 = ssub.s32 %s7, 1
      %s94 = smul.u32 32, %s12
      %p95 = scmp.lt.s32.totalorder %s94, 63
      %s96 = scalar_select %p95, %s94, 63
      %s97 = smul.addr %s96, 8
      %s98 = scalar_lea.vmem %s0, %s97
      %p99 = pneg %p33
      %p100 = pneg %p30
      %p101 = pneg %p59
      %p102 = pneg %p56
      %s103 = smul.u32 32, %s12
      %p104 = scmp.lt.s32.totalorder %s103, 63
      %s105 = scalar_select %p104, %s103, 63
      %s106 = smul.addr %s105, 4
      %s107 = scalar_lea.vmem %s1, %s106
      %s108 = smul.u32 32, %s12
      %p109 = scmp.lt.s32.totalorder %s108, 63
      %s110 = scalar_select %p109, %s108, 63
      %s111 = smul.addr %s110, 8
      %s112 = scalar_lea.vmem %s0, %s111
      %s113 = smul.u32 32, %s12
      %s114 = smul.u32 32, %s12
      %p115 = scmp.lt.s32.totalorder %s114, 63
      %s116 = scalar_select %p115, %s114, 63
      %s117 = smul.addr %s116, 4
      %s118 = scalar_lea.vmem %s1, %s117
      %s119 = smul.u32 32, %s12
      %v120 = vld [vmem:[%s112] sm:$0xff]
      %v121 = vld [vmem:[%s112 + $0x8] sm:$0xff]
      %v122 = vld [vmem:[%s112 + $0x10] sm:$0xff]
      %v123 = vld [vmem:[%s112 + $0x18] sm:$0xff]
      %v124 = vld [vmem:[%s112 + $0x20] sm:$0xff]
      %v125 = vld [vmem:[%s112 + $0x28] sm:$0xff]
      %v126 = vld [vmem:[%s112 + $0x30] sm:$0xff]
      %v127 = vld [vmem:[%s112 + $0x38] sm:$0xff]
      %v128 = vld [vmem:[%s112 + $0x40] sm:$0xff]
      %v129 = vld [vmem:[%s112 + $0x48] sm:$0xff]
      %v130 = vld [vmem:[%s112 + $0x50] sm:$0xff]
      %v131 = vld [vmem:[%s112 + $0x58] sm:$0xff]
      %v132 = vld [vmem:[%s112 + $0x60] sm:$0xff]
      %v133 = vld [vmem:[%s112 + $0x68] sm:$0xff]
      %v134 = vld [vmem:[%s112 + $0x70] sm:$0xff]
      %v135 = vld [vmem:[%s112 + $0x78] sm:$0xff]
      %v136 = vld [vmem:[%s112 + $0x80] sm:$0xff]
      %v137 = vld [vmem:[%s112 + $0x88] sm:$0xff]
      %v138 = vld [vmem:[%s112 + $0x90] sm:$0xff]
      %v139 = vld [vmem:[%s112 + $0x98] sm:$0xff]
      %v140 = vld [vmem:[%s112 + $0xa0] sm:$0xff]
      %v141 = vld [vmem:[%s112 + $0xa8] sm:$0xff]
      %v142 = vld [vmem:[%s112 + $0xb0] sm:$0xff]
      %v143 = vld [vmem:[%s112 + $0xb8] sm:$0xff]
      %v144 = vld [vmem:[%s112 + $0xc0] sm:$0xff]
      %v145 = vld [vmem:[%s112 + $0xc8] sm:$0xff]
      %v146 = vld [vmem:[%s112 + $0xd0] sm:$0xff]
      %v147 = vld [vmem:[%s112 + $0xd8] sm:$0xff]
      %v148 = vld [vmem:[%s112 + $0xe0] sm:$0xff]
      %v149 = vld [vmem:[%s112 + $0xe8] sm:$0xff]
      %v150 = vld [vmem:[%s112 + $0xf0] sm:$0xff]
      %v151 = vld [vmem:[%s112 + $0xf8] sm:$0xff]
      %v152 = vmul.f32 %v120, %v120
      %v153 = vmul.f32 %v121, %v121
      %v154 = vmul.f32 %v122, %v122
      %v155 = vmul.f32 %v123, %v123
      %v156 = vmul.f32 %v124, %v124
      %v157 = vmul.f32 %v125, %v125
      %v158 = vmul.f32 %v126, %v126
      %v159 = vmul.f32 %v127, %v127
      %v160 = vmul.f32 %v128, %v128
      %v161 = vmul.f32 %v129, %v129
      %v162 = vmul.f32 %v130, %v130
      %v163 = vmul.f32 %v131, %v131
      %v164 = vmul.f32 %v132, %v132
      %v165 = vmul.f32 %v133, %v133
      %v166 = vmul.f32 %v134, %v134
      %v167 = vmul.f32 %v135, %v135
      %v168 = vmul.f32 %v136, %v136
      %v169 = vmul.f32 %v137, %v137
      %v170 = vmul.f32 %v138, %v138
      %v171 = vmul.f32 %v139, %v139
      %v172 = vmul.f32 %v140, %v140
      %v173 = vmul.f32 %v141, %v141
      %v174 = vmul.f32 %v142, %v142
      %v175 = vmul.f32 %v143, %v143
      %v176 = vmul.f32 %v144, %v144
      %v177 = vmul.f32 %v145, %v145
      %v178 = vmul.f32 %v146, %v146
      %v179 = vmul.f32 %v147, %v147
      %v180 = vmul.f32 %v148, %v148
      %v181 = vmul.f32 %v149, %v149
      %v182 = vmul.f32 %v150, %v150
      %v183 = vmul.f32 %v151, %v151
      %vm184 = vcmask 293888
      %v185 = vsel %vm184, %v152, 0.0
      %186 = vadd.xlane.f32.xlu0 %v185
      %v187 = vpop.xlane.xlu0 %186
      %v188 = vsel %vm184, %v153, 0.0
      %189 = vadd.xlane.f32.xlu0 %v188
      %v190 = vpop.xlane.xlu0 %189
      %v191 = vsel %vm184, %v154, 0.0
      %192 = vadd.xlane.f32.xlu0 %v191
      %v193 = vpop.xlane.xlu0 %192
      %v194 = vsel %vm184, %v155, 0.0
      %195 = vadd.xlane.f32.xlu0 %v194
      %v196 = vpop.xlane.xlu0 %195
      %v197 = vsel %vm184, %v156, 0.0
      %198 = vadd.xlane.f32.xlu0 %v197
      %v199 = vpop.xlane.xlu0 %198
      %v200 = vsel %vm184, %v157, 0.0
      %201 = vadd.xlane.f32.xlu0 %v200
      %v202 = vpop.xlane.xlu0 %201
      %v203 = vsel %vm184, %v158, 0.0
      %204 = vadd.xlane.f32.xlu0 %v203
      %v205 = vpop.xlane.xlu0 %204
      %v206 = vsel %vm184, %v159, 0.0
      %207 = vadd.xlane.f32.xlu0 %v206
      %v208 = vpop.xlane.xlu0 %207
      %v209 = vsel %vm184, %v160, 0.0
      %210 = vadd.xlane.f32.xlu0 %v209
      %v211 = vpop.xlane.xlu0 %210
      %v212 = vsel %vm184, %v161, 0.0
      %213 = vadd.xlane.f32.xlu0 %v212
      %v214 = vpop.xlane.xlu0 %213
      %v215 = vsel %vm184, %v162, 0.0
      %216 = vadd.xlane.f32.xlu0 %v215
      %v217 = vpop.xlane.xlu0 %216
      %v218 = vsel %vm184, %v163, 0.0
      %219 = vadd.xlane.f32.xlu0 %v218
      %v220 = vpop.xlane.xlu0 %219
      %v221 = vsel %vm184, %v164, 0.0
      %222 = vadd.xlane.f32.xlu0 %v221
      %v223 = vpop.xlane.xlu0 %222
      %v224 = vsel %vm184, %v165, 0.0
      %225 = vadd.xlane.f32.xlu0 %v224
      %v226 = vpop.xlane.xlu0 %225
      %v227 = vsel %vm184, %v166, 0.0
      %228 = vadd.xlane.f32.xlu0 %v227
      %v229 = vpop.xlane.xlu0 %228
      %v230 = vsel %vm184, %v167, 0.0
      %231 = vadd.xlane.f32.xlu0 %v230
      %v232 = vpop.xlane.xlu0 %231
      %v233 = vsel %vm184, %v168, 0.0
      %234 = vadd.xlane.f32.xlu0 %v233
      %v235 = vpop.xlane.xlu0 %234
      %v236 = vsel %vm184, %v169, 0.0
      %237 = vadd.xlane.f32.xlu0 %v236
      %v238 = vpop.xlane.xlu0 %237
      %v239 = vsel %vm184, %v170, 0.0
      %240 = vadd.xlane.f32.xlu0 %v239
      %v241 = vpop.xlane.xlu0 %240
      %v242 = vsel %vm184, %v171, 0.0
      %243 = vadd.xlane.f32.xlu0 %v242
      %v244 = vpop.xlane.xlu0 %243
      %v245 = vsel %vm184, %v172, 0.0
      %246 = vadd.xlane.f32.xlu0 %v245
      %v247 = vpop.xlane.xlu0 %246
      %v248 = vsel %vm184, %v173, 0.0
      %249 = vadd.xlane.f32.xlu0 %v248
      %v250 = vpop.xlane.xlu0 %249
      %v251 = vsel %vm184, %v174, 0.0
      %252 = vadd.xlane.f32.xlu0 %v251
      %v253 = vpop.xlane.xlu0 %252
      %v254 = vsel %vm184, %v175, 0.0
      %255 = vadd.xlane.f32.xlu0 %v254
      %v256 = vpop.xlane.xlu0 %255
      %v257 = vsel %vm184, %v176, 0.0
      %258 = vadd.xlane.f32.xlu0 %v257
      %v259 = vpop.xlane.xlu0 %258
      %v260 = vsel %vm184, %v177, 0.0
      %261 = vadd.xlane.f32.xlu0 %v260
      %v262 = vpop.xlane.xlu0 %261
      %v263 = vsel %vm184, %v178, 0.0
      %264 = vadd.xlane.f32.xlu0 %v263
      %v265 = vpop.xlane.xlu0 %264
      %v266 = vsel %vm184, %v179, 0.0
      %267 = vadd.xlane.f32.xlu0 %v266
      %v268 = vpop.xlane.xlu0 %267
      %v269 = vsel %vm184, %v180, 0.0
      %270 = vadd.xlane.f32.xlu0 %v269
      %v271 = vpop.xlane.xlu0 %270
      %v272 = vsel %vm184, %v181, 0.0
      %273 = vadd.xlane.f32.xlu0 %v272
      %v274 = vpop.xlane.xlu0 %273
      %v275 = vsel %vm184, %v182, 0.0
      %276 = vadd.xlane.f32.xlu0 %v275
      %v277 = vpop.xlane.xlu0 %276
      %v278 = vsel %vm184, %v183, 0.0
      %279 = vadd.xlane.f32.xlu0 %v278
      %v280 = vpop.xlane.xlu0 %279
      %v281 = vrsqrt.pop %v187
      %v282 = vmul.f32 %v281, %v187
      %v283 = vmul.f32 %v282, %v281
      %v284 = vmul.f32 0.5, %v283
      %v285 = vsub.f32 1.5, %v284
      %v286 = vmul.f32 %v281, %v285
      %v287 = vmul.f32 %v187, %v286
      %vm288 = vcmp.eq.f32.partialorder %v187, inf
      %v289 = vsel %vm288, %v187, %v287
      %vm290 = vcmp.eq.f32.partialorder %v187, 0.0
      %v291 = vand.u32 %v187, 2147483648
      %v292 = vsel %vm290, %v291, %v289
      %v293 = vrsqrt.pop %v190
      %v294 = vmul.f32 %v293, %v190
      %v295 = vmul.f32 %v294, %v293
      %v296 = vmul.f32 0.5, %v295
      %v297 = vsub.f32 1.5, %v296
      %v298 = vmul.f32 %v293, %v297
      %v299 = vmul.f32 %v190, %v298
      %vm300 = vcmp.eq.f32.partialorder %v190, inf
      %v301 = vsel %vm300, %v190, %v299
      %vm302 = vcmp.eq.f32.partialorder %v190, 0.0
      %v303 = vand.u32 %v190, 2147483648
      %v304 = vsel %vm302, %v303, %v301
      %v305 = vrsqrt.pop %v193
      %v306 = vmul.f32 %v305, %v193
      %v307 = vmul.f32 %v306, %v305
      %v308 = vmul.f32 0.5, %v307
      %v309 = vsub.f32 1.5, %v308
      %v310 = vmul.f32 %v305, %v309
      %v311 = vmul.f32 %v193, %v310
      %vm312 = vcmp.eq.f32.partialorder %v193, inf
      %v313 = vsel %vm312, %v193, %v311
      %vm314 = vcmp.eq.f32.partialorder %v193, 0.0
      %v315 = vand.u32 %v193, 2147483648
      %v316 = vsel %vm314, %v315, %v313
      %v317 = vrsqrt.pop %v196
      %v318 = vmul.f32 %v317, %v196
      %v319 = vmul.f32 %v318, %v317
      %v320 = vmul.f32 0.5, %v319
      %v321 = vsub.f32 1.5, %v320
      %v322 = vmul.f32 %v317, %v321
      %v323 = vmul.f32 %v196, %v322
      %vm324 = vcmp.eq.f32.partialorder %v196, inf
      %v325 = vsel %vm324, %v196, %v323
      %vm326 = vcmp.eq.f32.partialorder %v196, 0.0
      %v327 = vand.u32 %v196, 2147483648
      %v328 = vsel %vm326, %v327, %v325
      %v329 = vrsqrt.pop %v199
      %v330 = vmul.f32 %v329, %v199
      %v331 = vmul.f32 %v330, %v329
      %v332 = vmul.f32 0.5, %v331
      %v333 = vsub.f32 1.5, %v332
      %v334 = vmul.f32 %v329, %v333
      %v335 = vmul.f32 %v199, %v334
      %vm336 = vcmp.eq.f32.partialorder %v199, inf
      %v337 = vsel %vm336, %v199, %v335
      %vm338 = vcmp.eq.f32.partialorder %v199, 0.0
      %v339 = vand.u32 %v199, 2147483648
      %v340 = vsel %vm338, %v339, %v337
      %v341 = vrsqrt.pop %v202
      %v342 = vmul.f32 %v341, %v202
      %v343 = vmul.f32 %v342, %v341
      %v344 = vmul.f32 0.5, %v343
      %v345 = vsub.f32 1.5, %v344
      %v346 = vmul.f32 %v341, %v345
      %v347 = vmul.f32 %v202, %v346
      %vm348 = vcmp.eq.f32.partialorder %v202, inf
      %v349 = vsel %vm348, %v202, %v347
      %vm350 = vcmp.eq.f32.partialorder %v202, 0.0
      %v351 = vand.u32 %v202, 2147483648
      %v352 = vsel %vm350, %v351, %v349
      %v353 = vrsqrt.pop %v205
      %v354 = vmul.f32 %v353, %v205
      %v355 = vmul.f32 %v354, %v353
      %v356 = vmul.f32 0.5, %v355
      %v357 = vsub.f32 1.5, %v356
      %v358 = vmul.f32 %v353, %v357
      %v359 = vmul.f32 %v205, %v358
      %vm360 = vcmp.eq.f32.partialorder %v205, inf
      %v361 = vsel %vm360, %v205, %v359
      %vm362 = vcmp.eq.f32.partialorder %v205, 0.0
      %v363 = vand.u32 %v205, 2147483648
      %v364 = vsel %vm362, %v363, %v361
      %v365 = vrsqrt.pop %v208
      %v366 = vmul.f32 %v365, %v208
      %v367 = vmul.f32 %v366, %v365
      %v368 = vmul.f32 0.5, %v367
      %v369 = vsub.f32 1.5, %v368
      %v370 = vmul.f32 %v365, %v369
      %v371 = vmul.f32 %v208, %v370
      %vm372 = vcmp.eq.f32.partialorder %v208, inf
      %v373 = vsel %vm372, %v208, %v371
      %vm374 = vcmp.eq.f32.partialorder %v208, 0.0
      %v375 = vand.u32 %v208, 2147483648
      %v376 = vsel %vm374, %v375, %v373
      %v377 = vrsqrt.pop %v211
      %v378 = vmul.f32 %v377, %v211
      %v379 = vmul.f32 %v378, %v377
      %v380 = vmul.f32 0.5, %v379
      %v381 = vsub.f32 1.5, %v380
      %v382 = vmul.f32 %v377, %v381
      %v383 = vmul.f32 %v211, %v382
      %vm384 = vcmp.eq.f32.partialorder %v211, inf
      %v385 = vsel %vm384, %v211, %v383
      %vm386 = vcmp.eq.f32.partialorder %v211, 0.0
      %v387 = vand.u32 %v211, 2147483648
      %v388 = vsel %vm386, %v387, %v385
      %v389 = vrsqrt.pop %v214
      %v390 = vmul.f32 %v389, %v214
      %v391 = vmul.f32 %v390, %v389
      %v392 = vmul.f32 0.5, %v391
      %v393 = vsub.f32 1.5, %v392
      %v394 = vmul.f32 %v389, %v393
      %v395 = vmul.f32 %v214, %v394
      %vm396 = vcmp.eq.f32.partialorder %v214, inf
      %v397 = vsel %vm396, %v214, %v395
      %vm398 = vcmp.eq.f32.partialorder %v214, 0.0
      %v399 = vand.u32 %v214, 2147483648
      %v400 = vsel %vm398, %v399, %v397
      %v401 = vrsqrt.pop %v217
      %v402 = vmul.f32 %v401, %v217
      %v403 = vmul.f32 %v402, %v401
      %v404 = vmul.f32 0.5, %v403
      %v405 = vsub.f32 1.5, %v404
      %v406 = vmul.f32 %v401, %v405
      %v407 = vmul.f32 %v217, %v406
      %vm408 = vcmp.eq.f32.partialorder %v217, inf
      %v409 = vsel %vm408, %v217, %v407
      %vm410 = vcmp.eq.f32.partialorder %v217, 0.0
      %v411 = vand.u32 %v217, 2147483648
      %v412 = vsel %vm410, %v411, %v409
      %v413 = vrsqrt.pop %v220
      %v414 = vmul.f32 %v413, %v220
      %v415 = vmul.f32 %v414, %v413
      %v416 = vmul.f32 0.5, %v415
      %v417 = vsub.f32 1.5, %v416
      %v418 = vmul.f32 %v413, %v417
      %v419 = vmul.f32 %v220, %v418
      %vm420 = vcmp.eq.f32.partialorder %v220, inf
      %v421 = vsel %vm420, %v220, %v419
      %vm422 = vcmp.eq.f32.partialorder %v220, 0.0
      %v423 = vand.u32 %v220, 2147483648
      %v424 = vsel %vm422, %v423, %v421
      %v425 = vrsqrt.pop %v223
      %v426 = vmul.f32 %v425, %v223
      %v427 = vmul.f32 %v426, %v425
      %v428 = vmul.f32 0.5, %v427
      %v429 = vsub.f32 1.5, %v428
      %v430 = vmul.f32 %v425, %v429
      %v431 = vmul.f32 %v223, %v430
      %vm432 = vcmp.eq.f32.partialorder %v223, inf
      %v433 = vsel %vm432, %v223, %v431
      %vm434 = vcmp.eq.f32.partialorder %v223, 0.0
      %v435 = vand.u32 %v223, 2147483648
      %v436 = vsel %vm434, %v435, %v433
      %v437 = vrsqrt.pop %v226
      %v438 = vmul.f32 %v437, %v226
      %v439 = vmul.f32 %v438, %v437
      %v440 = vmul.f32 0.5, %v439
      %v441 = vsub.f32 1.5, %v440
      %v442 = vmul.f32 %v437, %v441
      %v443 = vmul.f32 %v226, %v442
      %vm444 = vcmp.eq.f32.partialorder %v226, inf
      %v445 = vsel %vm444, %v226, %v443
      %vm446 = vcmp.eq.f32.partialorder %v226, 0.0
      %v447 = vand.u32 %v226, 2147483648
      %v448 = vsel %vm446, %v447, %v445
      %v449 = vrsqrt.pop %v229
      %v450 = vmul.f32 %v449, %v229
      %v451 = vmul.f32 %v450, %v449
      %v452 = vmul.f32 0.5, %v451
      %v453 = vsub.f32 1.5, %v452
      %v454 = vmul.f32 %v449, %v453
      %v455 = vmul.f32 %v229, %v454
      %vm456 = vcmp.eq.f32.partialorder %v229, inf
      %v457 = vsel %vm456, %v229, %v455
      %vm458 = vcmp.eq.f32.partialorder %v229, 0.0
      %v459 = vand.u32 %v229, 2147483648
      %v460 = vsel %vm458, %v459, %v457
      %v461 = vrsqrt.pop %v232
      %v462 = vmul.f32 %v461, %v232
      %v463 = vmul.f32 %v462, %v461
      %v464 = vmul.f32 0.5, %v463
      %v465 = vsub.f32 1.5, %v464
      %v466 = vmul.f32 %v461, %v465
      %v467 = vmul.f32 %v232, %v466
      %vm468 = vcmp.eq.f32.partialorder %v232, inf
      %v469 = vsel %vm468, %v232, %v467
      %vm470 = vcmp.eq.f32.partialorder %v232, 0.0
      %v471 = vand.u32 %v232, 2147483648
      %v472 = vsel %vm470, %v471, %v469
      %v473 = vrsqrt.pop %v235
      %v474 = vmul.f32 %v473, %v235
      %v475 = vmul.f32 %v474, %v473
      %v476 = vmul.f32 0.5, %v475
      %v477 = vsub.f32 1.5, %v476
      %v478 = vmul.f32 %v473, %v477
      %v479 = vmul.f32 %v235, %v478
      %vm480 = vcmp.eq.f32.partialorder %v235, inf
      %v481 = vsel %vm480, %v235, %v479
      %vm482 = vcmp.eq.f32.partialorder %v235, 0.0
      %v483 = vand.u32 %v235, 2147483648
      %v484 = vsel %vm482, %v483, %v481
      %v485 = vrsqrt.pop %v238
      %v486 = vmul.f32 %v485, %v238
      %v487 = vmul.f32 %v486, %v485
      %v488 = vmul.f32 0.5, %v487
      %v489 = vsub.f32 1.5, %v488
      %v490 = vmul.f32 %v485, %v489
      %v491 = vmul.f32 %v238, %v490
      %vm492 = vcmp.eq.f32.partialorder %v238, inf
      %v493 = vsel %vm492, %v238, %v491
      %vm494 = vcmp.eq.f32.partialorder %v238, 0.0
      %v495 = vand.u32 %v238, 2147483648
      %v496 = vsel %vm494, %v495, %v493
      %v497 = vrsqrt.pop %v241
      %v498 = vmul.f32 %v497, %v241
      %v499 = vmul.f32 %v498, %v497
      %v500 = vmul.f32 0.5, %v499
      %v501 = vsub.f32 1.5, %v500
      %v502 = vmul.f32 %v497, %v501
      %v503 = vmul.f32 %v241, %v502
      %vm504 = vcmp.eq.f32.partialorder %v241, inf
      %v505 = vsel %vm504, %v241, %v503
      %vm506 = vcmp.eq.f32.partialorder %v241, 0.0
      %v507 = vand.u32 %v241, 2147483648
      %v508 = vsel %vm506, %v507, %v505
      %v509 = vrsqrt.pop %v244
      %v510 = vmul.f32 %v509, %v244
      %v511 = vmul.f32 %v510, %v509
      %v512 = vmul.f32 0.5, %v511
      %v513 = vsub.f32 1.5, %v512
      %v514 = vmul.f32 %v509, %v513
      %v515 = vmul.f32 %v244, %v514
      %vm516 = vcmp.eq.f32.partialorder %v244, inf
      %v517 = vsel %vm516, %v244, %v515
      %vm518 = vcmp.eq.f32.partialorder %v244, 0.0
      %v519 = vand.u32 %v244, 2147483648
      %v520 = vsel %vm518, %v519, %v517
      %v521 = vrsqrt.pop %v247
      %v522 = vmul.f32 %v521, %v247
      %v523 = vmul.f32 %v522, %v521
      %v524 = vmul.f32 0.5, %v523
      %v525 = vsub.f32 1.5, %v524
      %v526 = vmul.f32 %v521, %v525
      %v527 = vmul.f32 %v247, %v526
      %vm528 = vcmp.eq.f32.partialorder %v247, inf
      %v529 = vsel %vm528, %v247, %v527
      %vm530 = vcmp.eq.f32.partialorder %v247, 0.0
      %v531 = vand.u32 %v247, 2147483648
      %v532 = vsel %vm530, %v531, %v529
      %v533 = vrsqrt.pop %v250
      %v534 = vmul.f32 %v533, %v250
      %v535 = vmul.f32 %v534, %v533
      %v536 = vmul.f32 0.5, %v535
      %v537 = vsub.f32 1.5, %v536
      %v538 = vmul.f32 %v533, %v537
      %v539 = vmul.f32 %v250, %v538
      %vm540 = vcmp.eq.f32.partialorder %v250, inf
      %v541 = vsel %vm540, %v250, %v539
      %vm542 = vcmp.eq.f32.partialorder %v250, 0.0
      %v543 = vand.u32 %v250, 2147483648
      %v544 = vsel %vm542, %v543, %v541
      %v545 = vrsqrt.pop %v253
      %v546 = vmul.f32 %v545, %v253
      %v547 = vmul.f32 %v546, %v545
      %v548 = vmul.f32 0.5, %v547
      %v549 = vsub.f32 1.5, %v548
      %v550 = vmul.f32 %v545, %v549
      %v551 = vmul.f32 %v253, %v550
      %vm552 = vcmp.eq.f32.partialorder %v253, inf
      %v553 = vsel %vm552, %v253, %v551
      %vm554 = vcmp.eq.f32.partialorder %v253, 0.0
      %v555 = vand.u32 %v253, 2147483648
      %v556 = vsel %vm554, %v555, %v553
      %v557 = vrsqrt.pop %v256
      %v558 = vmul.f32 %v557, %v256
      %v559 = vmul.f32 %v558, %v557
      %v560 = vmul.f32 0.5, %v559
      %v561 = vsub.f32 1.5, %v560
      %v562 = vmul.f32 %v557, %v561
      %v563 = vmul.f32 %v256, %v562
      %vm564 = vcmp.eq.f32.partialorder %v256, inf
      %v565 = vsel %vm564, %v256, %v563
      %vm566 = vcmp.eq.f32.partialorder %v256, 0.0
      %v567 = vand.u32 %v256, 2147483648
      %v568 = vsel %vm566, %v567, %v565
      %v569 = vrsqrt.pop %v259
      %v570 = vmul.f32 %v569, %v259
      %v571 = vmul.f32 %v570, %v569
      %v572 = vmul.f32 0.5, %v571
      %v573 = vsub.f32 1.5, %v572
      %v574 = vmul.f32 %v569, %v573
      %v575 = vmul.f32 %v259, %v574
      %vm576 = vcmp.eq.f32.partialorder %v259, inf
      %v577 = vsel %vm576, %v259, %v575
      %vm578 = vcmp.eq.f32.partialorder %v259, 0.0
      %v579 = vand.u32 %v259, 2147483648
      %v580 = vsel %vm578, %v579, %v577
      %v581 = vrsqrt.pop %v262
      %v582 = vmul.f32 %v581, %v262
      %v583 = vmul.f32 %v582, %v581
      %v584 = vmul.f32 0.5, %v583
      %v585 = vsub.f32 1.5, %v584
      %v586 = vmul.f32 %v581, %v585
      %v587 = vmul.f32 %v262, %v586
      %vm588 = vcmp.eq.f32.partialorder %v262, inf
      %v589 = vsel %vm588, %v262, %v587
      %vm590 = vcmp.eq.f32.partialorder %v262, 0.0
      %v591 = vand.u32 %v262, 2147483648
      %v592 = vsel %vm590, %v591, %v589
      %v593 = vrsqrt.pop %v265
      %v594 = vmul.f32 %v593, %v265
      %v595 = vmul.f32 %v594, %v593
      %v596 = vmul.f32 0.5, %v595
      %v597 = vsub.f32 1.5, %v596
      %v598 = vmul.f32 %v593, %v597
      %v599 = vmul.f32 %v265, %v598
      %vm600 = vcmp.eq.f32.partialorder %v265, inf
      %v601 = vsel %vm600, %v265, %v599
      %vm602 = vcmp.eq.f32.partialorder %v265, 0.0
      %v603 = vand.u32 %v265, 2147483648
      %v604 = vsel %vm602, %v603, %v601
      %v605 = vrsqrt.pop %v268
      %v606 = vmul.f32 %v605, %v268
      %v607 = vmul.f32 %v606, %v605
      %v608 = vmul.f32 0.5, %v607
      %v609 = vsub.f32 1.5, %v608
      %v610 = vmul.f32 %v605, %v609
      %v611 = vmul.f32 %v268, %v610
      %vm612 = vcmp.eq.f32.partialorder %v268, inf
      %v613 = vsel %vm612, %v268, %v611
      %vm614 = vcmp.eq.f32.partialorder %v268, 0.0
      %v615 = vand.u32 %v268, 2147483648
      %v616 = vsel %vm614, %v615, %v613
      %v617 = vrsqrt.pop %v271
      %v618 = vmul.f32 %v617, %v271
      %v619 = vmul.f32 %v618, %v617
      %v620 = vmul.f32 0.5, %v619
      %v621 = vsub.f32 1.5, %v620
      %v622 = vmul.f32 %v617, %v621
      %v623 = vmul.f32 %v271, %v622
      %vm624 = vcmp.eq.f32.partialorder %v271, inf
      %v625 = vsel %vm624, %v271, %v623
      %vm626 = vcmp.eq.f32.partialorder %v271, 0.0
      %v627 = vand.u32 %v271, 2147483648
      %v628 = vsel %vm626, %v627, %v625
      %v629 = vrsqrt.pop %v274
      %v630 = vmul.f32 %v629, %v274
      %v631 = vmul.f32 %v630, %v629
      %v632 = vmul.f32 0.5, %v631
      %v633 = vsub.f32 1.5, %v632
      %v634 = vmul.f32 %v629, %v633
      %v635 = vmul.f32 %v274, %v634
      %vm636 = vcmp.eq.f32.partialorder %v274, inf
      %v637 = vsel %vm636, %v274, %v635
      %vm638 = vcmp.eq.f32.partialorder %v274, 0.0
      %v639 = vand.u32 %v274, 2147483648
      %v640 = vsel %vm638, %v639, %v637
      %v641 = vrsqrt.pop %v277
      %v642 = vmul.f32 %v641, %v277
      %v643 = vmul.f32 %v642, %v641
      %v644 = vmul.f32 0.5, %v643
      %v645 = vsub.f32 1.5, %v644
      %v646 = vmul.f32 %v641, %v645
      %v647 = vmul.f32 %v277, %v646
      %vm648 = vcmp.eq.f32.partialorder %v277, inf
      %v649 = vsel %vm648, %v277, %v647
      %vm650 = vcmp.eq.f32.partialorder %v277, 0.0
      %v651 = vand.u32 %v277, 2147483648
      %v652 = vsel %vm650, %v651, %v649
      %v653 = vrsqrt.pop %v280
      %v654 = vmul.f32 %v653, %v280
      %v655 = vmul.f32 %v654, %v653
      %v656 = vmul.f32 0.5, %v655
      %v657 = vsub.f32 1.5, %v656
      %v658 = vmul.f32 %v653, %v657
      %v659 = vmul.f32 %v280, %v658
      %vm660 = vcmp.eq.f32.partialorder %v280, inf
      %v661 = vsel %vm660, %v280, %v659
      %vm662 = vcmp.eq.f32.partialorder %v280, 0.0
      %v663 = vand.u32 %v280, 2147483648
      %v664 = vsel %vm662, %v663, %v661
      %v665 = vmax.f32 %v292, 1e-12
      %v666 = vmax.f32 %v304, 1e-12
      %v667 = vmax.f32 %v316, 1e-12
      %v668 = vmax.f32 %v328, 1e-12
      %v669 = vmax.f32 %v340, 1e-12
      %v670 = vmax.f32 %v352, 1e-12
      %v671 = vmax.f32 %v364, 1e-12
      %v672 = vmax.f32 %v376, 1e-12
      %v673 = vmax.f32 %v388, 1e-12
      %v674 = vmax.f32 %v400, 1e-12
      %v675 = vmax.f32 %v412, 1e-12
      %v676 = vmax.f32 %v424, 1e-12
      %v677 = vmax.f32 %v436, 1e-12
      %v678 = vmax.f32 %v448, 1e-12
      %v679 = vmax.f32 %v460, 1e-12
      %v680 = vmax.f32 %v472, 1e-12
      %v681 = vmax.f32 %v484, 1e-12
      %v682 = vmax.f32 %v496, 1e-12
      %v683 = vmax.f32 %v508, 1e-12
      %v684 = vmax.f32 %v520, 1e-12
      %v685 = vmax.f32 %v532, 1e-12
      %v686 = vmax.f32 %v544, 1e-12
      %v687 = vmax.f32 %v556, 1e-12
      %v688 = vmax.f32 %v568, 1e-12
      %v689 = vmax.f32 %v580, 1e-12
      %v690 = vmax.f32 %v592, 1e-12
      %v691 = vmax.f32 %v604, 1e-12
      %v692 = vmax.f32 %v616, 1e-12
      %v693 = vmax.f32 %v628, 1e-12
      %v694 = vmax.f32 %v640, 1e-12
      %v695 = vmax.f32 %v652, 1e-12
      %v696 = vmax.f32 %v664, 1e-12
      %v697 = vrcp.pop %v665
      %v698 = vrcp.pop %v666
      %v699 = vrcp.pop %v667
      %v700 = vrcp.pop %v668
      %v701 = vrcp.pop %v669
      %v702 = vrcp.pop %v670
      %v703 = vrcp.pop %v671
      %v704 = vrcp.pop %v672
      %v705 = vrcp.pop %v673
      %v706 = vrcp.pop %v674
      %v707 = vrcp.pop %v675
      %v708 = vrcp.pop %v676
      %v709 = vrcp.pop %v677
      %v710 = vrcp.pop %v678
      %v711 = vrcp.pop %v679
      %v712 = vrcp.pop %v680
      %v713 = vrcp.pop %v681
      %v714 = vrcp.pop %v682
      %v715 = vrcp.pop %v683
      %v716 = vrcp.pop %v684
      %v717 = vrcp.pop %v685
      %v718 = vrcp.pop %v686
      %v719 = vrcp.pop %v687
      %v720 = vrcp.pop %v688
      %v721 = vrcp.pop %v689
      %v722 = vrcp.pop %v690
      %v723 = vrcp.pop %v691
      %v724 = vrcp.pop %v692
      %v725 = vrcp.pop %v693
      %v726 = vrcp.pop %v694
      %v727 = vrcp.pop %v695
      %v728 = vrcp.pop %v696
      %v729 = vmul.f32 %v120, %v697
      %v730 = vmul.f32 %v121, %v698
      %v731 = vmul.f32 %v122, %v699
      %v732 = vmul.f32 %v123, %v700
      %v733 = vmul.f32 %v124, %v701
      %v734 = vmul.f32 %v125, %v702
      %v735 = vmul.f32 %v126, %v703
      %v736 = vmul.f32 %v127, %v704
      %v737 = vmul.f32 %v128, %v705
      %v738 = vmul.f32 %v129, %v706
      %v739 = vmul.f32 %v130, %v707
      %v740 = vmul.f32 %v131, %v708
      %v741 = vmul.f32 %v132, %v709
      %v742 = vmul.f32 %v133, %v710
      %v743 = vmul.f32 %v134, %v711
      %v744 = vmul.f32 %v135, %v712
      %v745 = vmul.f32 %v136, %v713
      %v746 = vmul.f32 %v137, %v714
      %v747 = vmul.f32 %v138, %v715
      %v748 = vmul.f32 %v139, %v716
      %v749 = vmul.f32 %v140, %v717
      %v750 = vmul.f32 %v141, %v718
      %v751 = vmul.f32 %v142, %v719
      %v752 = vmul.f32 %v143, %v720
      %v753 = vmul.f32 %v144, %v721
      %v754 = vmul.f32 %v145, %v722
      %v755 = vmul.f32 %v146, %v723
      %v756 = vmul.f32 %v147, %v724
      %v757 = vmul.f32 %v148, %v725
      %v758 = vmul.f32 %v149, %v726
      %v759 = vmul.f32 %v150, %v727
      %v760 = vmul.f32 %v151, %v728
      %v761 = vpack.c.bf16 %v729, %v729
      %v762 = vpack.c.bf16 %v730, %v730
      %v763 = vpack.c.bf16 %v731, %v731
      %v764 = vpack.c.bf16 %v732, %v732
      %v765 = vpack.c.bf16 %v733, %v733
      %v766 = vpack.c.bf16 %v734, %v734
      %v767 = vpack.c.bf16 %v735, %v735
      %v768 = vpack.c.bf16 %v736, %v736
      %v769 = vpack.c.bf16 %v737, %v737
      %v770 = vpack.c.bf16 %v738, %v738
      %v771 = vpack.c.bf16 %v739, %v739
      %v772 = vpack.c.bf16 %v740, %v740
      %v773 = vpack.c.bf16 %v741, %v741
      %v774 = vpack.c.bf16 %v742, %v742
      %v775 = vpack.c.bf16 %v743, %v743
      %v776 = vpack.c.bf16 %v744, %v744
      %v777 = vpack.c.bf16 %v745, %v745
      %v778 = vpack.c.bf16 %v746, %v746
      %v779 = vpack.c.bf16 %v747, %v747
      %v780 = vpack.c.bf16 %v748, %v748
      %v781 = vpack.c.bf16 %v749, %v749
      %v782 = vpack.c.bf16 %v750, %v750
      %v783 = vpack.c.bf16 %v751, %v751
      %v784 = vpack.c.bf16 %v752, %v752
      %v785 = vpack.c.bf16 %v753, %v753
      %v786 = vpack.c.bf16 %v754, %v754
      %v787 = vpack.c.bf16 %v755, %v755
      %v788 = vpack.c.bf16 %v756, %v756
      %v789 = vpack.c.bf16 %v757, %v757
      %v790 = vpack.c.bf16 %v758, %v758
      %v791 = vpack.c.bf16 %v759, %v759
      %v792 = vpack.c.bf16 %v760, %v760
      %vm793 = vcmask 289792
      %794 = vst.msk [vmem:[%s118] sm:$0xf] %vm793, %v761
      %795 = vst.msk [vmem:[%s118 + $0x4] sm:$0xf] %vm793, %v762
      %796 = vst.msk [vmem:[%s118 + $0x8] sm:$0xf] %vm793, %v763
      %797 = vst.msk [vmem:[%s118 + $0xc] sm:$0xf] %vm793, %v764
      %798 = vst.msk [vmem:[%s118 + $0x10] sm:$0xf] %vm793, %v765
      %799 = vst.msk [vmem:[%s118 + $0x14] sm:$0xf] %vm793, %v766
      %800 = vst.msk [vmem:[%s118 + $0x18] sm:$0xf] %vm793, %v767
      %801 = vst.msk [vmem:[%s118 + $0x1c] sm:$0xf] %vm793, %v768
      %802 = vst.msk [vmem:[%s118 + $0x20] sm:$0xf] %vm793, %v769
      %803 = vst.msk [vmem:[%s118 + $0x24] sm:$0xf] %vm793, %v770
      %804 = vst.msk [vmem:[%s118 + $0x28] sm:$0xf] %vm793, %v771
      %805 = vst.msk [vmem:[%s118 + $0x2c] sm:$0xf] %vm793, %v772
      %806 = vst.msk [vmem:[%s118 + $0x30] sm:$0xf] %vm793, %v773
      %807 = vst.msk [vmem:[%s118 + $0x34] sm:$0xf] %vm793, %v774
      %808 = vst.msk [vmem:[%s118 + $0x38] sm:$0xf] %vm793, %v775
      %809 = vst.msk [vmem:[%s118 + $0x3c] sm:$0xf] %vm793, %v776
      %810 = vst.msk [vmem:[%s118 + $0x40] sm:$0xf] %vm793, %v777
      %811 = vst.msk [vmem:[%s118 + $0x44] sm:$0xf] %vm793, %v778
      %812 = vst.msk [vmem:[%s118 + $0x48] sm:$0xf] %vm793, %v779
      %813 = vst.msk [vmem:[%s118 + $0x4c] sm:$0xf] %vm793, %v780
      %814 = vst.msk [vmem:[%s118 + $0x50] sm:$0xf] %vm793, %v781
      %815 = vst.msk [vmem:[%s118 + $0x54] sm:$0xf] %vm793, %v782
      %816 = vst.msk [vmem:[%s118 + $0x58] sm:$0xf] %vm793, %v783
      %817 = vst.msk [vmem:[%s118 + $0x5c] sm:$0xf] %vm793, %v784
      %818 = vst.msk [vmem:[%s118 + $0x60] sm:$0xf] %vm793, %v785
      %819 = vst.msk [vmem:[%s118 + $0x64] sm:$0xf] %vm793, %v786
      %820 = vst.msk [vmem:[%s118 + $0x68] sm:$0xf] %vm793, %v787
      %821 = vst.msk [vmem:[%s118 + $0x6c] sm:$0xf] %vm793, %v788
      %822 = vst.msk [vmem:[%s118 + $0x70] sm:$0xf] %vm793, %v789
      %823 = vst.msk [vmem:[%s118 + $0x74] sm:$0xf] %vm793, %v790
      %824 = vst.msk [vmem:[%s118 + $0x78] sm:$0xf] %vm793, %v791
      %825 = vst.msk [vmem:[%s118 + $0x7c] sm:$0xf] %vm793, %v792
      %s826 = smul.u32 32, %s12
      %p827 = scmp.lt.s32.totalorder %s826, 63
      %s828 = scalar_select %p827, %s826, 63
      %s829 = smul.addr %s828, 4
      %s830 = scalar_lea.vmem %s1, %s829
      // Predicated region
      $region25: #{transformer_v5_forward.8} parent=23 // pred_check
        %p831 = pneg %p56
      $region26: #{transformer_v5_forward.8} parent=23 // pred_check_branch
        %833 = sbr.rel (%p831) target = $region28
      $region27: #{transformer_v5_forward.8} parent=23 // pred_region
        %s834 = smul.u32 32, %s12
      $region28: #{transformer_v5_forward.8} parent=23 // pred_fallthru
        _
    $region24: #{transformer_v5_forward.8} parent=5 // pred_fallthru
      _
    %p835 = scmp.le.s32.totalorder 2, %s7
    // Predicated region
    $region29: #{transformer_v5_forward.8} parent=5 // pred_check
      %p836 = pneg %p835
    $region30: #{transformer_v5_forward.8} parent=5 // pred_check_branch
      %838 = sbr.rel (%p836) target = $region32
    $region31: #{transformer_v5_forward.8} parent=5 // pred_region
      %s839 = ssub.s32 %s7, 2
      // Predicated region
      $region33: #{transformer_v5_forward.8} parent=31 // pred_check
        %p840 = pneg %p62
      $region34: #{transformer_v5_forward.8} parent=31 // pred_check_branch
        %842 = sbr.rel (%p840) target = $region36
      $region35: #{transformer_v5_forward.8} parent=31 // pred_region
        %s843 = smul.u32 32, %s13
        %p844 = scmp.lt.s32.totalorder %s843, 63
        %s845 = scalar_select %p844, %s843, 63
        %s846 = smul.addr %s845, 4
        %s847 = scalar_lea.vmem %s1, %s846
      $region36: #{transformer_v5_forward.8} parent=31 // pred_fallthru
        _
    $region32: #{transformer_v5_forward.8} parent=5 // pred_fallthru
      _
  $region6: #{transformer_v5_forward.8} parent=0 // loop_footer
    %s11 = sadd.s32 1, %s7
  $region7: #{transformer_v5_forward.8} parent=0 // loop_footer_branch
    %6 = sbr.rel target = $region3
  $region8: #{transformer_v5_forward.8} parent=0 // loop_exit
    _

// kernel: transformer_v5_forward.9
$region0: #{transformer_v5_forward.9}
  #allocation0 [shape = 'u32[]', space=smem, size = 0x4, offset = 0x4, fixed_abs, tag = 'smem constant byte address 0x4 - core index']
  #allocation1 [shape = 'u32[72,128]{1,0:T(1,128)}', space=vmem, size = 0x9000, scoped, tag = 'internal scratch']
  #allocation2 [shape = 'f32[128,5]{1,0:T(8,128)}', space=vmem, size = 0x10000, scoped, tag = 'scratch operand']
  #allocation3 [shape = 's32[128,5]{1,0:T(8,128)}', space=vmem, size = 0x10000, scoped, tag = 'scratch operand']
  %s0 = inlined_call_operand.vmem [shape: bf16[2,256,36], index: 0, kind: input, shape index: {}, may-alias: {0,1}]
  %s1 = inlined_call_operand.vmem [shape: bf16[2,256,36], index: 1, kind: input, shape index: {}, may-alias: {0,1}]
  %s2 = inlined_call_operand.vmem [shape: s32[2,256,128], index: 2, kind: output, shape index: {}]
  %s3 = sld [smem:[#allocation0]]
  $region49: #{transformer_v5_forward.9} parent=0
    _
  %s5 = ssub.s32 1, %s3
  %s6 = scalar_select 0, %s5, %s3
  loop: start=0, step=1, limit=10
  $region2: #{transformer_v5_forward.9} parent=0 // loop_pre_header
    _
  $region3: #{transformer_v5_forward.9} parent=0 // loop_header
    %s8 = sphi 0, %s12
    %p9 = scmp.ge.s32.totalorder %s8, 10
    %s15 = sphi 0, %s34
    %s16 = sphi 0, %s30
    %s17 = sphi 0, %s26
    %s18 = sphi 0, %s15
    %s19 = sphi 0, %s16
    %s20 = sphi 0, %s17
    %s21 = sphi 0, %s18
    %s22 = sphi 0, %s19
    %s23 = sphi 0, %s20
    %s39 = sphi 0, %s41
    %s42 = sphi 0, %s39
    %s43 = sphi 0, %s42
    %s59 = sphi 0, %s43
    %s67 = sphi 0, %s69
    %s70 = sphi 0, %s67
    %s71 = sphi 0, %s70
    %s87 = sphi 0, %s71
    %s95 = sphi 0, %s97
    %s98 = sphi 0, %s95
    %s99 = sphi 0, %s98
    %s115 = sphi 0, %s99
  $region4: #{transformer_v5_forward.9} parent=0 // loop_header_branch
    %11 = sbr.rel (%p9) target = $region8
  $region5: #{transformer_v5_forward.9} parent=0 // loop_body
    %s13 = ssub.s32 %s8, 1
    %s14 = ssub.s32 %s8, 2
    %s24 = sadd.s32 1, %s17
    %p25 = scmp.ge.s32.totalorder %s24, 2
    %s26 = scalar_select %p25, 0, %s24
    %s27 = sadd.s32 1, %s16
    %s28 = scalar_select %p25, %s27, %s16
    %p29 = scmp.ge.s32.totalorder %s28, 2
    %s30 = scalar_select %p29, 0, %s28
    %s31 = sadd.s32 1, %s15
    %s32 = scalar_select %p29, %s31, %s15
    %p33 = scmp.ge.s32.totalorder %s32, 2
    %s34 = scalar_select %p33, 0, %s32
    %s35 = ssub.s32 %s15, %s34
    %s36 = ssub.s32 %s16, %s30
    %s37 = sor.u32 %s35, %s36
    %p38 = scmp.eq.s32.totalorder %s37, 0
    %s40 = sadd.s32 %s39, 1
    %s41 = scalar_select %p38, %s39, %s40
    %p44 = pneg %p38
    %p45 = scmp.eq.s32.totalorder %s8, 7
    %p46 = por %p44, %p45
    %p47 = scmp.ne.s32.totalorder %s39, %s42
    %p48 = scmp.eq.s32.totalorder %s8, 0
    %p49 = por %p47, %p48
    %p50 = scmp.ne.s32.totalorder %s39, %s42
    %p51 = scmp.eq.s32.totalorder %s13, 7
    %p52 = por %p50, %p51
    %p53 = scmp.ne.s32.totalorder %s42, %s43
    %p54 = scmp.eq.s32.totalorder %s13, 0
    %p55 = por %p53, %p54
    %p56 = scmp.ne.s32.totalorder %s42, %s43
    %p57 = scmp.eq.s32.totalorder %s14, 7
    %p58 = por %p56, %p57
    %p60 = scmp.ne.s32.totalorder %s43, %s59
    %p61 = scmp.eq.s32.totalorder %s14, 0
    %p62 = por %p60, %p61
    %s63 = ssub.s32 %s15, %s34
    %s64 = ssub.s32 %s17, %s26
    %s65 = sor.u32 %s63, %s64
    %p66 = scmp.eq.s32.totalorder %s65, 0
    %s68 = sadd.s32 %s67, 1
    %s69 = scalar_select %p66, %s67, %s68
    %p72 = pneg %p66
    %p73 = scmp.eq.s32.totalorder %s8, 7
    %p74 = por %p72, %p73
    %p75 = scmp.ne.s32.totalorder %s67, %s70
    %p76 = scmp.eq.s32.totalorder %s8, 0
    %p77 = por %p75, %p76
    %p78 = scmp.ne.s32.totalorder %s67, %s70
    %p79 = scmp.eq.s32.totalorder %s13, 7
    %p80 = por %p78, %p79
    %p81 = scmp.ne.s32.totalorder %s70, %s71
    %p82 = scmp.eq.s32.totalorder %s13, 0
    %p83 = por %p81, %p82
    %p84 = scmp.ne.s32.totalorder %s70, %s71
    %p85 = scmp.eq.s32.totalorder %s14, 7
    %p86 = por %p84, %p85
    %p88 = scmp.ne.s32.totalorder %s71, %s87
    %p89 = scmp.eq.s32.totalorder %s14, 0
    %p90 = por %p88, %p89
    %s91 = ssub.s32 %s15, %s34
    %s92 = ssub.s32 %s16, %s30
    %s93 = sor.u32 %s91, %s92
    %p94 = scmp.eq.s32.totalorder %s93, 0
    %s96 = sadd.s32 %s95, 1
    %s97 = scalar_select %p94, %s95, %s96
    %p100 = pneg %p94
    %p101 = scmp.eq.s32.totalorder %s8, 7
    %p102 = por %p100, %p101
    %p103 = scmp.ne.s32.totalorder %s95, %s98
    %p104 = scmp.eq.s32.totalorder %s8, 0
    %p105 = por %p103, %p104
    %p106 = scmp.ne.s32.totalorder %s95, %s98
    %p107 = scmp.eq.s32.totalorder %s13, 7
    %p108 = por %p106, %p107
    %p109 = scmp.ne.s32.totalorder %s98, %s99
    %p110 = scmp.eq.s32.totalorder %s13, 0
    %p111 = por %p109, %p110
    %p112 = scmp.ne.s32.totalorder %s98, %s99
    %p113 = scmp.eq.s32.totalorder %s14, 7
    %p114 = por %p112, %p113
    %p116 = scmp.ne.s32.totalorder %s99, %s115
    %p117 = scmp.eq.s32.totalorder %s14, 0
    %p118 = por %p116, %p117
    %p119 = scmp.le.s32.totalorder 1, %s8
    %p120 = scmp.lt.s32.totalorder %s8, 9
    %p121 = pnand %p119, %p120
    %p122 = pneg %p121
    // Predicated region
    $region9: #{transformer_v5_forward.9} parent=5 // pred_check
      _
    $region10: #{transformer_v5_forward.9} parent=5 // pred_check_branch
      %124 = sbr.rel (%p121) target = $region12
    $region11: #{transformer_v5_forward.9} parent=5 // pred_region
      %s125 = ssub.s32 %s8, 1
    $region12: #{transformer_v5_forward.9} parent=5 // pred_fallthru
      _
    %p126 = scmp.lt.s32.totalorder %s8, 8
    // Predicated region
    $region13: #{transformer_v5_forward.9} parent=5 // pred_check
      %p127 = pneg %p126
    $region14: #{transformer_v5_forward.9} parent=5 // pred_check_branch
      %129 = sbr.rel (%p127) target = $region16
    $region15: #{transformer_v5_forward.9} parent=5 // pred_region
      // Predicated region
      $region17: #{transformer_v5_forward.9} parent=15 // pred_check
        %p130 = pneg %p49
      $region18: #{transformer_v5_forward.9} parent=15 // pred_check_branch
        %132 = sbr.rel (%p130) target = $region20
      $region19: #{transformer_v5_forward.9} parent=15 // pred_region
        %s133 = smul.u32 16, %s16
        %p134 = scmp.lt.s32.totalorder %s15, 1
        %s135 = scalar_select %p134, %s15, 1
        %p136 = scmp.lt.s32.totalorder %s133, 31
        %s137 = scalar_select %p136, %s133, 31
        %s138 = smul.addr %s135, 32
        %s139 = sadd.s32 %s137, %s138
        %s140 = smul.addr %s139, 4
        %s141 = scalar_lea.vmem %s0, %s140
        %s142 = smul.u32 16, %s16
      $region20: #{transformer_v5_forward.9} parent=15 // pred_fallthru
        _
      // Predicated region
      $region21: #{transformer_v5_forward.9} parent=15 // pred_check
        %p143 = pneg %p77
      $region22: #{transformer_v5_forward.9} parent=15 // pred_check_branch
        %145 = sbr.rel (%p143) target = $region24
      $region23: #{transformer_v5_forward.9} parent=15 // pred_region
        %s146 = smul.u32 16, %s17
        %p147 = scmp.lt.s32.totalorder %s15, 1
        %s148 = scalar_select %p147, %s15, 1
        %p149 = scmp.lt.s32.totalorder %s146, 31
        %s150 = scalar_select %p149, %s146, 31
        %s151 = smul.addr %s148, 32
        %s152 = sadd.s32 %s150, %s151
        %s153 = smul.addr %s152, 4
        %s154 = scalar_lea.vmem %s1, %s153
        %s155 = smul.u32 16, %s17
      $region24: #{transformer_v5_forward.9} parent=15 // pred_fallthru
        _
    $region16: #{transformer_v5_forward.9} parent=5 // pred_fallthru
      _
    %p156 = scmp.le.s32.totalorder 1, %s8
    %p157 = scmp.lt.s32.totalorder %s8, 9
    %p158 = pnand %p156, %p157
    %p159 = pneg %p158
    // Predicated region
    $region25: #{transformer_v5_forward.9} parent=5 // pred_check
      _
    $region26: #{transformer_v5_forward.9} parent=5 // pred_check_branch
      %161 = sbr.rel (%p158) target = $region28
    $region27: #{transformer_v5_forward.9} parent=5 // pred_region
      %s162 = ssub.s32 %s8, 1
      %s163 = smul.u32 16, %s19
      %p164 = scmp.lt.s32.totalorder %s18, 1
      %s165 = scalar_select %p164, %s18, 1
      %p166 = scmp.lt.s32.totalorder %s163, 31
      %s167 = scalar_select %p166, %s163, 31
      %s168 = smul.addr %s165, 32
      %s169 = sadd.s32 %s167, %s168
      %s170 = smul.addr %s169, 4
      %s171 = scalar_lea.vmem %s0, %s170
      %p172 = pneg %p55
      %p173 = pneg %p52
      %s174 = smul.u32 16, %s20
      %p175 = scmp.lt.s32.totalorder %s18, 1
      %s176 = scalar_select %p175, %s18, 1
      %p177 = scmp.lt.s32.totalorder %s174, 31
      %s178 = scalar_select %p177, %s174, 31
      %s179 = smul.addr %s176, 32
      %s180 = sadd.s32 %s178, %s179
      %s181 = smul.addr %s180, 4
      %s182 = scalar_lea.vmem %s1, %s181
      %p183 = pneg %p83
      %p184 = pneg %p80
      %p185 = pneg %p111
      %p186 = pneg %p108
      %s187 = smul.u32 16, %s19
      %p188 = scmp.lt.s32.totalorder %s18, 1
      %s189 = scalar_select %p188, %s18, 1
      %p190 = scmp.lt.s32.totalorder %s187, 31
      %s191 = scalar_select %p190, %s187, 31
      %s192 = smul.addr %s189, 32
      %s193 = sadd.s32 %s191, %s192
      %s194 = smul.addr %s193, 8
      %s195 = scalar_lea.vmem %s2, %s194
      %s196 = smul.u32 16, %s19
      %p197 = scmp.lt.s32.totalorder %s18, 1
      %s198 = scalar_select %p197, %s18, 1
      %p199 = scmp.lt.s32.totalorder %s196, 31
      %s200 = scalar_select %p199, %s196, 31
      %s201 = smul.addr %s198, 32
      %s202 = sadd.s32 %s200, %s201
      %s203 = smul.addr %s202, 4
      %s204 = scalar_lea.vmem %s0, %s203
      %s205 = smul.u32 16, %s19
      %s206 = smul.u32 16, %s20
      %p207 = scmp.lt.s32.totalorder %s18, 1
      %s208 = scalar_select %p207, %s18, 1
      %p209 = scmp.lt.s32.totalorder %s206, 31
      %s210 = scalar_select %p209, %s206, 31
      %s211 = smul.addr %s208, 32
      %s212 = sadd.s32 %s210, %s211
      %s213 = smul.addr %s212, 4
      %s214 = scalar_lea.vmem %s1, %s213
      %s215 = smul.u32 16, %s20
      %s216 = smul.u32 16, %s19
      %p217 = scmp.lt.s32.totalorder %s18, 1
      %s218 = scalar_select %p217, %s18, 1
      %p219 = scmp.lt.s32.totalorder %s216, 31
      %s220 = scalar_select %p219, %s216, 31
      %s221 = smul.addr %s218, 32
      %s222 = sadd.s32 %s220, %s221
      %s223 = smul.addr %s222, 8
      %s224 = scalar_lea.vmem %s2, %s223
      %s225 = smul.u32 16, %s19
      %p226 = scmp.eq.s32.totalorder %s20, 0
      // Predicated region
      $region29: #{transformer_v5_forward.9} parent=27 // pred_check
        %p227 = pneg %p226
      $region30: #{transformer_v5_forward.9} parent=27 // pred_check_branch
        %229 = sbr.rel (%p227) target = $region32
      $region31: #{transformer_v5_forward.9} parent=27 // pred_region
        %vm230 = vcmask 39936
        %231 = vst.msk [vmem:[#allocation2] sm:$0xff] %vm230, -inf
        %232 = vst.msk [vmem:[#allocation2 + $0x8] sm:$0xff] %vm230, -inf
        %233 = vst.msk [vmem:[#allocation2 + $0x10] sm:$0xff] %vm230, -inf
        %234 = vst.msk [vmem:[#allocation2 + $0x18] sm:$0xff] %vm230, -inf
        %235 = vst.msk [vmem:[#allocation2 + $0x20] sm:$0xff] %vm230, -inf
        %236 = vst.msk [vmem:[#allocation2 + $0x28] sm:$0xff] %vm230, -inf
        %237 = vst.msk [vmem:[#allocation2 + $0x30] sm:$0xff] %vm230, -inf
        %238 = vst.msk [vmem:[#allocation2 + $0x38] sm:$0xff] %vm230, -inf
        %239 = vst.msk [vmem:[#allocation2 + $0x40] sm:$0xff] %vm230, -inf
        %240 = vst.msk [vmem:[#allocation2 + $0x48] sm:$0xff] %vm230, -inf
        %241 = vst.msk [vmem:[#allocation2 + $0x50] sm:$0xff] %vm230, -inf
        %242 = vst.msk [vmem:[#allocation2 + $0x58] sm:$0xff] %vm230, -inf
        %243 = vst.msk [vmem:[#allocation2 + $0x60] sm:$0xff] %vm230, -inf
        %244 = vst.msk [vmem:[#allocation2 + $0x68] sm:$0xff] %vm230, -inf
        %245 = vst.msk [vmem:[#allocation2 + $0x70] sm:$0xff] %vm230, -inf
        %246 = vst.msk [vmem:[#allocation2 + $0x78] sm:$0xff] %vm230, -inf
        %247 = vst.msk [vmem:[#allocation3] sm:$0xff] %vm230, 1073741824
        %248 = vst.msk [vmem:[#allocation3 + $0x8] sm:$0xff] %vm230, 1073741824
        %249 = vst.msk [vmem:[#allocation3 + $0x10] sm:$0xff] %vm230, 1073741824
        %250 = vst.msk [vmem:[#allocation3 + $0x18] sm:$0xff] %vm230, 1073741824
        %251 = vst.msk [vmem:[#allocation3 + $0x20] sm:$0xff] %vm230, 1073741824
        %252 = vst.msk [vmem:[#allocation3 + $0x28] sm:$0xff] %vm230, 1073741824
        %253 = vst.msk [vmem:[#allocation3 + $0x30] sm:$0xff] %vm230, 1073741824
        %254 = vst.msk [vmem:[#allocation3 + $0x38] sm:$0xff] %vm230, 1073741824
        %255 = vst.msk [vmem:[#allocation3 + $0x40] sm:$0xff] %vm230, 1073741824
        %256 = vst.msk [vmem:[#allocation3 + $0x48] sm:$0xff] %vm230, 1073741824
        %257 = vst.msk [vmem:[#allocation3 + $0x50] sm:$0xff] %vm230, 1073741824
        %258 = vst.msk [vmem:[#allocation3 + $0x58] sm:$0xff] %vm230, 1073741824
        %259 = vst.msk [vmem:[#allocation3 + $0x60] sm:$0xff] %vm230, 1073741824
        %260 = vst.msk [vmem:[#allocation3 + $0x68] sm:$0xff] %vm230, 1073741824
        %261 = vst.msk [vmem:[#allocation3 + $0x70] sm:$0xff] %vm230, 1073741824
        %262 = vst.msk [vmem:[#allocation3 + $0x78] sm:$0xff] %vm230, 1073741824
      $region32: #{transformer_v5_forward.9} parent=27 // pred_fallthru
        _
      %v263 = vld [vmem:[%s204] sm:$0xf]
      %v264 = vld [vmem:[%s204 + $0x4] sm:$0xf]
      %v265 = vld [vmem:[%s204 + $0x8] sm:$0xf]
      %v266 = vld [vmem:[%s204 + $0xc] sm:$0xf]
      %v267 = vld [vmem:[%s204 + $0x10] sm:$0xf]
      %v268 = vld [vmem:[%s204 + $0x14] sm:$0xf]
      %v269 = vld [vmem:[%s204 + $0x18] sm:$0xf]
      %v270 = vld [vmem:[%s204 + $0x1c] sm:$0xf]
      %v271 = vld [vmem:[%s204 + $0x20] sm:$0xf]
      %v272 = vld [vmem:[%s204 + $0x24] sm:$0xf]
      %v273 = vld [vmem:[%s204 + $0x28] sm:$0xf]
      %v274 = vld [vmem:[%s204 + $0x2c] sm:$0xf]
      %v275 = vld [vmem:[%s204 + $0x30] sm:$0xf]
      %v276 = vld [vmem:[%s204 + $0x34] sm:$0xf]
      %v277 = vld [vmem:[%s204 + $0x38] sm:$0xf]
      %v278 = vld [vmem:[%s204 + $0x3c] sm:$0xf]
      %v279 = vld [vmem:[%s214] sm:$0xf]
      %v280 = vld [vmem:[%s214 + $0x4] sm:$0xf]
      %v281 = vld [vmem:[%s214 + $0x8] sm:$0xf]
      %v282 = vld [vmem:[%s214 + $0xc] sm:$0xf]
      %v283 = vld [vmem:[%s214 + $0x10] sm:$0xf]
      %v284 = vld [vmem:[%s214 + $0x14] sm:$0xf]
      %v285 = vld [vmem:[%s214 + $0x18] sm:$0xf]
      %v286 = vld [vmem:[%s214 + $0x1c] sm:$0xf]
      %v287 = vld [vmem:[%s214 + $0x20] sm:$0xf]
      %v288 = vld [vmem:[%s214 + $0x24] sm:$0xf]
      %v289 = vld [vmem:[%s214 + $0x28] sm:$0xf]
      %v290 = vld [vmem:[%s214 + $0x2c] sm:$0xf]
      %v291 = vld [vmem:[%s214 + $0x30] sm:$0xf]
      %v292 = vld [vmem:[%s214 + $0x34] sm:$0xf]
      %v293 = vld [vmem:[%s214 + $0x38] sm:$0xf]
      %v294 = vld [vmem:[%s214 + $0x3c] sm:$0xf]
      %v311 = vunpack.c.l.b16 %v263
      %v312 = vunpack.c.l.b16 %v264
      %v313 = vunpack.c.l.b16 %v265
      %v314 = vunpack.c.l.b16 %v266
      %v315 = vunpack.c.l.b16 %v267
      %v316 = vunpack.c.l.b16 %v268
      %v317 = vunpack.c.l.b16 %v269
      %v318 = vunpack.c.l.b16 %v270
      %v319 = vunpack.c.l.b16 %v271
      %v320 = vunpack.c.l.b16 %v272
      %v321 = vunpack.c.l.b16 %v273
      %v322 = vunpack.c.l.b16 %v274
      %v323 = vunpack.c.l.b16 %v275
      %v324 = vunpack.c.l.b16 %v276
      %v325 = vunpack.c.l.b16 %v277
      %v326 = vunpack.c.l.b16 %v278
      %v327 = vpack.c.b16 %v312, %v311
      %v328 = vpack.c.b16 %v314, %v313
      %v329 = vpack.c.b16 %v316, %v315
      %v330 = vpack.c.b16 %v318, %v317
      %v331 = vpack.c.b16 %v320, %v319
      %v332 = vpack.c.b16 %v322, %v321
      %v333 = vpack.c.b16 %v324, %v323
      %v334 = vpack.c.b16 %v326, %v325
      %v351 = vunpack.c.l.b16 %v279
      %v352 = vunpack.c.l.b16 %v280
      %v353 = vunpack.c.l.b16 %v281
      %v354 = vunpack.c.l.b16 %v282
      %v355 = vunpack.c.l.b16 %v283
      %v356 = vunpack.c.l.b16 %v284
      %v357 = vunpack.c.l.b16 %v285
      %v358 = vunpack.c.l.b16 %v286
      %v359 = vunpack.c.l.b16 %v287
      %v360 = vunpack.c.l.b16 %v288
      %v361 = vunpack.c.l.b16 %v289
      %v362 = vunpack.c.l.b16 %v290
      %v363 = vunpack.c.l.b16 %v291
      %v364 = vunpack.c.l.b16 %v292
      %v365 = vunpack.c.l.b16 %v293
      %v366 = vunpack.c.l.b16 %v294
      %v367 = vpack.c.b16 %v352, %v351
      %v368 = vpack.c.b16 %v354, %v353
      %v369 = vpack.c.b16 %v356, %v355
      %v370 = vpack.c.b16 %v358, %v357
      %v371 = vpack.c.b16 %v360, %v359
      %v372 = vpack.c.b16 %v362, %v361
      %v373 = vpack.c.b16 %v364, %v363
      %v374 = vpack.c.b16 %v366, %v365
      %vm375 = vcmask 293888
      %v377 = vsel %vm375, %v327, 0
      %v380 = vsel %vm375, %v328, 0
      %v383 = vsel %vm375, %v329, 0
      %v386 = vsel %vm375, %v330, 0
      %v389 = vsel %vm375, %v331, 0
      %v392 = vsel %vm375, %v332, 0
      %v395 = vsel %vm375, %v333, 0
      %v398 = vsel %vm375, %v334, 0
      %v401 = vsel %vm375, %v367, 0
      %v404 = vsel %vm375, %v368, 0
      %v407 = vsel %vm375, %v369, 0
      %v410 = vsel %vm375, %v370, 0
      %v413 = vsel %vm375, %v371, 0
      %v416 = vsel %vm375, %v372, 0
      %v419 = vsel %vm375, %v373, 0
      %v422 = vsel %vm375, %v374, 0
      %424 = vmatpush.bf16.xpose.msra.mxu0 %v422
      %425 = vmatpush.bf16.xpose.msra.mxu0 %v419
      %426 = vmatpush.bf16.xpose.msra.mxu0 %v416
      %427 = vmatpush.bf16.xpose.msra.mxu0 %v413
      %428 = vmatpush.bf16.xpose.msra.mxu0 %v410
      %429 = vmatpush.bf16.xpose.msra.mxu0 %v407
      %430 = vmatpush.bf16.xpose.msra.mxu0 %v404
      %431 = vmatpush.bf16.xpose.msra.mxu0 %v401
      %432 = vmatmul.bf16.gmra.mxu0 %v377
      %v433 = vpop.f32.mrf.mxu0
      %v434 = vadd.f32 0.0, %v433
      %v435 = vpop.f32.mrf.mxu0
      %v436 = vadd.f32 0.0, %v435
      %437 = vmatmul.bf16.gmra.mxu0 %v380
      %v438 = vpop.f32.mrf.mxu0
      %v439 = vadd.f32 0.0, %v438
      %v440 = vpop.f32.mrf.mxu0
      %v441 = vadd.f32 0.0, %v440
      %442 = vmatmul.bf16.gmra.mxu0 %v383
      %v443 = vpop.f32.mrf.mxu0
      %v444 = vadd.f32 0.0, %v443
      %v445 = vpop.f32.mrf.mxu0
      %v446 = vadd.f32 0.0, %v445
      %447 = vmatmul.bf16.gmra.mxu0 %v386
      %v448 = vpop.f32.mrf.mxu0
      %v449 = vadd.f32 0.0, %v448
      %v450 = vpop.f32.mrf.mxu0
      %v451 = vadd.f32 0.0, %v450
      %452 = vmatmul.bf16.gmra.mxu0 %v389
      %v453 = vpop.f32.mrf.mxu0
      %v454 = vadd.f32 0.0, %v453
      %v455 = vpop.f32.mrf.mxu0
      %v456 = vadd.f32 0.0, %v455
      %457 = vmatmul.bf16.gmra.mxu0 %v392
      %v458 = vpop.f32.mrf.mxu0
      %v459 = vadd.f32 0.0, %v458
      %v460 = vpop.f32.mrf.mxu0
      %v461 = vadd.f32 0.0, %v460
      %462 = vmatmul.bf16.gmra.mxu0 %v395
      %v463 = vpop.f32.mrf.mxu0
      %v464 = vadd.f32 0.0, %v463
      %v465 = vpop.f32.mrf.mxu0
      %v466 = vadd.f32 0.0, %v465
      %467 = vmatmul.bf16.gmra.mxu0 %v398
      %v468 = vpop.f32.mrf.mxu0
      %v469 = vadd.f32 0.0, %v468
      %v470 = vpop.f32.mrf.mxu0
      %v471 = vadd.f32 0.0, %v470
      %472 = vdwg.mxu0
      %v473 = vlaneseq
      %v474 = vand.u32 %v473, 127
      %s475 = smul.u32 %s20, 128
      %v476 = vstv %s475
      %v477 = vadd.s32 %v474, %v476
      %v478 = vld [vmem:[#allocation2] sm:$0xff]
      %v479 = vld [vmem:[#allocation2 + $0x8] sm:$0xff]
      %v480 = vld [vmem:[#allocation2 + $0x10] sm:$0xff]
      %v481 = vld [vmem:[#allocation2 + $0x18] sm:$0xff]
      %v482 = vld [vmem:[#allocation2 + $0x20] sm:$0xff]
      %v483 = vld [vmem:[#allocation2 + $0x28] sm:$0xff]
      %v484 = vld [vmem:[#allocation2 + $0x30] sm:$0xff]
      %v485 = vld [vmem:[#allocation2 + $0x38] sm:$0xff]
      %v486 = vld [vmem:[#allocation2 + $0x40] sm:$0xff]
      %v487 = vld [vmem:[#allocation2 + $0x48] sm:$0xff]
      %v488 = vld [vmem:[#allocation2 + $0x50] sm:$0xff]
      %v489 = vld [vmem:[#allocation2 + $0x58] sm:$0xff]
      %v490 = vld [vmem:[#allocation2 + $0x60] sm:$0xff]
      %v491 = vld [vmem:[#allocation2 + $0x68] sm:$0xff]
      %v492 = vld [vmem:[#allocation2 + $0x70] sm:$0xff]
      %v493 = vld [vmem:[#allocation2 + $0x78] sm:$0xff]
      %510 = vrot.lane.b32.xlu0 %v434, 5
      %v511 = vpop.permute.xlu0 %510
      %512 = vrot.lane.b32.xlu0 %v436, 5
      %v513 = vpop.permute.xlu0 %512
      %514 = vrot.lane.b32.xlu0 %v439, 5
      %v515 = vpop.permute.xlu0 %514
      %516 = vrot.lane.b32.xlu0 %v441, 5
      %v517 = vpop.permute.xlu0 %516
      %518 = vrot.lane.b32.xlu0 %v444, 5
      %v519 = vpop.permute.xlu0 %518
      %520 = vrot.lane.b32.xlu0 %v446, 5
      %v521 = vpop.permute.xlu0 %520
      %522 = vrot.lane.b32.xlu0 %v449, 5
      %v523 = vpop.permute.xlu0 %522
      %524 = vrot.lane.b32.xlu0 %v451, 5
      %v525 = vpop.permute.xlu0 %524
      %526 = vrot.lane.b32.xlu0 %v454, 5
      %v527 = vpop.permute.xlu0 %526
      %528 = vrot.lane.b32.xlu0 %v456, 5
      %v529 = vpop.permute.xlu0 %528
      %530 = vrot.lane.b32.xlu0 %v459, 5
      %v531 = vpop.permute.xlu0 %530
      %532 = vrot.lane.b32.xlu0 %v461, 5
      %v533 = vpop.permute.xlu0 %532
      %534 = vrot.lane.b32.xlu0 %v464, 5
      %v535 = vpop.permute.xlu0 %534
      %536 = vrot.lane.b32.xlu0 %v466, 5
      %v537 = vpop.permute.xlu0 %536
      %538 = vrot.lane.b32.xlu0 %v469, 5
      %v539 = vpop.permute.xlu0 %538
      %540 = vrot.lane.b32.xlu0 %v471, 5
      %v541 = vpop.permute.xlu0 %540
      %vm558 = vcmask 39936
      %v559 = vsel %vm558, %v478, %v511
      %v560 = vsel %vm558, %v479, %v513
      %v561 = vsel %vm558, %v480, %v515
      %v562 = vsel %vm558, %v481, %v517
      %v563 = vsel %vm558, %v482, %v519
      %v564 = vsel %vm558, %v483, %v521
      %v565 = vsel %vm558, %v484, %v523
      %v566 = vsel %vm558, %v485, %v525
      %v567 = vsel %vm558, %v486, %v527
      %v568 = vsel %vm558, %v487, %v529
      %v569 = vsel %vm558, %v488, %v531
      %v570 = vsel %vm558, %v489, %v533
      %v571 = vsel %vm558, %v490, %v535
      %v572 = vsel %vm558, %v491, %v537
      %v573 = vsel %vm558, %v492, %v539
      %v574 = vsel %vm558, %v493, %v541
      %v575 = vld [vmem:[#allocation3] sm:$0xff]
      %v576 = vld [vmem:[#allocation3 + $0x8] sm:$0xff]
      %v577 = vld [vmem:[#allocation3 + $0x10] sm:$0xff]
      %v578 = vld [vmem:[#allocation3 + $0x18] sm:$0xff]
      %v579 = vld [vmem:[#allocation3 + $0x20] sm:$0xff]
      %v580 = vld [vmem:[#allocation3 + $0x28] sm:$0xff]
      %v581 = vld [vmem:[#allocation3 + $0x30] sm:$0xff]
      %v582 = vld [vmem:[#allocation3 + $0x38] sm:$0xff]
      %v583 = vld [vmem:[#allocation3 + $0x40] sm:$0xff]
      %v584 = vld [vmem:[#allocation3 + $0x48] sm:$0xff]
      %v585 = vld [vmem:[#allocation3 + $0x50] sm:$0xff]
      %v586 = vld [vmem:[#allocation3 + $0x58] sm:$0xff]
      %v587 = vld [vmem:[#allocation3 + $0x60] sm:$0xff]
      %v588 = vld [vmem:[#allocation3 + $0x68] sm:$0xff]
      %v589 = vld [vmem:[#allocation3 + $0x70] sm:$0xff]
      %v590 = vld [vmem:[#allocation3 + $0x78] sm:$0xff]
      %591 = vrot.lane.b32.xlu0 %v477, 5
      %v592 = vpop.permute.xlu0 %591
      %v593 = vsel %vm558, %v575, %v592
      %v594 = vsel %vm558, %v576, %v592
      %v595 = vsel %vm558, %v577, %v592
      %v596 = vsel %vm558, %v578, %v592
      %v597 = vsel %vm558, %v579, %v592
      %v598 = vsel %vm558, %v580, %v592
      %v599 = vsel %vm558, %v581, %v592
      %v600 = vsel %vm558, %v582, %v592
      %v601 = vsel %vm558, %v583, %v592
      %v602 = vsel %vm558, %v584, %v592
      %v603 = vsel %vm558, %v585, %v592
      %v604 = vsel %vm558, %v586, %v592
      %v605 = vsel %vm558, %v587, %v592
      %v606 = vsel %vm558, %v588, %v592
      %v607 = vsel %vm558, %v589, %v592
      %v608 = vsel %vm558, %v590, %v592
      %v609 = vsel %vm558, %v511, -inf
      %v610 = vmax.f32 %v559, %v609
      %611 = vmax.xlane.f32.xlu0 %v610
      %v612 = vpop.xlane.xlu0 %611
      %v613 = vsel %vm558, %v513, -inf
      %v614 = vmax.f32 %v560, %v613
      %615 = vmax.xlane.f32.xlu0 %v614
      %v616 = vpop.xlane.xlu0 %615
      %v617 = vsel %vm558, %v515, -inf
      %v618 = vmax.f32 %v561, %v617
      %619 = vmax.xlane.f32.xlu0 %v618
      %v620 = vpop.xlane.xlu0 %619
      %v621 = vsel %vm558, %v517, -inf
      %v622 = vmax.f32 %v562, %v621
      %623 = vmax.xlane.f32.xlu0 %v622
      %v624 = vpop.xlane.xlu0 %623
      %v625 = vsel %vm558, %v519, -inf
      %v626 = vmax.f32 %v563, %v625
      %627 = vmax.xlane.f32.xlu0 %v626
      %v628 = vpop.xlane.xlu0 %627
      %v629 = vsel %vm558, %v521, -inf
      %v630 = vmax.f32 %v564, %v629
      %631 = vmax.xlane.f32.xlu0 %v630
      %v632 = vpop.xlane.xlu0 %631
      %v633 = vsel %vm558, %v523, -inf
      %v634 = vmax.f32 %v565, %v633
      %635 = vmax.xlane.f32.xlu0 %v634
      %v636 = vpop.xlane.xlu0 %635
      %v637 = vsel %vm558, %v525, -inf
      %v638 = vmax.f32 %v566, %v637
      %639 = vmax.xlane.f32.xlu0 %v638
      %v640 = vpop.xlane.xlu0 %639
      %v641 = vsel %vm558, %v527, -inf
      %v642 = vmax.f32 %v567, %v641
      %643 = vmax.xlane.f32.xlu0 %v642
      %v644 = vpop.xlane.xlu0 %643
      %v645 = vsel %vm558, %v529, -inf
      %v646 = vmax.f32 %v568, %v645
      %647 = vmax.xlane.f32.xlu0 %v646
      %v648 = vpop.xlane.xlu0 %647
      %v649 = vsel %vm558, %v531, -inf
      %v650 = vmax.f32 %v569, %v649
      %651 = vmax.xlane.f32.xlu0 %v650
      %v652 = vpop.xlane.xlu0 %651
      %v653 = vsel %vm558, %v533, -inf
      %v654 = vmax.f32 %v570, %v653
      %655 = vmax.xlane.f32.xlu0 %v654
      %v656 = vpop.xlane.xlu0 %655
      %v657 = vsel %vm558, %v535, -inf
      %v658 = vmax.f32 %v571, %v657
      %659 = vmax.xlane.f32.xlu0 %v658
      %v660 = vpop.xlane.xlu0 %659
      %v661 = vsel %vm558, %v537, -inf
      %v662 = vmax.f32 %v572, %v661
      %663 = vmax.xlane.f32.xlu0 %v662
      %v664 = vpop.xlane.xlu0 %663
      %v665 = vsel %vm558, %v539, -inf
      %v666 = vmax.f32 %v573, %v665
      %667 = vmax.xlane.f32.xlu0 %v666
      %v668 = vpop.xlane.xlu0 %667
      %v669 = vsel %vm558, %v541, -inf
      %v670 = vmax.f32 %v574, %v669
      %671 = vmax.xlane.f32.xlu0 %v670
      %v672 = vpop.xlane.xlu0 %671
      %vm673 = vcmp.ge.f32.partialorder %v559, %v612
      %vm674 = vcmp.ge.f32.partialorder %v511, %v612
      %vm675 = vcmp.ge.f32.partialorder %v560, %v616
      %vm676 = vcmp.ge.f32.partialorder %v513, %v616
      %vm677 = vcmp.ge.f32.partialorder %v561, %v620
      %vm678 = vcmp.ge.f32.partialorder %v515, %v620
      %vm679 = vcmp.ge.f32.partialorder %v562, %v624
      %vm680 = vcmp.ge.f32.partialorder %v517, %v624
      %vm681 = vcmp.ge.f32.partialorder %v563, %v628
      %vm682 = vcmp.ge.f32.partialorder %v519, %v628
      %vm683 = vcmp.ge.f32.partialorder %v564, %v632
      %vm684 = vcmp.ge.f32.partialorder %v521, %v632
      %vm685 = vcmp.ge.f32.partialorder %v565, %v636
      %vm686 = vcmp.ge.f32.partialorder %v523, %v636
      %vm687 = vcmp.ge.f32.partialorder %v566, %v640
      %vm688 = vcmp.ge.f32.partialorder %v525, %v640
      %vm689 = vcmp.ge.f32.partialorder %v567, %v644
      %vm690 = vcmp.ge.f32.partialorder %v527, %v644
      %vm691 = vcmp.ge.f32.partialorder %v568, %v648
      %vm692 = vcmp.ge.f32.partialorder %v529, %v648
      %vm693 = vcmp.ge.f32.partialorder %v569, %v652
      %vm694 = vcmp.ge.f32.partialorder %v531, %v652
      %vm695 = vcmp.ge.f32.partialorder %v570, %v656
      %vm696 = vcmp.ge.f32.partialorder %v533, %v656
      %vm697 = vcmp.ge.f32.partialorder %v571, %v660
      %vm698 = vcmp.ge.f32.partialorder %v535, %v660
      %vm699 = vcmp.ge.f32.partialorder %v572, %v664
      %vm700 = vcmp.ge.f32.partialorder %v537, %v664
      %vm701 = vcmp.ge.f32.partialorder %v573, %v668
      %vm702 = vcmp.ge.f32.partialorder %v539, %v668
      %vm703 = vcmp.ge.f32.partialorder %v574, %v672
      %vm704 = vcmp.ge.f32.partialorder %v541, %v672
      %v705 = vsel %vm673, %v593, 1073741824
      %v706 = vsel %vm674, %v592, 1073741824
      %v707 = vsel %vm675, %v594, 1073741824
      %v708 = vsel %vm676, %v592, 1073741824
      %v709 = vsel %vm677, %v595, 1073741824
      %v710 = vsel %vm678, %v592, 1073741824
      %v711 = vsel %vm679, %v596, 1073741824
      %v712 = vsel %vm680, %v592, 1073741824
      %v713 = vsel %vm681, %v597, 1073741824
      %v714 = vsel %vm682, %v592, 1073741824
      %v715 = vsel %vm683, %v598, 1073741824
      %v716 = vsel %vm684, %v592, 1073741824
      %v717 = vsel %vm685, %v599, 1073741824
      %v718 = vsel %vm686, %v592, 1073741824
      %v719 = vsel %vm687, %v600, 1073741824
      %v720 = vsel %vm688, %v592, 1073741824
      %v721 = vsel %vm689, %v601, 1073741824
      %v722 = vsel %vm690, %v592, 1073741824
      %v723 = vsel %vm691, %v602, 1073741824
      %v724 = vsel %vm692, %v592, 1073741824
      %v725 = vsel %vm693, %v603, 1073741824
      %v726 = vsel %vm694, %v592, 1073741824
      %v727 = vsel %vm695, %v604, 1073741824
      %v728 = vsel %vm696, %v592, 1073741824
      %v729 = vsel %vm697, %v605, 1073741824
      %v730 = vsel %vm698, %v592, 1073741824
      %v731 = vsel %vm699, %v606, 1073741824
      %v732 = vsel %vm700, %v592, 1073741824
      %v733 = vsel %vm701, %v607, 1073741824
      %v734 = vsel %vm702, %v592, 1073741824
      %v735 = vsel %vm703, %v608, 1073741824
      %v736 = vsel %vm704, %v592, 1073741824
      %v737 = vsel %vm558, %v706, 2147483647
      %vm738 = vcmp.lt.s32.totalorder %v705, %v737
      %v739 = vsel %vm738, %v705, %v737
      %v740 = vand.u32 %v739, 65535
      %v741 = vshra.s32 %v739, 16
      %v742 = vcvt.s32.f32 %v740
      %v743 = vcvt.s32.f32 %v741
      %744 = vmin.xlane.f32.xlu0 %v743
      %v745 = vpop.xlane.xlu0 %744
      %vm746 = vcmp.eq.f32.partialorder %v743, %v745
      %v747 = vsel %vm746, %v742, inf
      %748 = vmin.xlane.f32.xlu0 %v747
      %v749 = vpop.xlane.xlu0 %748
      %v750 = vcvt.f32.s32 %v749
      %v751 = vcvt.f32.s32 %v745
      %v752 = vshll.u32 %v751, 16
      %v753 = vadd.s32 %v752, %v750
      %v754 = vsel %vm558, %v708, 2147483647
      %vm755 = vcmp.lt.s32.totalorder %v707, %v754
      %v756 = vsel %vm755, %v707, %v754
      %v757 = vand.u32 %v756, 65535
      %v758 = vshra.s32 %v756, 16
      %v759 = vcvt.s32.f32 %v757
      %v760 = vcvt.s32.f32 %v758
      %761 = vmin.xlane.f32.xlu0 %v760
      %v762 = vpop.xlane.xlu0 %761
      %vm763 = vcmp.eq.f32.partialorder %v760, %v762
      %v764 = vsel %vm763, %v759, inf
      %765 = vmin.xlane.f32.xlu0 %v764
      %v766 = vpop.xlane.xlu0 %765
      %v767 = vcvt.f32.s32 %v766
      %v768 = vcvt.f32.s32 %v762
      %v769 = vshll.u32 %v768, 16
      %v770 = vadd.s32 %v769, %v767
      %v771 = vsel %vm558, %v710, 2147483647
      %vm772 = vcmp.lt.s32.totalorder %v709, %v771
      %v773 = vsel %vm772, %v709, %v771
      %v774 = vand.u32 %v773, 65535
      %v775 = vshra.s32 %v773, 16
      %v776 = vcvt.s32.f32 %v774
      %v777 = vcvt.s32.f32 %v775
      %778 = vmin.xlane.f32.xlu0 %v777
      %v779 = vpop.xlane.xlu0 %778
      %vm780 = vcmp.eq.f32.partialorder %v777, %v779
      %v781 = vsel %vm780, %v776, inf
      %782 = vmin.xlane.f32.xlu0 %v781
      %v783 = vpop.xlane.xlu0 %782
      %v784 = vcvt.f32.s32 %v783
      %v785 = vcvt.f32.s32 %v779
      %v786 = vshll.u32 %v785, 16
      %v787 = vadd.s32 %v786, %v784
      %v788 = vsel %vm558, %v712, 2147483647
      %vm789 = vcmp.lt.s32.totalorder %v711, %v788
      %v790 = vsel %vm789, %v711, %v788
      %v791 = vand.u32 %v790, 65535
      %v792 = vshra.s32 %v790, 16
      %v793 = vcvt.s32.f32 %v791
      %v794 = vcvt.s32.f32 %v792
      %795 = vmin.xlane.f32.xlu0 %v794
      %v796 = vpop.xlane.xlu0 %795
      %vm797 = vcmp.eq.f32.partialorder %v794, %v796
      %v798 = vsel %vm797, %v793, inf
      %799 = vmin.xlane.f32.xlu0 %v798
      %v800 = vpop.xlane.xlu0 %799
      %v801 = vcvt.f32.s32 %v800
      %v802 = vcvt.f32.s32 %v796
      %v803 = vshll.u32 %v802, 16
      %v804 = vadd.s32 %v803, %v801
      %v805 = vsel %vm558, %v714, 2147483647
      %vm806 = vcmp.lt.s32.totalorder %v713, %v805
      %v807 = vsel %vm806, %v713, %v805
      %v808 = vand.u32 %v807, 65535
      %v809 = vshra.s32 %v807, 16
      %v810 = vcvt.s32.f32 %v808
      %v811 = vcvt.s32.f32 %v809
      %812 = vmin.xlane.f32.xlu0 %v811
      %v813 = vpop.xlane.xlu0 %812
      %vm814 = vcmp.eq.f32.partialorder %v811, %v813
      %v815 = vsel %vm814, %v810, inf
      %816 = vmin.xlane.f32.xlu0 %v815
      %v817 = vpop.xlane.xlu0 %816
      %v818 = vcvt.f32.s32 %v817
      %v819 = vcvt.f32.s32 %v813
      %v820 = vshll.u32 %v819, 16
      %v821 = vadd.s32 %v820, %v818
      %v822 = vsel %vm558, %v716, 2147483647
      %vm823 = vcmp.lt.s32.totalorder %v715, %v822
      %v824 = vsel %vm823, %v715, %v822
      %v825 = vand.u32 %v824, 65535
      %v826 = vshra.s32 %v824, 16
      %v827 = vcvt.s32.f32 %v825
      %v828 = vcvt.s32.f32 %v826
      %829 = vmin.xlane.f32.xlu0 %v828
      %v830 = vpop.xlane.xlu0 %829
      %vm831 = vcmp.eq.f32.partialorder %v828, %v830
      %v832 = vsel %vm831, %v827, inf
      %833 = vmin.xlane.f32.xlu0 %v832
      %v834 = vpop.xlane.xlu0 %833
      %v835 = vcvt.f32.s32 %v834
      %v836 = vcvt.f32.s32 %v830
      %v837 = vshll.u32 %v836, 16
      %v838 = vadd.s32 %v837, %v835
      %v839 = vsel %vm558, %v718, 2147483647
      %vm840 = vcmp.lt.s32.totalorder %v717, %v839
      %v841 = vsel %vm840, %v717, %v839
      %v842 = vand.u32 %v841, 65535
      %v843 = vshra.s32 %v841, 16
      %v844 = vcvt.s32.f32 %v842
      %v845 = vcvt.s32.f32 %v843
      %846 = vmin.xlane.f32.xlu0 %v845
      %v847 = vpop.xlane.xlu0 %846
      %vm848 = vcmp.eq.f32.partialorder %v845, %v847
      %v849 = vsel %vm848, %v844, inf
      %850 = vmin.xlane.f32.xlu0 %v849
      %v851 = vpop.xlane.xlu0 %850
      %v852 = vcvt.f32.s32 %v851
      %v853 = vcvt.f32.s32 %v847
      %v854 = vshll.u32 %v853, 16
      %v855 = vadd.s32 %v854, %v852
      %v856 = vsel %vm558, %v720, 2147483647
      %vm857 = vcmp.lt.s32.totalorder %v719, %v856
      %v858 = vsel %vm857, %v719, %v856
      %v859 = vand.u32 %v858, 65535
      %v860 = vshra.s32 %v858, 16
      %v861 = vcvt.s32.f32 %v859
      %v862 = vcvt.s32.f32 %v860
      %863 = vmin.xlane.f32.xlu0 %v862
      %v864 = vpop.xlane.xlu0 %863
      %vm865 = vcmp.eq.f32.partialorder %v862, %v864
      %v866 = vsel %vm865, %v861, inf
      %867 = vmin.xlane.f32.xlu0 %v866
      %v868 = vpop.xlane.xlu0 %867
      %v869 = vcvt.f32.s32 %v868
      %v870 = vcvt.f32.s32 %v864
      %v871 = vshll.u32 %v870, 16
      %v872 = vadd.s32 %v871, %v869
      %v873 = vsel %vm558, %v722, 2147483647
      %vm874 = vcmp.lt.s32.totalorder %v721, %v873
      %v875 = vsel %vm874, %v721, %v873
      %v876 = vand.u32 %v875, 65535
      %v877 = vshra.s32 %v875, 16
      %v878 = vcvt.s32.f32 %v876
      %v879 = vcvt.s32.f32 %v877
      %880 = vmin.xlane.f32.xlu0 %v879
      %v881 = vpop.xlane.xlu0 %880
      %vm882 = vcmp.eq.f32.partialorder %v879, %v881
      %v883 = vsel %vm882, %v878, inf
      %884 = vmin.xlane.f32.xlu0 %v883
      %v885 = vpop.xlane.xlu0 %884
      %v886 = vcvt.f32.s32 %v885
      %v887 = vcvt.f32.s32 %v881
      %v888 = vshll.u32 %v887, 16
      %v889 = vadd.s32 %v888, %v886
      %v890 = vsel %vm558, %v724, 2147483647
      %vm891 = vcmp.lt.s32.totalorder %v723, %v890
      %v892 = vsel %vm891, %v723, %v890
      %v893 = vand.u32 %v892, 65535
      %v894 = vshra.s32 %v892, 16
      %v895 = vcvt.s32.f32 %v893
      %v896 = vcvt.s32.f32 %v894
      %897 = vmin.xlane.f32.xlu0 %v896
      %v898 = vpop.xlane.xlu0 %897
      %vm899 = vcmp.eq.f32.partialorder %v896, %v898
      %v900 = vsel %vm899, %v895, inf
      %901 = vmin.xlane.f32.xlu0 %v900
      %v902 = vpop.xlane.xlu0 %901
      %v903 = vcvt.f32.s32 %v902
      %v904 = vcvt.f32.s32 %v898
      %v905 = vshll.u32 %v904, 16
      %v906 = vadd.s32 %v905, %v903
      %v907 = vsel %vm558, %v726, 2147483647
      %vm908 = vcmp.lt.s32.totalorder %v725, %v907
      %v909 = vsel %vm908, %v725, %v907
      %v910 = vand.u32 %v909, 65535
      %v911 = vshra.s32 %v909, 16
      %v912 = vcvt.s32.f32 %v910
      %v913 = vcvt.s32.f32 %v911
      %914 = vmin.xlane.f32.xlu0 %v913
      %v915 = vpop.xlane.xlu0 %914
      %vm916 = vcmp.eq.f32.partialorder %v913, %v915
      %v917 = vsel %vm916, %v912, inf
      %918 = vmin.xlane.f32.xlu0 %v917
      %v919 = vpop.xlane.xlu0 %918
      %v920 = vcvt.f32.s32 %v919
      %v921 = vcvt.f32.s32 %v915
      %v922 = vshll.u32 %v921, 16
      %v923 = vadd.s32 %v922, %v920
      %v924 = vsel %vm558, %v728, 2147483647
      %vm925 = vcmp.lt.s32.totalorder %v727, %v924
      %v926 = vsel %vm925, %v727, %v924
      %v927 = vand.u32 %v926, 65535
      %v928 = vshra.s32 %v926, 16
      %v929 = vcvt.s32.f32 %v927
      %v930 = vcvt.s32.f32 %v928
      %931 = vmin.xlane.f32.xlu0 %v930
      %v932 = vpop.xlane.xlu0 %931
      %vm933 = vcmp.eq.f32.partialorder %v930, %v932
      %v934 = vsel %vm933, %v929, inf
      %935 = vmin.xlane.f32.xlu0 %v934
      %v936 = vpop.xlane.xlu0 %935
      %v937 = vcvt.f32.s32 %v936
      %v938 = vcvt.f32.s32 %v932
      %v939 = vshll.u32 %v938, 16
      %v940 = vadd.s32 %v939, %v937
      %v941 = vsel %vm558, %v730, 2147483647
      %vm942 = vcmp.lt.s32.totalorder %v729, %v941
      %v943 = vsel %vm942, %v729, %v941
      %v944 = vand.u32 %v943, 65535
      %v945 = vshra.s32 %v943, 16
      %v946 = vcvt.s32.f32 %v944
      %v947 = vcvt.s32.f32 %v945
      %948 = vmin.xlane.f32.xlu0 %v947
      %v949 = vpop.xlane.xlu0 %948
      %vm950 = vcmp.eq.f32.partialorder %v947, %v949
      %v951 = vsel %vm950, %v946, inf
      %952 = vmin.xlane.f32.xlu0 %v951
      %v953 = vpop.xlane.xlu0 %952
      %v954 = vcvt.f32.s32 %v953
      %v955 = vcvt.f32.s32 %v949
      %v956 = vshll.u32 %v955, 16
      %v957 = vadd.s32 %v956, %v954
      %v958 = vsel %vm558, %v732, 2147483647
      %vm959 = vcmp.lt.s32.totalorder %v731, %v958
      %v960 = vsel %vm959, %v731, %v958
      %v961 = vand.u32 %v960, 65535
      %v962 = vshra.s32 %v960, 16
      %v963 = vcvt.s32.f32 %v961
      %v964 = vcvt.s32.f32 %v962
      %965 = vmin.xlane.f32.xlu0 %v964
      %v966 = vpop.xlane.xlu0 %965
      %vm967 = vcmp.eq.f32.partialorder %v964, %v966
      %v968 = vsel %vm967, %v963, inf
      %969 = vmin.xlane.f32.xlu0 %v968
      %v970 = vpop.xlane.xlu0 %969
      %v971 = vcvt.f32.s32 %v970
      %v972 = vcvt.f32.s32 %v966
      %v973 = vshll.u32 %v972, 16
      %v974 = vadd.s32 %v973, %v971
      %v975 = vsel %vm558, %v734, 2147483647
      %vm976 = vcmp.lt.s32.totalorder %v733, %v975
      %v977 = vsel %vm976, %v733, %v975
      %v978 = vand.u32 %v977, 65535
      %v979 = vshra.s32 %v977, 16
      %v980 = vcvt.s32.f32 %v978
      %v981 = vcvt.s32.f32 %v979
      %982 = vmin.xlane.f32.xlu0 %v981
      %v983 = vpop.xlane.xlu0 %982
      %vm984 = vcmp.eq.f32.partialorder %v981, %v983
      %v985 = vsel %vm984, %v980, inf
      %986 = vmin.xlane.f32.xlu0 %v985
      %v987 = vpop.xlane.xlu0 %986
      %v988 = vcvt.f32.s32 %v987
      %v989 = vcvt.f32.s32 %v983
      %v990 = vshll.u32 %v989, 16
      %v991 = vadd.s32 %v990, %v988
      %v992 = vsel %vm558, %v736, 2147483647
      %vm993 = vcmp.lt.s32.totalorder %v735, %v992
      %v994 = vsel %vm993, %v735, %v992
      %v995 = vand.u32 %v994, 65535
      %v996 = vshra.s32 %v994, 16
      %v997 = vcvt.s32.f32 %v995
      %v998 = vcvt.s32.f32 %v996
      %999 = vmin.xlane.f32.xlu0 %v998
      %v1000 = vpop.xlane.xlu0 %999
      %vm1001 = vcmp.eq.f32.partialorder %v998, %v1000
      %v1002 = vsel %vm1001, %v997, inf
      %1003 = vmin.xlane.f32.xlu0 %v1002
      %v1004 = vpop.xlane.xlu0 %1003
      %v1005 = vcvt.f32.s32 %v1004
      %v1006 = vcvt.f32.s32 %v1000
      %v1007 = vshll.u32 %v1006, 16
      %v1008 = vadd.s32 %v1007, %v1005
      %vm1009 = vcmp.eq.s32.totalorder %v593, %v753
      %vm1010 = vcmp.eq.s32.totalorder %v592, %v753
      %vm1011 = vcmp.eq.s32.totalorder %v594, %v770
      %vm1012 = vcmp.eq.s32.totalorder %v592, %v770
      %vm1013 = vcmp.eq.s32.totalorder %v595, %v787
      %vm1014 = vcmp.eq.s32.totalorder %v592, %v787
      %vm1015 = vcmp.eq.s32.totalorder %v596, %v804
      %vm1016 = vcmp.eq.s32.totalorder %v592, %v804
      %vm1017 = vcmp.eq.s32.totalorder %v597, %v821
      %vm1018 = vcmp.eq.s32.totalorder %v592, %v821
      %vm1019 = vcmp.eq.s32.totalorder %v598, %v838
      %vm1020 = vcmp.eq.s32.totalorder %v592, %v838
      %vm1021 = vcmp.eq.s32.totalorder %v599, %v855
      %vm1022 = vcmp.eq.s32.totalorder %v592, %v855
      %vm1023 = vcmp.eq.s32.totalorder %v600, %v872
      %vm1024 = vcmp.eq.s32.totalorder %v592, %v872
      %vm1025 = vcmp.eq.s32.totalorder %v601, %v889
      %vm1026 = vcmp.eq.s32.totalorder %v592, %v889
      %vm1027 = vcmp.eq.s32.totalorder %v602, %v906
      %vm1028 = vcmp.eq.s32.totalorder %v592, %v906
      %vm1029 = vcmp.eq.s32.totalorder %v603, %v923
      %vm1030 = vcmp.eq.s32.totalorder %v592, %v923
      %vm1031 = vcmp.eq.s32.totalorder %v604, %v940
      %vm1032 = vcmp.eq.s32.totalorder %v592, %v940
      %vm1033 = vcmp.eq.s32.totalorder %v605, %v957
      %vm1034 = vcmp.eq.s32.totalorder %v592, %v957
      %vm1035 = vcmp.eq.s32.totalorder %v606, %v974
      %vm1036 = vcmp.eq.s32.totalorder %v592, %v974
      %vm1037 = vcmp.eq.s32.totalorder %v607, %v991
      %vm1038 = vcmp.eq.s32.totalorder %v592, %v991
      %vm1039 = vcmp.eq.s32.totalorder %v608, %v1008
      %vm1040 = vcmp.eq.s32.totalorder %v592, %v1008
      %v1041 = vsel %vm1009, -inf, %v559
      %v1042 = vsel %vm1010, -inf, %v511
      %v1043 = vsel %vm1011, -inf, %v560
      %v1044 = vsel %vm1012, -inf, %v513
      %v1045 = vsel %vm1013, -inf, %v561
      %v1046 = vsel %vm1014, -inf, %v515
      %v1047 = vsel %vm1015, -inf, %v562
      %v1048 = vsel %vm1016, -inf, %v517
      %v1049 = vsel %vm1017, -inf, %v563
      %v1050 = vsel %vm1018, -inf, %v519
      %v1051 = vsel %vm1019, -inf, %v564
      %v1052 = vsel %vm1020, -inf, %v521
      %v1053 = vsel %vm1021, -inf, %v565
      %v1054 = vsel %vm1022, -inf, %v523
      %v1055 = vsel %vm1023, -inf, %v566
      %v1056 = vsel %vm1024, -inf, %v525
      %v1057 = vsel %vm1025, -inf, %v567
      %v1058 = vsel %vm1026, -inf, %v527
      %v1059 = vsel %vm1027, -inf, %v568
      %v1060 = vsel %vm1028, -inf, %v529
      %v1061 = vsel %vm1029, -inf, %v569
      %v1062 = vsel %vm1030, -inf, %v531
      %v1063 = vsel %vm1031, -inf, %v570
      %v1064 = vsel %vm1032, -inf, %v533
      %v1065 = vsel %vm1033, -inf, %v571
      %v1066 = vsel %vm1034, -inf, %v535
      %v1067 = vsel %vm1035, -inf, %v572
      %v1068 = vsel %vm1036, -inf, %v537
      %v1069 = vsel %vm1037, -inf, %v573
      %v1070 = vsel %vm1038, -inf, %v539
      %v1071 = vsel %vm1039, -inf, %v574
      %v1072 = vsel %vm1040, -inf, %v541
      %v1073 = vsel %vm558, %v1042, -inf
      %v1074 = vmax.f32 %v1041, %v1073
      %1075 = vmax.xlane.f32.xlu0 %v1074
      %v1076 = vpop.xlane.xlu0 %1075
      %v1077 = vsel %vm558, %v1044, -inf
      %v1078 = vmax.f32 %v1043, %v1077
      %1079 = vmax.xlane.f32.xlu0 %v1078
      %v1080 = vpop.xlane.xlu0 %1079
      %v1081 = vsel %vm558, %v1046, -inf
      %v1082 = vmax.f32 %v1045, %v1081
      %1083 = vmax.xlane.f32.xlu0 %v1082
      %v1084 = vpop.xlane.xlu0 %1083
      %v1085 = vsel %vm558, %v1048, -inf
      %v1086 = vmax.f32 %v1047, %v1085
      %1087 = vmax.xlane.f32.xlu0 %v1086
      %v1088 = vpop.xlane.xlu0 %1087
      %v1089 = vsel %vm558, %v1050, -inf
      %v1090 = vmax.f32 %v1049, %v1089
      %1091 = vmax.xlane.f32.xlu0 %v1090
      %v1092 = vpop.xlane.xlu0 %1091
      %v1093 = vsel %vm558, %v1052, -inf
      %v1094 = vmax.f32 %v1051, %v1093
      %1095 = vmax.xlane.f32.xlu0 %v1094
      %v1096 = vpop.xlane.xlu0 %1095
      %v1097 = vsel %vm558, %v1054, -inf
      %v1098 = vmax.f32 %v1053, %v1097
      %1099 = vmax.xlane.f32.xlu0 %v1098
      %v1100 = vpop.xlane.xlu0 %1099
      %v1101 = vsel %vm558, %v1056, -inf
      %v1102 = vmax.f32 %v1055, %v1101
      %1103 = vmax.xlane.f32.xlu0 %v1102
      %v1104 = vpop.xlane.xlu0 %1103
      %v1105 = vsel %vm558, %v1058, -inf
      %v1106 = vmax.f32 %v1057, %v1105
      %1107 = vmax.xlane.f32.xlu0 %v1106
      %v1108 = vpop.xlane.xlu0 %1107
      %v1109 = vsel %vm558, %v1060, -inf
      %v1110 = vmax.f32 %v1059, %v1109
      %1111 = vmax.xlane.f32.xlu0 %v1110
      %v1112 = vpop.xlane.xlu0 %1111
      %v1113 = vsel %vm558, %v1062, -inf
      %v1114 = vmax.f32 %v1061, %v1113
      %1115 = vmax.xlane.f32.xlu0 %v1114
      %v1116 = vpop.xlane.xlu0 %1115
      %v1117 = vsel %vm558, %v1064, -inf
      %v1118 = vmax.f32 %v1063, %v1117
      %1119 = vmax.xlane.f32.xlu0 %v1118
      %v1120 = vpop.xlane.xlu0 %1119
      %v1121 = vsel %vm558, %v1066, -inf
      %v1122 = vmax.f32 %v1065, %v1121
      %1123 = vmax.xlane.f32.xlu0 %v1122
      %v1124 = vpop.xlane.xlu0 %1123
      %v1125 = vsel %vm558, %v1068, -inf
      %v1126 = vmax.f32 %v1067, %v1125
      %1127 = vmax.xlane.f32.xlu0 %v1126
      %v1128 = vpop.xlane.xlu0 %1127
      %v1129 = vsel %vm558, %v1070, -inf
      %v1130 = vmax.f32 %v1069, %v1129
      %1131 = vmax.xlane.f32.xlu0 %v1130
      %v1132 = vpop.xlane.xlu0 %1131
      %v1133 = vsel %vm558, %v1072, -inf
      %v1134 = vmax.f32 %v1071, %v1133
      %1135 = vmax.xlane.f32.xlu0 %v1134
      %v1136 = vpop.xlane.xlu0 %1135
      %vm1137 = vcmp.ge.f32.partialorder %v1041, %v1076
      %vm1138 = vcmp.ge.f32.partialorder %v1042, %v1076
      %vm1139 = vcmp.ge.f32.partialorder %v1043, %v1080
      %vm1140 = vcmp.ge.f32.partialorder %v1044, %v1080
      %vm1141 = vcmp.ge.f32.partialorder %v1045, %v1084
      %vm1142 = vcmp.ge.f32.partialorder %v1046, %v1084
      %vm1143 = vcmp.ge.f32.partialorder %v1047, %v1088
      %vm1144 = vcmp.ge.f32.partialorder %v1048, %v1088
      %vm1145 = vcmp.ge.f32.partialorder %v1049, %v1092
      %vm1146 = vcmp.ge.f32.partialorder %v1050, %v1092
      %vm1147 = vcmp.ge.f32.partialorder %v1051, %v1096
      %vm1148 = vcmp.ge.f32.partialorder %v1052, %v1096
      %vm1149 = vcmp.ge.f32.partialorder %v1053, %v1100
      %vm1150 = vcmp.ge.f32.partialorder %v1054, %v1100
      %vm1151 = vcmp.ge.f32.partialorder %v1055, %v1104
      %vm1152 = vcmp.ge.f32.partialorder %v1056, %v1104
      %vm1153 = vcmp.ge.f32.partialorder %v1057, %v1108
      %vm1154 = vcmp.ge.f32.partialorder %v1058, %v1108
      %vm1155 = vcmp.ge.f32.partialorder %v1059, %v1112
      %vm1156 = vcmp.ge.f32.partialorder %v1060, %v1112
      %vm1157 = vcmp.ge.f32.partialorder %v1061, %v1116
      %vm1158 = vcmp.ge.f32.partialorder %v1062, %v1116
      %vm1159 = vcmp.ge.f32.partialorder %v1063, %v1120
      %vm1160 = vcmp.ge.f32.partialorder %v1064, %v1120
      %vm1161 = vcmp.ge.f32.partialorder %v1065, %v1124
      %vm1162 = vcmp.ge.f32.partialorder %v1066, %v1124
      %vm1163 = vcmp.ge.f32.partialorder %v1067, %v1128
      %vm1164 = vcmp.ge.f32.partialorder %v1068, %v1128
      %vm1165 = vcmp.ge.f32.partialorder %v1069, %v1132
      %vm1166 = vcmp.ge.f32.partialorder %v1070, %v1132
      %vm1167 = vcmp.ge.f32.partialorder %v1071, %v1136
      %vm1168 = vcmp.ge.f32.partialorder %v1072, %v1136
      %v1169 = vsel %vm1137, %v593, 1073741824
      %v1170 = vsel %vm1138, %v592, 1073741824
      %v1171 = vsel %vm1139, %v594, 1073741824
      %v1172 = vsel %vm1140, %v592, 1073741824
      %v1173 = vsel %vm1141, %v595, 1073741824
      %v1174 = vsel %vm1142, %v592, 1073741824
      %v1175 = vsel %vm1143, %v596, 1073741824
      %v1176 = vsel %vm1144, %v592, 1073741824
      %v1177 = vsel %vm1145, %v597, 1073741824
      %v1178 = vsel %vm1146, %v592, 1073741824
      %v1179 = vsel %vm1147, %v598, 1073741824
      %v1180 = vsel %vm1148, %v592, 1073741824
      %v1181 = vsel %vm1149, %v599, 1073741824
      %v1182 = vsel %vm1150, %v592, 1073741824
      %v1183 = vsel %vm1151, %v600, 1073741824
      %v1184 = vsel %vm1152, %v592, 1073741824
      %v1185 = vsel %vm1153, %v601, 1073741824
      %v1186 = vsel %vm1154, %v592, 1073741824
      %v1187 = vsel %vm1155, %v602, 1073741824
      %v1188 = vsel %vm1156, %v592, 1073741824
      %v1189 = vsel %vm1157, %v603, 1073741824
      %v1190 = vsel %vm1158, %v592, 1073741824
      %v1191 = vsel %vm1159, %v604, 1073741824
      %v1192 = vsel %vm1160, %v592, 1073741824
      %v1193 = vsel %vm1161, %v605, 1073741824
      %v1194 = vsel %vm1162, %v592, 1073741824
      %v1195 = vsel %vm1163, %v606, 1073741824
      %v1196 = vsel %vm1164, %v592, 1073741824
      %v1197 = vsel %vm1165, %v607, 1073741824
      %v1198 = vsel %vm1166, %v592, 1073741824
      %v1199 = vsel %vm1167, %v608, 1073741824
      %v1200 = vsel %vm1168, %v592, 1073741824
      %v1201 = vsel %vm558, %v1170, 2147483647
      %vm1202 = vcmp.lt.s32.totalorder %v1169, %v1201
      %v1203 = vsel %vm1202, %v1169, %v1201
      %v1204 = vand.u32 %v1203, 65535
      %v1205 = vshra.s32 %v1203, 16
      %v1206 = vcvt.s32.f32 %v1204
      %v1207 = vcvt.s32.f32 %v1205
      %1208 = vmin.xlane.f32.xlu0 %v1207
      %v1209 = vpop.xlane.xlu0 %1208
      %vm1210 = vcmp.eq.f32.partialorder %v1207, %v1209
      %v1211 = vsel %vm1210, %v1206, inf
      %1212 = vmin.xlane.f32.xlu0 %v1211
      %v1213 = vpop.xlane.xlu0 %1212
      %v1214 = vcvt.f32.s32 %v1213
      %v1215 = vcvt.f32.s32 %v1209
      %v1216 = vshll.u32 %v1215, 16
      %v1217 = vadd.s32 %v1216, %v1214
      %v1218 = vsel %vm558, %v1172, 2147483647
      %vm1219 = vcmp.lt.s32.totalorder %v1171, %v1218
      %v1220 = vsel %vm1219, %v1171, %v1218
      %v1221 = vand.u32 %v1220, 65535
      %v1222 = vshra.s32 %v1220, 16
      %v1223 = vcvt.s32.f32 %v1221
      %v1224 = vcvt.s32.f32 %v1222
      %1225 = vmin.xlane.f32.xlu0 %v1224
      %v1226 = vpop.xlane.xlu0 %1225
      %vm1227 = vcmp.eq.f32.partialorder %v1224, %v1226
      %v1228 = vsel %vm1227, %v1223, inf
      %1229 = vmin.xlane.f32.xlu0 %v1228
      %v1230 = vpop.xlane.xlu0 %1229
      %v1231 = vcvt.f32.s32 %v1230
      %v1232 = vcvt.f32.s32 %v1226
      %v1233 = vshll.u32 %v1232, 16
      %v1234 = vadd.s32 %v1233, %v1231
      %v1235 = vsel %vm558, %v1174, 2147483647
      %vm1236 = vcmp.lt.s32.totalorder %v1173, %v1235
      %v1237 = vsel %vm1236, %v1173, %v1235
      %v1238 = vand.u32 %v1237, 65535
      %v1239 = vshra.s32 %v1237, 16
      %v1240 = vcvt.s32.f32 %v1238
      %v1241 = vcvt.s32.f32 %v1239
      %1242 = vmin.xlane.f32.xlu0 %v1241
      %v1243 = vpop.xlane.xlu0 %1242
      %vm1244 = vcmp.eq.f32.partialorder %v1241, %v1243
      %v1245 = vsel %vm1244, %v1240, inf
      %1246 = vmin.xlane.f32.xlu0 %v1245
      %v1247 = vpop.xlane.xlu0 %1246
      %v1248 = vcvt.f32.s32 %v1247
      %v1249 = vcvt.f32.s32 %v1243
      %v1250 = vshll.u32 %v1249, 16
      %v1251 = vadd.s32 %v1250, %v1248
      %v1252 = vsel %vm558, %v1176, 2147483647
      %vm1253 = vcmp.lt.s32.totalorder %v1175, %v1252
      %v1254 = vsel %vm1253, %v1175, %v1252
      %v1255 = vand.u32 %v1254, 65535
      %v1256 = vshra.s32 %v1254, 16
      %v1257 = vcvt.s32.f32 %v1255
      %v1258 = vcvt.s32.f32 %v1256
      %1259 = vmin.xlane.f32.xlu0 %v1258
      %v1260 = vpop.xlane.xlu0 %1259
      %vm1261 = vcmp.eq.f32.partialorder %v1258, %v1260
      %v1262 = vsel %vm1261, %v1257, inf
      %1263 = vmin.xlane.f32.xlu0 %v1262
      %v1264 = vpop.xlane.xlu0 %1263
      %v1265 = vcvt.f32.s32 %v1264
      %v1266 = vcvt.f32.s32 %v1260
      %v1267 = vshll.u32 %v1266, 16
      %v1268 = vadd.s32 %v1267, %v1265
      %v1269 = vsel %vm558, %v1178, 2147483647
      %vm1270 = vcmp.lt.s32.totalorder %v1177, %v1269
      %v1271 = vsel %vm1270, %v1177, %v1269
      %v1272 = vand.u32 %v1271, 65535
      %v1273 = vshra.s32 %v1271, 16
      %v1274 = vcvt.s32.f32 %v1272
      %v1275 = vcvt.s32.f32 %v1273
      %1276 = vmin.xlane.f32.xlu0 %v1275
      %v1277 = vpop.xlane.xlu0 %1276
      %vm1278 = vcmp.eq.f32.partialorder %v1275, %v1277
      %v1279 = vsel %vm1278, %v1274, inf
      %1280 = vmin.xlane.f32.xlu0 %v1279
      %v1281 = vpop.xlane.xlu0 %1280
      %v1282 = vcvt.f32.s32 %v1281
      %v1283 = vcvt.f32.s32 %v1277
      %v1284 = vshll.u32 %v1283, 16
      %v1285 = vadd.s32 %v1284, %v1282
      %v1286 = vsel %vm558, %v1180, 2147483647
      %vm1287 = vcmp.lt.s32.totalorder %v1179, %v1286
      %v1288 = vsel %vm1287, %v1179, %v1286
      %v1289 = vand.u32 %v1288, 65535
      %v1290 = vshra.s32 %v1288, 16
      %v1291 = vcvt.s32.f32 %v1289
      %v1292 = vcvt.s32.f32 %v1290
      %1293 = vmin.xlane.f32.xlu0 %v1292
      %v1294 = vpop.xlane.xlu0 %1293
      %vm1295 = vcmp.eq.f32.partialorder %v1292, %v1294
      %v1296 = vsel %vm1295, %v1291, inf
      %1297 = vmin.xlane.f32.xlu0 %v1296
      %v1298 = vpop.xlane.xlu0 %1297
      %v1299 = vcvt.f32.s32 %v1298
      %v1300 = vcvt.f32.s32 %v1294
      %v1301 = vshll.u32 %v1300, 16
      %v1302 = vadd.s32 %v1301, %v1299
      %v1303 = vsel %vm558, %v1182, 2147483647
      %vm1304 = vcmp.lt.s32.totalorder %v1181, %v1303
      %v1305 = vsel %vm1304, %v1181, %v1303
      %v1306 = vand.u32 %v1305, 65535
      %v1307 = vshra.s32 %v1305, 16
      %v1308 = vcvt.s32.f32 %v1306
      %v1309 = vcvt.s32.f32 %v1307
      %1310 = vmin.xlane.f32.xlu0 %v1309
      %v1311 = vpop.xlane.xlu0 %1310
      %vm1312 = vcmp.eq.f32.partialorder %v1309, %v1311
      %v1313 = vsel %vm1312, %v1308, inf
      %1314 = vmin.xlane.f32.xlu0 %v1313
      %v1315 = vpop.xlane.xlu0 %1314
      %v1316 = vcvt.f32.s32 %v1315
      %v1317 = vcvt.f32.s32 %v1311
      %v1318 = vshll.u32 %v1317, 16
      %v1319 = vadd.s32 %v1318, %v1316
      %v1320 = vsel %vm558, %v1184, 2147483647
      %vm1321 = vcmp.lt.s32.totalorder %v1183, %v1320
      %v1322 = vsel %vm1321, %v1183, %v1320
      %v1323 = vand.u32 %v1322, 65535
      %v1324 = vshra.s32 %v1322, 16
      %v1325 = vcvt.s32.f32 %v1323
      %v1326 = vcvt.s32.f32 %v1324
      %1327 = vmin.xlane.f32.xlu0 %v1326
      %v1328 = vpop.xlane.xlu0 %1327
      %vm1329 = vcmp.eq.f32.partialorder %v1326, %v1328
      %v1330 = vsel %vm1329, %v1325, inf
      %1331 = vmin.xlane.f32.xlu0 %v1330
      %v1332 = vpop.xlane.xlu0 %1331
      %v1333 = vcvt.f32.s32 %v1332
      %v1334 = vcvt.f32.s32 %v1328
      %v1335 = vshll.u32 %v1334, 16
      %v1336 = vadd.s32 %v1335, %v1333
      %v1337 = vsel %vm558, %v1186, 2147483647
      %vm1338 = vcmp.lt.s32.totalorder %v1185, %v1337
      %v1339 = vsel %vm1338, %v1185, %v1337
      %v1340 = vand.u32 %v1339, 65535
      %v1341 = vshra.s32 %v1339, 16
      %v1342 = vcvt.s32.f32 %v1340
      %v1343 = vcvt.s32.f32 %v1341
      %1344 = vmin.xlane.f32.xlu0 %v1343
      %v1345 = vpop.xlane.xlu0 %1344
      %vm1346 = vcmp.eq.f32.partialorder %v1343, %v1345
      %v1347 = vsel %vm1346, %v1342, inf
      %1348 = vmin.xlane.f32.xlu0 %v1347
      %v1349 = vpop.xlane.xlu0 %1348
      %v1350 = vcvt.f32.s32 %v1349
      %v1351 = vcvt.f32.s32 %v1345
      %v1352 = vshll.u32 %v1351, 16
      %v1353 = vadd.s32 %v1352, %v1350
      %v1354 = vsel %vm558, %v1188, 2147483647
      %vm1355 = vcmp.lt.s32.totalorder %v1187, %v1354
      %v1356 = vsel %vm1355, %v1187, %v1354
      %v1357 = vand.u32 %v1356, 65535
      %v1358 = vshra.s32 %v1356, 16
      %v1359 = vcvt.s32.f32 %v1357
      %v1360 = vcvt.s32.f32 %v1358
      %1361 = vmin.xlane.f32.xlu0 %v1360
      %v1362 = vpop.xlane.xlu0 %1361
      %vm1363 = vcmp.eq.f32.partialorder %v1360, %v1362
      %v1364 = vsel %vm1363, %v1359, inf
      %1365 = vmin.xlane.f32.xlu0 %v1364
      %v1366 = vpop.xlane.xlu0 %1365
      %v1367 = vcvt.f32.s32 %v1366
      %v1368 = vcvt.f32.s32 %v1362
      %v1369 = vshll.u32 %v1368, 16
      %v1370 = vadd.s32 %v1369, %v1367
      %v1371 = vsel %vm558, %v1190, 2147483647
      %vm1372 = vcmp.lt.s32.totalorder %v1189, %v1371
      %v1373 = vsel %vm1372, %v1189, %v1371
      %v1374 = vand.u32 %v1373, 65535
      %v1375 = vshra.s32 %v1373, 16
      %v1376 = vcvt.s32.f32 %v1374
      %v1377 = vcvt.s32.f32 %v1375
      %1378 = vmin.xlane.f32.xlu0 %v1377
      %v1379 = vpop.xlane.xlu0 %1378
      %vm1380 = vcmp.eq.f32.partialorder %v1377, %v1379
      %v1381 = vsel %vm1380, %v1376, inf
      %1382 = vmin.xlane.f32.xlu0 %v1381
      %v1383 = vpop.xlane.xlu0 %1382
      %v1384 = vcvt.f32.s32 %v1383
      %v1385 = vcvt.f32.s32 %v1379
      %v1386 = vshll.u32 %v1385, 16
      %v1387 = vadd.s32 %v1386, %v1384
      %v1388 = vsel %vm558, %v1192, 2147483647
      %vm1389 = vcmp.lt.s32.totalorder %v1191, %v1388
      %v1390 = vsel %vm1389, %v1191, %v1388
      %v1391 = vand.u32 %v1390, 65535
      %v1392 = vshra.s32 %v1390, 16
      %v1393 = vcvt.s32.f32 %v1391
      %v1394 = vcvt.s32.f32 %v1392
      %1395 = vmin.xlane.f32.xlu0 %v1394
      %v1396 = vpop.xlane.xlu0 %1395
      %vm1397 = vcmp.eq.f32.partialorder %v1394, %v1396
      %v1398 = vsel %vm1397, %v1393, inf
      %1399 = vmin.xlane.f32.xlu0 %v1398
      %v1400 = vpop.xlane.xlu0 %1399
      %v1401 = vcvt.f32.s32 %v1400
      %v1402 = vcvt.f32.s32 %v1396
      %v1403 = vshll.u32 %v1402, 16
      %v1404 = vadd.s32 %v1403, %v1401
      %v1405 = vsel %vm558, %v1194, 2147483647
      %vm1406 = vcmp.lt.s32.totalorder %v1193, %v1405
      %v1407 = vsel %vm1406, %v1193, %v1405
      %v1408 = vand.u32 %v1407, 65535
      %v1409 = vshra.s32 %v1407, 16
      %v1410 = vcvt.s32.f32 %v1408
      %v1411 = vcvt.s32.f32 %v1409
      %1412 = vmin.xlane.f32.xlu0 %v1411
      %v1413 = vpop.xlane.xlu0 %1412
      %vm1414 = vcmp.eq.f32.partialorder %v1411, %v1413
      %v1415 = vsel %vm1414, %v1410, inf
      %1416 = vmin.xlane.f32.xlu0 %v1415
      %v1417 = vpop.xlane.xlu0 %1416
      %v1418 = vcvt.f32.s32 %v1417
      %v1419 = vcvt.f32.s32 %v1413
      %v1420 = vshll.u32 %v1419, 16
      %v1421 = vadd.s32 %v1420, %v1418
      %v1422 = vsel %vm558, %v1196, 2147483647
      %vm1423 = vcmp.lt.s32.totalorder %v1195, %v1422
      %v1424 = vsel %vm1423, %v1195, %v1422
      %v1425 = vand.u32 %v1424, 65535
      %v1426 = vshra.s32 %v1424, 16
      %v1427 = vcvt.s32.f32 %v1425
      %v1428 = vcvt.s32.f32 %v1426
      %1429 = vmin.xlane.f32.xlu0 %v1428
      %v1430 = vpop.xlane.xlu0 %1429
      %vm1431 = vcmp.eq.f32.partialorder %v1428, %v1430
      %v1432 = vsel %vm1431, %v1427, inf
      %1433 = vmin.xlane.f32.xlu0 %v1432
      %v1434 = vpop.xlane.xlu0 %1433
      %v1435 = vcvt.f32.s32 %v1434
      %v1436 = vcvt.f32.s32 %v1430
      %v1437 = vshll.u32 %v1436, 16
      %v1438 = vadd.s32 %v1437, %v1435
      %v1439 = vsel %vm558, %v1198, 2147483647
      %vm1440 = vcmp.lt.s32.totalorder %v1197, %v1439
      %v1441 = vsel %vm1440, %v1197, %v1439
      %v1442 = vand.u32 %v1441, 65535
      %v1443 = vshra.s32 %v1441, 16
      %v1444 = vcvt.s32.f32 %v1442
      %v1445 = vcvt.s32.f32 %v1443
      %1446 = vmin.xlane.f32.xlu0 %v1445
      %v1447 = vpop.xlane.xlu0 %1446
      %vm1448 = vcmp.eq.f32.partialorder %v1445, %v1447
      %v1449 = vsel %vm1448, %v1444, inf
      %1450 = vmin.xlane.f32.xlu0 %v1449
      %v1451 = vpop.xlane.xlu0 %1450
      %v1452 = vcvt.f32.s32 %v1451
      %v1453 = vcvt.f32.s32 %v1447
      %v1454 = vshll.u32 %v1453, 16
      %v1455 = vadd.s32 %v1454, %v1452
      %v1456 = vsel %vm558, %v1200, 2147483647
      %vm1457 = vcmp.lt.s32.totalorder %v1199, %v1456
      %v1458 = vsel %vm1457, %v1199, %v1456
      %v1459 = vand.u32 %v1458, 65535
      %v1460 = vshra.s32 %v1458, 16
      %v1461 = vcvt.s32.f32 %v1459
      %v1462 = vcvt.s32.f32 %v1460
      %1463 = vmin.xlane.f32.xlu0 %v1462
      %v1464 = vpop.xlane.xlu0 %1463
      %vm1465 = vcmp.eq.f32.partialorder %v1462, %v1464
      %v1466 = vsel %vm1465, %v1461, inf
      %1467 = vmin.xlane.f32.xlu0 %v1466
      %v1468 = vpop.xlane.xlu0 %1467
      %v1469 = vcvt.f32.s32 %v1468
      %v1470 = vcvt.f32.s32 %v1464
      %v1471 = vshll.u32 %v1470, 16
      %v1472 = vadd.s32 %v1471, %v1469
      %vm1473 = vcmp.eq.s32.totalorder %v593, %v1217
      %vm1474 = vcmp.eq.s32.totalorder %v592, %v1217
      %vm1475 = vcmp.eq.s32.totalorder %v594, %v1234
      %vm1476 = vcmp.eq.s32.totalorder %v592, %v1234
      %vm1477 = vcmp.eq.s32.totalorder %v595, %v1251
      %vm1478 = vcmp.eq.s32.totalorder %v592, %v1251
      %vm1479 = vcmp.eq.s32.totalorder %v596, %v1268
      %vm1480 = vcmp.eq.s32.totalorder %v592, %v1268
      %vm1481 = vcmp.eq.s32.totalorder %v597, %v1285
      %vm1482 = vcmp.eq.s32.totalorder %v592, %v1285
      %vm1483 = vcmp.eq.s32.totalorder %v598, %v1302
      %vm1484 = vcmp.eq.s32.totalorder %v592, %v1302
      %vm1485 = vcmp.eq.s32.totalorder %v599, %v1319
      %vm1486 = vcmp.eq.s32.totalorder %v592, %v1319
      %vm1487 = vcmp.eq.s32.totalorder %v600, %v1336
      %vm1488 = vcmp.eq.s32.totalorder %v592, %v1336
      %vm1489 = vcmp.eq.s32.totalorder %v601, %v1353
      %vm1490 = vcmp.eq.s32.totalorder %v592, %v1353
      %vm1491 = vcmp.eq.s32.totalorder %v602, %v1370
      %vm1492 = vcmp.eq.s32.totalorder %v592, %v1370
      %vm1493 = vcmp.eq.s32.totalorder %v603, %v1387
      %vm1494 = vcmp.eq.s32.totalorder %v592, %v1387
      %vm1495 = vcmp.eq.s32.totalorder %v604, %v1404
      %vm1496 = vcmp.eq.s32.totalorder %v592, %v1404
      %vm1497 = vcmp.eq.s32.totalorder %v605, %v1421
      %vm1498 = vcmp.eq.s32.totalorder %v592, %v1421
      %vm1499 = vcmp.eq.s32.totalorder %v606, %v1438
      %vm1500 = vcmp.eq.s32.totalorder %v592, %v1438
      %vm1501 = vcmp.eq.s32.totalorder %v607, %v1455
      %vm1502 = vcmp.eq.s32.totalorder %v592, %v1455
      %vm1503 = vcmp.eq.s32.totalorder %v608, %v1472
      %vm1504 = vcmp.eq.s32.totalorder %v592, %v1472
      %v1505 = vsel %vm1473, -inf, %v1041
      %v1506 = vsel %vm1474, -inf, %v1042
      %v1507 = vsel %vm1475, -inf, %v1043
      %v1508 = vsel %vm1476, -inf, %v1044
      %v1509 = vsel %vm1477, -inf, %v1045
      %v1510 = vsel %vm1478, -inf, %v1046
      %v1511 = vsel %vm1479, -inf, %v1047
      %v1512 = vsel %vm1480, -inf, %v1048
      %v1513 = vsel %vm1481, -inf, %v1049
      %v1514 = vsel %vm1482, -inf, %v1050
      %v1515 = vsel %vm1483, -inf, %v1051
      %v1516 = vsel %vm1484, -inf, %v1052
      %v1517 = vsel %vm1485, -inf, %v1053
      %v1518 = vsel %vm1486, -inf, %v1054
      %v1519 = vsel %vm1487, -inf, %v1055
      %v1520 = vsel %vm1488, -inf, %v1056
      %v1521 = vsel %vm1489, -inf, %v1057
      %v1522 = vsel %vm1490, -inf, %v1058
      %v1523 = vsel %vm1491, -inf, %v1059
      %v1524 = vsel %vm1492, -inf, %v1060
      %v1525 = vsel %vm1493, -inf, %v1061
      %v1526 = vsel %vm1494, -inf, %v1062
      %v1527 = vsel %vm1495, -inf, %v1063
      %v1528 = vsel %vm1496, -inf, %v1064
      %v1529 = vsel %vm1497, -inf, %v1065
      %v1530 = vsel %vm1498, -inf, %v1066
      %v1531 = vsel %vm1499, -inf, %v1067
      %v1532 = vsel %vm1500, -inf, %v1068
      %v1533 = vsel %vm1501, -inf, %v1069
      %v1534 = vsel %vm1502, -inf, %v1070
      %v1535 = vsel %vm1503, -inf, %v1071
      %v1536 = vsel %vm1504, -inf, %v1072
      %v1537 = vsel %vm558, %v1506, -inf
      %v1538 = vmax.f32 %v1505, %v1537
      %1539 = vmax.xlane.f32.xlu0 %v1538
      %v1540 = vpop.xlane.xlu0 %1539
      %v1541 = vsel %vm558, %v1508, -inf
      %v1542 = vmax.f32 %v1507, %v1541
      %1543 = vmax.xlane.f32.xlu0 %v1542
      %v1544 = vpop.xlane.xlu0 %1543
      %v1545 = vsel %vm558, %v1510, -inf
      %v1546 = vmax.f32 %v1509, %v1545
      %1547 = vmax.xlane.f32.xlu0 %v1546
      %v1548 = vpop.xlane.xlu0 %1547
      %v1549 = vsel %vm558, %v1512, -inf
      %v1550 = vmax.f32 %v1511, %v1549
      %1551 = vmax.xlane.f32.xlu0 %v1550
      %v1552 = vpop.xlane.xlu0 %1551
      %v1553 = vsel %vm558, %v1514, -inf
      %v1554 = vmax.f32 %v1513, %v1553
      %1555 = vmax.xlane.f32.xlu0 %v1554
      %v1556 = vpop.xlane.xlu0 %1555
      %v1557 = vsel %vm558, %v1516, -inf
      %v1558 = vmax.f32 %v1515, %v1557
      %1559 = vmax.xlane.f32.xlu0 %v1558
      %v1560 = vpop.xlane.xlu0 %1559
      %v1561 = vsel %vm558, %v1518, -inf
      %v1562 = vmax.f32 %v1517, %v1561
      %1563 = vmax.xlane.f32.xlu0 %v1562
      %v1564 = vpop.xlane.xlu0 %1563
      %v1565 = vsel %vm558, %v1520, -inf
      %v1566 = vmax.f32 %v1519, %v1565
      %1567 = vmax.xlane.f32.xlu0 %v1566
      %v1568 = vpop.xlane.xlu0 %1567
      %v1569 = vsel %vm558, %v1522, -inf
      %v1570 = vmax.f32 %v1521, %v1569
      %1571 = vmax.xlane.f32.xlu0 %v1570
      %v1572 = vpop.xlane.xlu0 %1571
      %v1573 = vsel %vm558, %v1524, -inf
      %v1574 = vmax.f32 %v1523, %v1573
      %1575 = vmax.xlane.f32.xlu0 %v1574
      %v1576 = vpop.xlane.xlu0 %1575
      %v1577 = vsel %vm558, %v1526, -inf
      %v1578 = vmax.f32 %v1525, %v1577
      %1579 = vmax.xlane.f32.xlu0 %v1578
      %v1580 = vpop.xlane.xlu0 %1579
      %v1581 = vsel %vm558, %v1528, -inf
      %v1582 = vmax.f32 %v1527, %v1581
      %1583 = vmax.xlane.f32.xlu0 %v1582
      %v1584 = vpop.xlane.xlu0 %1583
      %v1585 = vsel %vm558, %v1530, -inf
      %v1586 = vmax.f32 %v1529, %v1585
      %1587 = vmax.xlane.f32.xlu0 %v1586
      %v1588 = vpop.xlane.xlu0 %1587
      %v1589 = vsel %vm558, %v1532, -inf
      %v1590 = vmax.f32 %v1531, %v1589
      %1591 = vmax.xlane.f32.xlu0 %v1590
      %v1592 = vpop.xlane.xlu0 %1591
      %v1593 = vsel %vm558, %v1534, -inf
      %v1594 = vmax.f32 %v1533, %v1593
      %1595 = vmax.xlane.f32.xlu0 %v1594
      %v1596 = vpop.xlane.xlu0 %1595
      %v1597 = vsel %vm558, %v1536, -inf
      %v1598 = vmax.f32 %v1535, %v1597
      %1599 = vmax.xlane.f32.xlu0 %v1598
      %v1600 = vpop.xlane.xlu0 %1599
      %vm1601 = vcmp.ge.f32.partialorder %v1505, %v1540
      %vm1602 = vcmp.ge.f32.partialorder %v1506, %v1540
      %vm1603 = vcmp.ge.f32.partialorder %v1507, %v1544
      %vm1604 = vcmp.ge.f32.partialorder %v1508, %v1544
      %vm1605 = vcmp.ge.f32.partialorder %v1509, %v1548
      %vm1606 = vcmp.ge.f32.partialorder %v1510, %v1548
      %vm1607 = vcmp.ge.f32.partialorder %v1511, %v1552
      %vm1608 = vcmp.ge.f32.partialorder %v1512, %v1552
      %vm1609 = vcmp.ge.f32.partialorder %v1513, %v1556
      %vm1610 = vcmp.ge.f32.partialorder %v1514, %v1556
      %vm1611 = vcmp.ge.f32.partialorder %v1515, %v1560
      %vm1612 = vcmp.ge.f32.partialorder %v1516, %v1560
      %vm1613 = vcmp.ge.f32.partialorder %v1517, %v1564
      %vm1614 = vcmp.ge.f32.partialorder %v1518, %v1564
      %vm1615 = vcmp.ge.f32.partialorder %v1519, %v1568
      %vm1616 = vcmp.ge.f32.partialorder %v1520, %v1568
      %vm1617 = vcmp.ge.f32.partialorder %v1521, %v1572
      %vm1618 = vcmp.ge.f32.partialorder %v1522, %v1572
      %vm1619 = vcmp.ge.f32.partialorder %v1523, %v1576
      %vm1620 = vcmp.ge.f32.partialorder %v1524, %v1576
      %vm1621 = vcmp.ge.f32.partialorder %v1525, %v1580
      %vm1622 = vcmp.ge.f32.partialorder %v1526, %v1580
      %vm1623 = vcmp.ge.f32.partialorder %v1527, %v1584
      %vm1624 = vcmp.ge.f32.partialorder %v1528, %v1584
      %vm1625 = vcmp.ge.f32.partialorder %v1529, %v1588
      %vm1626 = vcmp.ge.f32.partialorder %v1530, %v1588
      %vm1627 = vcmp.ge.f32.partialorder %v1531, %v1592
      %vm1628 = vcmp.ge.f32.partialorder %v1532, %v1592
      %vm1629 = vcmp.ge.f32.partialorder %v1533, %v1596
      %vm1630 = vcmp.ge.f32.partialorder %v1534, %v1596
      %vm1631 = vcmp.ge.f32.partialorder %v1535, %v1600
      %vm1632 = vcmp.ge.f32.partialorder %v1536, %v1600
      %v1633 = vsel %vm1601, %v593, 1073741824
      %v1634 = vsel %vm1602, %v592, 1073741824
      %v1635 = vsel %vm1603, %v594, 1073741824
      %v1636 = vsel %vm1604, %v592, 1073741824
      %v1637 = vsel %vm1605, %v595, 1073741824
      %v1638 = vsel %vm1606, %v592, 1073741824
      %v1639 = vsel %vm1607, %v596, 1073741824
      %v1640 = vsel %vm1608, %v592, 1073741824
      %v1641 = vsel %vm1609, %v597, 1073741824
      %v1642 = vsel %vm1610, %v592, 1073741824
      %v1643 = vsel %vm1611, %v598, 1073741824
      %v1644 = vsel %vm1612, %v592, 1073741824
      %v1645 = vsel %vm1613, %v599, 1073741824
      %v1646 = vsel %vm1614, %v592, 1073741824
      %v1647 = vsel %vm1615, %v600, 1073741824
      %v1648 = vsel %vm1616, %v592, 1073741824
      %v1649 = vsel %vm1617, %v601, 1073741824
      %v1650 = vsel %vm1618, %v592, 1073741824
      %v1651 = vsel %vm1619, %v602, 1073741824
      %v1652 = vsel %vm1620, %v592, 1073741824
      %v1653 = vsel %vm1621, %v603, 1073741824
      %v1654 = vsel %vm1622, %v592, 1073741824
      %v1655 = vsel %vm1623, %v604, 1073741824
      %v1656 = vsel %vm1624, %v592, 1073741824
      %v1657 = vsel %vm1625, %v605, 1073741824
      %v1658 = vsel %vm1626, %v592, 1073741824
      %v1659 = vsel %vm1627, %v606, 1073741824
      %v1660 = vsel %vm1628, %v592, 1073741824
      %v1661 = vsel %vm1629, %v607, 1073741824
      %v1662 = vsel %vm1630, %v592, 1073741824
      %v1663 = vsel %vm1631, %v608, 1073741824
      %v1664 = vsel %vm1632, %v592, 1073741824
      %v1665 = vsel %vm558, %v1634, 2147483647
      %vm1666 = vcmp.lt.s32.totalorder %v1633, %v1665
      %v1667 = vsel %vm1666, %v1633, %v1665
      %v1668 = vand.u32 %v1667, 65535
      %v1669 = vshra.s32 %v1667, 16
      %v1670 = vcvt.s32.f32 %v1668
      %v1671 = vcvt.s32.f32 %v1669
      %1672 = vmin.xlane.f32.xlu0 %v1671
      %v1673 = vpop.xlane.xlu0 %1672
      %vm1674 = vcmp.eq.f32.partialorder %v1671, %v1673
      %v1675 = vsel %vm1674, %v1670, inf
      %1676 = vmin.xlane.f32.xlu0 %v1675
      %v1677 = vpop.xlane.xlu0 %1676
      %v1678 = vcvt.f32.s32 %v1677
      %v1679 = vcvt.f32.s32 %v1673
      %v1680 = vshll.u32 %v1679, 16
      %v1681 = vadd.s32 %v1680, %v1678
      %v1682 = vsel %vm558, %v1636, 2147483647
      %vm1683 = vcmp.lt.s32.totalorder %v1635, %v1682
      %v1684 = vsel %vm1683, %v1635, %v1682
      %v1685 = vand.u32 %v1684, 65535
      %v1686 = vshra.s32 %v1684, 16
      %v1687 = vcvt.s32.f32 %v1685
      %v1688 = vcvt.s32.f32 %v1686
      %1689 = vmin.xlane.f32.xlu0 %v1688
      %v1690 = vpop.xlane.xlu0 %1689
      %vm1691 = vcmp.eq.f32.partialorder %v1688, %v1690
      %v1692 = vsel %vm1691, %v1687, inf
      %1693 = vmin.xlane.f32.xlu0 %v1692
      %v1694 = vpop.xlane.xlu0 %1693
      %v1695 = vcvt.f32.s32 %v1694
      %v1696 = vcvt.f32.s32 %v1690
      %v1697 = vshll.u32 %v1696, 16
      %v1698 = vadd.s32 %v1697, %v1695
      %v1699 = vsel %vm558, %v1638, 2147483647
      %vm1700 = vcmp.lt.s32.totalorder %v1637, %v1699
      %v1701 = vsel %vm1700, %v1637, %v1699
      %v1702 = vand.u32 %v1701, 65535
      %v1703 = vshra.s32 %v1701, 16
      %v1704 = vcvt.s32.f32 %v1702
      %v1705 = vcvt.s32.f32 %v1703
      %1706 = vmin.xlane.f32.xlu0 %v1705
      %v1707 = vpop.xlane.xlu0 %1706
      %vm1708 = vcmp.eq.f32.partialorder %v1705, %v1707
      %v1709 = vsel %vm1708, %v1704, inf
      %1710 = vmin.xlane.f32.xlu0 %v1709
      %v1711 = vpop.xlane.xlu0 %1710
      %v1712 = vcvt.f32.s32 %v1711
      %v1713 = vcvt.f32.s32 %v1707
      %v1714 = vshll.u32 %v1713, 16
      %v1715 = vadd.s32 %v1714, %v1712
      %v1716 = vsel %vm558, %v1640, 2147483647
      %vm1717 = vcmp.lt.s32.totalorder %v1639, %v1716
      %v1718 = vsel %vm1717, %v1639, %v1716
      %v1719 = vand.u32 %v1718, 65535
      %v1720 = vshra.s32 %v1718, 16
      %v1721 = vcvt.s32.f32 %v1719
      %v1722 = vcvt.s32.f32 %v1720
      %1723 = vmin.xlane.f32.xlu0 %v1722
      %v1724 = vpop.xlane.xlu0 %1723
      %vm1725 = vcmp.eq.f32.partialorder %v1722, %v1724
      %v1726 = vsel %vm1725, %v1721, inf
      %1727 = vmin.xlane.f32.xlu0 %v1726
      %v1728 = vpop.xlane.xlu0 %1727
      %v1729 = vcvt.f32.s32 %v1728
      %v1730 = vcvt.f32.s32 %v1724
      %v1731 = vshll.u32 %v1730, 16
      %v1732 = vadd.s32 %v1731, %v1729
      %v1733 = vsel %vm558, %v1642, 2147483647
      %vm1734 = vcmp.lt.s32.totalorder %v1641, %v1733
      %v1735 = vsel %vm1734, %v1641, %v1733
      %v1736 = vand.u32 %v1735, 65535
      %v1737 = vshra.s32 %v1735, 16
      %v1738 = vcvt.s32.f32 %v1736
      %v1739 = vcvt.s32.f32 %v1737
      %1740 = vmin.xlane.f32.xlu0 %v1739
      %v1741 = vpop.xlane.xlu0 %1740
      %vm1742 = vcmp.eq.f32.partialorder %v1739, %v1741
      %v1743 = vsel %vm1742, %v1738, inf
      %1744 = vmin.xlane.f32.xlu0 %v1743
      %v1745 = vpop.xlane.xlu0 %1744
      %v1746 = vcvt.f32.s32 %v1745
      %v1747 = vcvt.f32.s32 %v1741
      %v1748 = vshll.u32 %v1747, 16
      %v1749 = vadd.s32 %v1748, %v1746
      %v1750 = vsel %vm558, %v1644, 2147483647
      %vm1751 = vcmp.lt.s32.totalorder %v1643, %v1750
      %v1752 = vsel %vm1751, %v1643, %v1750
      %v1753 = vand.u32 %v1752, 65535
      %v1754 = vshra.s32 %v1752, 16
      %v1755 = vcvt.s32.f32 %v1753
      %v1756 = vcvt.s32.f32 %v1754
      %1757 = vmin.xlane.f32.xlu0 %v1756
      %v1758 = vpop.xlane.xlu0 %1757
      %vm1759 = vcmp.eq.f32.partialorder %v1756, %v1758
      %v1760 = vsel %vm1759, %v1755, inf
      %1761 = vmin.xlane.f32.xlu0 %v1760
      %v1762 = vpop.xlane.xlu0 %1761
      %v1763 = vcvt.f32.s32 %v1762
      %v1764 = vcvt.f32.s32 %v1758
      %v1765 = vshll.u32 %v1764, 16
      %v1766 = vadd.s32 %v1765, %v1763
      %v1767 = vsel %vm558, %v1646, 2147483647
      %vm1768 = vcmp.lt.s32.totalorder %v1645, %v1767
      %v1769 = vsel %vm1768, %v1645, %v1767
      %v1770 = vand.u32 %v1769, 65535
      %v1771 = vshra.s32 %v1769, 16
      %v1772 = vcvt.s32.f32 %v1770
      %v1773 = vcvt.s32.f32 %v1771
      %1774 = vmin.xlane.f32.xlu0 %v1773
      %v1775 = vpop.xlane.xlu0 %1774
      %vm1776 = vcmp.eq.f32.partialorder %v1773, %v1775
      %v1777 = vsel %vm1776, %v1772, inf
      %1778 = vmin.xlane.f32.xlu0 %v1777
      %v1779 = vpop.xlane.xlu0 %1778
      %v1780 = vcvt.f32.s32 %v1779
      %v1781 = vcvt.f32.s32 %v1775
      %v1782 = vshll.u32 %v1781, 16
      %v1783 = vadd.s32 %v1782, %v1780
      %v1784 = vsel %vm558, %v1648, 2147483647
      %vm1785 = vcmp.lt.s32.totalorder %v1647, %v1784
      %v1786 = vsel %vm1785, %v1647, %v1784
      %v1787 = vand.u32 %v1786, 65535
      %v1788 = vshra.s32 %v1786, 16
      %v1789 = vcvt.s32.f32 %v1787
      %v1790 = vcvt.s32.f32 %v1788
      %1791 = vmin.xlane.f32.xlu0 %v1790
      %v1792 = vpop.xlane.xlu0 %1791
      %vm1793 = vcmp.eq.f32.partialorder %v1790, %v1792
      %v1794 = vsel %vm1793, %v1789, inf
      %1795 = vmin.xlane.f32.xlu0 %v1794
      %v1796 = vpop.xlane.xlu0 %1795
      %v1797 = vcvt.f32.s32 %v1796
      %v1798 = vcvt.f32.s32 %v1792
      %v1799 = vshll.u32 %v1798, 16
      %v1800 = vadd.s32 %v1799, %v1797
      %v1801 = vsel %vm558, %v1650, 2147483647
      %vm1802 = vcmp.lt.s32.totalorder %v1649, %v1801
      %v1803 = vsel %vm1802, %v1649, %v1801
      %v1804 = vand.u32 %v1803, 65535
      %v1805 = vshra.s32 %v1803, 16
      %v1806 = vcvt.s32.f32 %v1804
      %v1807 = vcvt.s32.f32 %v1805
      %1808 = vmin.xlane.f32.xlu0 %v1807
      %v1809 = vpop.xlane.xlu0 %1808
      %vm1810 = vcmp.eq.f32.partialorder %v1807, %v1809
      %v1811 = vsel %vm1810, %v1806, inf
      %1812 = vmin.xlane.f32.xlu0 %v1811
      %v1813 = vpop.xlane.xlu0 %1812
      %v1814 = vcvt.f32.s32 %v1813
      %v1815 = vcvt.f32.s32 %v1809
      %v1816 = vshll.u32 %v1815, 16
      %v1817 = vadd.s32 %v1816, %v1814
      %v1818 = vsel %vm558, %v1652, 2147483647
      %vm1819 = vcmp.lt.s32.totalorder %v1651, %v1818
      %v1820 = vsel %vm1819, %v1651, %v1818
      %v1821 = vand.u32 %v1820, 65535
      %v1822 = vshra.s32 %v1820, 16
      %v1823 = vcvt.s32.f32 %v1821
      %v1824 = vcvt.s32.f32 %v1822
      %1825 = vmin.xlane.f32.xlu0 %v1824
      %v1826 = vpop.xlane.xlu0 %1825
      %vm1827 = vcmp.eq.f32.partialorder %v1824, %v1826
      %v1828 = vsel %vm1827, %v1823, inf
      %1829 = vmin.xlane.f32.xlu0 %v1828
      %v1830 = vpop.xlane.xlu0 %1829
      %v1831 = vcvt.f32.s32 %v1830
      %v1832 = vcvt.f32.s32 %v1826
      %v1833 = vshll.u32 %v1832, 16
      %v1834 = vadd.s32 %v1833, %v1831
      %v1835 = vsel %vm558, %v1654, 2147483647
      %vm1836 = vcmp.lt.s32.totalorder %v1653, %v1835
      %v1837 = vsel %vm1836, %v1653, %v1835
      %v1838 = vand.u32 %v1837, 65535
      %v1839 = vshra.s32 %v1837, 16
      %v1840 = vcvt.s32.f32 %v1838
      %v1841 = vcvt.s32.f32 %v1839
      %1842 = vmin.xlane.f32.xlu0 %v1841
      %v1843 = vpop.xlane.xlu0 %1842
      %vm1844 = vcmp.eq.f32.partialorder %v1841, %v1843
      %v1845 = vsel %vm1844, %v1840, inf
      %1846 = vmin.xlane.f32.xlu0 %v1845
      %v1847 = vpop.xlane.xlu0 %1846
      %v1848 = vcvt.f32.s32 %v1847
      %v1849 = vcvt.f32.s32 %v1843
      %v1850 = vshll.u32 %v1849, 16
      %v1851 = vadd.s32 %v1850, %v1848
      %v1852 = vsel %vm558, %v1656, 2147483647
      %vm1853 = vcmp.lt.s32.totalorder %v1655, %v1852
      %v1854 = vsel %vm1853, %v1655, %v1852
      %v1855 = vand.u32 %v1854, 65535
      %v1856 = vshra.s32 %v1854, 16
      %v1857 = vcvt.s32.f32 %v1855
      %v1858 = vcvt.s32.f32 %v1856
      %1859 = vmin.xlane.f32.xlu0 %v1858
      %v1860 = vpop.xlane.xlu0 %1859
      %vm1861 = vcmp.eq.f32.partialorder %v1858, %v1860
      %v1862 = vsel %vm1861, %v1857, inf
      %1863 = vmin.xlane.f32.xlu0 %v1862
      %v1864 = vpop.xlane.xlu0 %1863
      %v1865 = vcvt.f32.s32 %v1864
      %v1866 = vcvt.f32.s32 %v1860
      %v1867 = vshll.u32 %v1866, 16
      %v1868 = vadd.s32 %v1867, %v1865
      %v1869 = vsel %vm558, %v1658, 2147483647
      %vm1870 = vcmp.lt.s32.totalorder %v1657, %v1869
      %v1871 = vsel %vm1870, %v1657, %v1869
      %v1872 = vand.u32 %v1871, 65535
      %v1873 = vshra.s32 %v1871, 16
      %v1874 = vcvt.s32.f32 %v1872
      %v1875 = vcvt.s32.f32 %v1873
      %1876 = vmin.xlane.f32.xlu0 %v1875
      %v1877 = vpop.xlane.xlu0 %1876
      %vm1878 = vcmp.eq.f32.partialorder %v1875, %v1877
      %v1879 = vsel %vm1878, %v1874, inf
      %1880 = vmin.xlane.f32.xlu0 %v1879
      %v1881 = vpop.xlane.xlu0 %1880
      %v1882 = vcvt.f32.s32 %v1881
      %v1883 = vcvt.f32.s32 %v1877
      %v1884 = vshll.u32 %v1883, 16
      %v1885 = vadd.s32 %v1884, %v1882
      %v1886 = vsel %vm558, %v1660, 2147483647
      %vm1887 = vcmp.lt.s32.totalorder %v1659, %v1886
      %v1888 = vsel %vm1887, %v1659, %v1886
      %v1889 = vand.u32 %v1888, 65535
      %v1890 = vshra.s32 %v1888, 16
      %v1891 = vcvt.s32.f32 %v1889
      %v1892 = vcvt.s32.f32 %v1890
      %1893 = vmin.xlane.f32.xlu0 %v1892
      %v1894 = vpop.xlane.xlu0 %1893
      %vm1895 = vcmp.eq.f32.partialorder %v1892, %v1894
      %v1896 = vsel %vm1895, %v1891, inf
      %1897 = vmin.xlane.f32.xlu0 %v1896
      %v1898 = vpop.xlane.xlu0 %1897
      %v1899 = vcvt.f32.s32 %v1898
      %v1900 = vcvt.f32.s32 %v1894
      %v1901 = vshll.u32 %v1900, 16
      %v1902 = vadd.s32 %v1901, %v1899
      %v1903 = vsel %vm558, %v1662, 2147483647
      %vm1904 = vcmp.lt.s32.totalorder %v1661, %v1903
      %v1905 = vsel %vm1904, %v1661, %v1903
      %v1906 = vand.u32 %v1905, 65535
      %v1907 = vshra.s32 %v1905, 16
      %v1908 = vcvt.s32.f32 %v1906
      %v1909 = vcvt.s32.f32 %v1907
      %1910 = vmin.xlane.f32.xlu0 %v1909
      %v1911 = vpop.xlane.xlu0 %1910
      %vm1912 = vcmp.eq.f32.partialorder %v1909, %v1911
      %v1913 = vsel %vm1912, %v1908, inf
      %1914 = vmin.xlane.f32.xlu0 %v1913
      %v1915 = vpop.xlane.xlu0 %1914
      %v1916 = vcvt.f32.s32 %v1915
      %v1917 = vcvt.f32.s32 %v1911
      %v1918 = vshll.u32 %v1917, 16
      %v1919 = vadd.s32 %v1918, %v1916
      %v1920 = vsel %vm558, %v1664, 2147483647
      %vm1921 = vcmp.lt.s32.totalorder %v1663, %v1920
      %v1922 = vsel %vm1921, %v1663, %v1920
      %v1923 = vand.u32 %v1922, 65535
      %v1924 = vshra.s32 %v1922, 16
      %v1925 = vcvt.s32.f32 %v1923
      %v1926 = vcvt.s32.f32 %v1924
      %1927 = vmin.xlane.f32.xlu0 %v1926
      %v1928 = vpop.xlane.xlu0 %1927
      %vm1929 = vcmp.eq.f32.partialorder %v1926, %v1928
      %v1930 = vsel %vm1929, %v1925, inf
      %1931 = vmin.xlane.f32.xlu0 %v1930
      %v1932 = vpop.xlane.xlu0 %1931
      %v1933 = vcvt.f32.s32 %v1932
      %v1934 = vcvt.f32.s32 %v1928
      %v1935 = vshll.u32 %v1934, 16
      %v1936 = vadd.s32 %v1935, %v1933
      %vm1937 = vcmp.eq.s32.totalorder %v593, %v1681
      %vm1938 = vcmp.eq.s32.totalorder %v592, %v1681
      %vm1939 = vcmp.eq.s32.totalorder %v594, %v1698
      %vm1940 = vcmp.eq.s32.totalorder %v592, %v1698
      %vm1941 = vcmp.eq.s32.totalorder %v595, %v1715
      %vm1942 = vcmp.eq.s32.totalorder %v592, %v1715
      %vm1943 = vcmp.eq.s32.totalorder %v596, %v1732
      %vm1944 = vcmp.eq.s32.totalorder %v592, %v1732
      %vm1945 = vcmp.eq.s32.totalorder %v597, %v1749
      %vm1946 = vcmp.eq.s32.totalorder %v592, %v1749
      %vm1947 = vcmp.eq.s32.totalorder %v598, %v1766
      %vm1948 = vcmp.eq.s32.totalorder %v592, %v1766
      %vm1949 = vcmp.eq.s32.totalorder %v599, %v1783
      %vm1950 = vcmp.eq.s32.totalorder %v592, %v1783
      %vm1951 = vcmp.eq.s32.totalorder %v600, %v1800
      %vm1952 = vcmp.eq.s32.totalorder %v592, %v1800
      %vm1953 = vcmp.eq.s32.totalorder %v601, %v1817
      %vm1954 = vcmp.eq.s32.totalorder %v592, %v1817
      %vm1955 = vcmp.eq.s32.totalorder %v602, %v1834
      %vm1956 = vcmp.eq.s32.totalorder %v592, %v1834
      %vm1957 = vcmp.eq.s32.totalorder %v603, %v1851
      %vm1958 = vcmp.eq.s32.totalorder %v592, %v1851
      %vm1959 = vcmp.eq.s32.totalorder %v604, %v1868
      %vm1960 = vcmp.eq.s32.totalorder %v592, %v1868
      %vm1961 = vcmp.eq.s32.totalorder %v605, %v1885
      %vm1962 = vcmp.eq.s32.totalorder %v592, %v1885
      %vm1963 = vcmp.eq.s32.totalorder %v606, %v1902
      %vm1964 = vcmp.eq.s32.totalorder %v592, %v1902
      %vm1965 = vcmp.eq.s32.totalorder %v607, %v1919
      %vm1966 = vcmp.eq.s32.totalorder %v592, %v1919
      %vm1967 = vcmp.eq.s32.totalorder %v608, %v1936
      %vm1968 = vcmp.eq.s32.totalorder %v592, %v1936
      %v1969 = vsel %vm1937, -inf, %v1505
      %v1970 = vsel %vm1938, -inf, %v1506
      %v1971 = vsel %vm1939, -inf, %v1507
      %v1972 = vsel %vm1940, -inf, %v1508
      %v1973 = vsel %vm1941, -inf, %v1509
      %v1974 = vsel %vm1942, -inf, %v1510
      %v1975 = vsel %vm1943, -inf, %v1511
      %v1976 = vsel %vm1944, -inf, %v1512
      %v1977 = vsel %vm1945, -inf, %v1513
      %v1978 = vsel %vm1946, -inf, %v1514
      %v1979 = vsel %vm1947, -inf, %v1515
      %v1980 = vsel %vm1948, -inf, %v1516
      %v1981 = vsel %vm1949, -inf, %v1517
      %v1982 = vsel %vm1950, -inf, %v1518
      %v1983 = vsel %vm1951, -inf, %v1519
      %v1984 = vsel %vm1952, -inf, %v1520
      %v1985 = vsel %vm1953, -inf, %v1521
      %v1986 = vsel %vm1954, -inf, %v1522
      %v1987 = vsel %vm1955, -inf, %v1523
      %v1988 = vsel %vm1956, -inf, %v1524
      %v1989 = vsel %vm1957, -inf, %v1525
      %v1990 = vsel %vm1958, -inf, %v1526
      %v1991 = vsel %vm1959, -inf, %v1527
      %v1992 = vsel %vm1960, -inf, %v1528
      %v1993 = vsel %vm1961, -inf, %v1529
      %v1994 = vsel %vm1962, -inf, %v1530
      %v1995 = vsel %vm1963, -inf, %v1531
      %v1996 = vsel %vm1964, -inf, %v1532
      %v1997 = vsel %vm1965, -inf, %v1533
      %v1998 = vsel %vm1966, -inf, %v1534
      %v1999 = vsel %vm1967, -inf, %v1535
      %v2000 = vsel %vm1968, -inf, %v1536
      %v2001 = vsel %vm558, %v1970, -inf
      %v2002 = vmax.f32 %v1969, %v2001
      %2003 = vmax.xlane.f32.xlu0 %v2002
      %v2004 = vpop.xlane.xlu0 %2003
      %v2005 = vsel %vm558, %v1972, -inf
      %v2006 = vmax.f32 %v1971, %v2005
      %2007 = vmax.xlane.f32.xlu0 %v2006
      %v2008 = vpop.xlane.xlu0 %2007
      %v2009 = vsel %vm558, %v1974, -inf
      %v2010 = vmax.f32 %v1973, %v2009
      %2011 = vmax.xlane.f32.xlu0 %v2010
      %v2012 = vpop.xlane.xlu0 %2011
      %v2013 = vsel %vm558, %v1976, -inf
      %v2014 = vmax.f32 %v1975, %v2013
      %2015 = vmax.xlane.f32.xlu0 %v2014
      %v2016 = vpop.xlane.xlu0 %2015
      %v2017 = vsel %vm558, %v1978, -inf
      %v2018 = vmax.f32 %v1977, %v2017
      %2019 = vmax.xlane.f32.xlu0 %v2018
      %v2020 = vpop.xlane.xlu0 %2019
      %v2021 = vsel %vm558, %v1980, -inf
      %v2022 = vmax.f32 %v1979, %v2021
      %2023 = vmax.xlane.f32.xlu0 %v2022
      %v2024 = vpop.xlane.xlu0 %2023
      %v2025 = vsel %vm558, %v1982, -inf
      %v2026 = vmax.f32 %v1981, %v2025
      %2027 = vmax.xlane.f32.xlu0 %v2026
      %v2028 = vpop.xlane.xlu0 %2027
      %v2029 = vsel %vm558, %v1984, -inf
      %v2030 = vmax.f32 %v1983, %v2029
      %2031 = vmax.xlane.f32.xlu0 %v2030
      %v2032 = vpop.xlane.xlu0 %2031
      %v2033 = vsel %vm558, %v1986, -inf
      %v2034 = vmax.f32 %v1985, %v2033
      %2035 = vmax.xlane.f32.xlu0 %v2034
      %v2036 = vpop.xlane.xlu0 %2035
      %v2037 = vsel %vm558, %v1988, -inf
      %v2038 = vmax.f32 %v1987, %v2037
      %2039 = vmax.xlane.f32.xlu0 %v2038
      %v2040 = vpop.xlane.xlu0 %2039
      %v2041 = vsel %vm558, %v1990, -inf
      %v2042 = vmax.f32 %v1989, %v2041
      %2043 = vmax.xlane.f32.xlu0 %v2042
      %v2044 = vpop.xlane.xlu0 %2043
      %v2045 = vsel %vm558, %v1992, -inf
      %v2046 = vmax.f32 %v1991, %v2045
      %2047 = vmax.xlane.f32.xlu0 %v2046
      %v2048 = vpop.xlane.xlu0 %2047
      %v2049 = vsel %vm558, %v1994, -inf
      %v2050 = vmax.f32 %v1993, %v2049
      %2051 = vmax.xlane.f32.xlu0 %v2050
      %v2052 = vpop.xlane.xlu0 %2051
      %v2053 = vsel %vm558, %v1996, -inf
      %v2054 = vmax.f32 %v1995, %v2053
      %2055 = vmax.xlane.f32.xlu0 %v2054
      %v2056 = vpop.xlane.xlu0 %2055
      %v2057 = vsel %vm558, %v1998, -inf
      %v2058 = vmax.f32 %v1997, %v2057
      %2059 = vmax.xlane.f32.xlu0 %v2058
      %v2060 = vpop.xlane.xlu0 %2059
      %v2061 = vsel %vm558, %v2000, -inf
      %v2062 = vmax.f32 %v1999, %v2061
      %2063 = vmax.xlane.f32.xlu0 %v2062
      %v2064 = vpop.xlane.xlu0 %2063
      %vm2065 = vcmp.ge.f32.partialorder %v1969, %v2004
      %vm2066 = vcmp.ge.f32.partialorder %v1970, %v2004
      %vm2067 = vcmp.ge.f32.partialorder %v1971, %v2008
      %vm2068 = vcmp.ge.f32.partialorder %v1972, %v2008
      %vm2069 = vcmp.ge.f32.partialorder %v1973, %v2012
      %vm2070 = vcmp.ge.f32.partialorder %v1974, %v2012
      %vm2071 = vcmp.ge.f32.partialorder %v1975, %v2016
      %vm2072 = vcmp.ge.f32.partialorder %v1976, %v2016
      %vm2073 = vcmp.ge.f32.partialorder %v1977, %v2020
      %vm2074 = vcmp.ge.f32.partialorder %v1978, %v2020
      %vm2075 = vcmp.ge.f32.partialorder %v1979, %v2024
      %vm2076 = vcmp.ge.f32.partialorder %v1980, %v2024
      %vm2077 = vcmp.ge.f32.partialorder %v1981, %v2028
      %vm2078 = vcmp.ge.f32.partialorder %v1982, %v2028
      %vm2079 = vcmp.ge.f32.partialorder %v1983, %v2032
      %vm2080 = vcmp.ge.f32.partialorder %v1984, %v2032
      %vm2081 = vcmp.ge.f32.partialorder %v1985, %v2036
      %vm2082 = vcmp.ge.f32.partialorder %v1986, %v2036
      %vm2083 = vcmp.ge.f32.partialorder %v1987, %v2040
      %vm2084 = vcmp.ge.f32.partialorder %v1988, %v2040
      %vm2085 = vcmp.ge.f32.partialorder %v1989, %v2044
      %vm2086 = vcmp.ge.f32.partialorder %v1990, %v2044
      %vm2087 = vcmp.ge.f32.partialorder %v1991, %v2048
      %vm2088 = vcmp.ge.f32.partialorder %v1992, %v2048
      %vm2089 = vcmp.ge.f32.partialorder %v1993, %v2052
      %vm2090 = vcmp.ge.f32.partialorder %v1994, %v2052
      %vm2091 = vcmp.ge.f32.partialorder %v1995, %v2056
      %vm2092 = vcmp.ge.f32.partialorder %v1996, %v2056
      %vm2093 = vcmp.ge.f32.partialorder %v1997, %v2060
      %vm2094 = vcmp.ge.f32.partialorder %v1998, %v2060
      %vm2095 = vcmp.ge.f32.partialorder %v1999, %v2064
      %vm2096 = vcmp.ge.f32.partialorder %v2000, %v2064
      %v2097 = vsel %vm2065, %v593, 1073741824
      %v2098 = vsel %vm2066, %v592, 1073741824
      %v2099 = vsel %vm2067, %v594, 1073741824
      %v2100 = vsel %vm2068, %v592, 1073741824
      %v2101 = vsel %vm2069, %v595, 1073741824
      %v2102 = vsel %vm2070, %v592, 1073741824
      %v2103 = vsel %vm2071, %v596, 1073741824
      %v2104 = vsel %vm2072, %v592, 1073741824
      %v2105 = vsel %vm2073, %v597, 1073741824
      %v2106 = vsel %vm2074, %v592, 1073741824
      %v2107 = vsel %vm2075, %v598, 1073741824
      %v2108 = vsel %vm2076, %v592, 1073741824
      %v2109 = vsel %vm2077, %v599, 1073741824
      %v2110 = vsel %vm2078, %v592, 1073741824
      %v2111 = vsel %vm2079, %v600, 1073741824
      %v2112 = vsel %vm2080, %v592, 1073741824
      %v2113 = vsel %vm2081, %v601, 1073741824
      %v2114 = vsel %vm2082, %v592, 1073741824
      %v2115 = vsel %vm2083, %v602, 1073741824
      %v2116 = vsel %vm2084, %v592, 1073741824
      %v2117 = vsel %vm2085, %v603, 1073741824
      %v2118 = vsel %vm2086, %v592, 1073741824
      %v2119 = vsel %vm2087, %v604, 1073741824
      %v2120 = vsel %vm2088, %v592, 1073741824
      %v2121 = vsel %vm2089, %v605, 1073741824
      %v2122 = vsel %vm2090, %v592, 1073741824
      %v2123 = vsel %vm2091, %v606, 1073741824
      %v2124 = vsel %vm2092, %v592, 1073741824
      %v2125 = vsel %vm2093, %v607, 1073741824
      %v2126 = vsel %vm2094, %v592, 1073741824
      %v2127 = vsel %vm2095, %v608, 1073741824
      %v2128 = vsel %vm2096, %v592, 1073741824
      %v2129 = vsel %vm558, %v2098, 2147483647
      %vm2130 = vcmp.lt.s32.totalorder %v2097, %v2129
      %v2131 = vsel %vm2130, %v2097, %v2129
      %v2132 = vand.u32 %v2131, 65535
      %v2133 = vshra.s32 %v2131, 16
      %v2134 = vcvt.s32.f32 %v2132
      %v2135 = vcvt.s32.f32 %v2133
      %2136 = vmin.xlane.f32.xlu0 %v2135
      %v2137 = vpop.xlane.xlu0 %2136
      %vm2138 = vcmp.eq.f32.partialorder %v2135, %v2137
      %v2139 = vsel %vm2138, %v2134, inf
      %2140 = vmin.xlane.f32.xlu0 %v2139
      %v2141 = vpop.xlane.xlu0 %2140
      %v2142 = vcvt.f32.s32 %v2141
      %v2143 = vcvt.f32.s32 %v2137
      %v2144 = vshll.u32 %v2143, 16
      %v2145 = vadd.s32 %v2144, %v2142
      %v2146 = vsel %vm558, %v2100, 2147483647
      %vm2147 = vcmp.lt.s32.totalorder %v2099, %v2146
      %v2148 = vsel %vm2147, %v2099, %v2146
      %v2149 = vand.u32 %v2148, 65535
      %v2150 = vshra.s32 %v2148, 16
      %v2151 = vcvt.s32.f32 %v2149
      %v2152 = vcvt.s32.f32 %v2150
      %2153 = vmin.xlane.f32.xlu0 %v2152
      %v2154 = vpop.xlane.xlu0 %2153
      %vm2155 = vcmp.eq.f32.partialorder %v2152, %v2154
      %v2156 = vsel %vm2155, %v2151, inf
      %2157 = vmin.xlane.f32.xlu0 %v2156
      %v2158 = vpop.xlane.xlu0 %2157
      %v2159 = vcvt.f32.s32 %v2158
      %v2160 = vcvt.f32.s32 %v2154
      %v2161 = vshll.u32 %v2160, 16
      %v2162 = vadd.s32 %v2161, %v2159
      %v2163 = vsel %vm558, %v2102, 2147483647
      %vm2164 = vcmp.lt.s32.totalorder %v2101, %v2163
      %v2165 = vsel %vm2164, %v2101, %v2163
      %v2166 = vand.u32 %v2165, 65535
      %v2167 = vshra.s32 %v2165, 16
      %v2168 = vcvt.s32.f32 %v2166
      %v2169 = vcvt.s32.f32 %v2167
      %2170 = vmin.xlane.f32.xlu0 %v2169
      %v2171 = vpop.xlane.xlu0 %2170
      %vm2172 = vcmp.eq.f32.partialorder %v2169, %v2171
      %v2173 = vsel %vm2172, %v2168, inf
      %2174 = vmin.xlane.f32.xlu0 %v2173
      %v2175 = vpop.xlane.xlu0 %2174
      %v2176 = vcvt.f32.s32 %v2175
      %v2177 = vcvt.f32.s32 %v2171
      %v2178 = vshll.u32 %v2177, 16
      %v2179 = vadd.s32 %v2178, %v2176
      %v2180 = vsel %vm558, %v2104, 2147483647
      %vm2181 = vcmp.lt.s32.totalorder %v2103, %v2180
      %v2182 = vsel %vm2181, %v2103, %v2180
      %v2183 = vand.u32 %v2182, 65535
      %v2184 = vshra.s32 %v2182, 16
      %v2185 = vcvt.s32.f32 %v2183
      %v2186 = vcvt.s32.f32 %v2184
      %2187 = vmin.xlane.f32.xlu0 %v2186
      %v2188 = vpop.xlane.xlu0 %2187
      %vm2189 = vcmp.eq.f32.partialorder %v2186, %v2188
      %v2190 = vsel %vm2189, %v2185, inf
      %2191 = vmin.xlane.f32.xlu0 %v2190
      %v2192 = vpop.xlane.xlu0 %2191
      %v2193 = vcvt.f32.s32 %v2192
      %v2194 = vcvt.f32.s32 %v2188
      %v2195 = vshll.u32 %v2194, 16
      %v2196 = vadd.s32 %v2195, %v2193
      %v2197 = vsel %vm558, %v2106, 2147483647
      %vm2198 = vcmp.lt.s32.totalorder %v2105, %v2197
      %v2199 = vsel %vm2198, %v2105, %v2197
      %v2200 = vand.u32 %v2199, 65535
      %v2201 = vshra.s32 %v2199, 16
      %v2202 = vcvt.s32.f32 %v2200
      %v2203 = vcvt.s32.f32 %v2201
      %2204 = vmin.xlane.f32.xlu0 %v2203
      %v2205 = vpop.xlane.xlu0 %2204
      %vm2206 = vcmp.eq.f32.partialorder %v2203, %v2205
      %v2207 = vsel %vm2206, %v2202, inf
      %2208 = vmin.xlane.f32.xlu0 %v2207
      %v2209 = vpop.xlane.xlu0 %2208
      %v2210 = vcvt.f32.s32 %v2209
      %v2211 = vcvt.f32.s32 %v2205
      %v2212 = vshll.u32 %v2211, 16
      %v2213 = vadd.s32 %v2212, %v2210
      %v2214 = vsel %vm558, %v2108, 2147483647
      %vm2215 = vcmp.lt.s32.totalorder %v2107, %v2214
      %v2216 = vsel %vm2215, %v2107, %v2214
      %v2217 = vand.u32 %v2216, 65535
      %v2218 = vshra.s32 %v2216, 16
      %v2219 = vcvt.s32.f32 %v2217
      %v2220 = vcvt.s32.f32 %v2218
      %2221 = vmin.xlane.f32.xlu0 %v2220
      %v2222 = vpop.xlane.xlu0 %2221
      %vm2223 = vcmp.eq.f32.partialorder %v2220, %v2222
      %v2224 = vsel %vm2223, %v2219, inf
      %2225 = vmin.xlane.f32.xlu0 %v2224
      %v2226 = vpop.xlane.xlu0 %2225
      %v2227 = vcvt.f32.s32 %v2226
      %v2228 = vcvt.f32.s32 %v2222
      %v2229 = vshll.u32 %v2228, 16
      %v2230 = vadd.s32 %v2229, %v2227
      %v2231 = vsel %vm558, %v2110, 2147483647
      %vm2232 = vcmp.lt.s32.totalorder %v2109, %v2231
      %v2233 = vsel %vm2232, %v2109, %v2231
      %v2234 = vand.u32 %v2233, 65535
      %v2235 = vshra.s32 %v2233, 16
      %v2236 = vcvt.s32.f32 %v2234
      %v2237 = vcvt.s32.f32 %v2235
      %2238 = vmin.xlane.f32.xlu0 %v2237
      %v2239 = vpop.xlane.xlu0 %2238
      %vm2240 = vcmp.eq.f32.partialorder %v2237, %v2239
      %v2241 = vsel %vm2240, %v2236, inf
      %2242 = vmin.xlane.f32.xlu0 %v2241
      %v2243 = vpop.xlane.xlu0 %2242
      %v2244 = vcvt.f32.s32 %v2243
      %v2245 = vcvt.f32.s32 %v2239
      %v2246 = vshll.u32 %v2245, 16
      %v2247 = vadd.s32 %v2246, %v2244
      %v2248 = vsel %vm558, %v2112, 2147483647
      %vm2249 = vcmp.lt.s32.totalorder %v2111, %v2248
      %v2250 = vsel %vm2249, %v2111, %v2248
      %v2251 = vand.u32 %v2250, 65535
      %v2252 = vshra.s32 %v2250, 16
      %v2253 = vcvt.s32.f32 %v2251
      %v2254 = vcvt.s32.f32 %v2252
      %2255 = vmin.xlane.f32.xlu0 %v2254
      %v2256 = vpop.xlane.xlu0 %2255
      %vm2257 = vcmp.eq.f32.partialorder %v2254, %v2256
      %v2258 = vsel %vm2257, %v2253, inf
      %2259 = vmin.xlane.f32.xlu0 %v2258
      %v2260 = vpop.xlane.xlu0 %2259
      %v2261 = vcvt.f32.s32 %v2260
      %v2262 = vcvt.f32.s32 %v2256
      %v2263 = vshll.u32 %v2262, 16
      %v2264 = vadd.s32 %v2263, %v2261
      %v2265 = vsel %vm558, %v2114, 2147483647
      %vm2266 = vcmp.lt.s32.totalorder %v2113, %v2265
      %v2267 = vsel %vm2266, %v2113, %v2265
      %v2268 = vand.u32 %v2267, 65535
      %v2269 = vshra.s32 %v2267, 16
      %v2270 = vcvt.s32.f32 %v2268
      %v2271 = vcvt.s32.f32 %v2269
      %2272 = vmin.xlane.f32.xlu0 %v2271
      %v2273 = vpop.xlane.xlu0 %2272
      %vm2274 = vcmp.eq.f32.partialorder %v2271, %v2273
      %v2275 = vsel %vm2274, %v2270, inf
      %2276 = vmin.xlane.f32.xlu0 %v2275
      %v2277 = vpop.xlane.xlu0 %2276
      %v2278 = vcvt.f32.s32 %v2277
      %v2279 = vcvt.f32.s32 %v2273
      %v2280 = vshll.u32 %v2279, 16
      %v2281 = vadd.s32 %v2280, %v2278
      %v2282 = vsel %vm558, %v2116, 2147483647
      %vm2283 = vcmp.lt.s32.totalorder %v2115, %v2282
      %v2284 = vsel %vm2283, %v2115, %v2282
      %v2285 = vand.u32 %v2284, 65535
      %v2286 = vshra.s32 %v2284, 16
      %v2287 = vcvt.s32.f32 %v2285
      %v2288 = vcvt.s32.f32 %v2286
      %2289 = vmin.xlane.f32.xlu0 %v2288
      %v2290 = vpop.xlane.xlu0 %2289
      %vm2291 = vcmp.eq.f32.partialorder %v2288, %v2290
      %v2292 = vsel %vm2291, %v2287, inf
      %2293 = vmin.xlane.f32.xlu0 %v2292
      %v2294 = vpop.xlane.xlu0 %2293
      %v2295 = vcvt.f32.s32 %v2294
      %v2296 = vcvt.f32.s32 %v2290
      %v2297 = vshll.u32 %v2296, 16
      %v2298 = vadd.s32 %v2297, %v2295
      %v2299 = vsel %vm558, %v2118, 2147483647
      %vm2300 = vcmp.lt.s32.totalorder %v2117, %v2299
      %v2301 = vsel %vm2300, %v2117, %v2299
      %v2302 = vand.u32 %v2301, 65535
      %v2303 = vshra.s32 %v2301, 16
      %v2304 = vcvt.s32.f32 %v2302
      %v2305 = vcvt.s32.f32 %v2303
      %2306 = vmin.xlane.f32.xlu0 %v2305
      %v2307 = vpop.xlane.xlu0 %2306
      %vm2308 = vcmp.eq.f32.partialorder %v2305, %v2307
      %v2309 = vsel %vm2308, %v2304, inf
      %2310 = vmin.xlane.f32.xlu0 %v2309
      %v2311 = vpop.xlane.xlu0 %2310
      %v2312 = vcvt.f32.s32 %v2311
      %v2313 = vcvt.f32.s32 %v2307
      %v2314 = vshll.u32 %v2313, 16
      %v2315 = vadd.s32 %v2314, %v2312
      %v2316 = vsel %vm558, %v2120, 2147483647
      %vm2317 = vcmp.lt.s32.totalorder %v2119, %v2316
      %v2318 = vsel %vm2317, %v2119, %v2316
      %v2319 = vand.u32 %v2318, 65535
      %v2320 = vshra.s32 %v2318, 16
      %v2321 = vcvt.s32.f32 %v2319
      %v2322 = vcvt.s32.f32 %v2320
      %2323 = vmin.xlane.f32.xlu0 %v2322
      %v2324 = vpop.xlane.xlu0 %2323
      %vm2325 = vcmp.eq.f32.partialorder %v2322, %v2324
      %v2326 = vsel %vm2325, %v2321, inf
      %2327 = vmin.xlane.f32.xlu0 %v2326
      %v2328 = vpop.xlane.xlu0 %2327
      %v2329 = vcvt.f32.s32 %v2328
      %v2330 = vcvt.f32.s32 %v2324
      %v2331 = vshll.u32 %v2330, 16
      %v2332 = vadd.s32 %v2331, %v2329
      %v2333 = vsel %vm558, %v2122, 2147483647
      %vm2334 = vcmp.lt.s32.totalorder %v2121, %v2333
      %v2335 = vsel %vm2334, %v2121, %v2333
      %v2336 = vand.u32 %v2335, 65535
      %v2337 = vshra.s32 %v2335, 16
      %v2338 = vcvt.s32.f32 %v2336
      %v2339 = vcvt.s32.f32 %v2337
      %2340 = vmin.xlane.f32.xlu0 %v2339
      %v2341 = vpop.xlane.xlu0 %2340
      %vm2342 = vcmp.eq.f32.partialorder %v2339, %v2341
      %v2343 = vsel %vm2342, %v2338, inf
      %2344 = vmin.xlane.f32.xlu0 %v2343
      %v2345 = vpop.xlane.xlu0 %2344
      %v2346 = vcvt.f32.s32 %v2345
      %v2347 = vcvt.f32.s32 %v2341
      %v2348 = vshll.u32 %v2347, 16
      %v2349 = vadd.s32 %v2348, %v2346
      %v2350 = vsel %vm558, %v2124, 2147483647
      %vm2351 = vcmp.lt.s32.totalorder %v2123, %v2350
      %v2352 = vsel %vm2351, %v2123, %v2350
      %v2353 = vand.u32 %v2352, 65535
      %v2354 = vshra.s32 %v2352, 16
      %v2355 = vcvt.s32.f32 %v2353
      %v2356 = vcvt.s32.f32 %v2354
      %2357 = vmin.xlane.f32.xlu0 %v2356
      %v2358 = vpop.xlane.xlu0 %2357
      %vm2359 = vcmp.eq.f32.partialorder %v2356, %v2358
      %v2360 = vsel %vm2359, %v2355, inf
      %2361 = vmin.xlane.f32.xlu0 %v2360
      %v2362 = vpop.xlane.xlu0 %2361
      %v2363 = vcvt.f32.s32 %v2362
      %v2364 = vcvt.f32.s32 %v2358
      %v2365 = vshll.u32 %v2364, 16
      %v2366 = vadd.s32 %v2365, %v2363
      %v2367 = vsel %vm558, %v2126, 2147483647
      %vm2368 = vcmp.lt.s32.totalorder %v2125, %v2367
      %v2369 = vsel %vm2368, %v2125, %v2367
      %v2370 = vand.u32 %v2369, 65535
      %v2371 = vshra.s32 %v2369, 16
      %v2372 = vcvt.s32.f32 %v2370
      %v2373 = vcvt.s32.f32 %v2371
      %2374 = vmin.xlane.f32.xlu0 %v2373
      %v2375 = vpop.xlane.xlu0 %2374
      %vm2376 = vcmp.eq.f32.partialorder %v2373, %v2375
      %v2377 = vsel %vm2376, %v2372, inf
      %2378 = vmin.xlane.f32.xlu0 %v2377
      %v2379 = vpop.xlane.xlu0 %2378
      %v2380 = vcvt.f32.s32 %v2379
      %v2381 = vcvt.f32.s32 %v2375
      %v2382 = vshll.u32 %v2381, 16
      %v2383 = vadd.s32 %v2382, %v2380
      %v2384 = vsel %vm558, %v2128, 2147483647
      %vm2385 = vcmp.lt.s32.totalorder %v2127, %v2384
      %v2386 = vsel %vm2385, %v2127, %v2384
      %v2387 = vand.u32 %v2386, 65535
      %v2388 = vshra.s32 %v2386, 16
      %v2389 = vcvt.s32.f32 %v2387
      %v2390 = vcvt.s32.f32 %v2388
      %2391 = vmin.xlane.f32.xlu0 %v2390
      %v2392 = vpop.xlane.xlu0 %2391
      %vm2393 = vcmp.eq.f32.partialorder %v2390, %v2392
      %v2394 = vsel %vm2393, %v2389, inf
      %2395 = vmin.xlane.f32.xlu0 %v2394
      %v2396 = vpop.xlane.xlu0 %2395
      %v2397 = vcvt.f32.s32 %v2396
      %v2398 = vcvt.f32.s32 %v2392
      %v2399 = vshll.u32 %v2398, 16
      %v2400 = vadd.s32 %v2399, %v2397
      %vm2401 = vcmp.eq.s32.totalorder %v593, %v2145
      %vm2402 = vcmp.eq.s32.totalorder %v592, %v2145
      %vm2403 = vcmp.eq.s32.totalorder %v594, %v2162
      %vm2404 = vcmp.eq.s32.totalorder %v592, %v2162
      %vm2405 = vcmp.eq.s32.totalorder %v595, %v2179
      %vm2406 = vcmp.eq.s32.totalorder %v592, %v2179
      %vm2407 = vcmp.eq.s32.totalorder %v596, %v2196
      %vm2408 = vcmp.eq.s32.totalorder %v592, %v2196
      %vm2409 = vcmp.eq.s32.totalorder %v597, %v2213
      %vm2410 = vcmp.eq.s32.totalorder %v592, %v2213
      %vm2411 = vcmp.eq.s32.totalorder %v598, %v2230
      %vm2412 = vcmp.eq.s32.totalorder %v592, %v2230
      %vm2413 = vcmp.eq.s32.totalorder %v599, %v2247
      %vm2414 = vcmp.eq.s32.totalorder %v592, %v2247
      %vm2415 = vcmp.eq.s32.totalorder %v600, %v2264
      %vm2416 = vcmp.eq.s32.totalorder %v592, %v2264
      %vm2417 = vcmp.eq.s32.totalorder %v601, %v2281
      %vm2418 = vcmp.eq.s32.totalorder %v592, %v2281
      %vm2419 = vcmp.eq.s32.totalorder %v602, %v2298
      %vm2420 = vcmp.eq.s32.totalorder %v592, %v2298
      %vm2421 = vcmp.eq.s32.totalorder %v603, %v2315
      %vm2422 = vcmp.eq.s32.totalorder %v592, %v2315
      %vm2423 = vcmp.eq.s32.totalorder %v604, %v2332
      %vm2424 = vcmp.eq.s32.totalorder %v592, %v2332
      %vm2425 = vcmp.eq.s32.totalorder %v605, %v2349
      %vm2426 = vcmp.eq.s32.totalorder %v592, %v2349
      %vm2427 = vcmp.eq.s32.totalorder %v606, %v2366
      %vm2428 = vcmp.eq.s32.totalorder %v592, %v2366
      %vm2429 = vcmp.eq.s32.totalorder %v607, %v2383
      %vm2430 = vcmp.eq.s32.totalorder %v592, %v2383
      %vm2431 = vcmp.eq.s32.totalorder %v608, %v2400
      %vm2432 = vcmp.eq.s32.totalorder %v592, %v2400
      %v2433 = vsel %vm2401, -inf, %v1969
      %v2434 = vsel %vm2402, -inf, %v1970
      %v2435 = vsel %vm2403, -inf, %v1971
      %v2436 = vsel %vm2404, -inf, %v1972
      %v2437 = vsel %vm2405, -inf, %v1973
      %v2438 = vsel %vm2406, -inf, %v1974
      %v2439 = vsel %vm2407, -inf, %v1975
      %v2440 = vsel %vm2408, -inf, %v1976
      %v2441 = vsel %vm2409, -inf, %v1977
      %v2442 = vsel %vm2410, -inf, %v1978
      %v2443 = vsel %vm2411, -inf, %v1979
      %v2444 = vsel %vm2412, -inf, %v1980
      %v2445 = vsel %vm2413, -inf, %v1981
      %v2446 = vsel %vm2414, -inf, %v1982
      %v2447 = vsel %vm2415, -inf, %v1983
      %v2448 = vsel %vm2416, -inf, %v1984
      %v2449 = vsel %vm2417, -inf, %v1985
      %v2450 = vsel %vm2418, -inf, %v1986
      %v2451 = vsel %vm2419, -inf, %v1987
      %v2452 = vsel %vm2420, -inf, %v1988
      %v2453 = vsel %vm2421, -inf, %v1989
      %v2454 = vsel %vm2422, -inf, %v1990
      %v2455 = vsel %vm2423, -inf, %v1991
      %v2456 = vsel %vm2424, -inf, %v1992
      %v2457 = vsel %vm2425, -inf, %v1993
      %v2458 = vsel %vm2426, -inf, %v1994
      %v2459 = vsel %vm2427, -inf, %v1995
      %v2460 = vsel %vm2428, -inf, %v1996
      %v2461 = vsel %vm2429, -inf, %v1997
      %v2462 = vsel %vm2430, -inf, %v1998
      %v2463 = vsel %vm2431, -inf, %v1999
      %v2464 = vsel %vm2432, -inf, %v2000
      %v2465 = vsel %vm558, %v2434, -inf
      %v2466 = vmax.f32 %v2433, %v2465
      %2467 = vmax.xlane.f32.xlu0 %v2466
      %v2468 = vpop.xlane.xlu0 %2467
      %v2469 = vsel %vm558, %v2436, -inf
      %v2470 = vmax.f32 %v2435, %v2469
      %2471 = vmax.xlane.f32.xlu0 %v2470
      %v2472 = vpop.xlane.xlu0 %2471
      %v2473 = vsel %vm558, %v2438, -inf
      %v2474 = vmax.f32 %v2437, %v2473
      %2475 = vmax.xlane.f32.xlu0 %v2474
      %v2476 = vpop.xlane.xlu0 %2475
      %v2477 = vsel %vm558, %v2440, -inf
      %v2478 = vmax.f32 %v2439, %v2477
      %2479 = vmax.xlane.f32.xlu0 %v2478
      %v2480 = vpop.xlane.xlu0 %2479
      %v2481 = vsel %vm558, %v2442, -inf
      %v2482 = vmax.f32 %v2441, %v2481
      %2483 = vmax.xlane.f32.xlu0 %v2482
      %v2484 = vpop.xlane.xlu0 %2483
      %v2485 = vsel %vm558, %v2444, -inf
      %v2486 = vmax.f32 %v2443, %v2485
      %2487 = vmax.xlane.f32.xlu0 %v2486
      %v2488 = vpop.xlane.xlu0 %2487
      %v2489 = vsel %vm558, %v2446, -inf
      %v2490 = vmax.f32 %v2445, %v2489
      %2491 = vmax.xlane.f32.xlu0 %v2490
      %v2492 = vpop.xlane.xlu0 %2491
      %v2493 = vsel %vm558, %v2448, -inf
      %v2494 = vmax.f32 %v2447, %v2493
      %2495 = vmax.xlane.f32.xlu0 %v2494
      %v2496 = vpop.xlane.xlu0 %2495
      %v2497 = vsel %vm558, %v2450, -inf
      %v2498 = vmax.f32 %v2449, %v2497
      %2499 = vmax.xlane.f32.xlu0 %v2498
      %v2500 = vpop.xlane.xlu0 %2499
      %v2501 = vsel %vm558, %v2452, -inf
      %v2502 = vmax.f32 %v2451, %v2501
      %2503 = vmax.xlane.f32.xlu0 %v2502
      %v2504 = vpop.xlane.xlu0 %2503
      %v2505 = vsel %vm558, %v2454, -inf
      %v2506 = vmax.f32 %v2453, %v2505
      %2507 = vmax.xlane.f32.xlu0 %v2506
      %v2508 = vpop.xlane.xlu0 %2507
      %v2509 = vsel %vm558, %v2456, -inf
      %v2510 = vmax.f32 %v2455, %v2509
      %2511 = vmax.xlane.f32.xlu0 %v2510
      %v2512 = vpop.xlane.xlu0 %2511
      %v2513 = vsel %vm558, %v2458, -inf
      %v2514 = vmax.f32 %v2457, %v2513
      %2515 = vmax.xlane.f32.xlu0 %v2514
      %v2516 = vpop.xlane.xlu0 %2515
      %v2517 = vsel %vm558, %v2460, -inf
      %v2518 = vmax.f32 %v2459, %v2517
      %2519 = vmax.xlane.f32.xlu0 %v2518
      %v2520 = vpop.xlane.xlu0 %2519
      %v2521 = vsel %vm558, %v2462, -inf
      %v2522 = vmax.f32 %v2461, %v2521
      %2523 = vmax.xlane.f32.xlu0 %v2522
      %v2524 = vpop.xlane.xlu0 %2523
      %v2525 = vsel %vm558, %v2464, -inf
      %v2526 = vmax.f32 %v2463, %v2525
      %2527 = vmax.xlane.f32.xlu0 %v2526
      %v2528 = vpop.xlane.xlu0 %2527
      %vm2529 = vcmp.ge.f32.partialorder %v2433, %v2468
      %vm2530 = vcmp.ge.f32.partialorder %v2434, %v2468
      %vm2531 = vcmp.ge.f32.partialorder %v2435, %v2472
      %vm2532 = vcmp.ge.f32.partialorder %v2436, %v2472
      %vm2533 = vcmp.ge.f32.partialorder %v2437, %v2476
      %vm2534 = vcmp.ge.f32.partialorder %v2438, %v2476
      %vm2535 = vcmp.ge.f32.partialorder %v2439, %v2480
      %vm2536 = vcmp.ge.f32.partialorder %v2440, %v2480
      %vm2537 = vcmp.ge.f32.partialorder %v2441, %v2484
      %vm2538 = vcmp.ge.f32.partialorder %v2442, %v2484
      %vm2539 = vcmp.ge.f32.partialorder %v2443, %v2488
      %vm2540 = vcmp.ge.f32.partialorder %v2444, %v2488
      %vm2541 = vcmp.ge.f32.partialorder %v2445, %v2492
      %vm2542 = vcmp.ge.f32.partialorder %v2446, %v2492
      %vm2543 = vcmp.ge.f32.partialorder %v2447, %v2496
      %vm2544 = vcmp.ge.f32.partialorder %v2448, %v2496
      %vm2545 = vcmp.ge.f32.partialorder %v2449, %v2500
      %vm2546 = vcmp.ge.f32.partialorder %v2450, %v2500
      %vm2547 = vcmp.ge.f32.partialorder %v2451, %v2504
      %vm2548 = vcmp.ge.f32.partialorder %v2452, %v2504
      %vm2549 = vcmp.ge.f32.partialorder %v2453, %v2508
      %vm2550 = vcmp.ge.f32.partialorder %v2454, %v2508
      %vm2551 = vcmp.ge.f32.partialorder %v2455, %v2512
      %vm2552 = vcmp.ge.f32.partialorder %v2456, %v2512
      %vm2553 = vcmp.ge.f32.partialorder %v2457, %v2516
      %vm2554 = vcmp.ge.f32.partialorder %v2458, %v2516
      %vm2555 = vcmp.ge.f32.partialorder %v2459, %v2520
      %vm2556 = vcmp.ge.f32.partialorder %v2460, %v2520
      %vm2557 = vcmp.ge.f32.partialorder %v2461, %v2524
      %vm2558 = vcmp.ge.f32.partialorder %v2462, %v2524
      %vm2559 = vcmp.ge.f32.partialorder %v2463, %v2528
      %vm2560 = vcmp.ge.f32.partialorder %v2464, %v2528
      %v2561 = vsel %vm2529, %v593, 1073741824
      %v2562 = vsel %vm2530, %v592, 1073741824
      %v2563 = vsel %vm2531, %v594, 1073741824
      %v2564 = vsel %vm2532, %v592, 1073741824
      %v2565 = vsel %vm2533, %v595, 1073741824
      %v2566 = vsel %vm2534, %v592, 1073741824
      %v2567 = vsel %vm2535, %v596, 1073741824
      %v2568 = vsel %vm2536, %v592, 1073741824
      %v2569 = vsel %vm2537, %v597, 1073741824
      %v2570 = vsel %vm2538, %v592, 1073741824
      %v2571 = vsel %vm2539, %v598, 1073741824
      %v2572 = vsel %vm2540, %v592, 1073741824
      %v2573 = vsel %vm2541, %v599, 1073741824
      %v2574 = vsel %vm2542, %v592, 1073741824
      %v2575 = vsel %vm2543, %v600, 1073741824
      %v2576 = vsel %vm2544, %v592, 1073741824
      %v2577 = vsel %vm2545, %v601, 1073741824
      %v2578 = vsel %vm2546, %v592, 1073741824
      %v2579 = vsel %vm2547, %v602, 1073741824
      %v2580 = vsel %vm2548, %v592, 1073741824
      %v2581 = vsel %vm2549, %v603, 1073741824
      %v2582 = vsel %vm2550, %v592, 1073741824
      %v2583 = vsel %vm2551, %v604, 1073741824
      %v2584 = vsel %vm2552, %v592, 1073741824
      %v2585 = vsel %vm2553, %v605, 1073741824
      %v2586 = vsel %vm2554, %v592, 1073741824
      %v2587 = vsel %vm2555, %v606, 1073741824
      %v2588 = vsel %vm2556, %v592, 1073741824
      %v2589 = vsel %vm2557, %v607, 1073741824
      %v2590 = vsel %vm2558, %v592, 1073741824
      %v2591 = vsel %vm2559, %v608, 1073741824
      %v2592 = vsel %vm2560, %v592, 1073741824
      %v2593 = vsel %vm558, %v2562, 2147483647
      %vm2594 = vcmp.lt.s32.totalorder %v2561, %v2593
      %v2595 = vsel %vm2594, %v2561, %v2593
      %v2596 = vand.u32 %v2595, 65535
      %v2597 = vshra.s32 %v2595, 16
      %v2598 = vcvt.s32.f32 %v2596
      %v2599 = vcvt.s32.f32 %v2597
      %2600 = vmin.xlane.f32.xlu0 %v2599
      %v2601 = vpop.xlane.xlu0 %2600
      %vm2602 = vcmp.eq.f32.partialorder %v2599, %v2601
      %v2603 = vsel %vm2602, %v2598, inf
      %2604 = vmin.xlane.f32.xlu0 %v2603
      %v2605 = vpop.xlane.xlu0 %2604
      %v2606 = vcvt.f32.s32 %v2605
      %v2607 = vcvt.f32.s32 %v2601
      %v2608 = vshll.u32 %v2607, 16
      %v2609 = vadd.s32 %v2608, %v2606
      %v2610 = vsel %vm558, %v2564, 2147483647
      %vm2611 = vcmp.lt.s32.totalorder %v2563, %v2610
      %v2612 = vsel %vm2611, %v2563, %v2610
      %v2613 = vand.u32 %v2612, 65535
      %v2614 = vshra.s32 %v2612, 16
      %v2615 = vcvt.s32.f32 %v2613
      %v2616 = vcvt.s32.f32 %v2614
      %2617 = vmin.xlane.f32.xlu0 %v2616
      %v2618 = vpop.xlane.xlu0 %2617
      %vm2619 = vcmp.eq.f32.partialorder %v2616, %v2618
      %v2620 = vsel %vm2619, %v2615, inf
      %2621 = vmin.xlane.f32.xlu0 %v2620
      %v2622 = vpop.xlane.xlu0 %2621
      %v2623 = vcvt.f32.s32 %v2622
      %v2624 = vcvt.f32.s32 %v2618
      %v2625 = vshll.u32 %v2624, 16
      %v2626 = vadd.s32 %v2625, %v2623
      %v2627 = vsel %vm558, %v2566, 2147483647
      %vm2628 = vcmp.lt.s32.totalorder %v2565, %v2627
      %v2629 = vsel %vm2628, %v2565, %v2627
      %v2630 = vand.u32 %v2629, 65535
      %v2631 = vshra.s32 %v2629, 16
      %v2632 = vcvt.s32.f32 %v2630
      %v2633 = vcvt.s32.f32 %v2631
      %2634 = vmin.xlane.f32.xlu0 %v2633
      %v2635 = vpop.xlane.xlu0 %2634
      %vm2636 = vcmp.eq.f32.partialorder %v2633, %v2635
      %v2637 = vsel %vm2636, %v2632, inf
      %2638 = vmin.xlane.f32.xlu0 %v2637
      %v2639 = vpop.xlane.xlu0 %2638
      %v2640 = vcvt.f32.s32 %v2639
      %v2641 = vcvt.f32.s32 %v2635
      %v2642 = vshll.u32 %v2641, 16
      %v2643 = vadd.s32 %v2642, %v2640
      %v2644 = vsel %vm558, %v2568, 2147483647
      %vm2645 = vcmp.lt.s32.totalorder %v2567, %v2644
      %v2646 = vsel %vm2645, %v2567, %v2644
      %v2647 = vand.u32 %v2646, 65535
      %v2648 = vshra.s32 %v2646, 16
      %v2649 = vcvt.s32.f32 %v2647
      %v2650 = vcvt.s32.f32 %v2648
      %2651 = vmin.xlane.f32.xlu0 %v2650
      %v2652 = vpop.xlane.xlu0 %2651
      %vm2653 = vcmp.eq.f32.partialorder %v2650, %v2652
      %v2654 = vsel %vm2653, %v2649, inf
      %2655 = vmin.xlane.f32.xlu0 %v2654
      %v2656 = vpop.xlane.xlu0 %2655
      %v2657 = vcvt.f32.s32 %v2656
      %v2658 = vcvt.f32.s32 %v2652
      %v2659 = vshll.u32 %v2658, 16
      %v2660 = vadd.s32 %v2659, %v2657
      %v2661 = vsel %vm558, %v2570, 2147483647
      %vm2662 = vcmp.lt.s32.totalorder %v2569, %v2661
      %v2663 = vsel %vm2662, %v2569, %v2661
      %v2664 = vand.u32 %v2663, 65535
      %v2665 = vshra.s32 %v2663, 16
      %v2666 = vcvt.s32.f32 %v2664
      %v2667 = vcvt.s32.f32 %v2665
      %2668 = vmin.xlane.f32.xlu0 %v2667
      %v2669 = vpop.xlane.xlu0 %2668
      %vm2670 = vcmp.eq.f32.partialorder %v2667, %v2669
      %v2671 = vsel %vm2670, %v2666, inf
      %2672 = vmin.xlane.f32.xlu0 %v2671
      %v2673 = vpop.xlane.xlu0 %2672
      %v2674 = vcvt.f32.s32 %v2673
      %v2675 = vcvt.f32.s32 %v2669
      %v2676 = vshll.u32 %v2675, 16
      %v2677 = vadd.s32 %v2676, %v2674
      %v2678 = vsel %vm558, %v2572, 2147483647
      %vm2679 = vcmp.lt.s32.totalorder %v2571, %v2678
      %v2680 = vsel %vm2679, %v2571, %v2678
      %v2681 = vand.u32 %v2680, 65535
      %v2682 = vshra.s32 %v2680, 16
      %v2683 = vcvt.s32.f32 %v2681
      %v2684 = vcvt.s32.f32 %v2682
      %2685 = vmin.xlane.f32.xlu0 %v2684
      %v2686 = vpop.xlane.xlu0 %2685
      %vm2687 = vcmp.eq.f32.partialorder %v2684, %v2686
      %v2688 = vsel %vm2687, %v2683, inf
      %2689 = vmin.xlane.f32.xlu0 %v2688
      %v2690 = vpop.xlane.xlu0 %2689
      %v2691 = vcvt.f32.s32 %v2690
      %v2692 = vcvt.f32.s32 %v2686
      %v2693 = vshll.u32 %v2692, 16
      %v2694 = vadd.s32 %v2693, %v2691
      %v2695 = vsel %vm558, %v2574, 2147483647
      %vm2696 = vcmp.lt.s32.totalorder %v2573, %v2695
      %v2697 = vsel %vm2696, %v2573, %v2695
      %v2698 = vand.u32 %v2697, 65535
      %v2699 = vshra.s32 %v2697, 16
      %v2700 = vcvt.s32.f32 %v2698
      %v2701 = vcvt.s32.f32 %v2699
      %2702 = vmin.xlane.f32.xlu0 %v2701
      %v2703 = vpop.xlane.xlu0 %2702
      %vm2704 = vcmp.eq.f32.partialorder %v2701, %v2703
      %v2705 = vsel %vm2704, %v2700, inf
      %2706 = vmin.xlane.f32.xlu0 %v2705
      %v2707 = vpop.xlane.xlu0 %2706
      %v2708 = vcvt.f32.s32 %v2707
      %v2709 = vcvt.f32.s32 %v2703
      %v2710 = vshll.u32 %v2709, 16
      %v2711 = vadd.s32 %v2710, %v2708
      %v2712 = vsel %vm558, %v2576, 2147483647
      %vm2713 = vcmp.lt.s32.totalorder %v2575, %v2712
      %v2714 = vsel %vm2713, %v2575, %v2712
      %v2715 = vand.u32 %v2714, 65535
      %v2716 = vshra.s32 %v2714, 16
      %v2717 = vcvt.s32.f32 %v2715
      %v2718 = vcvt.s32.f32 %v2716
      %2719 = vmin.xlane.f32.xlu0 %v2718
      %v2720 = vpop.xlane.xlu0 %2719
      %vm2721 = vcmp.eq.f32.partialorder %v2718, %v2720
      %v2722 = vsel %vm2721, %v2717, inf
      %2723 = vmin.xlane.f32.xlu0 %v2722
      %v2724 = vpop.xlane.xlu0 %2723
      %v2725 = vcvt.f32.s32 %v2724
      %v2726 = vcvt.f32.s32 %v2720
      %v2727 = vshll.u32 %v2726, 16
      %v2728 = vadd.s32 %v2727, %v2725
      %v2729 = vsel %vm558, %v2578, 2147483647
      %vm2730 = vcmp.lt.s32.totalorder %v2577, %v2729
      %v2731 = vsel %vm2730, %v2577, %v2729
      %v2732 = vand.u32 %v2731, 65535
      %v2733 = vshra.s32 %v2731, 16
      %v2734 = vcvt.s32.f32 %v2732
      %v2735 = vcvt.s32.f32 %v2733
      %2736 = vmin.xlane.f32.xlu0 %v2735
      %v2737 = vpop.xlane.xlu0 %2736
      %vm2738 = vcmp.eq.f32.partialorder %v2735, %v2737
      %v2739 = vsel %vm2738, %v2734, inf
      %2740 = vmin.xlane.f32.xlu0 %v2739
      %v2741 = vpop.xlane.xlu0 %2740
      %v2742 = vcvt.f32.s32 %v2741
      %v2743 = vcvt.f32.s32 %v2737
      %v2744 = vshll.u32 %v2743, 16
      %v2745 = vadd.s32 %v2744, %v2742
      %v2746 = vsel %vm558, %v2580, 2147483647
      %vm2747 = vcmp.lt.s32.totalorder %v2579, %v2746
      %v2748 = vsel %vm2747, %v2579, %v2746
      %v2749 = vand.u32 %v2748, 65535
      %v2750 = vshra.s32 %v2748, 16
      %v2751 = vcvt.s32.f32 %v2749
      %v2752 = vcvt.s32.f32 %v2750
      %2753 = vmin.xlane.f32.xlu0 %v2752
      %v2754 = vpop.xlane.xlu0 %2753
      %vm2755 = vcmp.eq.f32.partialorder %v2752, %v2754
      %v2756 = vsel %vm2755, %v2751, inf
      %2757 = vmin.xlane.f32.xlu0 %v2756
      %v2758 = vpop.xlane.xlu0 %2757
      %v2759 = vcvt.f32.s32 %v2758
      %v2760 = vcvt.f32.s32 %v2754
      %v2761 = vshll.u32 %v2760, 16
      %v2762 = vadd.s32 %v2761, %v2759
      %v2763 = vsel %vm558, %v2582, 2147483647
      %vm2764 = vcmp.lt.s32.totalorder %v2581, %v2763
      %v2765 = vsel %vm2764, %v2581, %v2763
      %v2766 = vand.u32 %v2765, 65535
      %v2767 = vshra.s32 %v2765, 16
      %v2768 = vcvt.s32.f32 %v2766
      %v2769 = vcvt.s32.f32 %v2767
      %2770 = vmin.xlane.f32.xlu0 %v2769
      %v2771 = vpop.xlane.xlu0 %2770
      %vm2772 = vcmp.eq.f32.partialorder %v2769, %v2771
      %v2773 = vsel %vm2772, %v2768, inf
      %2774 = vmin.xlane.f32.xlu0 %v2773
      %v2775 = vpop.xlane.xlu0 %2774
      %v2776 = vcvt.f32.s32 %v2775
      %v2777 = vcvt.f32.s32 %v2771
      %v2778 = vshll.u32 %v2777, 16
      %v2779 = vadd.s32 %v2778, %v2776
      %v2780 = vsel %vm558, %v2584, 2147483647
      %vm2781 = vcmp.lt.s32.totalorder %v2583, %v2780
      %v2782 = vsel %vm2781, %v2583, %v2780
      %v2783 = vand.u32 %v2782, 65535
      %v2784 = vshra.s32 %v2782, 16
      %v2785 = vcvt.s32.f32 %v2783
      %v2786 = vcvt.s32.f32 %v2784
      %2787 = vmin.xlane.f32.xlu0 %v2786
      %v2788 = vpop.xlane.xlu0 %2787
      %vm2789 = vcmp.eq.f32.partialorder %v2786, %v2788
      %v2790 = vsel %vm2789, %v2785, inf
      %2791 = vmin.xlane.f32.xlu0 %v2790
      %v2792 = vpop.xlane.xlu0 %2791
      %v2793 = vcvt.f32.s32 %v2792
      %v2794 = vcvt.f32.s32 %v2788
      %v2795 = vshll.u32 %v2794, 16
      %v2796 = vadd.s32 %v2795, %v2793
      %v2797 = vsel %vm558, %v2586, 2147483647
      %vm2798 = vcmp.lt.s32.totalorder %v2585, %v2797
      %v2799 = vsel %vm2798, %v2585, %v2797
      %v2800 = vand.u32 %v2799, 65535
      %v2801 = vshra.s32 %v2799, 16
      %v2802 = vcvt.s32.f32 %v2800
      %v2803 = vcvt.s32.f32 %v2801
      %2804 = vmin.xlane.f32.xlu0 %v2803
      %v2805 = vpop.xlane.xlu0 %2804
      %vm2806 = vcmp.eq.f32.partialorder %v2803, %v2805
      %v2807 = vsel %vm2806, %v2802, inf
      %2808 = vmin.xlane.f32.xlu0 %v2807
      %v2809 = vpop.xlane.xlu0 %2808
      %v2810 = vcvt.f32.s32 %v2809
      %v2811 = vcvt.f32.s32 %v2805
      %v2812 = vshll.u32 %v2811, 16
      %v2813 = vadd.s32 %v2812, %v2810
      %v2814 = vsel %vm558, %v2588, 2147483647
      %vm2815 = vcmp.lt.s32.totalorder %v2587, %v2814
      %v2816 = vsel %vm2815, %v2587, %v2814
      %v2817 = vand.u32 %v2816, 65535
      %v2818 = vshra.s32 %v2816, 16
      %v2819 = vcvt.s32.f32 %v2817
      %v2820 = vcvt.s32.f32 %v2818
      %2821 = vmin.xlane.f32.xlu0 %v2820
      %v2822 = vpop.xlane.xlu0 %2821
      %vm2823 = vcmp.eq.f32.partialorder %v2820, %v2822
      %v2824 = vsel %vm2823, %v2819, inf
      %2825 = vmin.xlane.f32.xlu0 %v2824
      %v2826 = vpop.xlane.xlu0 %2825
      %v2827 = vcvt.f32.s32 %v2826
      %v2828 = vcvt.f32.s32 %v2822
      %v2829 = vshll.u32 %v2828, 16
      %v2830 = vadd.s32 %v2829, %v2827
      %v2831 = vsel %vm558, %v2590, 2147483647
      %vm2832 = vcmp.lt.s32.totalorder %v2589, %v2831
      %v2833 = vsel %vm2832, %v2589, %v2831
      %v2834 = vand.u32 %v2833, 65535
      %v2835 = vshra.s32 %v2833, 16
      %v2836 = vcvt.s32.f32 %v2834
      %v2837 = vcvt.s32.f32 %v2835
      %2838 = vmin.xlane.f32.xlu0 %v2837
      %v2839 = vpop.xlane.xlu0 %2838
      %vm2840 = vcmp.eq.f32.partialorder %v2837, %v2839
      %v2841 = vsel %vm2840, %v2836, inf
      %2842 = vmin.xlane.f32.xlu0 %v2841
      %v2843 = vpop.xlane.xlu0 %2842
      %v2844 = vcvt.f32.s32 %v2843
      %v2845 = vcvt.f32.s32 %v2839
      %v2846 = vshll.u32 %v2845, 16
      %v2847 = vadd.s32 %v2846, %v2844
      %v2848 = vsel %vm558, %v2592, 2147483647
      %vm2849 = vcmp.lt.s32.totalorder %v2591, %v2848
      %v2850 = vsel %vm2849, %v2591, %v2848
      %v2851 = vand.u32 %v2850, 65535
      %v2852 = vshra.s32 %v2850, 16
      %v2853 = vcvt.s32.f32 %v2851
      %v2854 = vcvt.s32.f32 %v2852
      %2855 = vmin.xlane.f32.xlu0 %v2854
      %v2856 = vpop.xlane.xlu0 %2855
      %vm2857 = vcmp.eq.f32.partialorder %v2854, %v2856
      %v2858 = vsel %vm2857, %v2853, inf
      %2859 = vmin.xlane.f32.xlu0 %v2858
      %v2860 = vpop.xlane.xlu0 %2859
      %v2861 = vcvt.f32.s32 %v2860
      %v2862 = vcvt.f32.s32 %v2856
      %v2863 = vshll.u32 %v2862, 16
      %v2864 = vadd.s32 %v2863, %v2861
      %vm2865 = vcmask 7168
      %v2866 = vsel %vm2865, %v612, %v1076
      %v2867 = vsel %vm2865, %v616, %v1080
      %v2868 = vsel %vm2865, %v620, %v1084
      %v2869 = vsel %vm2865, %v624, %v1088
      %v2870 = vsel %vm2865, %v628, %v1092
      %v2871 = vsel %vm2865, %v632, %v1096
      %v2872 = vsel %vm2865, %v636, %v1100
      %v2873 = vsel %vm2865, %v640, %v1104
      %v2874 = vsel %vm2865, %v644, %v1108
      %v2875 = vsel %vm2865, %v648, %v1112
      %v2876 = vsel %vm2865, %v652, %v1116
      %v2877 = vsel %vm2865, %v656, %v1120
      %v2878 = vsel %vm2865, %v660, %v1124
      %v2879 = vsel %vm2865, %v664, %v1128
      %v2880 = vsel %vm2865, %v668, %v1132
      %v2881 = vsel %vm2865, %v672, %v1136
      %vm2882 = vcmask 15360
      %v2883 = vsel %vm2882, %v2866, %v1540
      %v2884 = vsel %vm2882, %v2867, %v1544
      %v2885 = vsel %vm2882, %v2868, %v1548
      %v2886 = vsel %vm2882, %v2869, %v1552
      %v2887 = vsel %vm2882, %v2870, %v1556
      %v2888 = vsel %vm2882, %v2871, %v1560
      %v2889 = vsel %vm2882, %v2872, %v1564
      %v2890 = vsel %vm2882, %v2873, %v1568
      %v2891 = vsel %vm2882, %v2874, %v1572
      %v2892 = vsel %vm2882, %v2875, %v1576
      %v2893 = vsel %vm2882, %v2876, %v1580
      %v2894 = vsel %vm2882, %v2877, %v1584
      %v2895 = vsel %vm2882, %v2878, %v1588
      %v2896 = vsel %vm2882, %v2879, %v1592
      %v2897 = vsel %vm2882, %v2880, %v1596
      %v2898 = vsel %vm2882, %v2881, %v1600
      %vm2899 = vcmask 23552
      %v2900 = vsel %vm2899, %v2883, %v2004
      %v2901 = vsel %vm2899, %v2884, %v2008
      %v2902 = vsel %vm2899, %v2885, %v2012
      %v2903 = vsel %vm2899, %v2886, %v2016
      %v2904 = vsel %vm2899, %v2887, %v2020
      %v2905 = vsel %vm2899, %v2888, %v2024
      %v2906 = vsel %vm2899, %v2889, %v2028
      %v2907 = vsel %vm2899, %v2890, %v2032
      %v2908 = vsel %vm2899, %v2891, %v2036
      %v2909 = vsel %vm2899, %v2892, %v2040
      %v2910 = vsel %vm2899, %v2893, %v2044
      %v2911 = vsel %vm2899, %v2894, %v2048
      %v2912 = vsel %vm2899, %v2895, %v2052
      %v2913 = vsel %vm2899, %v2896, %v2056
      %v2914 = vsel %vm2899, %v2897, %v2060
      %v2915 = vsel %vm2899, %v2898, %v2064
      %vm2916 = vcmask 31744
      %v2917 = vsel %vm2916, %v2900, %v2468
      %v2918 = vsel %vm2916, %v2901, %v2472
      %v2919 = vsel %vm2916, %v2902, %v2476
      %v2920 = vsel %vm2916, %v2903, %v2480
      %v2921 = vsel %vm2916, %v2904, %v2484
      %v2922 = vsel %vm2916, %v2905, %v2488
      %v2923 = vsel %vm2916, %v2906, %v2492
      %v2924 = vsel %vm2916, %v2907, %v2496
      %v2925 = vsel %vm2916, %v2908, %v2500
      %v2926 = vsel %vm2916, %v2909, %v2504
      %v2927 = vsel %vm2916, %v2910, %v2508
      %v2928 = vsel %vm2916, %v2911, %v2512
      %v2929 = vsel %vm2916, %v2912, %v2516
      %v2930 = vsel %vm2916, %v2913, %v2520
      %v2931 = vsel %vm2916, %v2914, %v2524
      %v2932 = vsel %vm2916, %v2915, %v2528
      %2933 = vst.msk [vmem:[#allocation2] sm:$0xff] %vm558, %v2917
      %2934 = vst.msk [vmem:[#allocation2 + $0x8] sm:$0xff] %vm558, %v2918
      %2935 = vst.msk [vmem:[#allocation2 + $0x10] sm:$0xff] %vm558, %v2919
      %2936 = vst.msk [vmem:[#allocation2 + $0x18] sm:$0xff] %vm558, %v2920
      %2937 = vst.msk [vmem:[#allocation2 + $0x20] sm:$0xff] %vm558, %v2921
      %2938 = vst.msk [vmem:[#allocation2 + $0x28] sm:$0xff] %vm558, %v2922
      %2939 = vst.msk [vmem:[#allocation2 + $0x30] sm:$0xff] %vm558, %v2923
      %2940 = vst.msk [vmem:[#allocation2 + $0x38] sm:$0xff] %vm558, %v2924
      %2941 = vst.msk [vmem:[#allocation2 + $0x40] sm:$0xff] %vm558, %v2925
      %2942 = vst.msk [vmem:[#allocation2 + $0x48] sm:$0xff] %vm558, %v2926
      %2943 = vst.msk [vmem:[#allocation2 + $0x50] sm:$0xff] %vm558, %v2927
      %2944 = vst.msk [vmem:[#allocation2 + $0x58] sm:$0xff] %vm558, %v2928
      %2945 = vst.msk [vmem:[#allocation2 + $0x60] sm:$0xff] %vm558, %v2929
      %2946 = vst.msk [vmem:[#allocation2 + $0x68] sm:$0xff] %vm558, %v2930
      %2947 = vst.msk [vmem:[#allocation2 + $0x70] sm:$0xff] %vm558, %v2931
      %2948 = vst.msk [vmem:[#allocation2 + $0x78] sm:$0xff] %vm558, %v2932
      %v2949 = vsel %vm2865, %v753, %v1217
      %v2950 = vsel %vm2865, %v770, %v1234
      %v2951 = vsel %vm2865, %v787, %v1251
      %v2952 = vsel %vm2865, %v804, %v1268
      %v2953 = vsel %vm2865, %v821, %v1285
      %v2954 = vsel %vm2865, %v838, %v1302
      %v2955 = vsel %vm2865, %v855, %v1319
      %v2956 = vsel %vm2865, %v872, %v1336
      %v2957 = vsel %vm2865, %v889, %v1353
      %v2958 = vsel %vm2865, %v906, %v1370
      %v2959 = vsel %vm2865, %v923, %v1387
      %v2960 = vsel %vm2865, %v940, %v1404
      %v2961 = vsel %vm2865, %v957, %v1421
      %v2962 = vsel %vm2865, %v974, %v1438
      %v2963 = vsel %vm2865, %v991, %v1455
      %v2964 = vsel %vm2865, %v1008, %v1472
      %v2965 = vsel %vm2882, %v2949, %v1681
      %v2966 = vsel %vm2882, %v2950, %v1698
      %v2967 = vsel %vm2882, %v2951, %v1715
      %v2968 = vsel %vm2882, %v2952, %v1732
      %v2969 = vsel %vm2882, %v2953, %v1749
      %v2970 = vsel %vm2882, %v2954, %v1766
      %v2971 = vsel %vm2882, %v2955, %v1783
      %v2972 = vsel %vm2882, %v2956, %v1800
      %v2973 = vsel %vm2882, %v2957, %v1817
      %v2974 = vsel %vm2882, %v2958, %v1834
      %v2975 = vsel %vm2882, %v2959, %v1851
      %v2976 = vsel %vm2882, %v2960, %v1868
      %v2977 = vsel %vm2882, %v2961, %v1885
      %v2978 = vsel %vm2882, %v2962, %v1902
      %v2979 = vsel %vm2882, %v2963, %v1919
      %v2980 = vsel %vm2882, %v2964, %v1936
      %v2981 = vsel %vm2899, %v2965, %v2145
      %v2982 = vsel %vm2899, %v2966, %v2162
      %v2983 = vsel %vm2899, %v2967, %v2179
      %v2984 = vsel %vm2899, %v2968, %v2196
      %v2985 = vsel %vm2899, %v2969, %v2213
      %v2986 = vsel %vm2899, %v2970, %v2230
      %v2987 = vsel %vm2899, %v2971, %v2247
      %v2988 = vsel %vm2899, %v2972, %v2264
      %v2989 = vsel %vm2899, %v2973, %v2281
      %v2990 = vsel %vm2899, %v2974, %v2298
      %v2991 = vsel %vm2899, %v2975, %v2315
      %v2992 = vsel %vm2899, %v2976, %v2332
      %v2993 = vsel %vm2899, %v2977, %v2349
      %v2994 = vsel %vm2899, %v2978, %v2366
      %v2995 = vsel %vm2899, %v2979, %v2383
      %v2996 = vsel %vm2899, %v2980, %v2400
      %v2997 = vsel %vm2916, %v2981, %v2609
      %v2998 = vsel %vm2916, %v2982, %v2626
      %v2999 = vsel %vm2916, %v2983, %v2643
      %v3000 = vsel %vm2916, %v2984, %v2660
      %v3001 = vsel %vm2916, %v2985, %v2677
      %v3002 = vsel %vm2916, %v2986, %v2694
      %v3003 = vsel %vm2916, %v2987, %v2711
      %v3004 = vsel %vm2916, %v2988, %v2728
      %v3005 = vsel %vm2916, %v2989, %v2745
      %v3006 = vsel %vm2916, %v2990, %v2762
      %v3007 = vsel %vm2916, %v2991, %v2779
      %v3008 = vsel %vm2916, %v2992, %v2796
      %v3009 = vsel %vm2916, %v2993, %v2813
      %v3010 = vsel %vm2916, %v2994, %v2830
      %v3011 = vsel %vm2916, %v2995, %v2847
      %v3012 = vsel %vm2916, %v2996, %v2864
      %3013 = vst.msk [vmem:[#allocation3] sm:$0xff] %vm558, %v2997
      %3014 = vst.msk [vmem:[#allocation3 + $0x8] sm:$0xff] %vm558, %v2998
      %3015 = vst.msk [vmem:[#allocation3 + $0x10] sm:$0xff] %vm558, %v2999
      %3016 = vst.msk [vmem:[#allocation3 + $0x18] sm:$0xff] %vm558, %v3000
      %3017 = vst.msk [vmem:[#allocation3 + $0x20] sm:$0xff] %vm558, %v3001
      %3018 = vst.msk [vmem:[#allocation3 + $0x28] sm:$0xff] %vm558, %v3002
      %3019 = vst.msk [vmem:[#allocation3 + $0x30] sm:$0xff] %vm558, %v3003
      %3020 = vst.msk [vmem:[#allocation3 + $0x38] sm:$0xff] %vm558, %v3004
      %3021 = vst.msk [vmem:[#allocation3 + $0x40] sm:$0xff] %vm558, %v3005
      %3022 = vst.msk [vmem:[#allocation3 + $0x48] sm:$0xff] %vm558, %v3006
      %3023 = vst.msk [vmem:[#allocation3 + $0x50] sm:$0xff] %vm558, %v3007
      %3024 = vst.msk [vmem:[#allocation3 + $0x58] sm:$0xff] %vm558, %v3008
      %3025 = vst.msk [vmem:[#allocation3 + $0x60] sm:$0xff] %vm558, %v3009
      %3026 = vst.msk [vmem:[#allocation3 + $0x68] sm:$0xff] %vm558, %v3010
      %3027 = vst.msk [vmem:[#allocation3 + $0x70] sm:$0xff] %vm558, %v3011
      %3028 = vst.msk [vmem:[#allocation3 + $0x78] sm:$0xff] %vm558, %v3012
      %p3029 = scmp.eq.s32.totalorder %s20, 1
      // Predicated region
      $region33: #{transformer_v5_forward.9} parent=27 // pred_check
        %p3030 = pneg %p3029
      $region34: #{transformer_v5_forward.9} parent=27 // pred_check_branch
        %3032 = sbr.rel (%p3030) target = $region36
      $region35: #{transformer_v5_forward.9} parent=27 // pred_region
        %3033 = vst [vmem:[%s224] sm:$0xff] 0
        %3034 = vst [vmem:[%s224 + $0x8] sm:$0xff] 0
        %3035 = vst [vmem:[%s224 + $0x10] sm:$0xff] 0
        %3036 = vst [vmem:[%s224 + $0x18] sm:$0xff] 0
        %3037 = vst [vmem:[%s224 + $0x20] sm:$0xff] 0
        %3038 = vst [vmem:[%s224 + $0x28] sm:$0xff] 0
        %3039 = vst [vmem:[%s224 + $0x30] sm:$0xff] 0
        %3040 = vst [vmem:[%s224 + $0x38] sm:$0xff] 0
        %3041 = vst [vmem:[%s224 + $0x40] sm:$0xff] 0
        %3042 = vst [vmem:[%s224 + $0x48] sm:$0xff] 0
        %3043 = vst [vmem:[%s224 + $0x50] sm:$0xff] 0
        %3044 = vst [vmem:[%s224 + $0x58] sm:$0xff] 0
        %3045 = vst [vmem:[%s224 + $0x60] sm:$0xff] 0
        %3046 = vst [vmem:[%s224 + $0x68] sm:$0xff] 0
        %3047 = vst [vmem:[%s224 + $0x70] sm:$0xff] 0
        %3048 = vst [vmem:[%s224 + $0x78] sm:$0xff] 0
        %v3049 = vld [vmem:[#allocation2] sm:$0xff]
        %v3050 = vld [vmem:[#allocation2 + $0x8] sm:$0xff]
        %v3051 = vld [vmem:[#allocation2 + $0x10] sm:$0xff]
        %v3052 = vld [vmem:[#allocation2 + $0x18] sm:$0xff]
        %v3053 = vld [vmem:[#allocation2 + $0x20] sm:$0xff]
        %v3054 = vld [vmem:[#allocation2 + $0x28] sm:$0xff]
        %v3055 = vld [vmem:[#allocation2 + $0x30] sm:$0xff]
        %v3056 = vld [vmem:[#allocation2 + $0x38] sm:$0xff]
        %v3057 = vld [vmem:[#allocation2 + $0x40] sm:$0xff]
        %v3058 = vld [vmem:[#allocation2 + $0x48] sm:$0xff]
        %v3059 = vld [vmem:[#allocation2 + $0x50] sm:$0xff]
        %v3060 = vld [vmem:[#allocation2 + $0x58] sm:$0xff]
        %v3061 = vld [vmem:[#allocation2 + $0x60] sm:$0xff]
        %v3062 = vld [vmem:[#allocation2 + $0x68] sm:$0xff]
        %v3063 = vld [vmem:[#allocation2 + $0x70] sm:$0xff]
        %v3064 = vld [vmem:[#allocation2 + $0x78] sm:$0xff]
        %3081 = vst.msk [vmem:[%s224] sm:$0xff] %vm558, %v3049
        %3082 = vst.msk [vmem:[%s224 + $0x8] sm:$0xff] %vm558, %v3050
        %3083 = vst.msk [vmem:[%s224 + $0x10] sm:$0xff] %vm558, %v3051
        %3084 = vst.msk [vmem:[%s224 + $0x18] sm:$0xff] %vm558, %v3052
        %3085 = vst.msk [vmem:[%s224 + $0x20] sm:$0xff] %vm558, %v3053
        %3086 = vst.msk [vmem:[%s224 + $0x28] sm:$0xff] %vm558, %v3054
        %3087 = vst.msk [vmem:[%s224 + $0x30] sm:$0xff] %vm558, %v3055
        %3088 = vst.msk [vmem:[%s224 + $0x38] sm:$0xff] %vm558, %v3056
        %3089 = vst.msk [vmem:[%s224 + $0x40] sm:$0xff] %vm558, %v3057
        %3090 = vst.msk [vmem:[%s224 + $0x48] sm:$0xff] %vm558, %v3058
        %3091 = vst.msk [vmem:[%s224 + $0x50] sm:$0xff] %vm558, %v3059
        %3092 = vst.msk [vmem:[%s224 + $0x58] sm:$0xff] %vm558, %v3060
        %3093 = vst.msk [vmem:[%s224 + $0x60] sm:$0xff] %vm558, %v3061
        %3094 = vst.msk [vmem:[%s224 + $0x68] sm:$0xff] %vm558, %v3062
        %3095 = vst.msk [vmem:[%s224 + $0x70] sm:$0xff] %vm558, %v3063
        %3096 = vst.msk [vmem:[%s224 + $0x78] sm:$0xff] %vm558, %v3064
        %v3097 = vld [vmem:[#allocation3] sm:$0xff]
        %v3098 = vld [vmem:[#allocation3 + $0x8] sm:$0xff]
        %v3099 = vld [vmem:[#allocation3 + $0x10] sm:$0xff]
        %v3100 = vld [vmem:[#allocation3 + $0x18] sm:$0xff]
        %v3101 = vld [vmem:[#allocation3 + $0x20] sm:$0xff]
        %v3102 = vld [vmem:[#allocation3 + $0x28] sm:$0xff]
        %v3103 = vld [vmem:[#allocation3 + $0x30] sm:$0xff]
        %v3104 = vld [vmem:[#allocation3 + $0x38] sm:$0xff]
        %v3105 = vld [vmem:[#allocation3 + $0x40] sm:$0xff]
        %v3106 = vld [vmem:[#allocation3 + $0x48] sm:$0xff]
        %v3107 = vld [vmem:[#allocation3 + $0x50] sm:$0xff]
        %v3108 = vld [vmem:[#allocation3 + $0x58] sm:$0xff]
        %v3109 = vld [vmem:[#allocation3 + $0x60] sm:$0xff]
        %v3110 = vld [vmem:[#allocation3 + $0x68] sm:$0xff]
        %v3111 = vld [vmem:[#allocation3 + $0x70] sm:$0xff]
        %v3112 = vld [vmem:[#allocation3 + $0x78] sm:$0xff]
        %3113 = vrot.lane.b32.xlu0 %v3097, 5
        %v3114 = vpop.permute.xlu0 %3113
        %3115 = vrot.lane.b32.xlu0 %v3098, 5
        %v3116 = vpop.permute.xlu0 %3115
        %3117 = vrot.lane.b32.xlu0 %v3099, 5
        %v3118 = vpop.permute.xlu0 %3117
        %3119 = vrot.lane.b32.xlu0 %v3100, 5
        %v3120 = vpop.permute.xlu0 %3119
        %3121 = vrot.lane.b32.xlu0 %v3101, 5
        %v3122 = vpop.permute.xlu0 %3121
        %3123 = vrot.lane.b32.xlu0 %v3102, 5
        %v3124 = vpop.permute.xlu0 %3123
        %3125 = vrot.lane.b32.xlu0 %v3103, 5
        %v3126 = vpop.permute.xlu0 %3125
        %3127 = vrot.lane.b32.xlu0 %v3104, 5
        %v3128 = vpop.permute.xlu0 %3127
        %3129 = vrot.lane.b32.xlu0 %v3105, 5
        %v3130 = vpop.permute.xlu0 %3129
        %3131 = vrot.lane.b32.xlu0 %v3106, 5
        %v3132 = vpop.permute.xlu0 %3131
        %3133 = vrot.lane.b32.xlu0 %v3107, 5
        %v3134 = vpop.permute.xlu0 %3133
        %3135 = vrot.lane.b32.xlu0 %v3108, 5
        %v3136 = vpop.permute.xlu0 %3135
        %3137 = vrot.lane.b32.xlu0 %v3109, 5
        %v3138 = vpop.permute.xlu0 %3137
        %3139 = vrot.lane.b32.xlu0 %v3110, 5
        %v3140 = vpop.permute.xlu0 %3139
        %3141 = vrot.lane.b32.xlu0 %v3111, 5
        %v3142 = vpop.permute.xlu0 %3141
        %3143 = vrot.lane.b32.xlu0 %v3112, 5
        %v3144 = vpop.permute.xlu0 %3143
        %vm3145 = vcmask 80936
        %3146 = vst.msk [vmem:[%s224] sm:$0xff] %vm3145, %v3114
        %3147 = vst.msk [vmem:[%s224 + $0x8] sm:$0xff] %vm3145, %v3116
        %3148 = vst.msk [vmem:[%s224 + $0x10] sm:$0xff] %vm3145, %v3118
        %3149 = vst.msk [vmem:[%s224 + $0x18] sm:$0xff] %vm3145, %v3120
        %3150 = vst.msk [vmem:[%s224 + $0x20] sm:$0xff] %vm3145, %v3122
        %3151 = vst.msk [vmem:[%s224 + $0x28] sm:$0xff] %vm3145, %v3124
        %3152 = vst.msk [vmem:[%s224 + $0x30] sm:$0xff] %vm3145, %v3126
        %3153 = vst.msk [vmem:[%s224 + $0x38] sm:$0xff] %vm3145, %v3128
        %3154 = vst.msk [vmem:[%s224 + $0x40] sm:$0xff] %vm3145, %v3130
        %3155 = vst.msk [vmem:[%s224 + $0x48] sm:$0xff] %vm3145, %v3132
        %3156 = vst.msk [vmem:[%s224 + $0x50] sm:$0xff] %vm3145, %v3134
        %3157 = vst.msk [vmem:[%s224 + $0x58] sm:$0xff] %vm3145, %v3136
        %3158 = vst.msk [vmem:[%s224 + $0x60] sm:$0xff] %vm3145, %v3138
        %3159 = vst.msk [vmem:[%s224 + $0x68] sm:$0xff] %vm3145, %v3140
        %3160 = vst.msk [vmem:[%s224 + $0x70] sm:$0xff] %vm3145, %v3142
        %3161 = vst.msk [vmem:[%s224 + $0x78] sm:$0xff] %vm3145, %v3144
      $region36: #{transformer_v5_forward.9} parent=27 // pred_fallthru
        _
      %s3162 = smul.u32 16, %s19
      %p3163 = scmp.lt.s32.totalorder %s18, 1
      %s3164 = scalar_select %p3163, %s18, 1
      %p3165 = scmp.lt.s32.totalorder %s3162, 31
      %s3166 = scalar_select %p3165, %s3162, 31
      %s3167 = smul.addr %s3164, 32
      %s3168 = sadd.s32 %s3166, %s3167
      %s3169 = smul.addr %s3168, 8
      %s3170 = scalar_lea.vmem %s2, %s3169
      // Predicated region
      $region37: #{transformer_v5_forward.9} parent=27 // pred_check
        %p3171 = pneg %p108
      $region38: #{transformer_v5_forward.9} parent=27 // pred_check_branch
        %3173 = sbr.rel (%p3171) target = $region40
      $region39: #{transformer_v5_forward.9} parent=27 // pred_region
        %s3174 = smul.u32 16, %s19
      $region40: #{transformer_v5_forward.9} parent=27 // pred_fallthru
        _
    $region28: #{transformer_v5_forward.9} parent=5 // pred_fallthru
      _
    %p3175 = scmp.le.s32.totalorder 2, %s8
    // Predicated region
    $region41: #{transformer_v5_forward.9} parent=5 // pred_check
      %p3176 = pneg %p3175
    $region42: #{transformer_v5_forward.9} parent=5 // pred_check_branch
      %3178 = sbr.rel (%p3176) target = $region44
    $region43: #{transformer_v5_forward.9} parent=5 // pred_region
      %s3179 = ssub.s32 %s8, 2
      // Predicated region
      $region45: #{transformer_v5_forward.9} parent=43 // pred_check
        %p3180 = pneg %p114
      $region46: #{transformer_v5_forward.9} parent=43 // pred_check_branch
        %3182 = sbr.rel (%p3180) target = $region48
      $region47: #{transformer_v5_forward.9} parent=43 // pred_region
        %s3183 = smul.u32 16, %s22
        %p3184 = scmp.lt.s32.totalorder %s21, 1
        %s3185 = scalar_select %p3184, %s21, 1
        %p3186 = scmp.lt.s32.totalorder %s3183, 31
        %s3187 = scalar_select %p3186, %s3183, 31
        %s3188 = smul.addr %s3185, 32
        %s3189 = sadd.s32 %s3187, %s3188
        %s3190 = smul.addr %s3189, 8
        %s3191 = scalar_lea.vmem %s2, %s3190
      $region48: #{transformer_v5_forward.9} parent=43 // pred_fallthru
        _
    $region44: #{transformer_v5_forward.9} parent=5 // pred_fallthru
      _
  $region6: #{transformer_v5_forward.9} parent=0 // loop_footer
    %s12 = sadd.s32 1, %s8
  $region7: #{transformer_v5_forward.9} parent=0 // loop_footer_branch
    %7 = sbr.rel target = $region3
  $region8: #{transformer_v5_forward.9} parent=0 // loop_exit
    _

// kernel: transformer_v5_forward.10
$region0: #{transformer_v5_forward.10}
  #allocation0 [shape = 'u32[]', space=smem, size = 0x4, offset = 0x4, fixed_abs, tag = 'smem constant byte address 0x4 - core index']
  #allocation1 [shape = 'u32[72,128]{1,0:T(1,128)}', space=vmem, size = 0x9000, scoped, tag = 'internal scratch']
  %s0 = inlined_call_operand.vmem [shape: bf16[512,16], index: 0, kind: input, shape index: {}]
  %s1 = inlined_call_operand.vmem [shape: bf16[16,4], index: 1, kind: input, shape index: {}]
  %s2 = inlined_call_operand.vmem [shape: f32[1,4], index: 2, kind: input, shape index: {}]
  %s3 = inlined_call_operand.vmem [shape: f32[512,4], index: 3, kind: output, shape index: {}]
  %s4 = sld [smem:[#allocation0]]
  $region45: #{transformer_v5_forward.10} parent=0
    _
  %s6 = ssub.s32 1, %s4
  %s7 = scalar_select 0, %s6, %s4
  loop: start=0, step=1, limit=4
  $region2: #{transformer_v5_forward.10} parent=0 // loop_pre_header
    _
  $region3: #{transformer_v5_forward.10} parent=0 // loop_header
    %s9 = sphi 0, %s13
    %p10 = scmp.ge.s32.totalorder %s9, 4
    %s19 = sphi 0, %s21
    %s22 = sphi 0, %s19
    %s23 = sphi 0, %s22
    %s39 = sphi 0, %s23
    %s43 = sphi 0, %s43
    %s45 = sphi 0, %s43
    %s46 = sphi 0, %s45
    %s60 = sphi 0, %s46
    %s64 = sphi 0, %s64
    %s66 = sphi 0, %s64
    %s67 = sphi 0, %s66
    %s81 = sphi 0, %s67
    %s87 = sphi 0, %s89
    %s90 = sphi 0, %s87
    %s91 = sphi 0, %s90
    %s107 = sphi 0, %s91
  $region4: #{transformer_v5_forward.10} parent=0 // loop_header_branch
    %12 = sbr.rel (%p10) target = $region8
  $region5: #{transformer_v5_forward.10} parent=0 // loop_body
    %s14 = ssub.s32 %s9, 1
    %s15 = ssub.s32 %s9, 2
    %s16 = sadd.s32 %s9, 1
    %s17 = ssub.s32 %s9, %s16
    %p18 = scmp.eq.s32.totalorder %s17, 0
    %s20 = sadd.s32 %s19, 1
    %s21 = scalar_select %p18, %s19, %s20
    %p24 = pneg %p18
    %p25 = scmp.eq.s32.totalorder %s9, 1
    %p26 = por %p24, %p25
    %p27 = scmp.ne.s32.totalorder %s19, %s22
    %p28 = scmp.eq.s32.totalorder %s9, 0
    %p29 = por %p27, %p28
    %p30 = scmp.ne.s32.totalorder %s19, %s22
    %p31 = scmp.eq.s32.totalorder %s14, 1
    %p32 = por %p30, %p31
    %p33 = scmp.ne.s32.totalorder %s22, %s23
    %p34 = scmp.eq.s32.totalorder %s14, 0
    %p35 = por %p33, %p34
    %p36 = scmp.ne.s32.totalorder %s22, %s23
    %p37 = scmp.eq.s32.totalorder %s15, 1
    %p38 = por %p36, %p37
    %p40 = scmp.ne.s32.totalorder %s23, %s39
    %p41 = scmp.eq.s32.totalorder %s15, 0
    %p42 = por %p40, %p41
    %s44 = sadd.s32 %s43, 1
    %p47 = scmp.eq.s32.totalorder %s9, 1
    %p48 = scmp.ne.s32.totalorder %s43, %s45
    %p49 = scmp.eq.s32.totalorder %s9, 0
    %p50 = por %p48, %p49
    %p51 = scmp.ne.s32.totalorder %s43, %s45
    %p52 = scmp.eq.s32.totalorder %s14, 1
    %p53 = por %p51, %p52
    %p54 = scmp.ne.s32.totalorder %s45, %s46
    %p55 = scmp.eq.s32.totalorder %s14, 0
    %p56 = por %p54, %p55
    %p57 = scmp.ne.s32.totalorder %s45, %s46
    %p58 = scmp.eq.s32.totalorder %s15, 1
    %p59 = por %p57, %p58
    %p61 = scmp.ne.s32.totalorder %s46, %s60
    %p62 = scmp.eq.s32.totalorder %s15, 0
    %p63 = por %p61, %p62
    %s65 = sadd.s32 %s64, 1
    %p68 = scmp.eq.s32.totalorder %s9, 1
    %p69 = scmp.ne.s32.totalorder %s64, %s66
    %p70 = scmp.eq.s32.totalorder %s9, 0
    %p71 = por %p69, %p70
    %p72 = scmp.ne.s32.totalorder %s64, %s66
    %p73 = scmp.eq.s32.totalorder %s14, 1
    %p74 = por %p72, %p73
    %p75 = scmp.ne.s32.totalorder %s66, %s67
    %p76 = scmp.eq.s32.totalorder %s14, 0
    %p77 = por %p75, %p76
    %p78 = scmp.ne.s32.totalorder %s66, %s67
    %p79 = scmp.eq.s32.totalorder %s15, 1
    %p80 = por %p78, %p79
    %p82 = scmp.ne.s32.totalorder %s67, %s81
    %p83 = scmp.eq.s32.totalorder %s15, 0
    %p84 = por %p82, %p83
    %s85 = ssub.s32 %s9, %s16
    %p86 = scmp.eq.s32.totalorder %s85, 0
    %s88 = sadd.s32 %s87, 1
    %s89 = scalar_select %p86, %s87, %s88
    %p92 = pneg %p86
    %p93 = scmp.eq.s32.totalorder %s9, 1
    %p94 = por %p92, %p93
    %p95 = scmp.ne.s32.totalorder %s87, %s90
    %p96 = scmp.eq.s32.totalorder %s9, 0
    %p97 = por %p95, %p96
    %p98 = scmp.ne.s32.totalorder %s87, %s90
    %p99 = scmp.eq.s32.totalorder %s14, 1
    %p100 = por %p98, %p99
    %p101 = scmp.ne.s32.totalorder %s90, %s91
    %p102 = scmp.eq.s32.totalorder %s14, 0
    %p103 = por %p101, %p102
    %p104 = scmp.ne.s32.totalorder %s90, %s91
    %p105 = scmp.eq.s32.totalorder %s15, 1
    %p106 = por %p104, %p105
    %p108 = scmp.ne.s32.totalorder %s91, %s107
    %p109 = scmp.eq.s32.totalorder %s15, 0
    %p110 = por %p108, %p109
    %p111 = scmp.le.s32.totalorder 1, %s9
    %p112 = scmp.lt.s32.totalorder %s9, 3
    %p113 = pnand %p111, %p112
    %p114 = pneg %p113
    // Predicated region
    $region9: #{transformer_v5_forward.10} parent=5 // pred_check
      _
    $region10: #{transformer_v5_forward.10} parent=5 // pred_check_branch
      %116 = sbr.rel (%p113) target = $region12
    $region11: #{transformer_v5_forward.10} parent=5 // pred_region
      %s117 = ssub.s32 %s9, 1
      // Predicated region
      $region13: #{transformer_v5_forward.10} parent=11 // pred_check
        %p118 = pneg %p56
      $region14: #{transformer_v5_forward.10} parent=11 // pred_check_branch
        %120 = sbr.rel (%p118) target = $region16
      $region15: #{transformer_v5_forward.10} parent=11 // pred_region
        _
      $region16: #{transformer_v5_forward.10} parent=11 // pred_fallthru
        _
      // Predicated region
      $region17: #{transformer_v5_forward.10} parent=11 // pred_check
        %p121 = pneg %p77
      $region18: #{transformer_v5_forward.10} parent=11 // pred_check_branch
        %123 = sbr.rel (%p121) target = $region20
      $region19: #{transformer_v5_forward.10} parent=11 // pred_region
        _
      $region20: #{transformer_v5_forward.10} parent=11 // pred_fallthru
        _
    $region12: #{transformer_v5_forward.10} parent=5 // pred_fallthru
      _
    %p124 = scmp.lt.s32.totalorder %s9, 2
    // Predicated region
    $region21: #{transformer_v5_forward.10} parent=5 // pred_check
      %p125 = pneg %p124
    $region22: #{transformer_v5_forward.10} parent=5 // pred_check_branch
      %127 = sbr.rel (%p125) target = $region24
    $region23: #{transformer_v5_forward.10} parent=5 // pred_region
      // Predicated region
      $region25: #{transformer_v5_forward.10} parent=23 // pred_check
        %p128 = pneg %p29
      $region26: #{transformer_v5_forward.10} parent=23 // pred_check_branch
        %130 = sbr.rel (%p128) target = $region28
      $region27: #{transformer_v5_forward.10} parent=23 // pred_region
        %s131 = smul.u32 32, %s9
        %p132 = scmp.lt.s32.totalorder %s131, 63
        %s133 = scalar_select %p132, %s131, 63
        %s134 = smul.addr %s133, 4
        %s135 = scalar_lea.vmem %s0, %s134
        %s136 = smul.u32 32, %s9
      $region28: #{transformer_v5_forward.10} parent=23 // pred_fallthru
        _
    $region24: #{transformer_v5_forward.10} parent=5 // pred_fallthru
      _
    %p137 = scmp.le.s32.totalorder 1, %s9
    %p138 = scmp.lt.s32.totalorder %s9, 3
    %p139 = pnand %p137, %p138
    %p140 = pneg %p139
    // Predicated region
    $region29: #{transformer_v5_forward.10} parent=5 // pred_check
      _
    $region30: #{transformer_v5_forward.10} parent=5 // pred_check_branch
      %142 = sbr.rel (%p139) target = $region32
    $region31: #{transformer_v5_forward.10} parent=5 // pred_region
      %s143 = ssub.s32 %s9, 1
      %s144 = smul.u32 32, %s14
      %p145 = scmp.lt.s32.totalorder %s144, 63
      %s146 = scalar_select %p145, %s144, 63
      %s147 = smul.addr %s146, 4
      %s148 = scalar_lea.vmem %s0, %s147
      %p149 = pneg %p35
      %p150 = pneg %p32
      %p151 = pneg %p56
      %p152 = pneg %p53
      %p153 = pneg %p77
      %p154 = pneg %p74
      %p155 = pneg %p103
      %p156 = pneg %p100
      %s157 = smul.u32 32, %s14
      %p158 = scmp.lt.s32.totalorder %s157, 63
      %s159 = scalar_select %p158, %s157, 63
      %s160 = smul.addr %s159, 8
      %s161 = scalar_lea.vmem %s3, %s160
      %s162 = smul.u32 32, %s14
      %p163 = scmp.lt.s32.totalorder %s162, 63
      %s164 = scalar_select %p163, %s162, 63
      %s165 = smul.addr %s164, 4
      %s166 = scalar_lea.vmem %s0, %s165
      %s167 = smul.u32 32, %s14
      %s168 = smul.u32 32, %s14
      %p169 = scmp.lt.s32.totalorder %s168, 63
      %s170 = scalar_select %p169, %s168, 63
      %s171 = smul.addr %s170, 8
      %s172 = scalar_lea.vmem %s3, %s171
      %s173 = smul.u32 32, %s14
      %v175 = vld [vmem:[%s166] sm:$0xf]
      %v176 = vld [vmem:[%s166 + $0x4] sm:$0xf]
      %v177 = vld [vmem:[%s166 + $0x8] sm:$0xf]
      %v178 = vld [vmem:[%s166 + $0xc] sm:$0xf]
      %v179 = vld [vmem:[%s166 + $0x10] sm:$0xf]
      %v180 = vld [vmem:[%s166 + $0x14] sm:$0xf]
      %v181 = vld [vmem:[%s166 + $0x18] sm:$0xf]
      %v182 = vld [vmem:[%s166 + $0x1c] sm:$0xf]
      %v183 = vld [vmem:[%s166 + $0x20] sm:$0xf]
      %v184 = vld [vmem:[%s166 + $0x24] sm:$0xf]
      %v185 = vld [vmem:[%s166 + $0x28] sm:$0xf]
      %v186 = vld [vmem:[%s166 + $0x2c] sm:$0xf]
      %v187 = vld [vmem:[%s166 + $0x30] sm:$0xf]
      %v188 = vld [vmem:[%s166 + $0x34] sm:$0xf]
      %v189 = vld [vmem:[%s166 + $0x38] sm:$0xf]
      %v190 = vld [vmem:[%s166 + $0x3c] sm:$0xf]
      %v191 = vld [vmem:[%s166 + $0x40] sm:$0xf]
      %v192 = vld [vmem:[%s166 + $0x44] sm:$0xf]
      %v193 = vld [vmem:[%s166 + $0x48] sm:$0xf]
      %v194 = vld [vmem:[%s166 + $0x4c] sm:$0xf]
      %v195 = vld [vmem:[%s166 + $0x50] sm:$0xf]
      %v196 = vld [vmem:[%s166 + $0x54] sm:$0xf]
      %v197 = vld [vmem:[%s166 + $0x58] sm:$0xf]
      %v198 = vld [vmem:[%s166 + $0x5c] sm:$0xf]
      %v199 = vld [vmem:[%s166 + $0x60] sm:$0xf]
      %v200 = vld [vmem:[%s166 + $0x64] sm:$0xf]
      %v201 = vld [vmem:[%s166 + $0x68] sm:$0xf]
      %v202 = vld [vmem:[%s166 + $0x6c] sm:$0xf]
      %v203 = vld [vmem:[%s166 + $0x70] sm:$0xf]
      %v204 = vld [vmem:[%s166 + $0x74] sm:$0xf]
      %v205 = vld [vmem:[%s166 + $0x78] sm:$0xf]
      %v206 = vld [vmem:[%s166 + $0x7c] sm:$0xf]
      %v207 = vld [vmem:[%s1] sm:$0xf]
      %v208 = vld [vmem:[%s1 + $0x4] sm:$0xf]
      %v209 = vld [vmem:[%s2] sm:$0x1]
      %v211 = vperm.slane %v209, 0
      %v245 = vunpack.c.l.b16 %v175
      %v246 = vunpack.c.l.b16 %v176
      %v247 = vunpack.c.l.b16 %v177
      %v248 = vunpack.c.l.b16 %v178
      %v249 = vunpack.c.l.b16 %v179
      %v250 = vunpack.c.l.b16 %v180
      %v251 = vunpack.c.l.b16 %v181
      %v252 = vunpack.c.l.b16 %v182
      %v253 = vunpack.c.l.b16 %v183
      %v254 = vunpack.c.l.b16 %v184
      %v255 = vunpack.c.l.b16 %v185
      %v256 = vunpack.c.l.b16 %v186
      %v257 = vunpack.c.l.b16 %v187
      %v258 = vunpack.c.l.b16 %v188
      %v259 = vunpack.c.l.b16 %v189
      %v260 = vunpack.c.l.b16 %v190
      %v261 = vunpack.c.l.b16 %v191
      %v262 = vunpack.c.l.b16 %v192
      %v263 = vunpack.c.l.b16 %v193
      %v264 = vunpack.c.l.b16 %v194
      %v265 = vunpack.c.l.b16 %v195
      %v266 = vunpack.c.l.b16 %v196
      %v267 = vunpack.c.l.b16 %v197
      %v268 = vunpack.c.l.b16 %v198
      %v269 = vunpack.c.l.b16 %v199
      %v270 = vunpack.c.l.b16 %v200
      %v271 = vunpack.c.l.b16 %v201
      %v272 = vunpack.c.l.b16 %v202
      %v273 = vunpack.c.l.b16 %v203
      %v274 = vunpack.c.l.b16 %v204
      %v275 = vunpack.c.l.b16 %v205
      %v276 = vunpack.c.l.b16 %v206
      %v277 = vpack.c.b16 %v246, %v245
      %v278 = vpack.c.b16 %v248, %v247
      %v279 = vpack.c.b16 %v250, %v249
      %v280 = vpack.c.b16 %v252, %v251
      %v281 = vpack.c.b16 %v254, %v253
      %v282 = vpack.c.b16 %v256, %v255
      %v283 = vpack.c.b16 %v258, %v257
      %v284 = vpack.c.b16 %v260, %v259
      %v285 = vpack.c.b16 %v262, %v261
      %v286 = vpack.c.b16 %v264, %v263
      %v287 = vpack.c.b16 %v266, %v265
      %v288 = vpack.c.b16 %v268, %v267
      %v289 = vpack.c.b16 %v270, %v269
      %v290 = vpack.c.b16 %v272, %v271
      %v291 = vpack.c.b16 %v274, %v273
      %v292 = vpack.c.b16 %v276, %v275
      %v295 = vunpack.c.l.b16 %v207
      %v296 = vunpack.c.l.b16 %v208
      %v297 = vpack.c.b16 %v296, %v295
      %vm299 = vcmask 130048
      %v301 = vsel %vm299, %v277, 0
      %v304 = vsel %vm299, %v278, 0
      %v307 = vsel %vm299, %v279, 0
      %v310 = vsel %vm299, %v280, 0
      %v313 = vsel %vm299, %v281, 0
      %v316 = vsel %vm299, %v282, 0
      %v319 = vsel %vm299, %v283, 0
      %v322 = vsel %vm299, %v284, 0
      %v325 = vsel %vm299, %v285, 0
      %v328 = vsel %vm299, %v286, 0
      %v331 = vsel %vm299, %v287, 0
      %v334 = vsel %vm299, %v288, 0
      %v337 = vsel %vm299, %v289, 0
      %v340 = vsel %vm299, %v290, 0
      %v343 = vsel %vm299, %v291, 0
      %v346 = vsel %vm299, %v292, 0
      %348 = vmatpush.bf16.msra.mxu0 0
      %349 = vmatpush.bf16.msra.mxu0 0
      %350 = vmatpush.bf16.msra.mxu0 0
      %351 = vmatpush.bf16.msra.mxu0 0
      %352 = vmatpush.bf16.msra.mxu0 0
      %353 = vmatpush.bf16.msra.mxu0 0
      %354 = vmatpush.bf16.msra.mxu0 0
      %355 = vmatpush.bf16.msra.mxu0 %v297
      %356 = vmatmul.bf16.gmra.mxu0 %v301
      %v357 = vpop.f32.mrf.mxu0
      %v358 = vadd.f32 %v211, %v357
      %v359 = vpop.f32.mrf.mxu0
      %v360 = vadd.f32 %v211, %v359
      %361 = vmatmul.bf16.gmra.mxu0 %v304
      %v362 = vpop.f32.mrf.mxu0
      %v363 = vadd.f32 %v211, %v362
      %v364 = vpop.f32.mrf.mxu0
      %v365 = vadd.f32 %v211, %v364
      %366 = vmatmul.bf16.gmra.mxu0 %v307
      %v367 = vpop.f32.mrf.mxu0
      %v368 = vadd.f32 %v211, %v367
      %v369 = vpop.f32.mrf.mxu0
      %v370 = vadd.f32 %v211, %v369
      %371 = vmatmul.bf16.gmra.mxu0 %v310
      %v372 = vpop.f32.mrf.mxu0
      %v373 = vadd.f32 %v211, %v372
      %v374 = vpop.f32.mrf.mxu0
      %v375 = vadd.f32 %v211, %v374
      %376 = vmatmul.bf16.gmra.mxu0 %v313
      %v377 = vpop.f32.mrf.mxu0
      %v378 = vadd.f32 %v211, %v377
      %v379 = vpop.f32.mrf.mxu0
      %v380 = vadd.f32 %v211, %v379
      %381 = vmatmul.bf16.gmra.mxu0 %v316
      %v382 = vpop.f32.mrf.mxu0
      %v383 = vadd.f32 %v211, %v382
      %v384 = vpop.f32.mrf.mxu0
      %v385 = vadd.f32 %v211, %v384
      %386 = vmatmul.bf16.gmra.mxu0 %v319
      %v387 = vpop.f32.mrf.mxu0
      %v388 = vadd.f32 %v211, %v387
      %v389 = vpop.f32.mrf.mxu0
      %v390 = vadd.f32 %v211, %v389
      %391 = vmatmul.bf16.gmra.mxu0 %v322
      %v392 = vpop.f32.mrf.mxu0
      %v393 = vadd.f32 %v211, %v392
      %v394 = vpop.f32.mrf.mxu0
      %v395 = vadd.f32 %v211, %v394
      %396 = vmatmul.bf16.gmra.mxu0 %v325
      %v397 = vpop.f32.mrf.mxu0
      %v398 = vadd.f32 %v211, %v397
      %v399 = vpop.f32.mrf.mxu0
      %v400 = vadd.f32 %v211, %v399
      %401 = vmatmul.bf16.gmra.mxu0 %v328
      %v402 = vpop.f32.mrf.mxu0
      %v403 = vadd.f32 %v211, %v402
      %v404 = vpop.f32.mrf.mxu0
      %v405 = vadd.f32 %v211, %v404
      %406 = vmatmul.bf16.gmra.mxu0 %v331
      %v407 = vpop.f32.mrf.mxu0
      %v408 = vadd.f32 %v211, %v407
      %v409 = vpop.f32.mrf.mxu0
      %v410 = vadd.f32 %v211, %v409
      %411 = vmatmul.bf16.gmra.mxu0 %v334
      %v412 = vpop.f32.mrf.mxu0
      %v413 = vadd.f32 %v211, %v412
      %v414 = vpop.f32.mrf.mxu0
      %v415 = vadd.f32 %v211, %v414
      %416 = vmatmul.bf16.gmra.mxu0 %v337
      %v417 = vpop.f32.mrf.mxu0
      %v418 = vadd.f32 %v211, %v417
      %v419 = vpop.f32.mrf.mxu0
      %v420 = vadd.f32 %v211, %v419
      %421 = vmatmul.bf16.gmra.mxu0 %v340
      %v422 = vpop.f32.mrf.mxu0
      %v423 = vadd.f32 %v211, %v422
      %v424 = vpop.f32.mrf.mxu0
      %v425 = vadd.f32 %v211, %v424
      %426 = vmatmul.bf16.gmra.mxu0 %v343
      %v427 = vpop.f32.mrf.mxu0
      %v428 = vadd.f32 %v211, %v427
      %v429 = vpop.f32.mrf.mxu0
      %v430 = vadd.f32 %v211, %v429
      %431 = vmatmul.bf16.gmra.mxu0 %v346
      %v432 = vpop.f32.mrf.mxu0
      %v433 = vadd.f32 %v211, %v432
      %v434 = vpop.f32.mrf.mxu0
      %v435 = vadd.f32 %v211, %v434
      %436 = vdwg.mxu0
      %vm437 = vcmask 31744
      %438 = vst.msk [vmem:[%s172] sm:$0xff] %vm437, %v358
      %439 = vst.msk [vmem:[%s172 + $0x8] sm:$0xff] %vm437, %v360
      %440 = vst.msk [vmem:[%s172 + $0x10] sm:$0xff] %vm437, %v363
      %441 = vst.msk [vmem:[%s172 + $0x18] sm:$0xff] %vm437, %v365
      %442 = vst.msk [vmem:[%s172 + $0x20] sm:$0xff] %vm437, %v368
      %443 = vst.msk [vmem:[%s172 + $0x28] sm:$0xff] %vm437, %v370
      %444 = vst.msk [vmem:[%s172 + $0x30] sm:$0xff] %vm437, %v373
      %445 = vst.msk [vmem:[%s172 + $0x38] sm:$0xff] %vm437, %v375
      %446 = vst.msk [vmem:[%s172 + $0x40] sm:$0xff] %vm437, %v378
      %447 = vst.msk [vmem:[%s172 + $0x48] sm:$0xff] %vm437, %v380
      %448 = vst.msk [vmem:[%s172 + $0x50] sm:$0xff] %vm437, %v383
      %449 = vst.msk [vmem:[%s172 + $0x58] sm:$0xff] %vm437, %v385
      %450 = vst.msk [vmem:[%s172 + $0x60] sm:$0xff] %vm437, %v388
      %451 = vst.msk [vmem:[%s172 + $0x68] sm:$0xff] %vm437, %v390
      %452 = vst.msk [vmem:[%s172 + $0x70] sm:$0xff] %vm437, %v393
      %453 = vst.msk [vmem:[%s172 + $0x78] sm:$0xff] %vm437, %v395
      %454 = vst.msk [vmem:[%s172 + $0x80] sm:$0xff] %vm437, %v398
      %455 = vst.msk [vmem:[%s172 + $0x88] sm:$0xff] %vm437, %v400
      %456 = vst.msk [vmem:[%s172 + $0x90] sm:$0xff] %vm437, %v403
      %457 = vst.msk [vmem:[%s172 + $0x98] sm:$0xff] %vm437, %v405
      %458 = vst.msk [vmem:[%s172 + $0xa0] sm:$0xff] %vm437, %v408
      %459 = vst.msk [vmem:[%s172 + $0xa8] sm:$0xff] %vm437, %v410
      %460 = vst.msk [vmem:[%s172 + $0xb0] sm:$0xff] %vm437, %v413
      %461 = vst.msk [vmem:[%s172 + $0xb8] sm:$0xff] %vm437, %v415
      %462 = vst.msk [vmem:[%s172 + $0xc0] sm:$0xff] %vm437, %v418
      %463 = vst.msk [vmem:[%s172 + $0xc8] sm:$0xff] %vm437, %v420
      %464 = vst.msk [vmem:[%s172 + $0xd0] sm:$0xff] %vm437, %v423
      %465 = vst.msk [vmem:[%s172 + $0xd8] sm:$0xff] %vm437, %v425
      %466 = vst.msk [vmem:[%s172 + $0xe0] sm:$0xff] %vm437, %v428
      %467 = vst.msk [vmem:[%s172 + $0xe8] sm:$0xff] %vm437, %v430
      %468 = vst.msk [vmem:[%s172 + $0xf0] sm:$0xff] %vm437, %v433
      %469 = vst.msk [vmem:[%s172 + $0xf8] sm:$0xff] %vm437, %v435
      %s470 = smul.u32 32, %s14
      %p471 = scmp.lt.s32.totalorder %s470, 63
      %s472 = scalar_select %p471, %s470, 63
      %s473 = smul.addr %s472, 8
      %s474 = scalar_lea.vmem %s3, %s473
      // Predicated region
      $region33: #{transformer_v5_forward.10} parent=31 // pred_check
        %p475 = pneg %p100
      $region34: #{transformer_v5_forward.10} parent=31 // pred_check_branch
        %477 = sbr.rel (%p475) target = $region36
      $region35: #{transformer_v5_forward.10} parent=31 // pred_region
        %s478 = smul.u32 32, %s14
      $region36: #{transformer_v5_forward.10} parent=31 // pred_fallthru
        _
    $region32: #{transformer_v5_forward.10} parent=5 // pred_fallthru
      _
    %p479 = scmp.le.s32.totalorder 2, %s9
    // Predicated region
    $region37: #{transformer_v5_forward.10} parent=5 // pred_check
      %p480 = pneg %p479
    $region38: #{transformer_v5_forward.10} parent=5 // pred_check_branch
      %482 = sbr.rel (%p480) target = $region40
    $region39: #{transformer_v5_forward.10} parent=5 // pred_region
      %s483 = ssub.s32 %s9, 2
      // Predicated region
      $region41: #{transformer_v5_forward.10} parent=39 // pred_check
        %p484 = pneg %p106
      $region42: #{transformer_v5_forward.10} parent=39 // pred_check_branch
        %486 = sbr.rel (%p484) target = $region44
      $region43: #{transformer_v5_forward.10} parent=39 // pred_region
        %s487 = smul.u32 32, %s15
        %p488 = scmp.lt.s32.totalorder %s487, 63
        %s489 = scalar_select %p488, %s487, 63
        %s490 = smul.addr %s489, 8
        %s491 = scalar_lea.vmem %s3, %s490
      $region44: #{transformer_v5_forward.10} parent=39 // pred_fallthru
        _
    $region40: #{transformer_v5_forward.10} parent=5 // pred_fallthru
      _
  $region6: #{transformer_v5_forward.10} parent=0 // loop_footer
    %s13 = sadd.s32 1, %s9
  $region7: #{transformer_v5_forward.10} parent=0 // loop_footer_branch
    %8 = sbr.rel target = $region3
  $region8: #{transformer_v5_forward.10} parent=0 // loop_exit
    _

// kernel: transformer_v5_forward.6
$region0: #{transformer_v5_forward.6}
  #allocation0 [shape = 'u32[]', space=smem, size = 0x4, offset = 0x4, fixed_abs, tag = 'smem constant byte address 0x4 - core index']
  #allocation1 [shape = 'u32[72,128]{1,0:T(1,128)}', space=vmem, size = 0x9000, scoped, tag = 'internal scratch']
  %s0 = inlined_call_operand.vmem [shape: bf16[512,36], index: 0, kind: input, shape index: {}]
  %s1 = inlined_call_operand.vmem [shape: bf16[36,4], index: 1, kind: input, shape index: {}]
  %s2 = inlined_call_operand.vmem [shape: f32[1,4], index: 2, kind: input, shape index: {}]
  %s3 = inlined_call_operand.vmem [shape: f32[512,4], index: 3, kind: output, shape index: {}]
  %s4 = sld [smem:[#allocation0]]
  $region45: #{transformer_v5_forward.6} parent=0
    _
  %s6 = ssub.s32 1, %s4
  %s7 = scalar_select 0, %s6, %s4
  loop: start=0, step=1, limit=4
  $region2: #{transformer_v5_forward.6} parent=0 // loop_pre_header
    _
  $region3: #{transformer_v5_forward.6} parent=0 // loop_header
    %s9 = sphi 0, %s13
    %p10 = scmp.ge.s32.totalorder %s9, 4
    %s19 = sphi 0, %s21
    %s22 = sphi 0, %s19
    %s23 = sphi 0, %s22
    %s39 = sphi 0, %s23
    %s43 = sphi 0, %s43
    %s45 = sphi 0, %s43
    %s46 = sphi 0, %s45
    %s60 = sphi 0, %s46
    %s64 = sphi 0, %s64
    %s66 = sphi 0, %s64
    %s67 = sphi 0, %s66
    %s81 = sphi 0, %s67
    %s87 = sphi 0, %s89
    %s90 = sphi 0, %s87
    %s91 = sphi 0, %s90
    %s107 = sphi 0, %s91
  $region4: #{transformer_v5_forward.6} parent=0 // loop_header_branch
    %12 = sbr.rel (%p10) target = $region8
  $region5: #{transformer_v5_forward.6} parent=0 // loop_body
    %s14 = ssub.s32 %s9, 1
    %s15 = ssub.s32 %s9, 2
    %s16 = sadd.s32 %s9, 1
    %s17 = ssub.s32 %s9, %s16
    %p18 = scmp.eq.s32.totalorder %s17, 0
    %s20 = sadd.s32 %s19, 1
    %s21 = scalar_select %p18, %s19, %s20
    %p24 = pneg %p18
    %p25 = scmp.eq.s32.totalorder %s9, 1
    %p26 = por %p24, %p25
    %p27 = scmp.ne.s32.totalorder %s19, %s22
    %p28 = scmp.eq.s32.totalorder %s9, 0
    %p29 = por %p27, %p28
    %p30 = scmp.ne.s32.totalorder %s19, %s22
    %p31 = scmp.eq.s32.totalorder %s14, 1
    %p32 = por %p30, %p31
    %p33 = scmp.ne.s32.totalorder %s22, %s23
    %p34 = scmp.eq.s32.totalorder %s14, 0
    %p35 = por %p33, %p34
    %p36 = scmp.ne.s32.totalorder %s22, %s23
    %p37 = scmp.eq.s32.totalorder %s15, 1
    %p38 = por %p36, %p37
    %p40 = scmp.ne.s32.totalorder %s23, %s39
    %p41 = scmp.eq.s32.totalorder %s15, 0
    %p42 = por %p40, %p41
    %s44 = sadd.s32 %s43, 1
    %p47 = scmp.eq.s32.totalorder %s9, 1
    %p48 = scmp.ne.s32.totalorder %s43, %s45
    %p49 = scmp.eq.s32.totalorder %s9, 0
    %p50 = por %p48, %p49
    %p51 = scmp.ne.s32.totalorder %s43, %s45
    %p52 = scmp.eq.s32.totalorder %s14, 1
    %p53 = por %p51, %p52
    %p54 = scmp.ne.s32.totalorder %s45, %s46
    %p55 = scmp.eq.s32.totalorder %s14, 0
    %p56 = por %p54, %p55
    %p57 = scmp.ne.s32.totalorder %s45, %s46
    %p58 = scmp.eq.s32.totalorder %s15, 1
    %p59 = por %p57, %p58
    %p61 = scmp.ne.s32.totalorder %s46, %s60
    %p62 = scmp.eq.s32.totalorder %s15, 0
    %p63 = por %p61, %p62
    %s65 = sadd.s32 %s64, 1
    %p68 = scmp.eq.s32.totalorder %s9, 1
    %p69 = scmp.ne.s32.totalorder %s64, %s66
    %p70 = scmp.eq.s32.totalorder %s9, 0
    %p71 = por %p69, %p70
    %p72 = scmp.ne.s32.totalorder %s64, %s66
    %p73 = scmp.eq.s32.totalorder %s14, 1
    %p74 = por %p72, %p73
    %p75 = scmp.ne.s32.totalorder %s66, %s67
    %p76 = scmp.eq.s32.totalorder %s14, 0
    %p77 = por %p75, %p76
    %p78 = scmp.ne.s32.totalorder %s66, %s67
    %p79 = scmp.eq.s32.totalorder %s15, 1
    %p80 = por %p78, %p79
    %p82 = scmp.ne.s32.totalorder %s67, %s81
    %p83 = scmp.eq.s32.totalorder %s15, 0
    %p84 = por %p82, %p83
    %s85 = ssub.s32 %s9, %s16
    %p86 = scmp.eq.s32.totalorder %s85, 0
    %s88 = sadd.s32 %s87, 1
    %s89 = scalar_select %p86, %s87, %s88
    %p92 = pneg %p86
    %p93 = scmp.eq.s32.totalorder %s9, 1
    %p94 = por %p92, %p93
    %p95 = scmp.ne.s32.totalorder %s87, %s90
    %p96 = scmp.eq.s32.totalorder %s9, 0
    %p97 = por %p95, %p96
    %p98 = scmp.ne.s32.totalorder %s87, %s90
    %p99 = scmp.eq.s32.totalorder %s14, 1
    %p100 = por %p98, %p99
    %p101 = scmp.ne.s32.totalorder %s90, %s91
    %p102 = scmp.eq.s32.totalorder %s14, 0
    %p103 = por %p101, %p102
    %p104 = scmp.ne.s32.totalorder %s90, %s91
    %p105 = scmp.eq.s32.totalorder %s15, 1
    %p106 = por %p104, %p105
    %p108 = scmp.ne.s32.totalorder %s91, %s107
    %p109 = scmp.eq.s32.totalorder %s15, 0
    %p110 = por %p108, %p109
    %p111 = scmp.le.s32.totalorder 1, %s9
    %p112 = scmp.lt.s32.totalorder %s9, 3
    %p113 = pnand %p111, %p112
    %p114 = pneg %p113
    // Predicated region
    $region9: #{transformer_v5_forward.6} parent=5 // pred_check
      _
    $region10: #{transformer_v5_forward.6} parent=5 // pred_check_branch
      %116 = sbr.rel (%p113) target = $region12
    $region11: #{transformer_v5_forward.6} parent=5 // pred_region
      %s117 = ssub.s32 %s9, 1
      // Predicated region
      $region13: #{transformer_v5_forward.6} parent=11 // pred_check
        %p118 = pneg %p56
      $region14: #{transformer_v5_forward.6} parent=11 // pred_check_branch
        %120 = sbr.rel (%p118) target = $region16
      $region15: #{transformer_v5_forward.6} parent=11 // pred_region
        _
      $region16: #{transformer_v5_forward.6} parent=11 // pred_fallthru
        _
      // Predicated region
      $region17: #{transformer_v5_forward.6} parent=11 // pred_check
        %p121 = pneg %p77
      $region18: #{transformer_v5_forward.6} parent=11 // pred_check_branch
        %123 = sbr.rel (%p121) target = $region20
      $region19: #{transformer_v5_forward.6} parent=11 // pred_region
        _
      $region20: #{transformer_v5_forward.6} parent=11 // pred_fallthru
        _
    $region12: #{transformer_v5_forward.6} parent=5 // pred_fallthru
      _
    %p124 = scmp.lt.s32.totalorder %s9, 2
    // Predicated region
    $region21: #{transformer_v5_forward.6} parent=5 // pred_check
      %p125 = pneg %p124
    $region22: #{transformer_v5_forward.6} parent=5 // pred_check_branch
      %127 = sbr.rel (%p125) target = $region24
    $region23: #{transformer_v5_forward.6} parent=5 // pred_region
      // Predicated region
      $region25: #{transformer_v5_forward.6} parent=23 // pred_check
        %p128 = pneg %p29
      $region26: #{transformer_v5_forward.6} parent=23 // pred_check_branch
        %130 = sbr.rel (%p128) target = $region28
      $region27: #{transformer_v5_forward.6} parent=23 // pred_region
        %s131 = smul.u32 32, %s9
        %p132 = scmp.lt.s32.totalorder %s131, 63
        %s133 = scalar_select %p132, %s131, 63
        %s134 = smul.addr %s133, 4
        %s135 = scalar_lea.vmem %s0, %s134
        %s136 = smul.u32 32, %s9
      $region28: #{transformer_v5_forward.6} parent=23 // pred_fallthru
        _
    $region24: #{transformer_v5_forward.6} parent=5 // pred_fallthru
      _
    %p137 = scmp.le.s32.totalorder 1, %s9
    %p138 = scmp.lt.s32.totalorder %s9, 3
    %p139 = pnand %p137, %p138
    %p140 = pneg %p139
    // Predicated region
    $region29: #{transformer_v5_forward.6} parent=5 // pred_check
      _
    $region30: #{transformer_v5_forward.6} parent=5 // pred_check_branch
      %142 = sbr.rel (%p139) target = $region32
    $region31: #{transformer_v5_forward.6} parent=5 // pred_region
      %s143 = ssub.s32 %s9, 1
      %s144 = smul.u32 32, %s14
      %p145 = scmp.lt.s32.totalorder %s144, 63
      %s146 = scalar_select %p145, %s144, 63
      %s147 = smul.addr %s146, 4
      %s148 = scalar_lea.vmem %s0, %s147
      %p149 = pneg %p35
      %p150 = pneg %p32
      %p151 = pneg %p56
      %p152 = pneg %p53
      %p153 = pneg %p77
      %p154 = pneg %p74
      %p155 = pneg %p103
      %p156 = pneg %p100
      %s157 = smul.u32 32, %s14
      %p158 = scmp.lt.s32.totalorder %s157, 63
      %s159 = scalar_select %p158, %s157, 63
      %s160 = smul.addr %s159, 8
      %s161 = scalar_lea.vmem %s3, %s160
      %s162 = smul.u32 32, %s14
      %p163 = scmp.lt.s32.totalorder %s162, 63
      %s164 = scalar_select %p163, %s162, 63
      %s165 = smul.addr %s164, 4
      %s166 = scalar_lea.vmem %s0, %s165
      %s167 = smul.u32 32, %s14
      %s168 = smul.u32 32, %s14
      %p169 = scmp.lt.s32.totalorder %s168, 63
      %s170 = scalar_select %p169, %s168, 63
      %s171 = smul.addr %s170, 8
      %s172 = scalar_lea.vmem %s3, %s171
      %s173 = smul.u32 32, %s14
      %v175 = vld [vmem:[%s166] sm:$0xf]
      %v176 = vld [vmem:[%s166 + $0x4] sm:$0xf]
      %v177 = vld [vmem:[%s166 + $0x8] sm:$0xf]
      %v178 = vld [vmem:[%s166 + $0xc] sm:$0xf]
      %v179 = vld [vmem:[%s166 + $0x10] sm:$0xf]
      %v180 = vld [vmem:[%s166 + $0x14] sm:$0xf]
      %v181 = vld [vmem:[%s166 + $0x18] sm:$0xf]
      %v182 = vld [vmem:[%s166 + $0x1c] sm:$0xf]
      %v183 = vld [vmem:[%s166 + $0x20] sm:$0xf]
      %v184 = vld [vmem:[%s166 + $0x24] sm:$0xf]
      %v185 = vld [vmem:[%s166 + $0x28] sm:$0xf]
      %v186 = vld [vmem:[%s166 + $0x2c] sm:$0xf]
      %v187 = vld [vmem:[%s166 + $0x30] sm:$0xf]
      %v188 = vld [vmem:[%s166 + $0x34] sm:$0xf]
      %v189 = vld [vmem:[%s166 + $0x38] sm:$0xf]
      %v190 = vld [vmem:[%s166 + $0x3c] sm:$0xf]
      %v191 = vld [vmem:[%s166 + $0x40] sm:$0xf]
      %v192 = vld [vmem:[%s166 + $0x44] sm:$0xf]
      %v193 = vld [vmem:[%s166 + $0x48] sm:$0xf]
      %v194 = vld [vmem:[%s166 + $0x4c] sm:$0xf]
      %v195 = vld [vmem:[%s166 + $0x50] sm:$0xf]
      %v196 = vld [vmem:[%s166 + $0x54] sm:$0xf]
      %v197 = vld [vmem:[%s166 + $0x58] sm:$0xf]
      %v198 = vld [vmem:[%s166 + $0x5c] sm:$0xf]
      %v199 = vld [vmem:[%s166 + $0x60] sm:$0xf]
      %v200 = vld [vmem:[%s166 + $0x64] sm:$0xf]
      %v201 = vld [vmem:[%s166 + $0x68] sm:$0xf]
      %v202 = vld [vmem:[%s166 + $0x6c] sm:$0xf]
      %v203 = vld [vmem:[%s166 + $0x70] sm:$0xf]
      %v204 = vld [vmem:[%s166 + $0x74] sm:$0xf]
      %v205 = vld [vmem:[%s166 + $0x78] sm:$0xf]
      %v206 = vld [vmem:[%s166 + $0x7c] sm:$0xf]
      %v207 = vld [vmem:[%s1] sm:$0xf]
      %v208 = vld [vmem:[%s1 + $0x4] sm:$0xf]
      %v209 = vld [vmem:[%s1 + $0x8] sm:$0xf]
      %v210 = vld [vmem:[%s1 + $0xc] sm:$0xf]
      %v211 = vld [vmem:[%s1 + $0x10] sm:$0x3]
      %v212 = vld [vmem:[%s2] sm:$0x1]
      %v214 = vperm.slane %v212, 0
      %v248 = vunpack.c.l.b16 %v175
      %v249 = vunpack.c.l.b16 %v176
      %v250 = vunpack.c.l.b16 %v177
      %v251 = vunpack.c.l.b16 %v178
      %v252 = vunpack.c.l.b16 %v179
      %v253 = vunpack.c.l.b16 %v180
      %v254 = vunpack.c.l.b16 %v181
      %v255 = vunpack.c.l.b16 %v182
      %v256 = vunpack.c.l.b16 %v183
      %v257 = vunpack.c.l.b16 %v184
      %v258 = vunpack.c.l.b16 %v185
      %v259 = vunpack.c.l.b16 %v186
      %v260 = vunpack.c.l.b16 %v187
      %v261 = vunpack.c.l.b16 %v188
      %v262 = vunpack.c.l.b16 %v189
      %v263 = vunpack.c.l.b16 %v190
      %v264 = vunpack.c.l.b16 %v191
      %v265 = vunpack.c.l.b16 %v192
      %v266 = vunpack.c.l.b16 %v193
      %v267 = vunpack.c.l.b16 %v194
      %v268 = vunpack.c.l.b16 %v195
      %v269 = vunpack.c.l.b16 %v196
      %v270 = vunpack.c.l.b16 %v197
      %v271 = vunpack.c.l.b16 %v198
      %v272 = vunpack.c.l.b16 %v199
      %v273 = vunpack.c.l.b16 %v200
      %v274 = vunpack.c.l.b16 %v201
      %v275 = vunpack.c.l.b16 %v202
      %v276 = vunpack.c.l.b16 %v203
      %v277 = vunpack.c.l.b16 %v204
      %v278 = vunpack.c.l.b16 %v205
      %v279 = vunpack.c.l.b16 %v206
      %v280 = vpack.c.b16 %v249, %v248
      %v281 = vpack.c.b16 %v251, %v250
      %v282 = vpack.c.b16 %v253, %v252
      %v283 = vpack.c.b16 %v255, %v254
      %v284 = vpack.c.b16 %v257, %v256
      %v285 = vpack.c.b16 %v259, %v258
      %v286 = vpack.c.b16 %v261, %v260
      %v287 = vpack.c.b16 %v263, %v262
      %v288 = vpack.c.b16 %v265, %v264
      %v289 = vpack.c.b16 %v267, %v266
      %v290 = vpack.c.b16 %v269, %v268
      %v291 = vpack.c.b16 %v271, %v270
      %v292 = vpack.c.b16 %v273, %v272
      %v293 = vpack.c.b16 %v275, %v274
      %v294 = vpack.c.b16 %v277, %v276
      %v295 = vpack.c.b16 %v279, %v278
      %v301 = vunpack.c.l.b16 %v207
      %v302 = vunpack.c.l.b16 %v208
      %v303 = vunpack.c.l.b16 %v209
      %v304 = vunpack.c.l.b16 %v210
      %v305 = vunpack.c.l.b16 %v211
      %v306 = vpack.c.b16 %v302, %v301
      %v307 = vpack.c.b16 %v304, %v303
      %v308 = vpack.c.b16 %v305, %v305
      %vm311 = vcmask 293888
      %v313 = vsel %vm311, %v280, 0
      %v316 = vsel %vm311, %v281, 0
      %v319 = vsel %vm311, %v282, 0
      %v322 = vsel %vm311, %v283, 0
      %v325 = vsel %vm311, %v284, 0
      %v328 = vsel %vm311, %v285, 0
      %v331 = vsel %vm311, %v286, 0
      %v334 = vsel %vm311, %v287, 0
      %v337 = vsel %vm311, %v288, 0
      %v340 = vsel %vm311, %v289, 0
      %v343 = vsel %vm311, %v290, 0
      %v346 = vsel %vm311, %v291, 0
      %v349 = vsel %vm311, %v292, 0
      %v352 = vsel %vm311, %v293, 0
      %v355 = vsel %vm311, %v294, 0
      %v358 = vsel %vm311, %v295, 0
      %vm360 = vcmask 1041408
      %v362 = vsel %vm360, %v308, 0
      %364 = vmatpush.bf16.msra.mxu0 0
      %365 = vmatpush.bf16.msra.mxu0 0
      %366 = vmatpush.bf16.msra.mxu0 0
      %367 = vmatpush.bf16.msra.mxu0 0
      %368 = vmatpush.bf16.msra.mxu0 0
      %369 = vmatpush.bf16.msra.mxu0 %v362
      %370 = vmatpush.bf16.msra.mxu0 %v307
      %371 = vmatpush.bf16.msra.mxu0 %v306
      %372 = vmatmul.bf16.gmra.mxu0 %v313
      %v373 = vpop.f32.mrf.mxu0
      %v374 = vadd.f32 %v214, %v373
      %v375 = vpop.f32.mrf.mxu0
      %v376 = vadd.f32 %v214, %v375
      %377 = vmatmul.bf16.gmra.mxu0 %v316
      %v378 = vpop.f32.mrf.mxu0
      %v379 = vadd.f32 %v214, %v378
      %v380 = vpop.f32.mrf.mxu0
      %v381 = vadd.f32 %v214, %v380
      %382 = vmatmul.bf16.gmra.mxu0 %v319
      %v383 = vpop.f32.mrf.mxu0
      %v384 = vadd.f32 %v214, %v383
      %v385 = vpop.f32.mrf.mxu0
      %v386 = vadd.f32 %v214, %v385
      %387 = vmatmul.bf16.gmra.mxu0 %v322
      %v388 = vpop.f32.mrf.mxu0
      %v389 = vadd.f32 %v214, %v388
      %v390 = vpop.f32.mrf.mxu0
      %v391 = vadd.f32 %v214, %v390
      %392 = vmatmul.bf16.gmra.mxu0 %v325
      %v393 = vpop.f32.mrf.mxu0
      %v394 = vadd.f32 %v214, %v393
      %v395 = vpop.f32.mrf.mxu0
      %v396 = vadd.f32 %v214, %v395
      %397 = vmatmul.bf16.gmra.mxu0 %v328
      %v398 = vpop.f32.mrf.mxu0
      %v399 = vadd.f32 %v214, %v398
      %v400 = vpop.f32.mrf.mxu0
      %v401 = vadd.f32 %v214, %v400
      %402 = vmatmul.bf16.gmra.mxu0 %v331
      %v403 = vpop.f32.mrf.mxu0
      %v404 = vadd.f32 %v214, %v403
      %v405 = vpop.f32.mrf.mxu0
      %v406 = vadd.f32 %v214, %v405
      %407 = vmatmul.bf16.gmra.mxu0 %v334
      %v408 = vpop.f32.mrf.mxu0
      %v409 = vadd.f32 %v214, %v408
      %v410 = vpop.f32.mrf.mxu0
      %v411 = vadd.f32 %v214, %v410
      %412 = vmatmul.bf16.gmra.mxu0 %v337
      %v413 = vpop.f32.mrf.mxu0
      %v414 = vadd.f32 %v214, %v413
      %v415 = vpop.f32.mrf.mxu0
      %v416 = vadd.f32 %v214, %v415
      %417 = vmatmul.bf16.gmra.mxu0 %v340
      %v418 = vpop.f32.mrf.mxu0
      %v419 = vadd.f32 %v214, %v418
      %v420 = vpop.f32.mrf.mxu0
      %v421 = vadd.f32 %v214, %v420
      %422 = vmatmul.bf16.gmra.mxu0 %v343
      %v423 = vpop.f32.mrf.mxu0
      %v424 = vadd.f32 %v214, %v423
      %v425 = vpop.f32.mrf.mxu0
      %v426 = vadd.f32 %v214, %v425
      %427 = vmatmul.bf16.gmra.mxu0 %v346
      %v428 = vpop.f32.mrf.mxu0
      %v429 = vadd.f32 %v214, %v428
      %v430 = vpop.f32.mrf.mxu0
      %v431 = vadd.f32 %v214, %v430
      %432 = vmatmul.bf16.gmra.mxu0 %v349
      %v433 = vpop.f32.mrf.mxu0
      %v434 = vadd.f32 %v214, %v433
      %v435 = vpop.f32.mrf.mxu0
      %v436 = vadd.f32 %v214, %v435
      %437 = vmatmul.bf16.gmra.mxu0 %v352
      %v438 = vpop.f32.mrf.mxu0
      %v439 = vadd.f32 %v214, %v438
      %v440 = vpop.f32.mrf.mxu0
      %v441 = vadd.f32 %v214, %v440
      %442 = vmatmul.bf16.gmra.mxu0 %v355
      %v443 = vpop.f32.mrf.mxu0
      %v444 = vadd.f32 %v214, %v443
      %v445 = vpop.f32.mrf.mxu0
      %v446 = vadd.f32 %v214, %v445
      %447 = vmatmul.bf16.gmra.mxu0 %v358
      %v448 = vpop.f32.mrf.mxu0
      %v449 = vadd.f32 %v214, %v448
      %v450 = vpop.f32.mrf.mxu0
      %v451 = vadd.f32 %v214, %v450
      %452 = vdwg.mxu0
      %v453 = vmax.f32 %v374, 0.0
      %v454 = vmax.f32 %v376, 0.0
      %v455 = vmax.f32 %v379, 0.0
      %v456 = vmax.f32 %v381, 0.0
      %v457 = vmax.f32 %v384, 0.0
      %v458 = vmax.f32 %v386, 0.0
      %v459 = vmax.f32 %v389, 0.0
      %v460 = vmax.f32 %v391, 0.0
      %v461 = vmax.f32 %v394, 0.0
      %v462 = vmax.f32 %v396, 0.0
      %v463 = vmax.f32 %v399, 0.0
      %v464 = vmax.f32 %v401, 0.0
      %v465 = vmax.f32 %v404, 0.0
      %v466 = vmax.f32 %v406, 0.0
      %v467 = vmax.f32 %v409, 0.0
      %v468 = vmax.f32 %v411, 0.0
      %v469 = vmax.f32 %v414, 0.0
      %v470 = vmax.f32 %v416, 0.0
      %v471 = vmax.f32 %v419, 0.0
      %v472 = vmax.f32 %v421, 0.0
      %v473 = vmax.f32 %v424, 0.0
      %v474 = vmax.f32 %v426, 0.0
      %v475 = vmax.f32 %v429, 0.0
      %v476 = vmax.f32 %v431, 0.0
      %v477 = vmax.f32 %v434, 0.0
      %v478 = vmax.f32 %v436, 0.0
      %v479 = vmax.f32 %v439, 0.0
      %v480 = vmax.f32 %v441, 0.0
      %v481 = vmax.f32 %v444, 0.0
      %v482 = vmax.f32 %v446, 0.0
      %v483 = vmax.f32 %v449, 0.0
      %v484 = vmax.f32 %v451, 0.0
      %vm485 = vcmask 31744
      %486 = vst.msk [vmem:[%s172] sm:$0xff] %vm485, %v453
      %487 = vst.msk [vmem:[%s172 + $0x8] sm:$0xff] %vm485, %v454
      %488 = vst.msk [vmem:[%s172 + $0x10] sm:$0xff] %vm485, %v455
      %489 = vst.msk [vmem:[%s172 + $0x18] sm:$0xff] %vm485, %v456
      %490 = vst.msk [vmem:[%s172 + $0x20] sm:$0xff] %vm485, %v457
      %491 = vst.msk [vmem:[%s172 + $0x28] sm:$0xff] %vm485, %v458
      %492 = vst.msk [vmem:[%s172 + $0x30] sm:$0xff] %vm485, %v459
      %493 = vst.msk [vmem:[%s172 + $0x38] sm:$0xff] %vm485, %v460
      %494 = vst.msk [vmem:[%s172 + $0x40] sm:$0xff] %vm485, %v461
      %495 = vst.msk [vmem:[%s172 + $0x48] sm:$0xff] %vm485, %v462
      %496 = vst.msk [vmem:[%s172 + $0x50] sm:$0xff] %vm485, %v463
      %497 = vst.msk [vmem:[%s172 + $0x58] sm:$0xff] %vm485, %v464
      %498 = vst.msk [vmem:[%s172 + $0x60] sm:$0xff] %vm485, %v465
      %499 = vst.msk [vmem:[%s172 + $0x68] sm:$0xff] %vm485, %v466
      %500 = vst.msk [vmem:[%s172 + $0x70] sm:$0xff] %vm485, %v467
      %501 = vst.msk [vmem:[%s172 + $0x78] sm:$0xff] %vm485, %v468
      %502 = vst.msk [vmem:[%s172 + $0x80] sm:$0xff] %vm485, %v469
      %503 = vst.msk [vmem:[%s172 + $0x88] sm:$0xff] %vm485, %v470
      %504 = vst.msk [vmem:[%s172 + $0x90] sm:$0xff] %vm485, %v471
      %505 = vst.msk [vmem:[%s172 + $0x98] sm:$0xff] %vm485, %v472
      %506 = vst.msk [vmem:[%s172 + $0xa0] sm:$0xff] %vm485, %v473
      %507 = vst.msk [vmem:[%s172 + $0xa8] sm:$0xff] %vm485, %v474
      %508 = vst.msk [vmem:[%s172 + $0xb0] sm:$0xff] %vm485, %v475
      %509 = vst.msk [vmem:[%s172 + $0xb8] sm:$0xff] %vm485, %v476
      %510 = vst.msk [vmem:[%s172 + $0xc0] sm:$0xff] %vm485, %v477
      %511 = vst.msk [vmem:[%s172 + $0xc8] sm:$0xff] %vm485, %v478
      %512 = vst.msk [vmem:[%s172 + $0xd0] sm:$0xff] %vm485, %v479
      %513 = vst.msk [vmem:[%s172 + $0xd8] sm:$0xff] %vm485, %v480
      %514 = vst.msk [vmem:[%s172 + $0xe0] sm:$0xff] %vm485, %v481
      %515 = vst.msk [vmem:[%s172 + $0xe8] sm:$0xff] %vm485, %v482
      %516 = vst.msk [vmem:[%s172 + $0xf0] sm:$0xff] %vm485, %v483
      %517 = vst.msk [vmem:[%s172 + $0xf8] sm:$0xff] %vm485, %v484
      %s518 = smul.u32 32, %s14
      %p519 = scmp.lt.s32.totalorder %s518, 63
      %s520 = scalar_select %p519, %s518, 63
      %s521 = smul.addr %s520, 8
      %s522 = scalar_lea.vmem %s3, %s521
      // Predicated region
      $region33: #{transformer_v5_forward.6} parent=31 // pred_check
        %p523 = pneg %p100
      $region34: #{transformer_v5_forward.6} parent=31 // pred_check_branch
        %525 = sbr.rel (%p523) target = $region36
      $region35: #{transformer_v5_forward.6} parent=31 // pred_region
        %s526 = smul.u32 32, %s14
      $region36: #{transformer_v5_forward.6} parent=31 // pred_fallthru
        _
    $region32: #{transformer_v5_forward.6} parent=5 // pred_fallthru
      _
    %p527 = scmp.le.s32.totalorder 2, %s9
    // Predicated region
    $region37: #{transformer_v5_forward.6} parent=5 // pred_check
      %p528 = pneg %p527
    $region38: #{transformer_v5_forward.6} parent=5 // pred_check_branch
      %530 = sbr.rel (%p528) target = $region40
    $region39: #{transformer_v5_forward.6} parent=5 // pred_region
      %s531 = ssub.s32 %s9, 2
      // Predicated region
      $region41: #{transformer_v5_forward.6} parent=39 // pred_check
        %p532 = pneg %p106
      $region42: #{transformer_v5_forward.6} parent=39 // pred_check_branch
        %534 = sbr.rel (%p532) target = $region44
      $region43: #{transformer_v5_forward.6} parent=39 // pred_region
        %s535 = smul.u32 32, %s15
        %p536 = scmp.lt.s32.totalorder %s535, 63
        %s537 = scalar_select %p536, %s535, 63
        %s538 = smul.addr %s537, 8
        %s539 = scalar_lea.vmem %s3, %s538
      $region44: #{transformer_v5_forward.6} parent=39 // pred_fallthru
        _
    $region40: #{transformer_v5_forward.6} parent=5 // pred_fallthru
      _
  $region6: #{transformer_v5_forward.6} parent=0 // loop_footer
    %s13 = sadd.s32 1, %s9
  $region7: #{transformer_v5_forward.6} parent=0 // loop_footer_branch
    %8 = sbr.rel target = $region3
  $region8: #{transformer_v5_forward.6} parent=0 // loop_exit
    _

// kernel: transformer_v5_forward.7
$region0: #{transformer_v5_forward.7}
  #allocation0 [shape = 'u32[]', space=smem, size = 0x4, offset = 0x4, fixed_abs, tag = 'smem constant byte address 0x4 - core index']
  #allocation1 [shape = 'u32[72,128]{1,0:T(1,128)}', space=vmem, size = 0x9000, scoped, tag = 'internal scratch']
  %s0 = inlined_call_operand.vmem [shape: bf16[512,36], index: 0, kind: input, shape index: {}]
  %s1 = inlined_call_operand.vmem [shape: bf16[36,4], index: 1, kind: input, shape index: {}]
  %s2 = inlined_call_operand.vmem [shape: f32[1,4], index: 2, kind: input, shape index: {}]
  %s3 = inlined_call_operand.vmem [shape: f32[512,4], index: 3, kind: output, shape index: {}]
  %s4 = sld [smem:[#allocation0]]
  $region45: #{transformer_v5_forward.7} parent=0
    _
  %s6 = ssub.s32 1, %s4
  %s7 = scalar_select 0, %s6, %s4
  loop: start=0, step=1, limit=4
  $region2: #{transformer_v5_forward.7} parent=0 // loop_pre_header
    _
  $region3: #{transformer_v5_forward.7} parent=0 // loop_header
    %s9 = sphi 0, %s13
    %p10 = scmp.ge.s32.totalorder %s9, 4
    %s19 = sphi 0, %s21
    %s22 = sphi 0, %s19
    %s23 = sphi 0, %s22
    %s39 = sphi 0, %s23
    %s43 = sphi 0, %s43
    %s45 = sphi 0, %s43
    %s46 = sphi 0, %s45
    %s60 = sphi 0, %s46
    %s64 = sphi 0, %s64
    %s66 = sphi 0, %s64
    %s67 = sphi 0, %s66
    %s81 = sphi 0, %s67
    %s87 = sphi 0, %s89
    %s90 = sphi 0, %s87
    %s91 = sphi 0, %s90
    %s107 = sphi 0, %s91
  $region4: #{transformer_v5_forward.7} parent=0 // loop_header_branch
    %12 = sbr.rel (%p10) target = $region8
  $region5: #{transformer_v5_forward.7} parent=0 // loop_body
    %s14 = ssub.s32 %s9, 1
    %s15 = ssub.s32 %s9, 2
    %s16 = sadd.s32 %s9, 1
    %s17 = ssub.s32 %s9, %s16
    %p18 = scmp.eq.s32.totalorder %s17, 0
    %s20 = sadd.s32 %s19, 1
    %s21 = scalar_select %p18, %s19, %s20
    %p24 = pneg %p18
    %p25 = scmp.eq.s32.totalorder %s9, 1
    %p26 = por %p24, %p25
    %p27 = scmp.ne.s32.totalorder %s19, %s22
    %p28 = scmp.eq.s32.totalorder %s9, 0
    %p29 = por %p27, %p28
    %p30 = scmp.ne.s32.totalorder %s19, %s22
    %p31 = scmp.eq.s32.totalorder %s14, 1
    %p32 = por %p30, %p31
    %p33 = scmp.ne.s32.totalorder %s22, %s23
    %p34 = scmp.eq.s32.totalorder %s14, 0
    %p35 = por %p33, %p34
    %p36 = scmp.ne.s32.totalorder %s22, %s23
    %p37 = scmp.eq.s32.totalorder %s15, 1
    %p38 = por %p36, %p37
    %p40 = scmp.ne.s32.totalorder %s23, %s39
    %p41 = scmp.eq.s32.totalorder %s15, 0
    %p42 = por %p40, %p41
    %s44 = sadd.s32 %s43, 1
    %p47 = scmp.eq.s32.totalorder %s9, 1
    %p48 = scmp.ne.s32.totalorder %s43, %s45
    %p49 = scmp.eq.s32.totalorder %s9, 0
    %p50 = por %p48, %p49
    %p51 = scmp.ne.s32.totalorder %s43, %s45
    %p52 = scmp.eq.s32.totalorder %s14, 1
    %p53 = por %p51, %p52
    %p54 = scmp.ne.s32.totalorder %s45, %s46
    %p55 = scmp.eq.s32.totalorder %s14, 0
    %p56 = por %p54, %p55
    %p57 = scmp.ne.s32.totalorder %s45, %s46
    %p58 = scmp.eq.s32.totalorder %s15, 1
    %p59 = por %p57, %p58
    %p61 = scmp.ne.s32.totalorder %s46, %s60
    %p62 = scmp.eq.s32.totalorder %s15, 0
    %p63 = por %p61, %p62
    %s65 = sadd.s32 %s64, 1
    %p68 = scmp.eq.s32.totalorder %s9, 1
    %p69 = scmp.ne.s32.totalorder %s64, %s66
    %p70 = scmp.eq.s32.totalorder %s9, 0
    %p71 = por %p69, %p70
    %p72 = scmp.ne.s32.totalorder %s64, %s66
    %p73 = scmp.eq.s32.totalorder %s14, 1
    %p74 = por %p72, %p73
    %p75 = scmp.ne.s32.totalorder %s66, %s67
    %p76 = scmp.eq.s32.totalorder %s14, 0
    %p77 = por %p75, %p76
    %p78 = scmp.ne.s32.totalorder %s66, %s67
    %p79 = scmp.eq.s32.totalorder %s15, 1
    %p80 = por %p78, %p79
    %p82 = scmp.ne.s32.totalorder %s67, %s81
    %p83 = scmp.eq.s32.totalorder %s15, 0
    %p84 = por %p82, %p83
    %s85 = ssub.s32 %s9, %s16
    %p86 = scmp.eq.s32.totalorder %s85, 0
    %s88 = sadd.s32 %s87, 1
    %s89 = scalar_select %p86, %s87, %s88
    %p92 = pneg %p86
    %p93 = scmp.eq.s32.totalorder %s9, 1
    %p94 = por %p92, %p93
    %p95 = scmp.ne.s32.totalorder %s87, %s90
    %p96 = scmp.eq.s32.totalorder %s9, 0
    %p97 = por %p95, %p96
    %p98 = scmp.ne.s32.totalorder %s87, %s90
    %p99 = scmp.eq.s32.totalorder %s14, 1
    %p100 = por %p98, %p99
    %p101 = scmp.ne.s32.totalorder %s90, %s91
    %p102 = scmp.eq.s32.totalorder %s14, 0
    %p103 = por %p101, %p102
    %p104 = scmp.ne.s32.totalorder %s90, %s91
    %p105 = scmp.eq.s32.totalorder %s15, 1
    %p106 = por %p104, %p105
    %p108 = scmp.ne.s32.totalorder %s91, %s107
    %p109 = scmp.eq.s32.totalorder %s15, 0
    %p110 = por %p108, %p109
    %p111 = scmp.le.s32.totalorder 1, %s9
    %p112 = scmp.lt.s32.totalorder %s9, 3
    %p113 = pnand %p111, %p112
    %p114 = pneg %p113
    // Predicated region
    $region9: #{transformer_v5_forward.7} parent=5 // pred_check
      _
    $region10: #{transformer_v5_forward.7} parent=5 // pred_check_branch
      %116 = sbr.rel (%p113) target = $region12
    $region11: #{transformer_v5_forward.7} parent=5 // pred_region
      %s117 = ssub.s32 %s9, 1
      // Predicated region
      $region13: #{transformer_v5_forward.7} parent=11 // pred_check
        %p118 = pneg %p56
      $region14: #{transformer_v5_forward.7} parent=11 // pred_check_branch
        %120 = sbr.rel (%p118) target = $region16
      $region15: #{transformer_v5_forward.7} parent=11 // pred_region
        _
      $region16: #{transformer_v5_forward.7} parent=11 // pred_fallthru
        _
      // Predicated region
      $region17: #{transformer_v5_forward.7} parent=11 // pred_check
        %p121 = pneg %p77
      $region18: #{transformer_v5_forward.7} parent=11 // pred_check_branch
        %123 = sbr.rel (%p121) target = $region20
      $region19: #{transformer_v5_forward.7} parent=11 // pred_region
        _
      $region20: #{transformer_v5_forward.7} parent=11 // pred_fallthru
        _
    $region12: #{transformer_v5_forward.7} parent=5 // pred_fallthru
      _
    %p124 = scmp.lt.s32.totalorder %s9, 2
    // Predicated region
    $region21: #{transformer_v5_forward.7} parent=5 // pred_check
      %p125 = pneg %p124
    $region22: #{transformer_v5_forward.7} parent=5 // pred_check_branch
      %127 = sbr.rel (%p125) target = $region24
    $region23: #{transformer_v5_forward.7} parent=5 // pred_region
      // Predicated region
      $region25: #{transformer_v5_forward.7} parent=23 // pred_check
        %p128 = pneg %p29
      $region26: #{transformer_v5_forward.7} parent=23 // pred_check_branch
        %130 = sbr.rel (%p128) target = $region28
      $region27: #{transformer_v5_forward.7} parent=23 // pred_region
        %s131 = smul.u32 32, %s9
        %p132 = scmp.lt.s32.totalorder %s131, 63
        %s133 = scalar_select %p132, %s131, 63
        %s134 = smul.addr %s133, 4
        %s135 = scalar_lea.vmem %s0, %s134
        %s136 = smul.u32 32, %s9
      $region28: #{transformer_v5_forward.7} parent=23 // pred_fallthru
        _
    $region24: #{transformer_v5_forward.7} parent=5 // pred_fallthru
      _
    %p137 = scmp.le.s32.totalorder 1, %s9
    %p138 = scmp.lt.s32.totalorder %s9, 3
    %p139 = pnand %p137, %p138
    %p140 = pneg %p139
    // Predicated region
    $region29: #{transformer_v5_forward.7} parent=5 // pred_check
      _
    $region30: #{transformer_v5_forward.7} parent=5 // pred_check_branch
      %142 = sbr.rel (%p139) target = $region32
    $region31: #{transformer_v5_forward.7} parent=5 // pred_region
      %s143 = ssub.s32 %s9, 1
      %s144 = smul.u32 32, %s14
      %p145 = scmp.lt.s32.totalorder %s144, 63
      %s146 = scalar_select %p145, %s144, 63
      %s147 = smul.addr %s146, 4
      %s148 = scalar_lea.vmem %s0, %s147
      %p149 = pneg %p35
      %p150 = pneg %p32
      %p151 = pneg %p56
      %p152 = pneg %p53
      %p153 = pneg %p77
      %p154 = pneg %p74
      %p155 = pneg %p103
      %p156 = pneg %p100
      %s157 = smul.u32 32, %s14
      %p158 = scmp.lt.s32.totalorder %s157, 63
      %s159 = scalar_select %p158, %s157, 63
      %s160 = smul.addr %s159, 8
      %s161 = scalar_lea.vmem %s3, %s160
      %s162 = smul.u32 32, %s14
      %p163 = scmp.lt.s32.totalorder %s162, 63
      %s164 = scalar_select %p163, %s162, 63
      %s165 = smul.addr %s164, 4
      %s166 = scalar_lea.vmem %s0, %s165
      %s167 = smul.u32 32, %s14
      %s168 = smul.u32 32, %s14
      %p169 = scmp.lt.s32.totalorder %s168, 63
      %s170 = scalar_select %p169, %s168, 63
      %s171 = smul.addr %s170, 8
      %s172 = scalar_lea.vmem %s3, %s171
      %s173 = smul.u32 32, %s14
      %v175 = vld [vmem:[%s166] sm:$0xf]
      %v176 = vld [vmem:[%s166 + $0x4] sm:$0xf]
      %v177 = vld [vmem:[%s166 + $0x8] sm:$0xf]
      %v178 = vld [vmem:[%s166 + $0xc] sm:$0xf]
      %v179 = vld [vmem:[%s166 + $0x10] sm:$0xf]
      %v180 = vld [vmem:[%s166 + $0x14] sm:$0xf]
      %v181 = vld [vmem:[%s166 + $0x18] sm:$0xf]
      %v182 = vld [vmem:[%s166 + $0x1c] sm:$0xf]
      %v183 = vld [vmem:[%s166 + $0x20] sm:$0xf]
      %v184 = vld [vmem:[%s166 + $0x24] sm:$0xf]
      %v185 = vld [vmem:[%s166 + $0x28] sm:$0xf]
      %v186 = vld [vmem:[%s166 + $0x2c] sm:$0xf]
      %v187 = vld [vmem:[%s166 + $0x30] sm:$0xf]
      %v188 = vld [vmem:[%s166 + $0x34] sm:$0xf]
      %v189 = vld [vmem:[%s166 + $0x38] sm:$0xf]
      %v190 = vld [vmem:[%s166 + $0x3c] sm:$0xf]
      %v191 = vld [vmem:[%s166 + $0x40] sm:$0xf]
      %v192 = vld [vmem:[%s166 + $0x44] sm:$0xf]
      %v193 = vld [vmem:[%s166 + $0x48] sm:$0xf]
      %v194 = vld [vmem:[%s166 + $0x4c] sm:$0xf]
      %v195 = vld [vmem:[%s166 + $0x50] sm:$0xf]
      %v196 = vld [vmem:[%s166 + $0x54] sm:$0xf]
      %v197 = vld [vmem:[%s166 + $0x58] sm:$0xf]
      %v198 = vld [vmem:[%s166 + $0x5c] sm:$0xf]
      %v199 = vld [vmem:[%s166 + $0x60] sm:$0xf]
      %v200 = vld [vmem:[%s166 + $0x64] sm:$0xf]
      %v201 = vld [vmem:[%s166 + $0x68] sm:$0xf]
      %v202 = vld [vmem:[%s166 + $0x6c] sm:$0xf]
      %v203 = vld [vmem:[%s166 + $0x70] sm:$0xf]
      %v204 = vld [vmem:[%s166 + $0x74] sm:$0xf]
      %v205 = vld [vmem:[%s166 + $0x78] sm:$0xf]
      %v206 = vld [vmem:[%s166 + $0x7c] sm:$0xf]
      %v207 = vld [vmem:[%s1] sm:$0xf]
      %v208 = vld [vmem:[%s1 + $0x4] sm:$0xf]
      %v209 = vld [vmem:[%s1 + $0x8] sm:$0xf]
      %v210 = vld [vmem:[%s1 + $0xc] sm:$0xf]
      %v211 = vld [vmem:[%s1 + $0x10] sm:$0x3]
      %v212 = vld [vmem:[%s2] sm:$0x1]
      %v214 = vperm.slane %v212, 0
      %v248 = vunpack.c.l.b16 %v175
      %v249 = vunpack.c.l.b16 %v176
      %v250 = vunpack.c.l.b16 %v177
      %v251 = vunpack.c.l.b16 %v178
      %v252 = vunpack.c.l.b16 %v179
      %v253 = vunpack.c.l.b16 %v180
      %v254 = vunpack.c.l.b16 %v181
      %v255 = vunpack.c.l.b16 %v182
      %v256 = vunpack.c.l.b16 %v183
      %v257 = vunpack.c.l.b16 %v184
      %v258 = vunpack.c.l.b16 %v185
      %v259 = vunpack.c.l.b16 %v186
      %v260 = vunpack.c.l.b16 %v187
      %v261 = vunpack.c.l.b16 %v188
      %v262 = vunpack.c.l.b16 %v189
      %v263 = vunpack.c.l.b16 %v190
      %v264 = vunpack.c.l.b16 %v191
      %v265 = vunpack.c.l.b16 %v192
      %v266 = vunpack.c.l.b16 %v193
      %v267 = vunpack.c.l.b16 %v194
      %v268 = vunpack.c.l.b16 %v195
      %v269 = vunpack.c.l.b16 %v196
      %v270 = vunpack.c.l.b16 %v197
      %v271 = vunpack.c.l.b16 %v198
      %v272 = vunpack.c.l.b16 %v199
      %v273 = vunpack.c.l.b16 %v200
      %v274 = vunpack.c.l.b16 %v201
      %v275 = vunpack.c.l.b16 %v202
      %v276 = vunpack.c.l.b16 %v203
      %v277 = vunpack.c.l.b16 %v204
      %v278 = vunpack.c.l.b16 %v205
      %v279 = vunpack.c.l.b16 %v206
      %v280 = vpack.c.b16 %v249, %v248
      %v281 = vpack.c.b16 %v251, %v250
      %v282 = vpack.c.b16 %v253, %v252
      %v283 = vpack.c.b16 %v255, %v254
      %v284 = vpack.c.b16 %v257, %v256
      %v285 = vpack.c.b16 %v259, %v258
      %v286 = vpack.c.b16 %v261, %v260
      %v287 = vpack.c.b16 %v263, %v262
      %v288 = vpack.c.b16 %v265, %v264
      %v289 = vpack.c.b16 %v267, %v266
      %v290 = vpack.c.b16 %v269, %v268
      %v291 = vpack.c.b16 %v271, %v270
      %v292 = vpack.c.b16 %v273, %v272
      %v293 = vpack.c.b16 %v275, %v274
      %v294 = vpack.c.b16 %v277, %v276
      %v295 = vpack.c.b16 %v279, %v278
      %v301 = vunpack.c.l.b16 %v207
      %v302 = vunpack.c.l.b16 %v208
      %v303 = vunpack.c.l.b16 %v209
      %v304 = vunpack.c.l.b16 %v210
      %v305 = vunpack.c.l.b16 %v211
      %v306 = vpack.c.b16 %v302, %v301
      %v307 = vpack.c.b16 %v304, %v303
      %v308 = vpack.c.b16 %v305, %v305
      %vm311 = vcmask 293888
      %v313 = vsel %vm311, %v280, 0
      %v316 = vsel %vm311, %v281, 0
      %v319 = vsel %vm311, %v282, 0
      %v322 = vsel %vm311, %v283, 0
      %v325 = vsel %vm311, %v284, 0
      %v328 = vsel %vm311, %v285, 0
      %v331 = vsel %vm311, %v286, 0
      %v334 = vsel %vm311, %v287, 0
      %v337 = vsel %vm311, %v288, 0
      %v340 = vsel %vm311, %v289, 0
      %v343 = vsel %vm311, %v290, 0
      %v346 = vsel %vm311, %v291, 0
      %v349 = vsel %vm311, %v292, 0
      %v352 = vsel %vm311, %v293, 0
      %v355 = vsel %vm311, %v294, 0
      %v358 = vsel %vm311, %v295, 0
      %vm360 = vcmask 1041408
      %v362 = vsel %vm360, %v308, 0
      %364 = vmatpush.bf16.msra.mxu0 0
      %365 = vmatpush.bf16.msra.mxu0 0
      %366 = vmatpush.bf16.msra.mxu0 0
      %367 = vmatpush.bf16.msra.mxu0 0
      %368 = vmatpush.bf16.msra.mxu0 0
      %369 = vmatpush.bf16.msra.mxu0 %v362
      %370 = vmatpush.bf16.msra.mxu0 %v307
      %371 = vmatpush.bf16.msra.mxu0 %v306
      %372 = vmatmul.bf16.gmra.mxu0 %v313
      %v373 = vpop.f32.mrf.mxu0
      %v374 = vadd.f32 %v214, %v373
      %v375 = vpop.f32.mrf.mxu0
      %v376 = vadd.f32 %v214, %v375
      %377 = vmatmul.bf16.gmra.mxu0 %v316
      %v378 = vpop.f32.mrf.mxu0
      %v379 = vadd.f32 %v214, %v378
      %v380 = vpop.f32.mrf.mxu0
      %v381 = vadd.f32 %v214, %v380
      %382 = vmatmul.bf16.gmra.mxu0 %v319
      %v383 = vpop.f32.mrf.mxu0
      %v384 = vadd.f32 %v214, %v383
      %v385 = vpop.f32.mrf.mxu0
      %v386 = vadd.f32 %v214, %v385
      %387 = vmatmul.bf16.gmra.mxu0 %v322
      %v388 = vpop.f32.mrf.mxu0
      %v389 = vadd.f32 %v214, %v388
      %v390 = vpop.f32.mrf.mxu0
      %v391 = vadd.f32 %v214, %v390
      %392 = vmatmul.bf16.gmra.mxu0 %v325
      %v393 = vpop.f32.mrf.mxu0
      %v394 = vadd.f32 %v214, %v393
      %v395 = vpop.f32.mrf.mxu0
      %v396 = vadd.f32 %v214, %v395
      %397 = vmatmul.bf16.gmra.mxu0 %v328
      %v398 = vpop.f32.mrf.mxu0
      %v399 = vadd.f32 %v214, %v398
      %v400 = vpop.f32.mrf.mxu0
      %v401 = vadd.f32 %v214, %v400
      %402 = vmatmul.bf16.gmra.mxu0 %v331
      %v403 = vpop.f32.mrf.mxu0
      %v404 = vadd.f32 %v214, %v403
      %v405 = vpop.f32.mrf.mxu0
      %v406 = vadd.f32 %v214, %v405
      %407 = vmatmul.bf16.gmra.mxu0 %v334
      %v408 = vpop.f32.mrf.mxu0
      %v409 = vadd.f32 %v214, %v408
      %v410 = vpop.f32.mrf.mxu0
      %v411 = vadd.f32 %v214, %v410
      %412 = vmatmul.bf16.gmra.mxu0 %v337
      %v413 = vpop.f32.mrf.mxu0
      %v414 = vadd.f32 %v214, %v413
      %v415 = vpop.f32.mrf.mxu0
      %v416 = vadd.f32 %v214, %v415
      %417 = vmatmul.bf16.gmra.mxu0 %v340
      %v418 = vpop.f32.mrf.mxu0
      %v419 = vadd.f32 %v214, %v418
      %v420 = vpop.f32.mrf.mxu0
      %v421 = vadd.f32 %v214, %v420
      %422 = vmatmul.bf16.gmra.mxu0 %v343
      %v423 = vpop.f32.mrf.mxu0
      %v424 = vadd.f32 %v214, %v423
      %v425 = vpop.f32.mrf.mxu0
      %v426 = vadd.f32 %v214, %v425
      %427 = vmatmul.bf16.gmra.mxu0 %v346
      %v428 = vpop.f32.mrf.mxu0
      %v429 = vadd.f32 %v214, %v428
      %v430 = vpop.f32.mrf.mxu0
      %v431 = vadd.f32 %v214, %v430
      %432 = vmatmul.bf16.gmra.mxu0 %v349
      %v433 = vpop.f32.mrf.mxu0
      %v434 = vadd.f32 %v214, %v433
      %v435 = vpop.f32.mrf.mxu0
      %v436 = vadd.f32 %v214, %v435
      %437 = vmatmul.bf16.gmra.mxu0 %v352
      %v438 = vpop.f32.mrf.mxu0
      %v439 = vadd.f32 %v214, %v438
      %v440 = vpop.f32.mrf.mxu0
      %v441 = vadd.f32 %v214, %v440
      %442 = vmatmul.bf16.gmra.mxu0 %v355
      %v443 = vpop.f32.mrf.mxu0
      %v444 = vadd.f32 %v214, %v443
      %v445 = vpop.f32.mrf.mxu0
      %v446 = vadd.f32 %v214, %v445
      %447 = vmatmul.bf16.gmra.mxu0 %v358
      %v448 = vpop.f32.mrf.mxu0
      %v449 = vadd.f32 %v214, %v448
      %v450 = vpop.f32.mrf.mxu0
      %v451 = vadd.f32 %v214, %v450
      %452 = vdwg.mxu0
      %vm453 = vcmask 31744
      %454 = vst.msk [vmem:[%s172] sm:$0xff] %vm453, %v374
      %455 = vst.msk [vmem:[%s172 + $0x8] sm:$0xff] %vm453, %v376
      %456 = vst.msk [vmem:[%s172 + $0x10] sm:$0xff] %vm453, %v379
      %457 = vst.msk [vmem:[%s172 + $0x18] sm:$0xff] %vm453, %v381
      %458 = vst.msk [vmem:[%s172 + $0x20] sm:$0xff] %vm453, %v384
      %459 = vst.msk [vmem:[%s172 + $0x28] sm:$0xff] %vm453, %v386
      %460 = vst.msk [vmem:[%s172 + $0x30] sm:$0xff] %vm453, %v389
      %461 = vst.msk [vmem:[%s172 + $0x38] sm:$0xff] %vm453, %v391
      %462 = vst.msk [vmem:[%s172 + $0x40] sm:$0xff] %vm453, %v394
      %463 = vst.msk [vmem:[%s172 + $0x48] sm:$0xff] %vm453, %v396
      %464 = vst.msk [vmem:[%s172 + $0x50] sm:$0xff] %vm453, %v399
      %465 = vst.msk [vmem:[%s172 + $0x58] sm:$0xff] %vm453, %v401
      %466 = vst.msk [vmem:[%s172 + $0x60] sm:$0xff] %vm453, %v404
      %467 = vst.msk [vmem:[%s172 + $0x68] sm:$0xff] %vm453, %v406
      %468 = vst.msk [vmem:[%s172 + $0x70] sm:$0xff] %vm453, %v409
      %469 = vst.msk [vmem:[%s172 + $0x78] sm:$0xff] %vm453, %v411
      %470 = vst.msk [vmem:[%s172 + $0x80] sm:$0xff] %vm453, %v414
      %471 = vst.msk [vmem:[%s172 + $0x88] sm:$0xff] %vm453, %v416
      %472 = vst.msk [vmem:[%s172 + $0x90] sm:$0xff] %vm453, %v419
      %473 = vst.msk [vmem:[%s172 + $0x98] sm:$0xff] %vm453, %v421
      %474 = vst.msk [vmem:[%s172 + $0xa0] sm:$0xff] %vm453, %v424
      %475 = vst.msk [vmem:[%s172 + $0xa8] sm:$0xff] %vm453, %v426
      %476 = vst.msk [vmem:[%s172 + $0xb0] sm:$0xff] %vm453, %v429
      %477 = vst.msk [vmem:[%s172 + $0xb8] sm:$0xff] %vm453, %v431
      %478 = vst.msk [vmem:[%s172 + $0xc0] sm:$0xff] %vm453, %v434
      %479 = vst.msk [vmem:[%s172 + $0xc8] sm:$0xff] %vm453, %v436
      %480 = vst.msk [vmem:[%s172 + $0xd0] sm:$0xff] %vm453, %v439
      %481 = vst.msk [vmem:[%s172 + $0xd8] sm:$0xff] %vm453, %v441
      %482 = vst.msk [vmem:[%s172 + $0xe0] sm:$0xff] %vm453, %v444
      %483 = vst.msk [vmem:[%s172 + $0xe8] sm:$0xff] %vm453, %v446
      %484 = vst.msk [vmem:[%s172 + $0xf0] sm:$0xff] %vm453, %v449
      %485 = vst.msk [vmem:[%s172 + $0xf8] sm:$0xff] %vm453, %v451
      %s486 = smul.u32 32, %s14
      %p487 = scmp.lt.s32.totalorder %s486, 63
      %s488 = scalar_select %p487, %s486, 63
      %s489 = smul.addr %s488, 8
      %s490 = scalar_lea.vmem %s3, %s489
      // Predicated region
      $region33: #{transformer_v5_forward.7} parent=31 // pred_check
        %p491 = pneg %p100
      $region34: #{transformer_v5_forward.7} parent=31 // pred_check_branch
        %493 = sbr.rel (%p491) target = $region36
      $region35: #{transformer_v5_forward.7} parent=31 // pred_region
        %s494 = smul.u32 32, %s14
      $region36: #{transformer_v5_forward.7} parent=31 // pred_fallthru
        _
    $region32: #{transformer_v5_forward.7} parent=5 // pred_fallthru
      _
    %p495 = scmp.le.s32.totalorder 2, %s9
    // Predicated region
    $region37: #{transformer_v5_forward.7} parent=5 // pred_check
      %p496 = pneg %p495
    $region38: #{transformer_v5_forward.7} parent=5 // pred_check_branch
      %498 = sbr.rel (%p496) target = $region40
    $region39: #{transformer_v5_forward.7} parent=5 // pred_region
      %s499 = ssub.s32 %s9, 2
      // Predicated region
      $region41: #{transformer_v5_forward.7} parent=39 // pred_check
        %p500 = pneg %p106
      $region42: #{transformer_v5_forward.7} parent=39 // pred_check_branch
        %502 = sbr.rel (%p500) target = $region44
      $region43: #{transformer_v5_forward.7} parent=39 // pred_region
        %s503 = smul.u32 32, %s15
        %p504 = scmp.lt.s32.totalorder %s503, 63
        %s505 = scalar_select %p504, %s503, 63
        %s506 = smul.addr %s505, 8
        %s507 = scalar_lea.vmem %s3, %s506
      $region44: #{transformer_v5_forward.7} parent=39 // pred_fallthru
        _
    $region40: #{transformer_v5_forward.7} parent=5 // pred_fallthru
      _
  $region6: #{transformer_v5_forward.7} parent=0 // loop_footer
    %s13 = sadd.s32 1, %s9
  $region7: #{transformer_v5_forward.7} parent=0 // loop_footer_branch
    %8 = sbr.rel target = $region3
  $region8: #{transformer_v5_forward.7} parent=0 // loop_exit
    _

// kernel: transformer_v5_forward.11
$region0: #{transformer_v5_forward.11}
  #allocation0 [shape = 'u32[]', space=smem, size = 0x4, offset = 0x4, fixed_abs, tag = 'smem constant byte address 0x4 - core index']
  #allocation1 [shape = 'u32[72,128]{1,0:T(1,128)}', space=vmem, size = 0x9000, scoped, tag = 'internal scratch']
  %s0 = inlined_call_operand.vmem [shape: bf16[512,12], index: 0, kind: input, shape index: {}]
  %s1 = inlined_call_operand.vmem [shape: bf16[12,4], index: 1, kind: input, shape index: {}]
  %s2 = inlined_call_operand.vmem [shape: f32[1,4], index: 2, kind: input, shape index: {}]
  %s3 = inlined_call_operand.vmem [shape: f32[512,4], index: 3, kind: output, shape index: {}]
  %s4 = sld [smem:[#allocation0]]
  $region45: #{transformer_v5_forward.11} parent=0
    _
  %s6 = ssub.s32 1, %s4
  %s7 = scalar_select 0, %s6, %s4
  loop: start=0, step=1, limit=4
  $region2: #{transformer_v5_forward.11} parent=0 // loop_pre_header
    _
  $region3: #{transformer_v5_forward.11} parent=0 // loop_header
    %s9 = sphi 0, %s13
    %p10 = scmp.ge.s32.totalorder %s9, 4
    %s19 = sphi 0, %s21
    %s22 = sphi 0, %s19
    %s23 = sphi 0, %s22
    %s39 = sphi 0, %s23
    %s43 = sphi 0, %s43
    %s45 = sphi 0, %s43
    %s46 = sphi 0, %s45
    %s60 = sphi 0, %s46
    %s64 = sphi 0, %s64
    %s66 = sphi 0, %s64
    %s67 = sphi 0, %s66
    %s81 = sphi 0, %s67
    %s87 = sphi 0, %s89
    %s90 = sphi 0, %s87
    %s91 = sphi 0, %s90
    %s107 = sphi 0, %s91
  $region4: #{transformer_v5_forward.11} parent=0 // loop_header_branch
    %12 = sbr.rel (%p10) target = $region8
  $region5: #{transformer_v5_forward.11} parent=0 // loop_body
    %s14 = ssub.s32 %s9, 1
    %s15 = ssub.s32 %s9, 2
    %s16 = sadd.s32 %s9, 1
    %s17 = ssub.s32 %s9, %s16
    %p18 = scmp.eq.s32.totalorder %s17, 0
    %s20 = sadd.s32 %s19, 1
    %s21 = scalar_select %p18, %s19, %s20
    %p24 = pneg %p18
    %p25 = scmp.eq.s32.totalorder %s9, 1
    %p26 = por %p24, %p25
    %p27 = scmp.ne.s32.totalorder %s19, %s22
    %p28 = scmp.eq.s32.totalorder %s9, 0
    %p29 = por %p27, %p28
    %p30 = scmp.ne.s32.totalorder %s19, %s22
    %p31 = scmp.eq.s32.totalorder %s14, 1
    %p32 = por %p30, %p31
    %p33 = scmp.ne.s32.totalorder %s22, %s23
    %p34 = scmp.eq.s32.totalorder %s14, 0
    %p35 = por %p33, %p34
    %p36 = scmp.ne.s32.totalorder %s22, %s23
    %p37 = scmp.eq.s32.totalorder %s15, 1
    %p38 = por %p36, %p37
    %p40 = scmp.ne.s32.totalorder %s23, %s39
    %p41 = scmp.eq.s32.totalorder %s15, 0
    %p42 = por %p40, %p41
    %s44 = sadd.s32 %s43, 1
    %p47 = scmp.eq.s32.totalorder %s9, 1
    %p48 = scmp.ne.s32.totalorder %s43, %s45
    %p49 = scmp.eq.s32.totalorder %s9, 0
    %p50 = por %p48, %p49
    %p51 = scmp.ne.s32.totalorder %s43, %s45
    %p52 = scmp.eq.s32.totalorder %s14, 1
    %p53 = por %p51, %p52
    %p54 = scmp.ne.s32.totalorder %s45, %s46
    %p55 = scmp.eq.s32.totalorder %s14, 0
    %p56 = por %p54, %p55
    %p57 = scmp.ne.s32.totalorder %s45, %s46
    %p58 = scmp.eq.s32.totalorder %s15, 1
    %p59 = por %p57, %p58
    %p61 = scmp.ne.s32.totalorder %s46, %s60
    %p62 = scmp.eq.s32.totalorder %s15, 0
    %p63 = por %p61, %p62
    %s65 = sadd.s32 %s64, 1
    %p68 = scmp.eq.s32.totalorder %s9, 1
    %p69 = scmp.ne.s32.totalorder %s64, %s66
    %p70 = scmp.eq.s32.totalorder %s9, 0
    %p71 = por %p69, %p70
    %p72 = scmp.ne.s32.totalorder %s64, %s66
    %p73 = scmp.eq.s32.totalorder %s14, 1
    %p74 = por %p72, %p73
    %p75 = scmp.ne.s32.totalorder %s66, %s67
    %p76 = scmp.eq.s32.totalorder %s14, 0
    %p77 = por %p75, %p76
    %p78 = scmp.ne.s32.totalorder %s66, %s67
    %p79 = scmp.eq.s32.totalorder %s15, 1
    %p80 = por %p78, %p79
    %p82 = scmp.ne.s32.totalorder %s67, %s81
    %p83 = scmp.eq.s32.totalorder %s15, 0
    %p84 = por %p82, %p83
    %s85 = ssub.s32 %s9, %s16
    %p86 = scmp.eq.s32.totalorder %s85, 0
    %s88 = sadd.s32 %s87, 1
    %s89 = scalar_select %p86, %s87, %s88
    %p92 = pneg %p86
    %p93 = scmp.eq.s32.totalorder %s9, 1
    %p94 = por %p92, %p93
    %p95 = scmp.ne.s32.totalorder %s87, %s90
    %p96 = scmp.eq.s32.totalorder %s9, 0
    %p97 = por %p95, %p96
    %p98 = scmp.ne.s32.totalorder %s87, %s90
    %p99 = scmp.eq.s32.totalorder %s14, 1
    %p100 = por %p98, %p99
    %p101 = scmp.ne.s32.totalorder %s90, %s91
    %p102 = scmp.eq.s32.totalorder %s14, 0
    %p103 = por %p101, %p102
    %p104 = scmp.ne.s32.totalorder %s90, %s91
    %p105 = scmp.eq.s32.totalorder %s15, 1
    %p106 = por %p104, %p105
    %p108 = scmp.ne.s32.totalorder %s91, %s107
    %p109 = scmp.eq.s32.totalorder %s15, 0
    %p110 = por %p108, %p109
    %p111 = scmp.le.s32.totalorder 1, %s9
    %p112 = scmp.lt.s32.totalorder %s9, 3
    %p113 = pnand %p111, %p112
    %p114 = pneg %p113
    // Predicated region
    $region9: #{transformer_v5_forward.11} parent=5 // pred_check
      _
    $region10: #{transformer_v5_forward.11} parent=5 // pred_check_branch
      %116 = sbr.rel (%p113) target = $region12
    $region11: #{transformer_v5_forward.11} parent=5 // pred_region
      %s117 = ssub.s32 %s9, 1
      // Predicated region
      $region13: #{transformer_v5_forward.11} parent=11 // pred_check
        %p118 = pneg %p56
      $region14: #{transformer_v5_forward.11} parent=11 // pred_check_branch
        %120 = sbr.rel (%p118) target = $region16
      $region15: #{transformer_v5_forward.11} parent=11 // pred_region
        _
      $region16: #{transformer_v5_forward.11} parent=11 // pred_fallthru
        _
      // Predicated region
      $region17: #{transformer_v5_forward.11} parent=11 // pred_check
        %p121 = pneg %p77
      $region18: #{transformer_v5_forward.11} parent=11 // pred_check_branch
        %123 = sbr.rel (%p121) target = $region20
      $region19: #{transformer_v5_forward.11} parent=11 // pred_region
        _
      $region20: #{transformer_v5_forward.11} parent=11 // pred_fallthru
        _
    $region12: #{transformer_v5_forward.11} parent=5 // pred_fallthru
      _
    %p124 = scmp.lt.s32.totalorder %s9, 2
    // Predicated region
    $region21: #{transformer_v5_forward.11} parent=5 // pred_check
      %p125 = pneg %p124
    $region22: #{transformer_v5_forward.11} parent=5 // pred_check_branch
      %127 = sbr.rel (%p125) target = $region24
    $region23: #{transformer_v5_forward.11} parent=5 // pred_region
      // Predicated region
      $region25: #{transformer_v5_forward.11} parent=23 // pred_check
        %p128 = pneg %p29
      $region26: #{transformer_v5_forward.11} parent=23 // pred_check_branch
        %130 = sbr.rel (%p128) target = $region28
      $region27: #{transformer_v5_forward.11} parent=23 // pred_region
        %s131 = smul.u32 32, %s9
        %p132 = scmp.lt.s32.totalorder %s131, 63
        %s133 = scalar_select %p132, %s131, 63
        %s134 = smul.addr %s133, 4
        %s135 = scalar_lea.vmem %s0, %s134
        %s136 = smul.u32 32, %s9
      $region28: #{transformer_v5_forward.11} parent=23 // pred_fallthru
        _
    $region24: #{transformer_v5_forward.11} parent=5 // pred_fallthru
      _
    %p137 = scmp.le.s32.totalorder 1, %s9
    %p138 = scmp.lt.s32.totalorder %s9, 3
    %p139 = pnand %p137, %p138
    %p140 = pneg %p139
    // Predicated region
    $region29: #{transformer_v5_forward.11} parent=5 // pred_check
      _
    $region30: #{transformer_v5_forward.11} parent=5 // pred_check_branch
      %142 = sbr.rel (%p139) target = $region32
    $region31: #{transformer_v5_forward.11} parent=5 // pred_region
      %s143 = ssub.s32 %s9, 1
      %s144 = smul.u32 32, %s14
      %p145 = scmp.lt.s32.totalorder %s144, 63
      %s146 = scalar_select %p145, %s144, 63
      %s147 = smul.addr %s146, 4
      %s148 = scalar_lea.vmem %s0, %s147
      %p149 = pneg %p35
      %p150 = pneg %p32
      %p151 = pneg %p56
      %p152 = pneg %p53
      %p153 = pneg %p77
      %p154 = pneg %p74
      %p155 = pneg %p103
      %p156 = pneg %p100
      %s157 = smul.u32 32, %s14
      %p158 = scmp.lt.s32.totalorder %s157, 63
      %s159 = scalar_select %p158, %s157, 63
      %s160 = smul.addr %s159, 8
      %s161 = scalar_lea.vmem %s3, %s160
      %s162 = smul.u32 32, %s14
      %p163 = scmp.lt.s32.totalorder %s162, 63
      %s164 = scalar_select %p163, %s162, 63
      %s165 = smul.addr %s164, 4
      %s166 = scalar_lea.vmem %s0, %s165
      %s167 = smul.u32 32, %s14
      %s168 = smul.u32 32, %s14
      %p169 = scmp.lt.s32.totalorder %s168, 63
      %s170 = scalar_select %p169, %s168, 63
      %s171 = smul.addr %s170, 8
      %s172 = scalar_lea.vmem %s3, %s171
      %s173 = smul.u32 32, %s14
      %v175 = vld [vmem:[%s166] sm:$0xf]
      %v176 = vld [vmem:[%s166 + $0x4] sm:$0xf]
      %v177 = vld [vmem:[%s166 + $0x8] sm:$0xf]
      %v178 = vld [vmem:[%s166 + $0xc] sm:$0xf]
      %v179 = vld [vmem:[%s166 + $0x10] sm:$0xf]
      %v180 = vld [vmem:[%s166 + $0x14] sm:$0xf]
      %v181 = vld [vmem:[%s166 + $0x18] sm:$0xf]
      %v182 = vld [vmem:[%s166 + $0x1c] sm:$0xf]
      %v183 = vld [vmem:[%s166 + $0x20] sm:$0xf]
      %v184 = vld [vmem:[%s166 + $0x24] sm:$0xf]
      %v185 = vld [vmem:[%s166 + $0x28] sm:$0xf]
      %v186 = vld [vmem:[%s166 + $0x2c] sm:$0xf]
      %v187 = vld [vmem:[%s166 + $0x30] sm:$0xf]
      %v188 = vld [vmem:[%s166 + $0x34] sm:$0xf]
      %v189 = vld [vmem:[%s166 + $0x38] sm:$0xf]
      %v190 = vld [vmem:[%s166 + $0x3c] sm:$0xf]
      %v191 = vld [vmem:[%s166 + $0x40] sm:$0xf]
      %v192 = vld [vmem:[%s166 + $0x44] sm:$0xf]
      %v193 = vld [vmem:[%s166 + $0x48] sm:$0xf]
      %v194 = vld [vmem:[%s166 + $0x4c] sm:$0xf]
      %v195 = vld [vmem:[%s166 + $0x50] sm:$0xf]
      %v196 = vld [vmem:[%s166 + $0x54] sm:$0xf]
      %v197 = vld [vmem:[%s166 + $0x58] sm:$0xf]
      %v198 = vld [vmem:[%s166 + $0x5c] sm:$0xf]
      %v199 = vld [vmem:[%s166 + $0x60] sm:$0xf]
      %v200 = vld [vmem:[%s166 + $0x64] sm:$0xf]
      %v201 = vld [vmem:[%s166 + $0x68] sm:$0xf]
      %v202 = vld [vmem:[%s166 + $0x6c] sm:$0xf]
      %v203 = vld [vmem:[%s166 + $0x70] sm:$0xf]
      %v204 = vld [vmem:[%s166 + $0x74] sm:$0xf]
      %v205 = vld [vmem:[%s166 + $0x78] sm:$0xf]
      %v206 = vld [vmem:[%s166 + $0x7c] sm:$0xf]
      %v207 = vld [vmem:[%s1] sm:$0xf]
      %v208 = vld [vmem:[%s1 + $0x4] sm:$0x3]
      %v209 = vld [vmem:[%s2] sm:$0x1]
      %v211 = vperm.slane %v209, 0
      %v245 = vunpack.c.l.b16 %v175
      %v246 = vunpack.c.l.b16 %v176
      %v247 = vunpack.c.l.b16 %v177
      %v248 = vunpack.c.l.b16 %v178
      %v249 = vunpack.c.l.b16 %v179
      %v250 = vunpack.c.l.b16 %v180
      %v251 = vunpack.c.l.b16 %v181
      %v252 = vunpack.c.l.b16 %v182
      %v253 = vunpack.c.l.b16 %v183
      %v254 = vunpack.c.l.b16 %v184
      %v255 = vunpack.c.l.b16 %v185
      %v256 = vunpack.c.l.b16 %v186
      %v257 = vunpack.c.l.b16 %v187
      %v258 = vunpack.c.l.b16 %v188
      %v259 = vunpack.c.l.b16 %v189
      %v260 = vunpack.c.l.b16 %v190
      %v261 = vunpack.c.l.b16 %v191
      %v262 = vunpack.c.l.b16 %v192
      %v263 = vunpack.c.l.b16 %v193
      %v264 = vunpack.c.l.b16 %v194
      %v265 = vunpack.c.l.b16 %v195
      %v266 = vunpack.c.l.b16 %v196
      %v267 = vunpack.c.l.b16 %v197
      %v268 = vunpack.c.l.b16 %v198
      %v269 = vunpack.c.l.b16 %v199
      %v270 = vunpack.c.l.b16 %v200
      %v271 = vunpack.c.l.b16 %v201
      %v272 = vunpack.c.l.b16 %v202
      %v273 = vunpack.c.l.b16 %v203
      %v274 = vunpack.c.l.b16 %v204
      %v275 = vunpack.c.l.b16 %v205
      %v276 = vunpack.c.l.b16 %v206
      %v277 = vpack.c.b16 %v246, %v245
      %v278 = vpack.c.b16 %v248, %v247
      %v279 = vpack.c.b16 %v250, %v249
      %v280 = vpack.c.b16 %v252, %v251
      %v281 = vpack.c.b16 %v254, %v253
      %v282 = vpack.c.b16 %v256, %v255
      %v283 = vpack.c.b16 %v258, %v257
      %v284 = vpack.c.b16 %v260, %v259
      %v285 = vpack.c.b16 %v262, %v261
      %v286 = vpack.c.b16 %v264, %v263
      %v287 = vpack.c.b16 %v266, %v265
      %v288 = vpack.c.b16 %v268, %v267
      %v289 = vpack.c.b16 %v270, %v269
      %v290 = vpack.c.b16 %v272, %v271
      %v291 = vpack.c.b16 %v274, %v273
      %v292 = vpack.c.b16 %v276, %v275
      %v295 = vunpack.c.l.b16 %v207
      %v296 = vunpack.c.l.b16 %v208
      %v297 = vpack.c.b16 %v296, %v295
      %vm298 = vcmask 97280
      %v300 = vsel %vm298, %v277, 0
      %v303 = vsel %vm298, %v278, 0
      %v306 = vsel %vm298, %v279, 0
      %v309 = vsel %vm298, %v280, 0
      %v312 = vsel %vm298, %v281, 0
      %v315 = vsel %vm298, %v282, 0
      %v318 = vsel %vm298, %v283, 0
      %v321 = vsel %vm298, %v284, 0
      %v324 = vsel %vm298, %v285, 0
      %v327 = vsel %vm298, %v286, 0
      %v330 = vsel %vm298, %v287, 0
      %v333 = vsel %vm298, %v288, 0
      %v336 = vsel %vm298, %v289, 0
      %v339 = vsel %vm298, %v290, 0
      %v342 = vsel %vm298, %v291, 0
      %v345 = vsel %vm298, %v292, 0
      %vm347 = vcmask 1045504
      %v349 = vsel %vm347, %v297, 0
      %351 = vmatpush.bf16.msra.mxu0 0
      %352 = vmatpush.bf16.msra.mxu0 0
      %353 = vmatpush.bf16.msra.mxu0 0
      %354 = vmatpush.bf16.msra.mxu0 0
      %355 = vmatpush.bf16.msra.mxu0 0
      %356 = vmatpush.bf16.msra.mxu0 0
      %357 = vmatpush.bf16.msra.mxu0 0
      %358 = vmatpush.bf16.msra.mxu0 %v349
      %359 = vmatmul.bf16.gmra.mxu0 %v300
      %v360 = vpop.f32.mrf.mxu0
      %v361 = vadd.f32 %v211, %v360
      %v362 = vpop.f32.mrf.mxu0
      %v363 = vadd.f32 %v211, %v362
      %364 = vmatmul.bf16.gmra.mxu0 %v303
      %v365 = vpop.f32.mrf.mxu0
      %v366 = vadd.f32 %v211, %v365
      %v367 = vpop.f32.mrf.mxu0
      %v368 = vadd.f32 %v211, %v367
      %369 = vmatmul.bf16.gmra.mxu0 %v306
      %v370 = vpop.f32.mrf.mxu0
      %v371 = vadd.f32 %v211, %v370
      %v372 = vpop.f32.mrf.mxu0
      %v373 = vadd.f32 %v211, %v372
      %374 = vmatmul.bf16.gmra.mxu0 %v309
      %v375 = vpop.f32.mrf.mxu0
      %v376 = vadd.f32 %v211, %v375
      %v377 = vpop.f32.mrf.mxu0
      %v378 = vadd.f32 %v211, %v377
      %379 = vmatmul.bf16.gmra.mxu0 %v312
      %v380 = vpop.f32.mrf.mxu0
      %v381 = vadd.f32 %v211, %v380
      %v382 = vpop.f32.mrf.mxu0
      %v383 = vadd.f32 %v211, %v382
      %384 = vmatmul.bf16.gmra.mxu0 %v315
      %v385 = vpop.f32.mrf.mxu0
      %v386 = vadd.f32 %v211, %v385
      %v387 = vpop.f32.mrf.mxu0
      %v388 = vadd.f32 %v211, %v387
      %389 = vmatmul.bf16.gmra.mxu0 %v318
      %v390 = vpop.f32.mrf.mxu0
      %v391 = vadd.f32 %v211, %v390
      %v392 = vpop.f32.mrf.mxu0
      %v393 = vadd.f32 %v211, %v392
      %394 = vmatmul.bf16.gmra.mxu0 %v321
      %v395 = vpop.f32.mrf.mxu0
      %v396 = vadd.f32 %v211, %v395
      %v397 = vpop.f32.mrf.mxu0
      %v398 = vadd.f32 %v211, %v397
      %399 = vmatmul.bf16.gmra.mxu0 %v324
      %v400 = vpop.f32.mrf.mxu0
      %v401 = vadd.f32 %v211, %v400
      %v402 = vpop.f32.mrf.mxu0
      %v403 = vadd.f32 %v211, %v402
      %404 = vmatmul.bf16.gmra.mxu0 %v327
      %v405 = vpop.f32.mrf.mxu0
      %v406 = vadd.f32 %v211, %v405
      %v407 = vpop.f32.mrf.mxu0
      %v408 = vadd.f32 %v211, %v407
      %409 = vmatmul.bf16.gmra.mxu0 %v330
      %v410 = vpop.f32.mrf.mxu0
      %v411 = vadd.f32 %v211, %v410
      %v412 = vpop.f32.mrf.mxu0
      %v413 = vadd.f32 %v211, %v412
      %414 = vmatmul.bf16.gmra.mxu0 %v333
      %v415 = vpop.f32.mrf.mxu0
      %v416 = vadd.f32 %v211, %v415
      %v417 = vpop.f32.mrf.mxu0
      %v418 = vadd.f32 %v211, %v417
      %419 = vmatmul.bf16.gmra.mxu0 %v336
      %v420 = vpop.f32.mrf.mxu0
      %v421 = vadd.f32 %v211, %v420
      %v422 = vpop.f32.mrf.mxu0
      %v423 = vadd.f32 %v211, %v422
      %424 = vmatmul.bf16.gmra.mxu0 %v339
      %v425 = vpop.f32.mrf.mxu0
      %v426 = vadd.f32 %v211, %v425
      %v427 = vpop.f32.mrf.mxu0
      %v428 = vadd.f32 %v211, %v427
      %429 = vmatmul.bf16.gmra.mxu0 %v342
      %v430 = vpop.f32.mrf.mxu0
      %v431 = vadd.f32 %v211, %v430
      %v432 = vpop.f32.mrf.mxu0
      %v433 = vadd.f32 %v211, %v432
      %434 = vmatmul.bf16.gmra.mxu0 %v345
      %v435 = vpop.f32.mrf.mxu0
      %v436 = vadd.f32 %v211, %v435
      %v437 = vpop.f32.mrf.mxu0
      %v438 = vadd.f32 %v211, %v437
      %439 = vdwg.mxu0
      %vm440 = vcmask 31744
      %441 = vst.msk [vmem:[%s172] sm:$0xff] %vm440, %v361
      %442 = vst.msk [vmem:[%s172 + $0x8] sm:$0xff] %vm440, %v363
      %443 = vst.msk [vmem:[%s172 + $0x10] sm:$0xff] %vm440, %v366
      %444 = vst.msk [vmem:[%s172 + $0x18] sm:$0xff] %vm440, %v368
      %445 = vst.msk [vmem:[%s172 + $0x20] sm:$0xff] %vm440, %v371
      %446 = vst.msk [vmem:[%s172 + $0x28] sm:$0xff] %vm440, %v373
      %447 = vst.msk [vmem:[%s172 + $0x30] sm:$0xff] %vm440, %v376
      %448 = vst.msk [vmem:[%s172 + $0x38] sm:$0xff] %vm440, %v378
      %449 = vst.msk [vmem:[%s172 + $0x40] sm:$0xff] %vm440, %v381
      %450 = vst.msk [vmem:[%s172 + $0x48] sm:$0xff] %vm440, %v383
      %451 = vst.msk [vmem:[%s172 + $0x50] sm:$0xff] %vm440, %v386
      %452 = vst.msk [vmem:[%s172 + $0x58] sm:$0xff] %vm440, %v388
      %453 = vst.msk [vmem:[%s172 + $0x60] sm:$0xff] %vm440, %v391
      %454 = vst.msk [vmem:[%s172 + $0x68] sm:$0xff] %vm440, %v393
      %455 = vst.msk [vmem:[%s172 + $0x70] sm:$0xff] %vm440, %v396
      %456 = vst.msk [vmem:[%s172 + $0x78] sm:$0xff] %vm440, %v398
      %457 = vst.msk [vmem:[%s172 + $0x80] sm:$0xff] %vm440, %v401
      %458 = vst.msk [vmem:[%s172 + $0x88] sm:$0xff] %vm440, %v403
      %459 = vst.msk [vmem:[%s172 + $0x90] sm:$0xff] %vm440, %v406
      %460 = vst.msk [vmem:[%s172 + $0x98] sm:$0xff] %vm440, %v408
      %461 = vst.msk [vmem:[%s172 + $0xa0] sm:$0xff] %vm440, %v411
      %462 = vst.msk [vmem:[%s172 + $0xa8] sm:$0xff] %vm440, %v413
      %463 = vst.msk [vmem:[%s172 + $0xb0] sm:$0xff] %vm440, %v416
      %464 = vst.msk [vmem:[%s172 + $0xb8] sm:$0xff] %vm440, %v418
      %465 = vst.msk [vmem:[%s172 + $0xc0] sm:$0xff] %vm440, %v421
      %466 = vst.msk [vmem:[%s172 + $0xc8] sm:$0xff] %vm440, %v423
      %467 = vst.msk [vmem:[%s172 + $0xd0] sm:$0xff] %vm440, %v426
      %468 = vst.msk [vmem:[%s172 + $0xd8] sm:$0xff] %vm440, %v428
      %469 = vst.msk [vmem:[%s172 + $0xe0] sm:$0xff] %vm440, %v431
      %470 = vst.msk [vmem:[%s172 + $0xe8] sm:$0xff] %vm440, %v433
      %471 = vst.msk [vmem:[%s172 + $0xf0] sm:$0xff] %vm440, %v436
      %472 = vst.msk [vmem:[%s172 + $0xf8] sm:$0xff] %vm440, %v438
      %s473 = smul.u32 32, %s14
      %p474 = scmp.lt.s32.totalorder %s473, 63
      %s475 = scalar_select %p474, %s473, 63
      %s476 = smul.addr %s475, 8
      %s477 = scalar_lea.vmem %s3, %s476
      // Predicated region
      $region33: #{transformer_v5_forward.11} parent=31 // pred_check
        %p478 = pneg %p100
      $region34: #{transformer_v5_forward.11} parent=31 // pred_check_branch
        %480 = sbr.rel (%p478) target = $region36
      $region35: #{transformer_v5_forward.11} parent=31 // pred_region
        %s481 = smul.u32 32, %s14
      $region36: #{transformer_v5_forward.11} parent=31 // pred_fallthru
        _
    $region32: #{transformer_v5_forward.11} parent=5 // pred_fallthru
      _
    %p482 = scmp.le.s32.totalorder 2, %s9
    // Predicated region
    $region37: #{transformer_v5_forward.11} parent=5 // pred_check
      %p483 = pneg %p482
    $region38: #{transformer_v5_forward.11} parent=5 // pred_check_branch
      %485 = sbr.rel (%p483) target = $region40
    $region39: #{transformer_v5_forward.11} parent=5 // pred_region
      %s486 = ssub.s32 %s9, 2
      // Predicated region
      $region41: #{transformer_v5_forward.11} parent=39 // pred_check
        %p487 = pneg %p106
      $region42: #{transformer_v5_forward.11} parent=39 // pred_check_branch
        %489 = sbr.rel (%p487) target = $region44
      $region43: #{transformer_v5_forward.11} parent=39 // pred_region
        %s490 = smul.u32 32, %s15
        %p491 = scmp.lt.s32.totalorder %s490, 63
        %s492 = scalar_select %p491, %s490, 63
        %s493 = smul.addr %s492, 8
        %s494 = scalar_lea.vmem %s3, %s493
      $region44: #{transformer_v5_forward.11} parent=39 // pred_fallthru
        _
    $region40: #{transformer_v5_forward.11} parent=5 // pred_fallthru
      _
  $region6: #{transformer_v5_forward.11} parent=0 // loop_footer
    %s13 = sadd.s32 1, %s9
  $region7: #{transformer_v5_forward.11} parent=0 // loop_footer_branch
    %8 = sbr.rel target = $region3
  $region8: #{transformer_v5_forward.11} parent=0 // loop_exit
    _

</llo_original>
